<compile_context>
chip_gen: v7x
topology: tpu7x:2x2x1
jax: 0.10.0
libtpu: 0.0.40
codegen_flags: <defaults>
</compile_context>

<pallas_src>
import functools

import jax
import jax.numpy as jnp
from jax.experimental import pallas as pl
from jax.experimental.pallas import tpu as pltpu


def _round_up(n, m):
    return ((n + m - 1) // m) * m


_M_TILE = 256                     # fills the 256x256 MXU row dim on v6e/v7x; fine on v5e
_VMEM_LIMIT = 32 * 1024 * 1024    # safe on v5e/v6e/v7x


def _tile_m(M):
    """(Mp, tm): padded row count and row-tile size, 16-aligned for bf16 sublanes."""
    Mp = _round_up(M, 16)
    if Mp <= _M_TILE:
        return Mp, Mp
    Mp = _round_up(M, _M_TILE)
    return Mp, _M_TILE


def _pad_kn(K, N):
    """Padded (Kp, Np) for a (K, N) weight matrix.  K is never grid-tiled."""
    return _round_up(K, 128), _round_up(N, 128)


# --------------------------- Pallas GEMM kernel ------------------------------

def _gemm_bias_act_kernel(x_ref, w_ref, b_ref, o_ref, *, alpha, apply_act):
    """One (tm, tn) output tile: bf16 MXU dot, f32 accumulate, f32 bias+LeakyReLU."""
    y = jnp.dot(x_ref[...], w_ref[...], preferred_element_type=jnp.float32)
    y = y + b_ref[...]
    if apply_act:
        y = jnp.where(y >= 0.0, y, alpha * y)
    o_ref[...] = y


def pallas_linear(x, w_pad, b_pad, n_out, *, alpha=0.01, apply_act=True):
    """act(x @ W + b) with a tiled Pallas TPU kernel.

    x:     (M, K)  f32 or bf16 (cast to bf16 here)
    w_pad: (Kp, Np) bf16, zero-padded at init time
    b_pad: (1, Np)  f32,  zero-padded at init time
    Returns (M, n_out) f32.
    """
    M, K = x.shape
    Kp, Np = w_pad.shape
    Mp, tm = _tile_m(M)
    # Lane-dense N tiles; splitting the 512-wide layers gives v7x's 2nd TC work.
    tn = 256 if Np >= 512 else Np

    # Pad only the remainders; padded rows/cols contribute exact zeros.
    xp = jnp.pad(x.astype(jnp.bfloat16), ((0, Mp - M), (0, Kp - K)))

    grid = (Mp // tm, Np // tn)
    kernel = functools.partial(_gemm_bias_act_kernel, alpha=alpha, apply_act=apply_act)

    out = pl.pallas_call(
        kernel,
        out_shape=jax.ShapeDtypeStruct((Mp, Np), jnp.float32),
        grid_spec=pltpu.PrefetchScalarGridSpec(
            num_scalar_prefetch=0,
            grid=grid,
            in_specs=[
                pl.BlockSpec((tm, Kp), lambda i, j: (i, 0)),   # x row tile (K untiled)
                pl.BlockSpec((Kp, tn), lambda i, j: (0, j)),   # weight column tile
                pl.BlockSpec((1, tn), lambda i, j: (0, j)),    # bias row
            ],
            out_specs=pl.BlockSpec((tm, tn), lambda i, j: (i, j)),
        ),
        compiler_params=pltpu.CompilerParams(
            dimension_semantics=("parallel", "parallel"),
            vmem_limit_bytes=_VMEM_LIMIT,
        ),
    )(xp, w_pad, b_pad)
    return out[:M, :n_out]


# ------------------- fused fc1 -> LeakyReLU -> BN(128) -> fc2 ----------------

def _fc_tail_kernel(x_ref, w1_ref, b1_ref, g_ref, be_ref, w2_ref, b2_ref, o_ref,
                    *, alpha, batch, eps):
    h = jnp.dot(x_ref[...], w1_ref[...], preferred_element_type=jnp.float32)
    h = h + b1_ref[...]
    h = jnp.where(h >= 0.0, h, alpha * h)                       # LeakyReLU(0.01)
    # BatchNorm1d(128): training-mode batch stats over the VALID batch rows only
    # (zero-padded rows are masked out so they cannot pollute the statistics).
    rows = jax.lax.broadcasted_iota(jnp.int32, h.shape, 0)
    valid = (rows < batch).astype(jnp.float32)
    inv_b = 1.0 / batch
    mean = jnp.sum(h * valid, axis=0, keepdims=True) * inv_b
    d = (h - mean) * valid
    var = jnp.sum(d * d, axis=0, keepdims=True) * inv_b          # biased variance
    hn = (h - mean) * jax.lax.rsqrt(var + eps) * g_ref[...] + be_ref[...]
    y = jnp.dot(hn.astype(jnp.bfloat16), w2_ref[...],
                preferred_element_type=jnp.float32) + b2_ref[...]
    o_ref[...] = y


def pallas_fc_tail(x, fc1, norm2, fc2, n_out, *, alpha=0.01, eps=1e-5):
    """Single-kernel fc1 + LeakyReLU + BatchNorm1d(128) + fc2.  x: (B, 512) f32."""
    M, K = x.shape
    Mp = _round_up(M, 16)
    w1, b1 = fc1["w"], fc1["b"]          # (512, 128) bf16, (1, 128) f32
    gamma, beta = norm2                  # (1, 128) f32 each
    w2, b2 = fc2["w"], fc2["b"]          # (128, 128) bf16 (padded from (128, 9)), (1, 128) f32
    K1p, N1p = w1.shape
    K2p, N2p = w2.shape

    xp = jnp.pad(x.astype(jnp.bfloat16), ((0, Mp - M), (0, K1p - K)))
    kernel = functools.partial(_fc_tail_kernel, alpha=alpha, batch=M, eps=eps)

    out = pl.pallas_call(
        kernel,
        out_shape=jax.ShapeDtypeStruct((Mp, N2p), jnp.float32),
        grid_spec=pltpu.PrefetchScalarGridSpec(
            num_scalar_prefetch=0,
            grid=(1,),
            in_specs=[
                pl.BlockSpec((Mp, K1p), lambda i: (0, 0)),
                pl.BlockSpec((K1p, N1p), lambda i: (0, 0)),
                pl.BlockSpec((1, N1p), lambda i: (0, 0)),
                pl.BlockSpec((1, N1p), lambda i: (0, 0)),
                pl.BlockSpec((1, N1p), lambda i: (0, 0)),
                pl.BlockSpec((K2p, N2p), lambda i: (0, 0)),
                pl.BlockSpec((1, N2p), lambda i: (0, 0)),
            ],
            out_specs=pl.BlockSpec((Mp, N2p), lambda i: (0, 0)),
        ),
        compiler_params=pltpu.CompilerParams(
            dimension_semantics=("arbitrary",),
            vmem_limit_bytes=_VMEM_LIMIT,
        ),
    )(xp, w1, b1, gamma, beta, w2, b2)
    return out[:M, :n_out]


# ------------------------------ JAX glue ops ---------------------------------

def conv1d_lrelu(x, w_pad, b_pad, *, k, stride, n_out, alpha=0.01):
    """Conv1d (no padding) + LeakyReLU, channels-last.  x: (B, L, C_in)."""
    B, L, c_in = x.shape
    L_out = (L - k) // stride + 1
    span = stride * (L_out - 1) + 1
    xb = x.astype(jnp.bfloat16)  # cast once; MXU operands are bf16 anyway
    # im2col as k static strided slices concatenated on the channel (lane) axis:
    # patches[..., t*C_in + c] = x[b, l*stride + t, c]   (lane-dense, no gather)
    taps = [xb[:, t:t + span:stride, :] for t in range(k)]
    patches = jnp.concatenate(taps, axis=-1).reshape(B * L_out, k * c_in)
    y = pallas_linear(patches, w_pad, b_pad, n_out, alpha=alpha, apply_act=True)
    return y.reshape(B, L_out, n_out)
# TODO(synk): move im2col inside the GEMM kernel (sum of k sublane-shifted
# matmuls) to avoid the k-fold activation duplication in HBM.


def batchnorm_train(x, gamma, beta, axes, eps=1e-5):
    # Training-mode BatchNorm (batch statistics, biased variance), like PyTorch.
    mean = jnp.mean(x, axis=axes, keepdims=True)
    var = jnp.mean(jnp.square(x - mean), axis=axes, keepdims=True)
    return (x - mean) * jax.lax.rsqrt(var + eps) * gamma + beta


def maxpool1d_2(x):
    # MaxPool1d(kernel=2), channels-last (B, L, C): lane-dense pairwise max.
    B, L, C = x.shape
    L2 = L // 2
    return jnp.max(x[:, : L2 * 2, :].reshape(B, L2, 2, C), axis=2)
# TODO(synk): per-block BN (batch stats) + MaxPool could be fused into the GEMM
# epilogue with per-tile partial sums + a tiny follow-up kernel; kept as XLA
# glue here because the stats reduce across output tiles.


# ------------------------------ model definition -----------------------------

# (C_in, C_out, kernel, stride) for the 6 ConvBlocks of Video1DCNN (static config,
# deliberately NOT part of the traced params pytree).
_BLOCK_CFG = [
    (45, 128, 5, 2),
    (128, 256, 5, 1),
    (256, 512, 3, 1),
    (512, 512, 3, 1),
    (512, 512, 3, 1),
    (512, 512, 3, 1),
]


def _pack_weight(w_mat, b, K, N):
    """Pad a (K, N) weight to (Kp, Np) bf16 and bias to (1, Np) f32 — once, at init."""
    Kp, Np = _pad_kn(K, N)
    w_pad = jnp.zeros((Kp, Np), jnp.bfloat16).at[:K, :N].set(w_mat.astype(jnp.bfloat16))
    b_pad = jnp.zeros((1, Np), jnp.float32).at[0, :N].set(b)
    return w_pad, b_pad


def init_params(key):
    params = {"conv": [], "bn": []}
    for (cin, cout, k, stride) in _BLOCK_CFG:
        key, wk, bk = jax.random.split(key, 3)
        bound = 1.0 / (cin * k) ** 0.5
        w = jax.random.uniform(wk, (cout, cin, k), jnp.float32, -bound, bound)
        b = jax.random.uniform(bk, (cout,), jnp.float32, -bound, bound)
        # (C_out, C_in, k) -> (k*C_in, C_out): matches channels-last im2col ordering.
        w_mat = w.transpose(2, 1, 0).reshape(k * cin, cout)
        w_pad, b_pad = _pack_weight(w_mat, b, k * cin, cout)
        params["conv"].append(dict(w=w_pad, b=b_pad))
        params["bn"].append((jnp.ones((1, 1, cout), jnp.float32),
                             jnp.zeros((1, 1, cout), jnp.float32)))

    key, w1k, b1k, w2k, b2k = jax.random.split(key, 5)
    bound1 = 1.0 / 512 ** 0.5
    w1 = jax.random.uniform(w1k, (512, 128), jnp.float32, -bound1, bound1)
    b1 = jax.random.uniform(b1k, (128,), jnp.float32, -bound1, bound1)
    w1_pad, b1_pad = _pack_weight(w1, b1, 512, 128)
    params["fc1"] = dict(w=w1_pad, b=b1_pad)

    bound2 = 1.0 / 128 ** 0.5
    w2 = jax.random.uniform(w2k, (128, 9), jnp.float32, -bound2, bound2)
    b2 = jax.random.uniform(b2k, (9,), jnp.float32, -bound2, bound2)
    w2_pad, b2_pad = _pack_weight(w2, b2, 128, 9)
    params["fc2"] = dict(w=w2_pad, b=b2_pad)

    params["norm2"] = (jnp.ones((1, 128), jnp.float32), jnp.zeros((1, 128), jnp.float32))
    return params


def video_1dcnn_forward(params, x_ncl, batch_size):
    # One-time layout change: PyTorch NCL (B, C, L) -> channels-last (B, L, C).
    out = jnp.transpose(x_ncl, (0, 2, 1))
    for (cin, cout, k, stride), conv_p, (gamma, beta) in zip(
            _BLOCK_CFG, params["conv"], params["bn"]):
        out = conv1d_lrelu(out, conv_p["w"], conv_p["b"],
                           k=k, stride=stride, n_out=cout, alpha=0.01)  # Conv1d + LeakyReLU
        out = batchnorm_train(out, gamma, beta, axes=(0, 1))            # BatchNorm1d (batch stats)
        out = maxpool1d_2(out)                                          # MaxPool1d(2)
    # Final spatial length is 1, so (B, 1, 512) flattens identically to torch's NCL view.
    out = out.reshape(batch_size, -1)
    # fc1 + LeakyReLU + BatchNorm1d(128) + fc2 fused in one Pallas kernel.
    out = pallas_fc_tail(out, params["fc1"], params["norm2"], params["fc2"], n_out=9)
    return out


if __name__ == "__main__":
    # Smallest input consistent with the module: the 6-block stack forces the
    # final spatial length to be 1 (flatten -> 512 features), requiring L_in=388.
    B = 2
    C_IN = 45
    L_IN = 388

    key = jax.random.PRNGKey(0)
    key, xk = jax.random.split(key)
    x = jax.random.normal(xk, (B, C_IN, L_IN), dtype=jnp.float32)
    params = init_params(key)

    fwd = jax.jit(lambda p, inp: video_1dcnn_forward(p, inp, B))
    out = jax.block_until_ready(fwd(params, x))

    assert out.shape == (B, 9), out.shape
    assert bool(jnp.all(jnp.isfinite(out)))
    print("KERNEL_OK")
</pallas_src>

<mosaic_0001>
module attributes {stable_mosaic.version = 11 : i64} {
  func.func @_gemm_bias_act_kernel(%arg0: i32, %arg1: i32, %arg2: memref<256x256xbf16, #tpu.memory_space<vmem>>, %arg3: memref<256x128xbf16, #tpu.memory_space<vmem>>, %arg4: memref<1x128xf32, #tpu.memory_space<vmem>>, %arg5: memref<256x128xf32, #tpu.memory_space<vmem>>) attributes {dimension_semantics = [#tpu.dimension_semantics<parallel>, #tpu.dimension_semantics<parallel>], iteration_bounds = array<i64: 2, 1>, scalar_prefetch = 0 : i64, scratch_operands = 0 : i64, tpu.core_type = #tpu.core_type<tc>, window_params = [{transform_indices = @transform_0, window_bounds = array<i64: 256, 256>}, {transform_indices = @transform_1, window_bounds = array<i64: 256, 128>}, {transform_indices = @transform_2, window_bounds = array<i64: 1, 128>}, {transform_indices = @transform_3, window_bounds = array<i64: 256, 128>}]} {
    %c0 = arith.constant 0 : index
    %c0_0 = arith.constant 0 : index
    %0 = vector.load %arg2[%c0, %c0_0] : memref<256x256xbf16, #tpu.memory_space<vmem>>, vector<256x256xbf16>
    %c0_1 = arith.constant 0 : index
    %c0_2 = arith.constant 0 : index
    %1 = vector.load %arg3[%c0_1, %c0_2] : memref<256x128xbf16, #tpu.memory_space<vmem>>, vector<256x128xbf16>
    %cst = arith.constant dense<0.000000e+00> : vector<256x128xf32>
    %2 = tpu.matmul %0, %1, %cst {dimension_numbers = #tpu.dot_dimension_numbers<[1], [0], [0], [1], [0, 0, 1, 1], [], []>} : vector<256x256xbf16>, vector<256x128xbf16>, vector<256x128xf32> -> vector<256x128xf32>
    %c0_3 = arith.constant 0 : index
    %c0_4 = arith.constant 0 : index
    %3 = vector.load %arg4[%c0_3, %c0_4] : memref<1x128xf32, #tpu.memory_space<vmem>>, vector<1x128xf32>
    %4 = vector.broadcast %3 : vector<1x128xf32> to vector<256x128xf32>
    %5 = arith.addf %2, %4 : vector<256x128xf32>
    %cst_5 = arith.constant 0.000000e+00 : f32
    %6 = vector.broadcast %cst_5 : f32 to vector<256x128xf32>
    %7 = arith.cmpf oge, %5, %6 : vector<256x128xf32>
    %cst_6 = arith.constant 0.00999999977 : f32
    %8 = vector.broadcast %cst_6 : f32 to vector<256x128xf32>
    %9 = arith.mulf %8, %5 : vector<256x128xf32>
    %10 = arith.select %7, %5, %9 : vector<256x128xi1>, vector<256x128xf32>
    %c0_7 = arith.constant 0 : index
    %c0_8 = arith.constant 0 : index
    %11 = vector.load %arg5[%c0_7, %c0_8] : memref<256x128xf32, #tpu.memory_space<vmem>>, vector<256x128xf32>
    tpu.vector_store %arg5[%c0_7, %c0_8], %10 {strides = array<i32>} : memref<256x128xf32, #tpu.memory_space<vmem>>, vector<256x128xf32>,
    return
  }
  func.func @transform_0(%arg0: i32, %arg1: i32) -> (i32, i32) {
    %c0_i32 = arith.constant 0 : i32
    %c0_i32_0 = arith.constant 0 : i32
    return %arg0, %c0_i32 : i32, i32
  }
  func.func @transform_1(%arg0: i32, %arg1: i32) -> (i32, i32) {
    %c0_i32 = arith.constant 0 : i32
    %c0_i32_0 = arith.constant 0 : i32
    return %c0_i32, %arg1 : i32, i32
  }
  func.func @transform_2(%arg0: i32, %arg1: i32) -> (i32, i32) {
    %c0_i32 = arith.constant 0 : i32
    %c0_i32_0 = arith.constant 0 : i32
    return %c0_i32, %arg1 : i32, i32
  }
  func.func @transform_3(%arg0: i32, %arg1: i32) -> (i32, i32) {
    %c0_i32 = arith.constant 0 : i32
    return %arg0, %arg1 : i32, i32
  }
}

module attributes {stable_mosaic.version = 11 : i64} {
  func.func @_gemm_bias_act_kernel(%arg0: i32, %arg1: i32, %arg2: memref<192x640xbf16, #tpu.memory_space<vmem>>, %arg3: memref<640x256xbf16, #tpu.memory_space<vmem>>, %arg4: memref<1x256xf32, #tpu.memory_space<vmem>>, %arg5: memref<192x256xf32, #tpu.memory_space<vmem>>) attributes {dimension_semantics = [#tpu.dimension_semantics<parallel>, #tpu.dimension_semantics<parallel>], iteration_bounds = array<i64: 1, 1>, scalar_prefetch = 0 : i64, scratch_operands = 0 : i64, tpu.core_type = #tpu.core_type<tc>, window_params = [{transform_indices = @transform_0, window_bounds = array<i64: 192, 640>}, {transform_indices = @transform_1, window_bounds = array<i64: 640, 256>}, {transform_indices = @transform_2, window_bounds = array<i64: 1, 256>}, {transform_indices = @transform_3, window_bounds = array<i64: 192, 256>}]} {
    %c0 = arith.constant 0 : index
    %c0_0 = arith.constant 0 : index
    %0 = vector.load %arg2[%c0, %c0_0] : memref<192x640xbf16, #tpu.memory_space<vmem>>, vector<192x640xbf16>
    %c0_1 = arith.constant 0 : index
    %c0_2 = arith.constant 0 : index
    %1 = vector.load %arg3[%c0_1, %c0_2] : memref<640x256xbf16, #tpu.memory_space<vmem>>, vector<640x256xbf16>
    %cst = arith.constant dense<0.000000e+00> : vector<192x256xf32>
    %2 = tpu.matmul %0, %1, %cst {dimension_numbers = #tpu.dot_dimension_numbers<[1], [0], [0], [1], [0, 0, 1, 1], [], []>} : vector<192x640xbf16>, vector<640x256xbf16>, vector<192x256xf32> -> vector<192x256xf32>
    %c0_3 = arith.constant 0 : index
    %c0_4 = arith.constant 0 : index
    %3 = vector.load %arg4[%c0_3, %c0_4] : memref<1x256xf32, #tpu.memory_space<vmem>>, vector<1x256xf32>
    %4 = vector.broadcast %3 : vector<1x256xf32> to vector<192x256xf32>
    %5 = arith.addf %2, %4 : vector<192x256xf32>
    %cst_5 = arith.constant 0.000000e+00 : f32
    %6 = vector.broadcast %cst_5 : f32 to vector<192x256xf32>
    %7 = arith.cmpf oge, %5, %6 : vector<192x256xf32>
    %cst_6 = arith.constant 0.00999999977 : f32
    %8 = vector.broadcast %cst_6 : f32 to vector<192x256xf32>
    %9 = arith.mulf %8, %5 : vector<192x256xf32>
    %10 = arith.select %7, %5, %9 : vector<192x256xi1>, vector<192x256xf32>
    %c0_7 = arith.constant 0 : index
    %c0_8 = arith.constant 0 : index
    %11 = vector.load %arg5[%c0_7, %c0_8] : memref<192x256xf32, #tpu.memory_space<vmem>>, vector<192x256xf32>
    tpu.vector_store %arg5[%c0_7, %c0_8], %10 {strides = array<i32>} : memref<192x256xf32, #tpu.memory_space<vmem>>, vector<192x256xf32>,
    return
  }
  func.func @transform_0(%arg0: i32, %arg1: i32) -> (i32, i32) {
    %c0_i32 = arith.constant 0 : i32
    %c0_i32_0 = arith.constant 0 : i32
    return %arg0, %c0_i32 : i32, i32
  }
  func.func @transform_1(%arg0: i32, %arg1: i32) -> (i32, i32) {
    %c0_i32 = arith.constant 0 : i32
    %c0_i32_0 = arith.constant 0 : i32
    return %c0_i32, %arg1 : i32, i32
  }
  func.func @transform_2(%arg0: i32, %arg1: i32) -> (i32, i32) {
    %c0_i32 = arith.constant 0 : i32
    %c0_i32_0 = arith.constant 0 : i32
    return %c0_i32, %arg1 : i32, i32
  }
  func.func @transform_3(%arg0: i32, %arg1: i32) -> (i32, i32) {
    %c0_i32 = arith.constant 0 : i32
    return %arg0, %arg1 : i32, i32
  }
}

module attributes {stable_mosaic.version = 11 : i64} {
  func.func @_gemm_bias_act_kernel(%arg0: i32, %arg1: i32, %arg2: memref<96x768xbf16, #tpu.memory_space<vmem>>, %arg3: memref<768x256xbf16, #tpu.memory_space<vmem>>, %arg4: memref<1x256xf32, #tpu.memory_space<vmem>>, %arg5: memref<96x256xf32, #tpu.memory_space<vmem>>) attributes {dimension_semantics = [#tpu.dimension_semantics<parallel>, #tpu.dimension_semantics<parallel>], iteration_bounds = array<i64: 1, 2>, scalar_prefetch = 0 : i64, scratch_operands = 0 : i64, tpu.core_type = #tpu.core_type<tc>, window_params = [{transform_indices = @transform_0, window_bounds = array<i64: 96, 768>}, {transform_indices = @transform_1, window_bounds = array<i64: 768, 256>}, {transform_indices = @transform_2, window_bounds = array<i64: 1, 256>}, {transform_indices = @transform_3, window_bounds = array<i64: 96, 256>}]} {
    %c0 = arith.constant 0 : index
    %c0_0 = arith.constant 0 : index
    %0 = vector.load %arg2[%c0, %c0_0] : memref<96x768xbf16, #tpu.memory_space<vmem>>, vector<96x768xbf16>
    %c0_1 = arith.constant 0 : index
    %c0_2 = arith.constant 0 : index
    %1 = vector.load %arg3[%c0_1, %c0_2] : memref<768x256xbf16, #tpu.memory_space<vmem>>, vector<768x256xbf16>
    %cst = arith.constant dense<0.000000e+00> : vector<96x256xf32>
    %2 = tpu.matmul %0, %1, %cst {dimension_numbers = #tpu.dot_dimension_numbers<[1], [0], [0], [1], [0, 0, 1, 1], [], []>} : vector<96x768xbf16>, vector<768x256xbf16>, vector<96x256xf32> -> vector<96x256xf32>
    %c0_3 = arith.constant 0 : index
    %c0_4 = arith.constant 0 : index
    %3 = vector.load %arg4[%c0_3, %c0_4] : memref<1x256xf32, #tpu.memory_space<vmem>>, vector<1x256xf32>
    %4 = vector.broadcast %3 : vector<1x256xf32> to vector<96x256xf32>
    %5 = arith.addf %2, %4 : vector<96x256xf32>
    %cst_5 = arith.constant 0.000000e+00 : f32
    %6 = vector.broadcast %cst_5 : f32 to vector<96x256xf32>
    %7 = arith.cmpf oge, %5, %6 : vector<96x256xf32>
    %cst_6 = arith.constant 0.00999999977 : f32
    %8 = vector.broadcast %cst_6 : f32 to vector<96x256xf32>
    %9 = arith.mulf %8, %5 : vector<96x256xf32>
    %10 = arith.select %7, %5, %9 : vector<96x256xi1>, vector<96x256xf32>
    %c0_7 = arith.constant 0 : index
    %c0_8 = arith.constant 0 : index
    %11 = vector.load %arg5[%c0_7, %c0_8] : memref<96x256xf32, #tpu.memory_space<vmem>>, vector<96x256xf32>
    tpu.vector_store %arg5[%c0_7, %c0_8], %10 {strides = array<i32>} : memref<96x256xf32, #tpu.memory_space<vmem>>, vector<96x256xf32>,
    return
  }
  func.func @transform_0(%arg0: i32, %arg1: i32) -> (i32, i32) {
    %c0_i32 = arith.constant 0 : i32
    %c0_i32_0 = arith.constant 0 : i32
    return %arg0, %c0_i32 : i32, i32
  }
  func.func @transform_1(%arg0: i32, %arg1: i32) -> (i32, i32) {
    %c0_i32 = arith.constant 0 : i32
    %c0_i32_0 = arith.constant 0 : i32
    return %c0_i32, %arg1 : i32, i32
  }
  func.func @transform_2(%arg0: i32, %arg1: i32) -> (i32, i32) {
    %c0_i32 = arith.constant 0 : i32
    %c0_i32_0 = arith.constant 0 : i32
    return %c0_i32, %arg1 : i32, i32
  }
  func.func @transform_3(%arg0: i32, %arg1: i32) -> (i32, i32) {
    %c0_i32 = arith.constant 0 : i32
    return %arg0, %arg1 : i32, i32
  }
}

module attributes {stable_mosaic.version = 11 : i64} {
  func.func @_gemm_bias_act_kernel(%arg0: i32, %arg1: i32, %arg2: memref<48x1536xbf16, #tpu.memory_space<vmem>>, %arg3: memref<1536x256xbf16, #tpu.memory_space<vmem>>, %arg4: memref<1x256xf32, #tpu.memory_space<vmem>>, %arg5: memref<48x256xf32, #tpu.memory_space<vmem>>) attributes {dimension_semantics = [#tpu.dimension_semantics<parallel>, #tpu.dimension_semantics<parallel>], iteration_bounds = array<i64: 1, 2>, scalar_prefetch = 0 : i64, scratch_operands = 0 : i64, tpu.core_type = #tpu.core_type<tc>, window_params = [{transform_indices = @transform_0, window_bounds = array<i64: 48, 1536>}, {transform_indices = @transform_1, window_bounds = array<i64: 1536, 256>}, {transform_indices = @transform_2, window_bounds = array<i64: 1, 256>}, {transform_indices = @transform_3, window_bounds = array<i64: 48, 256>}]} {
    %c0 = arith.constant 0 : index
    %c0_0 = arith.constant 0 : index
    %0 = vector.load %arg2[%c0, %c0_0] : memref<48x1536xbf16, #tpu.memory_space<vmem>>, vector<48x1536xbf16>
    %c0_1 = arith.constant 0 : index
    %c0_2 = arith.constant 0 : index
    %1 = vector.load %arg3[%c0_1, %c0_2] : memref<1536x256xbf16, #tpu.memory_space<vmem>>, vector<1536x256xbf16>
    %cst = arith.constant dense<0.000000e+00> : vector<48x256xf32>
    %2 = tpu.matmul %0, %1, %cst {dimension_numbers = #tpu.dot_dimension_numbers<[1], [0], [0], [1], [0, 0, 1, 1], [], []>} : vector<48x1536xbf16>, vector<1536x256xbf16>, vector<48x256xf32> -> vector<48x256xf32>
    %c0_3 = arith.constant 0 : index
    %c0_4 = arith.constant 0 : index
    %3 = vector.load %arg4[%c0_3, %c0_4] : memref<1x256xf32, #tpu.memory_space<vmem>>, vector<1x256xf32>
    %4 = vector.broadcast %3 : vector<1x256xf32> to vector<48x256xf32>
    %5 = arith.addf %2, %4 : vector<48x256xf32>
    %cst_5 = arith.constant 0.000000e+00 : f32
    %6 = vector.broadcast %cst_5 : f32 to vector<48x256xf32>
    %7 = arith.cmpf oge, %5, %6 : vector<48x256xf32>
    %cst_6 = arith.constant 0.00999999977 : f32
    %8 = vector.broadcast %cst_6 : f32 to vector<48x256xf32>
    %9 = arith.mulf %8, %5 : vector<48x256xf32>
    %10 = arith.select %7, %5, %9 : vector<48x256xi1>, vector<48x256xf32>
    %c0_7 = arith.constant 0 : index
    %c0_8 = arith.constant 0 : index
    %11 = vector.load %arg5[%c0_7, %c0_8] : memref<48x256xf32, #tpu.memory_space<vmem>>, vector<48x256xf32>
    tpu.vector_store %arg5[%c0_7, %c0_8], %10 {strides = array<i32>} : memref<48x256xf32, #tpu.memory_space<vmem>>, vector<48x256xf32>,
    return
  }
  func.func @transform_0(%arg0: i32, %arg1: i32) -> (i32, i32) {
    %c0_i32 = arith.constant 0 : i32
    %c0_i32_0 = arith.constant 0 : i32
    return %arg0, %c0_i32 : i32, i32
  }
  func.func @transform_1(%arg0: i32, %arg1: i32) -> (i32, i32) {
    %c0_i32 = arith.constant 0 : i32
    %c0_i32_0 = arith.constant 0 : i32
    return %c0_i32, %arg1 : i32, i32
  }
  func.func @transform_2(%arg0: i32, %arg1: i32) -> (i32, i32) {
    %c0_i32 = arith.constant 0 : i32
    %c0_i32_0 = arith.constant 0 : i32
    return %c0_i32, %arg1 : i32, i32
  }
  func.func @transform_3(%arg0: i32, %arg1: i32) -> (i32, i32) {
    %c0_i32 = arith.constant 0 : i32
    return %arg0, %arg1 : i32, i32
  }
}

module attributes {stable_mosaic.version = 11 : i64} {
  func.func @_gemm_bias_act_kernel(%arg0: i32, %arg1: i32, %arg2: memref<16x1536xbf16, #tpu.memory_space<vmem>>, %arg3: memref<1536x256xbf16, #tpu.memory_space<vmem>>, %arg4: memref<1x256xf32, #tpu.memory_space<vmem>>, %arg5: memref<16x256xf32, #tpu.memory_space<vmem>>) attributes {dimension_semantics = [#tpu.dimension_semantics<parallel>, #tpu.dimension_semantics<parallel>], iteration_bounds = array<i64: 1, 2>, scalar_prefetch = 0 : i64, scratch_operands = 0 : i64, tpu.core_type = #tpu.core_type<tc>, window_params = [{transform_indices = @transform_0, window_bounds = array<i64: 16, 1536>}, {transform_indices = @transform_1, window_bounds = array<i64: 1536, 256>}, {transform_indices = @transform_2, window_bounds = array<i64: 1, 256>}, {transform_indices = @transform_3, window_bounds = array<i64: 16, 256>}]} {
    %c0 = arith.constant 0 : index
    %c0_0 = arith.constant 0 : index
    %0 = vector.load %arg2[%c0, %c0_0] : memref<16x1536xbf16, #tpu.memory_space<vmem>>, vector<16x1536xbf16>
    %c0_1 = arith.constant 0 : index
    %c0_2 = arith.constant 0 : index
    %1 = vector.load %arg3[%c0_1, %c0_2] : memref<1536x256xbf16, #tpu.memory_space<vmem>>, vector<1536x256xbf16>
    %cst = arith.constant dense<0.000000e+00> : vector<16x256xf32>
    %2 = tpu.matmul %0, %1, %cst {dimension_numbers = #tpu.dot_dimension_numbers<[1], [0], [0], [1], [0, 0, 1, 1], [], []>} : vector<16x1536xbf16>, vector<1536x256xbf16>, vector<16x256xf32> -> vector<16x256xf32>
    %c0_3 = arith.constant 0 : index
    %c0_4 = arith.constant 0 : index
    %3 = vector.load %arg4[%c0_3, %c0_4] : memref<1x256xf32, #tpu.memory_space<vmem>>, vector<1x256xf32>
    %4 = vector.broadcast %3 : vector<1x256xf32> to vector<16x256xf32>
    %5 = arith.addf %2, %4 : vector<16x256xf32>
    %cst_5 = arith.constant 0.000000e+00 : f32
    %6 = vector.broadcast %cst_5 : f32 to vector<16x256xf32>
    %7 = arith.cmpf oge, %5, %6 : vector<16x256xf32>
    %cst_6 = arith.constant 0.00999999977 : f32
    %8 = vector.broadcast %cst_6 : f32 to vector<16x256xf32>
    %9 = arith.mulf %8, %5 : vector<16x256xf32>
    %10 = arith.select %7, %5, %9 : vector<16x256xi1>, vector<16x256xf32>
    %c0_7 = arith.constant 0 : index
    %c0_8 = arith.constant 0 : index
    %11 = vector.load %arg5[%c0_7, %c0_8] : memref<16x256xf32, #tpu.memory_space<vmem>>, vector<16x256xf32>
    tpu.vector_store %arg5[%c0_7, %c0_8], %10 {strides = array<i32>} : memref<16x256xf32, #tpu.memory_space<vmem>>, vector<16x256xf32>,
    return
  }
  func.func @transform_0(%arg0: i32, %arg1: i32) -> (i32, i32) {
    %c0_i32 = arith.constant 0 : i32
    %c0_i32_0 = arith.constant 0 : i32
    return %arg0, %c0_i32 : i32, i32
  }
  func.func @transform_1(%arg0: i32, %arg1: i32) -> (i32, i32) {
    %c0_i32 = arith.constant 0 : i32
    %c0_i32_0 = arith.constant 0 : i32
    return %c0_i32, %arg1 : i32, i32
  }
  func.func @transform_2(%arg0: i32, %arg1: i32) -> (i32, i32) {
    %c0_i32 = arith.constant 0 : i32
    %c0_i32_0 = arith.constant 0 : i32
    return %c0_i32, %arg1 : i32, i32
  }
  func.func @transform_3(%arg0: i32, %arg1: i32) -> (i32, i32) {
    %c0_i32 = arith.constant 0 : i32
    return %arg0, %arg1 : i32, i32
  }
}

module attributes {stable_mosaic.version = 11 : i64} {
  func.func @_fc_tail_kernel(%arg0: i32, %arg1: memref<16x512xbf16, #tpu.memory_space<vmem>>, %arg2: memref<512x128xbf16, #tpu.memory_space<vmem>>, %arg3: memref<1x128xf32, #tpu.memory_space<vmem>>, %arg4: memref<1x128xf32, #tpu.memory_space<vmem>>, %arg5: memref<1x128xf32, #tpu.memory_space<vmem>>, %arg6: memref<128x128xbf16, #tpu.memory_space<vmem>>, %arg7: memref<1x128xf32, #tpu.memory_space<vmem>>, %arg8: memref<16x128xf32, #tpu.memory_space<vmem>>) attributes {dimension_semantics = [#tpu.dimension_semantics<arbitrary>], iteration_bounds = array<i64: 1>, scalar_prefetch = 0 : i64, scratch_operands = 0 : i64, tpu.core_type = #tpu.core_type<tc>, window_params = [{pipeline_mode = #tpu.pipeline_mode<synchronous>, transform_indices = @transform_0, window_bounds = array<i64: 16, 512>}, {pipeline_mode = #tpu.pipeline_mode<synchronous>, transform_indices = @transform_1, window_bounds = array<i64: 512, 128>}, {pipeline_mode = #tpu.pipeline_mode<synchronous>, transform_indices = @transform_2, window_bounds = array<i64: 1, 128>}, {pipeline_mode = #tpu.pipeline_mode<synchronous>, transform_indices = @transform_3, window_bounds = array<i64: 1, 128>}, {pipeline_mode = #tpu.pipeline_mode<synchronous>, transform_indices = @transform_4, window_bounds = array<i64: 1, 128>}, {pipeline_mode = #tpu.pipeline_mode<synchronous>, transform_indices = @transform_5, window_bounds = array<i64: 128, 128>}, {pipeline_mode = #tpu.pipeline_mode<synchronous>, transform_indices = @transform_6, window_bounds = array<i64: 1, 128>}, {pipeline_mode = #tpu.pipeline_mode<synchronous>, transform_indices = @transform_7, window_bounds = array<i64: 16, 128>}]} {
    %c0 = arith.constant 0 : index
    %c0_0 = arith.constant 0 : index
    %0 = vector.load %arg1[%c0, %c0_0] : memref<16x512xbf16, #tpu.memory_space<vmem>>, vector<16x512xbf16>
    %c0_1 = arith.constant 0 : index
    %c0_2 = arith.constant 0 : index
    %1 = vector.load %arg2[%c0_1, %c0_2] : memref<512x128xbf16, #tpu.memory_space<vmem>>, vector<512x128xbf16>
    %cst = arith.constant dense<0.000000e+00> : vector<16x128xf32>
    %2 = tpu.matmul %0, %1, %cst {dimension_numbers = #tpu.dot_dimension_numbers<[1], [0], [0], [1], [0, 0, 1, 1], [], []>} : vector<16x512xbf16>, vector<512x128xbf16>, vector<16x128xf32> -> vector<16x128xf32>
    %c0_3 = arith.constant 0 : index
    %c0_4 = arith.constant 0 : index
    %3 = vector.load %arg3[%c0_3, %c0_4] : memref<1x128xf32, #tpu.memory_space<vmem>>, vector<1x128xf32>
    %4 = vector.broadcast %3 : vector<1x128xf32> to vector<16x128xf32>
    %5 = arith.addf %2, %4 : vector<16x128xf32>
    %cst_5 = arith.constant 0.000000e+00 : f32
    %6 = vector.broadcast %cst_5 : f32 to vector<16x128xf32>
    %7 = arith.cmpf oge, %5, %6 : vector<16x128xf32>
    %cst_6 = arith.constant 0.00999999977 : f32
    %8 = vector.broadcast %cst_6 : f32 to vector<16x128xf32>
    %9 = arith.mulf %8, %5 : vector<16x128xf32>
    %10 = arith.select %7, %5, %9 : vector<16x128xi1>, vector<16x128xf32>
    %11 = tpu.iota {dimensions = array<i32: 0>} : vector<16x128xi32>
    %c2_i32 = arith.constant 2 : i32
    %12 = vector.broadcast %c2_i32 : i32 to vector<16x128xi32>
    %13 = arith.cmpi slt, %11, %12 : vector<16x128xi32>
    %14 = arith.extui %13 : vector<16x128xi1> to vector<16x128xi32>
    %15 = arith.sitofp %14 : vector<16x128xi32> to vector<16x128xf32>
    %16 = arith.mulf %10, %15 : vector<16x128xf32>
    %cst_7 = arith.constant dense<0.000000e+00> : vector<128xf32>
    %17 = vector.multi_reduction <add>, %16, %cst_7 [0] : vector<16x128xf32> to vector<128xf32>
    %18 = vector.shape_cast %17 : vector<128xf32> to vector<1x128xf32>
    %cst_8 = arith.constant 5.000000e-01 : f32
    %19 = vector.broadcast %cst_8 : f32 to vector<1x128xf32>
    %20 = arith.mulf %18, %19 : vector<1x128xf32>
    %21 = vector.broadcast %20 : vector<1x128xf32> to vector<16x128xf32>
    %22 = arith.subf %10, %21 : vector<16x128xf32>
    %23 = arith.mulf %22, %15 : vector<16x128xf32>
    %24 = arith.mulf %23, %23 : vector<16x128xf32>
    %cst_9 = arith.constant dense<0.000000e+00> : vector<128xf32>
    %25 = vector.multi_reduction <add>, %24, %cst_9 [0] : vector<16x128xf32> to vector<128xf32>
    %26 = vector.shape_cast %25 : vector<128xf32> to vector<1x128xf32>
    %cst_10 = arith.constant 5.000000e-01 : f32
    %27 = vector.broadcast %cst_10 : f32 to vector<1x128xf32>
    %28 = arith.mulf %26, %27 : vector<1x128xf32>
    %29 = vector.broadcast %20 : vector<1x128xf32> to vector<16x128xf32>
    %30 = arith.subf %10, %29 : vector<16x128xf32>
    %cst_11 = arith.constant 9.99999974E-6 : f32
    %31 = vector.broadcast %cst_11 : f32 to vector<1x128xf32>
    %32 = arith.addf %28, %31 : vector<1x128xf32>
    %33 = math.rsqrt %32 : vector<1x128xf32>
    %34 = vector.broadcast %33 : vector<1x128xf32> to vector<16x128xf32>
    %35 = arith.mulf %30, %34 : vector<16x128xf32>
    %c0_12 = arith.constant 0 : index
    %c0_13 = arith.constant 0 : index
    %36 = vector.load %arg4[%c0_12, %c0_13] : memref<1x128xf32, #tpu.memory_space<vmem>>, vector<1x128xf32>
    %37 = vector.broadcast %36 : vector<1x128xf32> to vector<16x128xf32>
    %38 = arith.mulf %35, %37 : vector<16x128xf32>
    %c0_14 = arith.constant 0 : index
    %c0_15 = arith.constant 0 : index
    %39 = vector.load %arg5[%c0_14, %c0_15] : memref<1x128xf32, #tpu.memory_space<vmem>>, vector<1x128xf32>
    %40 = vector.broadcast %39 : vector<1x128xf32> to vector<16x128xf32>
    %41 = arith.addf %38, %40 : vector<16x128xf32>
    %42 = arith.truncf %41 : vector<16x128xf32> to vector<16x128xbf16>
    %c0_16 = arith.constant 0 : index
    %c0_17 = arith.constant 0 : index
    %43 = vector.load %arg6[%c0_16, %c0_17] : memref<128x128xbf16, #tpu.memory_space<vmem>>, vector<128x128xbf16>
    %cst_18 = arith.constant dense<0.000000e+00> : vector<16x128xf32>
    %44 = tpu.matmul %42, %43, %cst_18 {dimension_numbers = #tpu.dot_dimension_numbers<[1], [0], [0], [1], [0, 0, 1, 1], [], []>} : vector<16x128xbf16>, vector<128x128xbf16>, vector<16x128xf32> -> vector<16x128xf32>
    %c0_19 = arith.constant 0 : index
    %c0_20 = arith.constant 0 : index
    %45 = vector.load %arg7[%c0_19, %c0_20] : memref<1x128xf32, #tpu.memory_space<vmem>>, vector<1x128xf32>
    %46 = vector.broadcast %45 : vector<1x128xf32> to vector<16x128xf32>
    %47 = arith.addf %44, %46 : vector<16x128xf32>
    %c0_21 = arith.constant 0 : index
    %c0_22 = arith.constant 0 : index
    %48 = vector.load %arg8[%c0_21, %c0_22] : memref<16x128xf32, #tpu.memory_space<vmem>>, vector<16x128xf32>
    tpu.vector_store %arg8[%c0_21, %c0_22], %47 {strides = array<i32>} : memref<16x128xf32, #tpu.memory_space<vmem>>, vector<16x128xf32>,
    return
  }
  func.func @transform_0(%arg0: i32) -> (i32, i32) {
    %c0_i32 = arith.constant 0 : i32
    %c0_i32_0 = arith.constant 0 : i32
    %c0_i32_1 = arith.constant 0 : i32
    return %c0_i32, %c0_i32_0 : i32, i32
  }
  func.func @transform_1(%arg0: i32) -> (i32, i32) {
    %c0_i32 = arith.constant 0 : i32
    %c0_i32_0 = arith.constant 0 : i32
    %c0_i32_1 = arith.constant 0 : i32
    return %c0_i32, %c0_i32_0 : i32, i32
  }
  func.func @transform_2(%arg0: i32) -> (i32, i32) {
    %c0_i32 = arith.constant 0 : i32
    %c0_i32_0 = arith.constant 0 : i32
    %c0_i32_1 = arith.constant 0 : i32
    return %c0_i32, %c0_i32_0 : i32, i32
  }
  func.func @transform_3(%arg0: i32) -> (i32, i32) {
    %c0_i32 = arith.constant 0 : i32
    %c0_i32_0 = arith.constant 0 : i32
    %c0_i32_1 = arith.constant 0 : i32
    return %c0_i32, %c0_i32_0 : i32, i32
  }
  func.func @transform_4(%arg0: i32) -> (i32, i32) {
    %c0_i32 = arith.constant 0 : i32
    %c0_i32_0 = arith.constant 0 : i32
    %c0_i32_1 = arith.constant 0 : i32
    return %c0_i32, %c0_i32_0 : i32, i32
  }
  func.func @transform_5(%arg0: i32) -> (i32, i32) {
    %c0_i32 = arith.constant 0 : i32
    %c0_i32_0 = arith.constant 0 : i32
    %c0_i32_1 = arith.constant 0 : i32
    return %c0_i32, %c0_i32_0 : i32, i32
  }
  func.func @transform_6(%arg0: i32) -> (i32, i32) {
    %c0_i32 = arith.constant 0 : i32
    %c0_i32_0 = arith.constant 0 : i32
    %c0_i32_1 = arith.constant 0 : i32
    return %c0_i32, %c0_i32_0 : i32, i32
  }
  func.func @transform_7(%arg0: i32) -> (i32, i32) {
    %c0_i32 = arith.constant 0 : i32
    %c0_i32_0 = arith.constant 0 : i32
    %c0_i32_1 = arith.constant 0 : i32
    return %c0_i32, %c0_i32_0 : i32, i32
  }
}

</mosaic_0001>

<llo_original>
// kernel: _lambda_.7
$region0: #{_lambda_.7}
  #allocation0 [shape = 'u32[]', space=smem, size = 0x4, offset = 0x4, fixed_abs, tag = 'smem constant byte address 0x4 - core index']
  #allocation1 [shape = 'u32[144,128]{1,0:T(1,128)}', space=vmem, size = 0x12000, scoped, tag = 'internal scratch']
  %s0 = inlined_call_operand.vmem [shape: bf16[512,256], index: 0, kind: input, shape index: {}]
  %s1 = inlined_call_operand.vmem [shape: bf16[256,128], index: 1, kind: input, shape index: {}]
  %s2 = inlined_call_operand.vmem [shape: f32[1,128], index: 2, kind: input, shape index: {}]
  %s3 = inlined_call_operand.vmem [shape: f32[512,128], index: 3, kind: output, shape index: {}]
  %s4 = sld [smem:[#allocation0]]
  $region45: #{_lambda_.7} parent=0
    _
  %s6 = ssub.s32 1, %s4
  %s7 = scalar_select 0, %s6, %s4
  loop: start=0, step=1, limit=4
  $region2: #{_lambda_.7} parent=0 // loop_pre_header
    _
  $region3: #{_lambda_.7} parent=0 // loop_header
    %s9 = sphi 0, %s13
    %p10 = scmp.ge.s32.totalorder %s9, 4
    %s16 = sphi 0, %s28
    %s17 = sphi 0, %s24
    %s18 = sphi 0, %s16
    %s19 = sphi 0, %s17
    %s20 = sphi 0, %s18
    %s21 = sphi 0, %s19
    %s31 = sphi 0, %s33
    %s34 = sphi 0, %s31
    %s35 = sphi 0, %s34
    %s51 = sphi 0, %s35
    %s57 = sphi 0, %s59
    %s60 = sphi 0, %s57
    %s61 = sphi 0, %s60
    %s77 = sphi 0, %s61
    %s83 = sphi 0, %s85
    %s86 = sphi 0, %s83
    %s87 = sphi 0, %s86
    %s103 = sphi 0, %s87
    %s111 = sphi 0, %s113
    %s114 = sphi 0, %s111
    %s115 = sphi 0, %s114
    %s131 = sphi 0, %s115
  $region4: #{_lambda_.7} parent=0 // loop_header_branch
    %12 = sbr.rel (%p10) target = $region8
  $region5: #{_lambda_.7} parent=0 // loop_body
    %s14 = ssub.s32 %s9, 1
    %s15 = ssub.s32 %s9, 2
    %s22 = sadd.s32 1, %s17
    %p23 = scmp.ge.s32.totalorder %s22, 1
    %s24 = scalar_select %p23, 0, %s22
    %s25 = sadd.s32 1, %s16
    %s26 = scalar_select %p23, %s25, %s16
    %p27 = scmp.ge.s32.totalorder %s26, 2
    %s28 = scalar_select %p27, 0, %s26
    %s29 = ssub.s32 %s16, %s28
    %p30 = scmp.eq.s32.totalorder %s29, 0
    %s32 = sadd.s32 %s31, 1
    %s33 = scalar_select %p30, %s31, %s32
    %p36 = pneg %p30
    %p37 = scmp.eq.s32.totalorder %s9, 1
    %p38 = por %p36, %p37
    %p39 = scmp.ne.s32.totalorder %s31, %s34
    %p40 = scmp.eq.s32.totalorder %s9, 0
    %p41 = por %p39, %p40
    %p42 = scmp.ne.s32.totalorder %s31, %s34
    %p43 = scmp.eq.s32.totalorder %s14, 1
    %p44 = por %p42, %p43
    %p45 = scmp.ne.s32.totalorder %s34, %s35
    %p46 = scmp.eq.s32.totalorder %s14, 0
    %p47 = por %p45, %p46
    %p48 = scmp.ne.s32.totalorder %s34, %s35
    %p49 = scmp.eq.s32.totalorder %s15, 1
    %p50 = por %p48, %p49
    %p52 = scmp.ne.s32.totalorder %s35, %s51
    %p53 = scmp.eq.s32.totalorder %s15, 0
    %p54 = por %p52, %p53
    %s55 = ssub.s32 %s17, %s24
    %p56 = scmp.eq.s32.totalorder %s55, 0
    %s58 = sadd.s32 %s57, 1
    %s59 = scalar_select %p56, %s57, %s58
    %p62 = pneg %p56
    %p63 = scmp.eq.s32.totalorder %s9, 1
    %p64 = por %p62, %p63
    %p65 = scmp.ne.s32.totalorder %s57, %s60
    %p66 = scmp.eq.s32.totalorder %s9, 0
    %p67 = por %p65, %p66
    %p68 = scmp.ne.s32.totalorder %s57, %s60
    %p69 = scmp.eq.s32.totalorder %s14, 1
    %p70 = por %p68, %p69
    %p71 = scmp.ne.s32.totalorder %s60, %s61
    %p72 = scmp.eq.s32.totalorder %s14, 0
    %p73 = por %p71, %p72
    %p74 = scmp.ne.s32.totalorder %s60, %s61
    %p75 = scmp.eq.s32.totalorder %s15, 1
    %p76 = por %p74, %p75
    %p78 = scmp.ne.s32.totalorder %s61, %s77
    %p79 = scmp.eq.s32.totalorder %s15, 0
    %p80 = por %p78, %p79
    %s81 = ssub.s32 %s17, %s24
    %p82 = scmp.eq.s32.totalorder %s81, 0
    %s84 = sadd.s32 %s83, 1
    %s85 = scalar_select %p82, %s83, %s84
    %p88 = pneg %p82
    %p89 = scmp.eq.s32.totalorder %s9, 1
    %p90 = por %p88, %p89
    %p91 = scmp.ne.s32.totalorder %s83, %s86
    %p92 = scmp.eq.s32.totalorder %s9, 0
    %p93 = por %p91, %p92
    %p94 = scmp.ne.s32.totalorder %s83, %s86
    %p95 = scmp.eq.s32.totalorder %s14, 1
    %p96 = por %p94, %p95
    %p97 = scmp.ne.s32.totalorder %s86, %s87
    %p98 = scmp.eq.s32.totalorder %s14, 0
    %p99 = por %p97, %p98
    %p100 = scmp.ne.s32.totalorder %s86, %s87
    %p101 = scmp.eq.s32.totalorder %s15, 1
    %p102 = por %p100, %p101
    %p104 = scmp.ne.s32.totalorder %s87, %s103
    %p105 = scmp.eq.s32.totalorder %s15, 0
    %p106 = por %p104, %p105
    %s107 = ssub.s32 %s16, %s28
    %s108 = ssub.s32 %s17, %s24
    %s109 = sor.u32 %s107, %s108
    %p110 = scmp.eq.s32.totalorder %s109, 0
    %s112 = sadd.s32 %s111, 1
    %s113 = scalar_select %p110, %s111, %s112
    %p116 = pneg %p110
    %p117 = scmp.eq.s32.totalorder %s9, 1
    %p118 = por %p116, %p117
    %p119 = scmp.ne.s32.totalorder %s111, %s114
    %p120 = scmp.eq.s32.totalorder %s9, 0
    %p121 = por %p119, %p120
    %p122 = scmp.ne.s32.totalorder %s111, %s114
    %p123 = scmp.eq.s32.totalorder %s14, 1
    %p124 = por %p122, %p123
    %p125 = scmp.ne.s32.totalorder %s114, %s115
    %p126 = scmp.eq.s32.totalorder %s14, 0
    %p127 = por %p125, %p126
    %p128 = scmp.ne.s32.totalorder %s114, %s115
    %p129 = scmp.eq.s32.totalorder %s15, 1
    %p130 = por %p128, %p129
    %p132 = scmp.ne.s32.totalorder %s115, %s131
    %p133 = scmp.eq.s32.totalorder %s15, 0
    %p134 = por %p132, %p133
    %p135 = scmp.le.s32.totalorder 1, %s9
    %p136 = scmp.lt.s32.totalorder %s9, 3
    %p137 = pnand %p135, %p136
    %p138 = pneg %p137
    // Predicated region
    $region9: #{_lambda_.7} parent=5 // pred_check
      _
    $region10: #{_lambda_.7} parent=5 // pred_check_branch
      %140 = sbr.rel (%p137) target = $region12
    $region11: #{_lambda_.7} parent=5 // pred_region
      %s141 = ssub.s32 %s9, 1
      // Predicated region
      $region13: #{_lambda_.7} parent=11 // pred_check
        %p142 = pneg %p73
      $region14: #{_lambda_.7} parent=11 // pred_check_branch
        %144 = sbr.rel (%p142) target = $region16
      $region15: #{_lambda_.7} parent=11 // pred_region
        %p145 = scmp.lt.s32.totalorder %s19, 0
        %s146 = scalar_select %p145, %s19, 0
        %s147 = smul.addr %s146, 4
        %s148 = scalar_lea.vmem %s1, %s147
      $region16: #{_lambda_.7} parent=11 // pred_fallthru
        _
      // Predicated region
      $region17: #{_lambda_.7} parent=11 // pred_check
        %p149 = pneg %p99
      $region18: #{_lambda_.7} parent=11 // pred_check_branch
        %151 = sbr.rel (%p149) target = $region20
      $region19: #{_lambda_.7} parent=11 // pred_region
        %p152 = scmp.lt.s32.totalorder %s19, 0
        %s153 = scalar_select %p152, %s19, 0
        %s154 = scalar_lea.vmem %s2, %s153
      $region20: #{_lambda_.7} parent=11 // pred_fallthru
        _
    $region12: #{_lambda_.7} parent=5 // pred_fallthru
      _
    %p155 = scmp.lt.s32.totalorder %s9, 2
    // Predicated region
    $region21: #{_lambda_.7} parent=5 // pred_check
      %p156 = pneg %p155
    $region22: #{_lambda_.7} parent=5 // pred_check_branch
      %158 = sbr.rel (%p156) target = $region24
    $region23: #{_lambda_.7} parent=5 // pred_region
      // Predicated region
      $region25: #{_lambda_.7} parent=23 // pred_check
        %p159 = pneg %p41
      $region26: #{_lambda_.7} parent=23 // pred_check_branch
        %161 = sbr.rel (%p159) target = $region28
      $region27: #{_lambda_.7} parent=23 // pred_region
        %s162 = smul.u32 32, %s16
        %p163 = scmp.lt.s32.totalorder %s162, 63
        %s164 = scalar_select %p163, %s162, 63
        %s165 = smul.addr %s164, 2
        %s166 = smul.addr %s165, 4
        %s167 = scalar_lea.vmem %s0, %s166
        %s168 = smul.u32 32, %s16
      $region28: #{_lambda_.7} parent=23 // pred_fallthru
        _
    $region24: #{_lambda_.7} parent=5 // pred_fallthru
      _
    %p169 = scmp.le.s32.totalorder 1, %s9
    %p170 = scmp.lt.s32.totalorder %s9, 3
    %p171 = pnand %p169, %p170
    %p172 = pneg %p171
    // Predicated region
    $region29: #{_lambda_.7} parent=5 // pred_check
      _
    $region30: #{_lambda_.7} parent=5 // pred_check_branch
      %174 = sbr.rel (%p171) target = $region32
    $region31: #{_lambda_.7} parent=5 // pred_region
      %s175 = ssub.s32 %s9, 1
      %s176 = smul.u32 32, %s18
      %p177 = scmp.lt.s32.totalorder %s176, 63
      %s178 = scalar_select %p177, %s176, 63
      %s179 = smul.addr %s178, 2
      %s180 = smul.addr %s179, 4
      %s181 = scalar_lea.vmem %s0, %s180
      %p182 = pneg %p47
      %p183 = pneg %p44
      %p184 = scmp.lt.s32.totalorder %s19, 0
      %s185 = scalar_select %p184, %s19, 0
      %s186 = smul.addr %s185, 4
      %s187 = scalar_lea.vmem %s1, %s186
      %p188 = pneg %p73
      %p189 = pneg %p70
      %p190 = scmp.lt.s32.totalorder %s19, 0
      %s191 = scalar_select %p190, %s19, 0
      %s192 = scalar_lea.vmem %s2, %s191
      %p193 = pneg %p99
      %p194 = pneg %p96
      %p195 = pneg %p127
      %p196 = pneg %p124
      %s197 = smul.u32 32, %s18
      %p198 = scmp.lt.s32.totalorder %s197, 63
      %s199 = scalar_select %p198, %s197, 63
      %p200 = scmp.lt.s32.totalorder %s19, 0
      %s201 = scalar_select %p200, %s19, 0
      %s202 = sadd.s32 %s201, %s199
      %s203 = smul.addr %s202, 8
      %s204 = scalar_lea.vmem %s3, %s203
      %s205 = smul.u32 32, %s18
      %p206 = scmp.lt.s32.totalorder %s205, 63
      %s207 = scalar_select %p206, %s205, 63
      %s208 = smul.addr %s207, 2
      %s209 = smul.addr %s208, 4
      %s210 = scalar_lea.vmem %s0, %s209
      %s211 = smul.u32 32, %s18
      %p212 = scmp.lt.s32.totalorder %s19, 0
      %s213 = scalar_select %p212, %s19, 0
      %s214 = smul.addr %s213, 4
      %s215 = scalar_lea.vmem %s1, %s214
      %p216 = scmp.lt.s32.totalorder %s19, 0
      %s217 = scalar_select %p216, %s19, 0
      %s218 = scalar_lea.vmem %s2, %s217
      %s219 = smul.u32 32, %s18
      %p220 = scmp.lt.s32.totalorder %s219, 63
      %s221 = scalar_select %p220, %s219, 63
      %p222 = scmp.lt.s32.totalorder %s19, 0
      %s223 = scalar_select %p222, %s19, 0
      %s224 = sadd.s32 %s223, %s221
      %s225 = smul.addr %s224, 8
      %s226 = scalar_lea.vmem %s3, %s225
      %s227 = smul.u32 32, %s18
      %v229 = vld [vmem:[%s210] sm:$0xff]
      %v230 = vld [vmem:[%s210 + $0x8] sm:$0xff]
      %v231 = vld [vmem:[%s210 + $0x10] sm:$0xff]
      %v232 = vld [vmem:[%s210 + $0x18] sm:$0xff]
      %v233 = vld [vmem:[%s210 + $0x20] sm:$0xff]
      %v234 = vld [vmem:[%s210 + $0x28] sm:$0xff]
      %v235 = vld [vmem:[%s210 + $0x30] sm:$0xff]
      %v236 = vld [vmem:[%s210 + $0x38] sm:$0xff]
      %v237 = vld [vmem:[%s210 + $0x40] sm:$0xff]
      %v238 = vld [vmem:[%s210 + $0x48] sm:$0xff]
      %v239 = vld [vmem:[%s210 + $0x50] sm:$0xff]
      %v240 = vld [vmem:[%s210 + $0x58] sm:$0xff]
      %v241 = vld [vmem:[%s210 + $0x60] sm:$0xff]
      %v242 = vld [vmem:[%s210 + $0x68] sm:$0xff]
      %v243 = vld [vmem:[%s210 + $0x70] sm:$0xff]
      %v244 = vld [vmem:[%s210 + $0x78] sm:$0xff]
      %v245 = vld [vmem:[%s210 + $0x80] sm:$0xff]
      %v246 = vld [vmem:[%s210 + $0x88] sm:$0xff]
      %v247 = vld [vmem:[%s210 + $0x90] sm:$0xff]
      %v248 = vld [vmem:[%s210 + $0x98] sm:$0xff]
      %v249 = vld [vmem:[%s210 + $0xa0] sm:$0xff]
      %v250 = vld [vmem:[%s210 + $0xa8] sm:$0xff]
      %v251 = vld [vmem:[%s210 + $0xb0] sm:$0xff]
      %v252 = vld [vmem:[%s210 + $0xb8] sm:$0xff]
      %v253 = vld [vmem:[%s210 + $0xc0] sm:$0xff]
      %v254 = vld [vmem:[%s210 + $0xc8] sm:$0xff]
      %v255 = vld [vmem:[%s210 + $0xd0] sm:$0xff]
      %v256 = vld [vmem:[%s210 + $0xd8] sm:$0xff]
      %v257 = vld [vmem:[%s210 + $0xe0] sm:$0xff]
      %v258 = vld [vmem:[%s210 + $0xe8] sm:$0xff]
      %v259 = vld [vmem:[%s210 + $0xf0] sm:$0xff]
      %v260 = vld [vmem:[%s210 + $0xf8] sm:$0xff]
      %v261 = vld [vmem:[%s215] sm:$0xf]
      %v262 = vld [vmem:[%s215 + $0x4] sm:$0xf]
      %v263 = vld [vmem:[%s215 + $0x8] sm:$0xf]
      %v264 = vld [vmem:[%s215 + $0xc] sm:$0xf]
      %v265 = vld [vmem:[%s215 + $0x10] sm:$0xf]
      %v266 = vld [vmem:[%s215 + $0x14] sm:$0xf]
      %v267 = vld [vmem:[%s215 + $0x18] sm:$0xf]
      %v268 = vld [vmem:[%s215 + $0x1c] sm:$0xf]
      %v269 = vld [vmem:[%s215 + $0x20] sm:$0xf]
      %v270 = vld [vmem:[%s215 + $0x24] sm:$0xf]
      %v271 = vld [vmem:[%s215 + $0x28] sm:$0xf]
      %v272 = vld [vmem:[%s215 + $0x2c] sm:$0xf]
      %v273 = vld [vmem:[%s215 + $0x30] sm:$0xf]
      %v274 = vld [vmem:[%s215 + $0x34] sm:$0xf]
      %v275 = vld [vmem:[%s215 + $0x38] sm:$0xf]
      %v276 = vld [vmem:[%s215 + $0x3c] sm:$0xf]
      %v277 = vld [vmem:[%s215 + $0x40] sm:$0xf]
      %v278 = vld [vmem:[%s215 + $0x44] sm:$0xf]
      %v279 = vld [vmem:[%s215 + $0x48] sm:$0xf]
      %v280 = vld [vmem:[%s215 + $0x4c] sm:$0xf]
      %v281 = vld [vmem:[%s215 + $0x50] sm:$0xf]
      %v282 = vld [vmem:[%s215 + $0x54] sm:$0xf]
      %v283 = vld [vmem:[%s215 + $0x58] sm:$0xf]
      %v284 = vld [vmem:[%s215 + $0x5c] sm:$0xf]
      %v285 = vld [vmem:[%s215 + $0x60] sm:$0xf]
      %v286 = vld [vmem:[%s215 + $0x64] sm:$0xf]
      %v287 = vld [vmem:[%s215 + $0x68] sm:$0xf]
      %v288 = vld [vmem:[%s215 + $0x6c] sm:$0xf]
      %v289 = vld [vmem:[%s215 + $0x70] sm:$0xf]
      %v290 = vld [vmem:[%s215 + $0x74] sm:$0xf]
      %v291 = vld [vmem:[%s215 + $0x78] sm:$0xf]
      %v292 = vld [vmem:[%s215 + $0x7c] sm:$0xf]
      %v293 = vld [vmem:[%s218] sm:$0x1]
      %v295 = vlaneseq
      %v296 = vshrl.u32 %v295, 7
      %v297 = vsub.s32 0, %v296
      %v298 = vrot.slane %v293, %v297
      %v332 = vunpack.c.l.b16 %v229
      %v333 = vunpack.c.h.b16 %v229
      %v334 = vunpack.c.l.b16 %v230
      %v335 = vunpack.c.h.b16 %v230
      %v336 = vunpack.c.l.b16 %v231
      %v337 = vunpack.c.h.b16 %v231
      %v338 = vunpack.c.l.b16 %v232
      %v339 = vunpack.c.h.b16 %v232
      %v340 = vunpack.c.l.b16 %v233
      %v341 = vunpack.c.h.b16 %v233
      %v342 = vunpack.c.l.b16 %v234
      %v343 = vunpack.c.h.b16 %v234
      %v344 = vunpack.c.l.b16 %v235
      %v345 = vunpack.c.h.b16 %v235
      %v346 = vunpack.c.l.b16 %v236
      %v347 = vunpack.c.h.b16 %v236
      %v348 = vunpack.c.l.b16 %v237
      %v349 = vunpack.c.h.b16 %v237
      %v350 = vunpack.c.l.b16 %v238
      %v351 = vunpack.c.h.b16 %v238
      %v352 = vunpack.c.l.b16 %v239
      %v353 = vunpack.c.h.b16 %v239
      %v354 = vunpack.c.l.b16 %v240
      %v355 = vunpack.c.h.b16 %v240
      %v356 = vunpack.c.l.b16 %v241
      %v357 = vunpack.c.h.b16 %v241
      %v358 = vunpack.c.l.b16 %v242
      %v359 = vunpack.c.h.b16 %v242
      %v360 = vunpack.c.l.b16 %v243
      %v361 = vunpack.c.h.b16 %v243
      %v362 = vunpack.c.l.b16 %v244
      %v363 = vunpack.c.h.b16 %v244
      %v364 = vunpack.c.l.b16 %v245
      %v365 = vunpack.c.h.b16 %v245
      %v366 = vunpack.c.l.b16 %v246
      %v367 = vunpack.c.h.b16 %v246
      %v368 = vunpack.c.l.b16 %v247
      %v369 = vunpack.c.h.b16 %v247
      %v370 = vunpack.c.l.b16 %v248
      %v371 = vunpack.c.h.b16 %v248
      %v372 = vunpack.c.l.b16 %v249
      %v373 = vunpack.c.h.b16 %v249
      %v374 = vunpack.c.l.b16 %v250
      %v375 = vunpack.c.h.b16 %v250
      %v376 = vunpack.c.l.b16 %v251
      %v377 = vunpack.c.h.b16 %v251
      %v378 = vunpack.c.l.b16 %v252
      %v379 = vunpack.c.h.b16 %v252
      %v380 = vunpack.c.l.b16 %v253
      %v381 = vunpack.c.h.b16 %v253
      %v382 = vunpack.c.l.b16 %v254
      %v383 = vunpack.c.h.b16 %v254
      %v384 = vunpack.c.l.b16 %v255
      %v385 = vunpack.c.h.b16 %v255
      %v386 = vunpack.c.l.b16 %v256
      %v387 = vunpack.c.h.b16 %v256
      %v388 = vunpack.c.l.b16 %v257
      %v389 = vunpack.c.h.b16 %v257
      %v390 = vunpack.c.l.b16 %v258
      %v391 = vunpack.c.h.b16 %v258
      %v392 = vunpack.c.l.b16 %v259
      %v393 = vunpack.c.h.b16 %v259
      %v394 = vunpack.c.l.b16 %v260
      %v395 = vunpack.c.h.b16 %v260
      %v396 = vpack.c.b16 %v334, %v332
      %v397 = vpack.c.b16 %v335, %v333
      %v398 = vpack.c.b16 %v338, %v336
      %v399 = vpack.c.b16 %v339, %v337
      %v400 = vpack.c.b16 %v342, %v340
      %v401 = vpack.c.b16 %v343, %v341
      %v402 = vpack.c.b16 %v346, %v344
      %v403 = vpack.c.b16 %v347, %v345
      %v404 = vpack.c.b16 %v350, %v348
      %v405 = vpack.c.b16 %v351, %v349
      %v406 = vpack.c.b16 %v354, %v352
      %v407 = vpack.c.b16 %v355, %v353
      %v408 = vpack.c.b16 %v358, %v356
      %v409 = vpack.c.b16 %v359, %v357
      %v410 = vpack.c.b16 %v362, %v360
      %v411 = vpack.c.b16 %v363, %v361
      %v412 = vpack.c.b16 %v366, %v364
      %v413 = vpack.c.b16 %v367, %v365
      %v414 = vpack.c.b16 %v370, %v368
      %v415 = vpack.c.b16 %v371, %v369
      %v416 = vpack.c.b16 %v374, %v372
      %v417 = vpack.c.b16 %v375, %v373
      %v418 = vpack.c.b16 %v378, %v376
      %v419 = vpack.c.b16 %v379, %v377
      %v420 = vpack.c.b16 %v382, %v380
      %v421 = vpack.c.b16 %v383, %v381
      %v422 = vpack.c.b16 %v386, %v384
      %v423 = vpack.c.b16 %v387, %v385
      %v424 = vpack.c.b16 %v390, %v388
      %v425 = vpack.c.b16 %v391, %v389
      %v426 = vpack.c.b16 %v394, %v392
      %v427 = vpack.c.b16 %v395, %v393
      %v492 = vunpack.c.l.b16 %v261
      %v493 = vunpack.c.l.b16 %v262
      %v494 = vunpack.c.l.b16 %v263
      %v495 = vunpack.c.l.b16 %v264
      %v496 = vunpack.c.l.b16 %v265
      %v497 = vunpack.c.l.b16 %v266
      %v498 = vunpack.c.l.b16 %v267
      %v499 = vunpack.c.l.b16 %v268
      %v500 = vunpack.c.l.b16 %v269
      %v501 = vunpack.c.l.b16 %v270
      %v502 = vunpack.c.l.b16 %v271
      %v503 = vunpack.c.l.b16 %v272
      %v504 = vunpack.c.l.b16 %v273
      %v505 = vunpack.c.l.b16 %v274
      %v506 = vunpack.c.l.b16 %v275
      %v507 = vunpack.c.l.b16 %v276
      %v508 = vunpack.c.l.b16 %v277
      %v509 = vunpack.c.l.b16 %v278
      %v510 = vunpack.c.l.b16 %v279
      %v511 = vunpack.c.l.b16 %v280
      %v512 = vunpack.c.l.b16 %v281
      %v513 = vunpack.c.l.b16 %v282
      %v514 = vunpack.c.l.b16 %v283
      %v515 = vunpack.c.l.b16 %v284
      %v516 = vunpack.c.l.b16 %v285
      %v517 = vunpack.c.l.b16 %v286
      %v518 = vunpack.c.l.b16 %v287
      %v519 = vunpack.c.l.b16 %v288
      %v520 = vunpack.c.l.b16 %v289
      %v521 = vunpack.c.l.b16 %v290
      %v522 = vunpack.c.l.b16 %v291
      %v523 = vunpack.c.l.b16 %v292
      %v524 = vpack.c.b16 %v493, %v492
      %v525 = vpack.c.b16 %v495, %v494
      %v526 = vpack.c.b16 %v497, %v496
      %v527 = vpack.c.b16 %v499, %v498
      %v528 = vpack.c.b16 %v501, %v500
      %v529 = vpack.c.b16 %v503, %v502
      %v530 = vpack.c.b16 %v505, %v504
      %v531 = vpack.c.b16 %v507, %v506
      %v532 = vpack.c.b16 %v509, %v508
      %v533 = vpack.c.b16 %v511, %v510
      %v534 = vpack.c.b16 %v513, %v512
      %v535 = vpack.c.b16 %v515, %v514
      %v536 = vpack.c.b16 %v517, %v516
      %v537 = vpack.c.b16 %v519, %v518
      %v538 = vpack.c.b16 %v521, %v520
      %v539 = vpack.c.b16 %v523, %v522
      %556 = vmatprep.subr.bf16.mxu0 0
      %557 = vmatpush1.bf16.msra.mxu0 %v524
      %558 = vmatprep.subr.bf16.mxu0 0
      %559 = vmatpush1.bf16.msra.mxu0 %v525
      %560 = vmatprep.subr.bf16.mxu0 0
      %561 = vmatpush1.bf16.msra.mxu0 %v526
      %562 = vmatprep.subr.bf16.mxu0 0
      %563 = vmatpush1.bf16.msra.mxu0 %v527
      %564 = vmatprep.subr.bf16.mxu0 0
      %565 = vmatpush1.bf16.msra.mxu0 %v528
      %566 = vmatprep.subr.bf16.mxu0 0
      %567 = vmatpush1.bf16.msra.mxu0 %v529
      %568 = vmatprep.subr.bf16.mxu0 0
      %569 = vmatpush1.bf16.msra.mxu0 %v530
      %570 = vmatprep.subr.bf16.mxu0 0
      %571 = vmatpush1.bf16.msra.mxu0 %v531
      %572 = vmatprep.subr.bf16.mxu0 0
      %573 = vmatpush1.bf16.msra.mxu0 %v532
      %574 = vmatprep.subr.bf16.mxu0 0
      %575 = vmatpush1.bf16.msra.mxu0 %v533
      %576 = vmatprep.subr.bf16.mxu0 0
      %577 = vmatpush1.bf16.msra.mxu0 %v534
      %578 = vmatprep.subr.bf16.mxu0 0
      %579 = vmatpush1.bf16.msra.mxu0 %v535
      %580 = vmatprep.subr.bf16.mxu0 0
      %581 = vmatpush1.bf16.msra.mxu0 %v536
      %582 = vmatprep.subr.bf16.mxu0 0
      %583 = vmatpush1.bf16.msra.mxu0 %v537
      %584 = vmatprep.subr.bf16.mxu0 0
      %585 = vmatpush1.bf16.msra.mxu0 %v538
      %586 = vmatprep.subr.bf16.mxu0 0
      %587 = vmatpush1.bf16.msra.mxu0 %v539
      %588 = vmatprep.mubr.bf16.mxu0 %v397
      %589 = vmatmul.mubr.bf16.gmra.mrb[0].mxu0 %v396
      %v590 = vpop.f32.mrb[0].mxu0
      %v591 = vadd.f32 %v298, %v590
      %v592 = vpop.f32.mrb[0].mxu0
      %v593 = vpop.f32.mrb[0].mxu0
      %v594 = vadd.f32 %v298, %v593
      %v595 = vpop.f32.mrb[0].mxu0
      %596 = vmatprep.mubr.bf16.mxu0 %v399
      %597 = vmatmul.mubr.bf16.gmra.mrb[0].mxu0 %v398
      %v598 = vpop.f32.mrb[0].mxu0
      %v599 = vadd.f32 %v298, %v598
      %v600 = vpop.f32.mrb[0].mxu0
      %v601 = vpop.f32.mrb[0].mxu0
      %v602 = vadd.f32 %v298, %v601
      %v603 = vpop.f32.mrb[0].mxu0
      %604 = vmatprep.mubr.bf16.mxu0 %v401
      %605 = vmatmul.mubr.bf16.gmra.mrb[0].mxu0 %v400
      %v606 = vpop.f32.mrb[0].mxu0
      %v607 = vadd.f32 %v298, %v606
      %v608 = vpop.f32.mrb[0].mxu0
      %v609 = vpop.f32.mrb[0].mxu0
      %v610 = vadd.f32 %v298, %v609
      %v611 = vpop.f32.mrb[0].mxu0
      %612 = vmatprep.mubr.bf16.mxu0 %v403
      %613 = vmatmul.mubr.bf16.gmra.mrb[0].mxu0 %v402
      %v614 = vpop.f32.mrb[0].mxu0
      %v615 = vadd.f32 %v298, %v614
      %v616 = vpop.f32.mrb[0].mxu0
      %v617 = vpop.f32.mrb[0].mxu0
      %v618 = vadd.f32 %v298, %v617
      %v619 = vpop.f32.mrb[0].mxu0
      %620 = vmatprep.mubr.bf16.mxu0 %v405
      %621 = vmatmul.mubr.bf16.gmra.mrb[0].mxu0 %v404
      %v622 = vpop.f32.mrb[0].mxu0
      %v623 = vadd.f32 %v298, %v622
      %v624 = vpop.f32.mrb[0].mxu0
      %v625 = vpop.f32.mrb[0].mxu0
      %v626 = vadd.f32 %v298, %v625
      %v627 = vpop.f32.mrb[0].mxu0
      %628 = vmatprep.mubr.bf16.mxu0 %v407
      %629 = vmatmul.mubr.bf16.gmra.mrb[0].mxu0 %v406
      %v630 = vpop.f32.mrb[0].mxu0
      %v631 = vadd.f32 %v298, %v630
      %v632 = vpop.f32.mrb[0].mxu0
      %v633 = vpop.f32.mrb[0].mxu0
      %v634 = vadd.f32 %v298, %v633
      %v635 = vpop.f32.mrb[0].mxu0
      %636 = vmatprep.mubr.bf16.mxu0 %v409
      %637 = vmatmul.mubr.bf16.gmra.mrb[0].mxu0 %v408
      %v638 = vpop.f32.mrb[0].mxu0
      %v639 = vadd.f32 %v298, %v638
      %v640 = vpop.f32.mrb[0].mxu0
      %v641 = vpop.f32.mrb[0].mxu0
      %v642 = vadd.f32 %v298, %v641
      %v643 = vpop.f32.mrb[0].mxu0
      %644 = vmatprep.mubr.bf16.mxu0 %v411
      %645 = vmatmul.mubr.bf16.gmra.mrb[0].mxu0 %v410
      %v646 = vpop.f32.mrb[0].mxu0
      %v647 = vadd.f32 %v298, %v646
      %v648 = vpop.f32.mrb[0].mxu0
      %v649 = vpop.f32.mrb[0].mxu0
      %v650 = vadd.f32 %v298, %v649
      %v651 = vpop.f32.mrb[0].mxu0
      %652 = vmatprep.mubr.bf16.mxu0 %v413
      %653 = vmatmul.mubr.bf16.gmra.mrb[0].mxu0 %v412
      %v654 = vpop.f32.mrb[0].mxu0
      %v655 = vadd.f32 %v298, %v654
      %v656 = vpop.f32.mrb[0].mxu0
      %v657 = vpop.f32.mrb[0].mxu0
      %v658 = vadd.f32 %v298, %v657
      %v659 = vpop.f32.mrb[0].mxu0
      %660 = vmatprep.mubr.bf16.mxu0 %v415
      %661 = vmatmul.mubr.bf16.gmra.mrb[0].mxu0 %v414
      %v662 = vpop.f32.mrb[0].mxu0
      %v663 = vadd.f32 %v298, %v662
      %v664 = vpop.f32.mrb[0].mxu0
      %v665 = vpop.f32.mrb[0].mxu0
      %v666 = vadd.f32 %v298, %v665
      %v667 = vpop.f32.mrb[0].mxu0
      %668 = vmatprep.mubr.bf16.mxu0 %v417
      %669 = vmatmul.mubr.bf16.gmra.mrb[0].mxu0 %v416
      %v670 = vpop.f32.mrb[0].mxu0
      %v671 = vadd.f32 %v298, %v670
      %v672 = vpop.f32.mrb[0].mxu0
      %v673 = vpop.f32.mrb[0].mxu0
      %v674 = vadd.f32 %v298, %v673
      %v675 = vpop.f32.mrb[0].mxu0
      %676 = vmatprep.mubr.bf16.mxu0 %v419
      %677 = vmatmul.mubr.bf16.gmra.mrb[0].mxu0 %v418
      %v678 = vpop.f32.mrb[0].mxu0
      %v679 = vadd.f32 %v298, %v678
      %v680 = vpop.f32.mrb[0].mxu0
      %v681 = vpop.f32.mrb[0].mxu0
      %v682 = vadd.f32 %v298, %v681
      %v683 = vpop.f32.mrb[0].mxu0
      %684 = vmatprep.mubr.bf16.mxu0 %v421
      %685 = vmatmul.mubr.bf16.gmra.mrb[0].mxu0 %v420
      %v686 = vpop.f32.mrb[0].mxu0
      %v687 = vadd.f32 %v298, %v686
      %v688 = vpop.f32.mrb[0].mxu0
      %v689 = vpop.f32.mrb[0].mxu0
      %v690 = vadd.f32 %v298, %v689
      %v691 = vpop.f32.mrb[0].mxu0
      %692 = vmatprep.mubr.bf16.mxu0 %v423
      %693 = vmatmul.mubr.bf16.gmra.mrb[0].mxu0 %v422
      %v694 = vpop.f32.mrb[0].mxu0
      %v695 = vadd.f32 %v298, %v694
      %v696 = vpop.f32.mrb[0].mxu0
      %v697 = vpop.f32.mrb[0].mxu0
      %v698 = vadd.f32 %v298, %v697
      %v699 = vpop.f32.mrb[0].mxu0
      %700 = vmatprep.mubr.bf16.mxu0 %v425
      %701 = vmatmul.mubr.bf16.gmra.mrb[0].mxu0 %v424
      %v702 = vpop.f32.mrb[0].mxu0
      %v703 = vadd.f32 %v298, %v702
      %v704 = vpop.f32.mrb[0].mxu0
      %v705 = vpop.f32.mrb[0].mxu0
      %v706 = vadd.f32 %v298, %v705
      %v707 = vpop.f32.mrb[0].mxu0
      %708 = vmatprep.mubr.bf16.mxu0 %v427
      %709 = vmatmul.mubr.bf16.gmra.mrb[0].mxu0 %v426
      %v710 = vpop.f32.mrb[0].mxu0
      %v711 = vadd.f32 %v298, %v710
      %v712 = vpop.f32.mrb[0].mxu0
      %v713 = vpop.f32.mrb[0].mxu0
      %v714 = vadd.f32 %v298, %v713
      %v715 = vpop.f32.mrb[0].mxu0
      %716 = vdwg.mxu0
      %vm717 = vcmp.ge.f32.partialorder %v591, 0.0
      %vm718 = vcmp.ge.f32.partialorder %v594, 0.0
      %vm719 = vcmp.ge.f32.partialorder %v599, 0.0
      %vm720 = vcmp.ge.f32.partialorder %v602, 0.0
      %vm721 = vcmp.ge.f32.partialorder %v607, 0.0
      %vm722 = vcmp.ge.f32.partialorder %v610, 0.0
      %vm723 = vcmp.ge.f32.partialorder %v615, 0.0
      %vm724 = vcmp.ge.f32.partialorder %v618, 0.0
      %vm725 = vcmp.ge.f32.partialorder %v623, 0.0
      %vm726 = vcmp.ge.f32.partialorder %v626, 0.0
      %vm727 = vcmp.ge.f32.partialorder %v631, 0.0
      %vm728 = vcmp.ge.f32.partialorder %v634, 0.0
      %vm729 = vcmp.ge.f32.partialorder %v639, 0.0
      %vm730 = vcmp.ge.f32.partialorder %v642, 0.0
      %vm731 = vcmp.ge.f32.partialorder %v647, 0.0
      %vm732 = vcmp.ge.f32.partialorder %v650, 0.0
      %vm733 = vcmp.ge.f32.partialorder %v655, 0.0
      %vm734 = vcmp.ge.f32.partialorder %v658, 0.0
      %vm735 = vcmp.ge.f32.partialorder %v663, 0.0
      %vm736 = vcmp.ge.f32.partialorder %v666, 0.0
      %vm737 = vcmp.ge.f32.partialorder %v671, 0.0
      %vm738 = vcmp.ge.f32.partialorder %v674, 0.0
      %vm739 = vcmp.ge.f32.partialorder %v679, 0.0
      %vm740 = vcmp.ge.f32.partialorder %v682, 0.0
      %vm741 = vcmp.ge.f32.partialorder %v687, 0.0
      %vm742 = vcmp.ge.f32.partialorder %v690, 0.0
      %vm743 = vcmp.ge.f32.partialorder %v695, 0.0
      %vm744 = vcmp.ge.f32.partialorder %v698, 0.0
      %vm745 = vcmp.ge.f32.partialorder %v703, 0.0
      %vm746 = vcmp.ge.f32.partialorder %v706, 0.0
      %vm747 = vcmp.ge.f32.partialorder %v711, 0.0
      %vm748 = vcmp.ge.f32.partialorder %v714, 0.0
      %v749 = vmul.f32 %v591, 0.01
      %v750 = vmul.f32 %v594, 0.01
      %v751 = vmul.f32 %v599, 0.01
      %v752 = vmul.f32 %v602, 0.01
      %v753 = vmul.f32 %v607, 0.01
      %v754 = vmul.f32 %v610, 0.01
      %v755 = vmul.f32 %v615, 0.01
      %v756 = vmul.f32 %v618, 0.01
      %v757 = vmul.f32 %v623, 0.01
      %v758 = vmul.f32 %v626, 0.01
      %v759 = vmul.f32 %v631, 0.01
      %v760 = vmul.f32 %v634, 0.01
      %v761 = vmul.f32 %v639, 0.01
      %v762 = vmul.f32 %v642, 0.01
      %v763 = vmul.f32 %v647, 0.01
      %v764 = vmul.f32 %v650, 0.01
      %v765 = vmul.f32 %v655, 0.01
      %v766 = vmul.f32 %v658, 0.01
      %v767 = vmul.f32 %v663, 0.01
      %v768 = vmul.f32 %v666, 0.01
      %v769 = vmul.f32 %v671, 0.01
      %v770 = vmul.f32 %v674, 0.01
      %v771 = vmul.f32 %v679, 0.01
      %v772 = vmul.f32 %v682, 0.01
      %v773 = vmul.f32 %v687, 0.01
      %v774 = vmul.f32 %v690, 0.01
      %v775 = vmul.f32 %v695, 0.01
      %v776 = vmul.f32 %v698, 0.01
      %v777 = vmul.f32 %v703, 0.01
      %v778 = vmul.f32 %v706, 0.01
      %v779 = vmul.f32 %v711, 0.01
      %v780 = vmul.f32 %v714, 0.01
      %v781 = vsel %vm717, %v591, %v749
      %v782 = vsel %vm718, %v594, %v750
      %v783 = vsel %vm719, %v599, %v751
      %v784 = vsel %vm720, %v602, %v752
      %v785 = vsel %vm721, %v607, %v753
      %v786 = vsel %vm722, %v610, %v754
      %v787 = vsel %vm723, %v615, %v755
      %v788 = vsel %vm724, %v618, %v756
      %v789 = vsel %vm725, %v623, %v757
      %v790 = vsel %vm726, %v626, %v758
      %v791 = vsel %vm727, %v631, %v759
      %v792 = vsel %vm728, %v634, %v760
      %v793 = vsel %vm729, %v639, %v761
      %v794 = vsel %vm730, %v642, %v762
      %v795 = vsel %vm731, %v647, %v763
      %v796 = vsel %vm732, %v650, %v764
      %v797 = vsel %vm733, %v655, %v765
      %v798 = vsel %vm734, %v658, %v766
      %v799 = vsel %vm735, %v663, %v767
      %v800 = vsel %vm736, %v666, %v768
      %v801 = vsel %vm737, %v671, %v769
      %v802 = vsel %vm738, %v674, %v770
      %v803 = vsel %vm739, %v679, %v771
      %v804 = vsel %vm740, %v682, %v772
      %v805 = vsel %vm741, %v687, %v773
      %v806 = vsel %vm742, %v690, %v774
      %v807 = vsel %vm743, %v695, %v775
      %v808 = vsel %vm744, %v698, %v776
      %v809 = vsel %vm745, %v703, %v777
      %v810 = vsel %vm746, %v706, %v778
      %v811 = vsel %vm747, %v711, %v779
      %v812 = vsel %vm748, %v714, %v780
      %813 = vst [vmem:[%s226] sm:$0xff] %v781
      %814 = vst [vmem:[%s226 + $0x8] sm:$0xff] %v782
      %815 = vst [vmem:[%s226 + $0x10] sm:$0xff] %v783
      %816 = vst [vmem:[%s226 + $0x18] sm:$0xff] %v784
      %817 = vst [vmem:[%s226 + $0x20] sm:$0xff] %v785
      %818 = vst [vmem:[%s226 + $0x28] sm:$0xff] %v786
      %819 = vst [vmem:[%s226 + $0x30] sm:$0xff] %v787
      %820 = vst [vmem:[%s226 + $0x38] sm:$0xff] %v788
      %821 = vst [vmem:[%s226 + $0x40] sm:$0xff] %v789
      %822 = vst [vmem:[%s226 + $0x48] sm:$0xff] %v790
      %823 = vst [vmem:[%s226 + $0x50] sm:$0xff] %v791
      %824 = vst [vmem:[%s226 + $0x58] sm:$0xff] %v792
      %825 = vst [vmem:[%s226 + $0x60] sm:$0xff] %v793
      %826 = vst [vmem:[%s226 + $0x68] sm:$0xff] %v794
      %827 = vst [vmem:[%s226 + $0x70] sm:$0xff] %v795
      %828 = vst [vmem:[%s226 + $0x78] sm:$0xff] %v796
      %829 = vst [vmem:[%s226 + $0x80] sm:$0xff] %v797
      %830 = vst [vmem:[%s226 + $0x88] sm:$0xff] %v798
      %831 = vst [vmem:[%s226 + $0x90] sm:$0xff] %v799
      %832 = vst [vmem:[%s226 + $0x98] sm:$0xff] %v800
      %833 = vst [vmem:[%s226 + $0xa0] sm:$0xff] %v801
      %834 = vst [vmem:[%s226 + $0xa8] sm:$0xff] %v802
      %835 = vst [vmem:[%s226 + $0xb0] sm:$0xff] %v803
      %836 = vst [vmem:[%s226 + $0xb8] sm:$0xff] %v804
      %837 = vst [vmem:[%s226 + $0xc0] sm:$0xff] %v805
      %838 = vst [vmem:[%s226 + $0xc8] sm:$0xff] %v806
      %839 = vst [vmem:[%s226 + $0xd0] sm:$0xff] %v807
      %840 = vst [vmem:[%s226 + $0xd8] sm:$0xff] %v808
      %841 = vst [vmem:[%s226 + $0xe0] sm:$0xff] %v809
      %842 = vst [vmem:[%s226 + $0xe8] sm:$0xff] %v810
      %843 = vst [vmem:[%s226 + $0xf0] sm:$0xff] %v811
      %844 = vst [vmem:[%s226 + $0xf8] sm:$0xff] %v812
      %s845 = smul.u32 32, %s18
      %p846 = scmp.lt.s32.totalorder %s845, 63
      %s847 = scalar_select %p846, %s845, 63
      %p848 = scmp.lt.s32.totalorder %s19, 0
      %s849 = scalar_select %p848, %s19, 0
      %s850 = sadd.s32 %s849, %s847
      %s851 = smul.addr %s850, 8
      %s852 = scalar_lea.vmem %s3, %s851
      // Predicated region
      $region33: #{_lambda_.7} parent=31 // pred_check
        %p853 = pneg %p124
      $region34: #{_lambda_.7} parent=31 // pred_check_branch
        %855 = sbr.rel (%p853) target = $region36
      $region35: #{_lambda_.7} parent=31 // pred_region
        %s856 = smul.u32 32, %s18
      $region36: #{_lambda_.7} parent=31 // pred_fallthru
        _
    $region32: #{_lambda_.7} parent=5 // pred_fallthru
      _
    %p857 = scmp.le.s32.totalorder 2, %s9
    // Predicated region
    $region37: #{_lambda_.7} parent=5 // pred_check
      %p858 = pneg %p857
    $region38: #{_lambda_.7} parent=5 // pred_check_branch
      %860 = sbr.rel (%p858) target = $region40
    $region39: #{_lambda_.7} parent=5 // pred_region
      %s861 = ssub.s32 %s9, 2
      // Predicated region
      $region41: #{_lambda_.7} parent=39 // pred_check
        %p862 = pneg %p130
      $region42: #{_lambda_.7} parent=39 // pred_check_branch
        %864 = sbr.rel (%p862) target = $region44
      $region43: #{_lambda_.7} parent=39 // pred_region
        %s865 = smul.u32 32, %s20
        %p866 = scmp.lt.s32.totalorder %s865, 63
        %s867 = scalar_select %p866, %s865, 63
        %p868 = scmp.lt.s32.totalorder %s21, 0
        %s869 = scalar_select %p868, %s21, 0
        %s870 = sadd.s32 %s869, %s867
        %s871 = smul.addr %s870, 8
        %s872 = scalar_lea.vmem %s3, %s871
      $region44: #{_lambda_.7} parent=39 // pred_fallthru
        _
    $region40: #{_lambda_.7} parent=5 // pred_fallthru
      _
  $region6: #{_lambda_.7} parent=0 // loop_footer
    %s13 = sadd.s32 1, %s9
  $region7: #{_lambda_.7} parent=0 // loop_footer_branch
    %8 = sbr.rel target = $region3
  $region8: #{_lambda_.7} parent=0 // loop_exit
    _

// kernel: _lambda_.8
$region0: #{_lambda_.8}
  #allocation0 [shape = 'u32[]', space=smem, size = 0x4, offset = 0x4, fixed_abs, tag = 'smem constant byte address 0x4 - core index']
  #allocation1 [shape = 'u32[144,128]{1,0:T(1,128)}', space=vmem, size = 0x12000, scoped, tag = 'internal scratch']
  %s0 = inlined_call_operand.vmem [shape: bf16[192,640], index: 0, kind: input, shape index: {}]
  %s1 = inlined_call_operand.vmem [shape: bf16[640,256], index: 1, kind: input, shape index: {}]
  %s2 = inlined_call_operand.vmem [shape: f32[1,256], index: 2, kind: input, shape index: {}]
  %s3 = inlined_call_operand.vmem [shape: f32[192,256], index: 3, kind: output, shape index: {}]
  %s4 = sld [smem:[#allocation0]]
  $region22: #{_lambda_.8} parent=0
    _
  %s6 = ssub.s32 1, %s4
  %s7 = scalar_select 0, %s6, %s4
  // Predicated region
  $region2: #{_lambda_.8} parent=0 // pred_check
    _
  $region3: #{_lambda_.8} parent=0 // pred_check_branch
    %9 = sbr.rel (0) target = $region5
  $region4: #{_lambda_.8} parent=0 // pred_region
    _
  $region5: #{_lambda_.8} parent=0 // pred_fallthru
    _
  // Predicated region
  $region6: #{_lambda_.8} parent=0 // pred_check
    _
  $region7: #{_lambda_.8} parent=0 // pred_check_branch
    %11 = sbr.rel (0) target = $region9
  $region8: #{_lambda_.8} parent=0 // pred_region
    _
  $region9: #{_lambda_.8} parent=0 // pred_fallthru
    _
  // Predicated region
  $region10: #{_lambda_.8} parent=0 // pred_check
    _
  $region11: #{_lambda_.8} parent=0 // pred_check_branch
    %13 = sbr.rel (0) target = $region13
  $region12: #{_lambda_.8} parent=0 // pred_region
    _
  $region13: #{_lambda_.8} parent=0 // pred_fallthru
    _
  %v15 = vld [vmem:[%s0] sm:$0xff]
  %v16 = vld [vmem:[%s0 + $0x8] sm:$0xff]
  %v17 = vld [vmem:[%s0 + $0x10] sm:$0xf]
  %v18 = vld [vmem:[%s0 + $0x14] sm:$0xff]
  %v19 = vld [vmem:[%s0 + $0x1c] sm:$0xff]
  %v20 = vld [vmem:[%s0 + $0x24] sm:$0xf]
  %v21 = vld [vmem:[%s0 + $0x28] sm:$0xff]
  %v22 = vld [vmem:[%s0 + $0x30] sm:$0xff]
  %v23 = vld [vmem:[%s0 + $0x38] sm:$0xf]
  %v24 = vld [vmem:[%s0 + $0x3c] sm:$0xff]
  %v25 = vld [vmem:[%s0 + $0x44] sm:$0xff]
  %v26 = vld [vmem:[%s0 + $0x4c] sm:$0xf]
  %v27 = vld [vmem:[%s0 + $0x50] sm:$0xff]
  %v28 = vld [vmem:[%s0 + $0x58] sm:$0xff]
  %v29 = vld [vmem:[%s0 + $0x60] sm:$0xf]
  %v30 = vld [vmem:[%s0 + $0x64] sm:$0xff]
  %v31 = vld [vmem:[%s0 + $0x6c] sm:$0xff]
  %v32 = vld [vmem:[%s0 + $0x74] sm:$0xf]
  %v33 = vld [vmem:[%s0 + $0x78] sm:$0xff]
  %v34 = vld [vmem:[%s0 + $0x80] sm:$0xff]
  %v35 = vld [vmem:[%s0 + $0x88] sm:$0xf]
  %v36 = vld [vmem:[%s0 + $0x8c] sm:$0xff]
  %v37 = vld [vmem:[%s0 + $0x94] sm:$0xff]
  %v38 = vld [vmem:[%s0 + $0x9c] sm:$0xf]
  %v39 = vld [vmem:[%s0 + $0xa0] sm:$0xff]
  %v40 = vld [vmem:[%s0 + $0xa8] sm:$0xff]
  %v41 = vld [vmem:[%s0 + $0xb0] sm:$0xf]
  %v42 = vld [vmem:[%s0 + $0xb4] sm:$0xff]
  %v43 = vld [vmem:[%s0 + $0xbc] sm:$0xff]
  %v44 = vld [vmem:[%s0 + $0xc4] sm:$0xf]
  %v45 = vld [vmem:[%s0 + $0xc8] sm:$0xff]
  %v46 = vld [vmem:[%s0 + $0xd0] sm:$0xff]
  %v47 = vld [vmem:[%s0 + $0xd8] sm:$0xf]
  %v48 = vld [vmem:[%s0 + $0xdc] sm:$0xff]
  %v49 = vld [vmem:[%s0 + $0xe4] sm:$0xff]
  %v50 = vld [vmem:[%s0 + $0xec] sm:$0xf]
  %v51 = vld [vmem:[%s0 + $0xf0] sm:$0xff]
  %v52 = vld [vmem:[%s0 + $0xf8] sm:$0xff]
  %v53 = vld [vmem:[%s0 + $0x100] sm:$0xf]
  %v54 = vld [vmem:[%s0 + $0x104] sm:$0xff]
  %v55 = vld [vmem:[%s0 + $0x10c] sm:$0xff]
  %v56 = vld [vmem:[%s0 + $0x114] sm:$0xf]
  %v57 = vld [vmem:[%s0 + $0x118] sm:$0xff]
  %v58 = vld [vmem:[%s0 + $0x120] sm:$0xff]
  %v59 = vld [vmem:[%s0 + $0x128] sm:$0xf]
  %v60 = vld [vmem:[%s0 + $0x12c] sm:$0xff]
  %v61 = vld [vmem:[%s0 + $0x134] sm:$0xff]
  %v62 = vld [vmem:[%s0 + $0x13c] sm:$0xf]
  %v63 = vld [vmem:[%s0 + $0x140] sm:$0xff]
  %v64 = vld [vmem:[%s0 + $0x148] sm:$0xff]
  %v65 = vld [vmem:[%s0 + $0x150] sm:$0xf]
  %v66 = vld [vmem:[%s0 + $0x154] sm:$0xff]
  %v67 = vld [vmem:[%s0 + $0x15c] sm:$0xff]
  %v68 = vld [vmem:[%s0 + $0x164] sm:$0xf]
  %v69 = vld [vmem:[%s0 + $0x168] sm:$0xff]
  %v70 = vld [vmem:[%s0 + $0x170] sm:$0xff]
  %v71 = vld [vmem:[%s0 + $0x178] sm:$0xf]
  %v72 = vld [vmem:[%s0 + $0x17c] sm:$0xff]
  %v73 = vld [vmem:[%s0 + $0x184] sm:$0xff]
  %v74 = vld [vmem:[%s0 + $0x18c] sm:$0xf]
  %v75 = vld [vmem:[%s0 + $0x190] sm:$0xff]
  %v76 = vld [vmem:[%s0 + $0x198] sm:$0xff]
  %v77 = vld [vmem:[%s0 + $0x1a0] sm:$0xf]
  %v78 = vld [vmem:[%s0 + $0x1a4] sm:$0xff]
  %v79 = vld [vmem:[%s0 + $0x1ac] sm:$0xff]
  %v80 = vld [vmem:[%s0 + $0x1b4] sm:$0xf]
  %v81 = vld [vmem:[%s0 + $0x1b8] sm:$0xff]
  %v82 = vld [vmem:[%s0 + $0x1c0] sm:$0xff]
  %v83 = vld [vmem:[%s0 + $0x1c8] sm:$0xf]
  %v84 = vld [vmem:[%s0 + $0x1cc] sm:$0xff]
  %v85 = vld [vmem:[%s0 + $0x1d4] sm:$0xff]
  %v86 = vld [vmem:[%s0 + $0x1dc] sm:$0xf]
  %v87 = vld [vmem:[%s1] sm:$0xff]
  %v88 = vld [vmem:[%s1 + $0x8] sm:$0xff]
  %v89 = vld [vmem:[%s1 + $0x10] sm:$0xff]
  %v90 = vld [vmem:[%s1 + $0x18] sm:$0xff]
  %v91 = vld [vmem:[%s1 + $0x20] sm:$0xff]
  %v92 = vld [vmem:[%s1 + $0x28] sm:$0xff]
  %v93 = vld [vmem:[%s1 + $0x30] sm:$0xff]
  %v94 = vld [vmem:[%s1 + $0x38] sm:$0xff]
  %v95 = vld [vmem:[%s1 + $0x40] sm:$0xff]
  %v96 = vld [vmem:[%s1 + $0x48] sm:$0xff]
  %v97 = vld [vmem:[%s1 + $0x50] sm:$0xff]
  %v98 = vld [vmem:[%s1 + $0x58] sm:$0xff]
  %v99 = vld [vmem:[%s1 + $0x60] sm:$0xff]
  %v100 = vld [vmem:[%s1 + $0x68] sm:$0xff]
  %v101 = vld [vmem:[%s1 + $0x70] sm:$0xff]
  %v102 = vld [vmem:[%s1 + $0x78] sm:$0xff]
  %v103 = vld [vmem:[%s1 + $0x80] sm:$0xff]
  %v104 = vld [vmem:[%s1 + $0x88] sm:$0xff]
  %v105 = vld [vmem:[%s1 + $0x90] sm:$0xff]
  %v106 = vld [vmem:[%s1 + $0x98] sm:$0xff]
  %v107 = vld [vmem:[%s1 + $0xa0] sm:$0xff]
  %v108 = vld [vmem:[%s1 + $0xa8] sm:$0xff]
  %v109 = vld [vmem:[%s1 + $0xb0] sm:$0xff]
  %v110 = vld [vmem:[%s1 + $0xb8] sm:$0xff]
  %v111 = vld [vmem:[%s1 + $0xc0] sm:$0xff]
  %v112 = vld [vmem:[%s1 + $0xc8] sm:$0xff]
  %v113 = vld [vmem:[%s1 + $0xd0] sm:$0xff]
  %v114 = vld [vmem:[%s1 + $0xd8] sm:$0xff]
  %v115 = vld [vmem:[%s1 + $0xe0] sm:$0xff]
  %v116 = vld [vmem:[%s1 + $0xe8] sm:$0xff]
  %v117 = vld [vmem:[%s1 + $0xf0] sm:$0xff]
  %v118 = vld [vmem:[%s1 + $0xf8] sm:$0xff]
  %v119 = vld [vmem:[%s1 + $0x100] sm:$0xff]
  %v120 = vld [vmem:[%s1 + $0x108] sm:$0xff]
  %v121 = vld [vmem:[%s1 + $0x110] sm:$0xff]
  %v122 = vld [vmem:[%s1 + $0x118] sm:$0xff]
  %v123 = vld [vmem:[%s1 + $0x120] sm:$0xff]
  %v124 = vld [vmem:[%s1 + $0x128] sm:$0xff]
  %v125 = vld [vmem:[%s1 + $0x130] sm:$0xff]
  %v126 = vld [vmem:[%s1 + $0x138] sm:$0xff]
  %v127 = vld [vmem:[%s1 + $0x140] sm:$0xff]
  %v128 = vld [vmem:[%s1 + $0x148] sm:$0xff]
  %v129 = vld [vmem:[%s1 + $0x150] sm:$0xff]
  %v130 = vld [vmem:[%s1 + $0x158] sm:$0xff]
  %v131 = vld [vmem:[%s1 + $0x160] sm:$0xff]
  %v132 = vld [vmem:[%s1 + $0x168] sm:$0xff]
  %v133 = vld [vmem:[%s1 + $0x170] sm:$0xff]
  %v134 = vld [vmem:[%s1 + $0x178] sm:$0xff]
  %v135 = vld [vmem:[%s1 + $0x180] sm:$0xff]
  %v136 = vld [vmem:[%s1 + $0x188] sm:$0xff]
  %v137 = vld [vmem:[%s1 + $0x190] sm:$0xff]
  %v138 = vld [vmem:[%s1 + $0x198] sm:$0xff]
  %v139 = vld [vmem:[%s1 + $0x1a0] sm:$0xff]
  %v140 = vld [vmem:[%s1 + $0x1a8] sm:$0xff]
  %v141 = vld [vmem:[%s1 + $0x1b0] sm:$0xff]
  %v142 = vld [vmem:[%s1 + $0x1b8] sm:$0xff]
  %v143 = vld [vmem:[%s1 + $0x1c0] sm:$0xff]
  %v144 = vld [vmem:[%s1 + $0x1c8] sm:$0xff]
  %v145 = vld [vmem:[%s1 + $0x1d0] sm:$0xff]
  %v146 = vld [vmem:[%s1 + $0x1d8] sm:$0xff]
  %v147 = vld [vmem:[%s1 + $0x1e0] sm:$0xff]
  %v148 = vld [vmem:[%s1 + $0x1e8] sm:$0xff]
  %v149 = vld [vmem:[%s1 + $0x1f0] sm:$0xff]
  %v150 = vld [vmem:[%s1 + $0x1f8] sm:$0xff]
  %v151 = vld [vmem:[%s1 + $0x200] sm:$0xff]
  %v152 = vld [vmem:[%s1 + $0x208] sm:$0xff]
  %v153 = vld [vmem:[%s1 + $0x210] sm:$0xff]
  %v154 = vld [vmem:[%s1 + $0x218] sm:$0xff]
  %v155 = vld [vmem:[%s1 + $0x220] sm:$0xff]
  %v156 = vld [vmem:[%s1 + $0x228] sm:$0xff]
  %v157 = vld [vmem:[%s1 + $0x230] sm:$0xff]
  %v158 = vld [vmem:[%s1 + $0x238] sm:$0xff]
  %v159 = vld [vmem:[%s1 + $0x240] sm:$0xff]
  %v160 = vld [vmem:[%s1 + $0x248] sm:$0xff]
  %v161 = vld [vmem:[%s1 + $0x250] sm:$0xff]
  %v162 = vld [vmem:[%s1 + $0x258] sm:$0xff]
  %v163 = vld [vmem:[%s1 + $0x260] sm:$0xff]
  %v164 = vld [vmem:[%s1 + $0x268] sm:$0xff]
  %v165 = vld [vmem:[%s1 + $0x270] sm:$0xff]
  %v166 = vld [vmem:[%s1 + $0x278] sm:$0xff]
  %v167 = vld [vmem:[%s2] sm:$0x3]
  %v169 = vlaneseq
  %v170 = vshrl.u32 %v169, 7
  %v171 = vsub.s32 0, %v170
  %v172 = vrot.slane %v167, %v171
  %v173 = vlaneseq
  %v174 = vshrl.u32 %v173, 7
  %v175 = vsub.s32 1, %v174
  %v176 = vrot.slane %v167, %v175
  %v251 = vunpack.c.l.b16 %v15
  %v252 = vunpack.c.h.b16 %v15
  %v253 = vunpack.c.l.b16 %v16
  %v254 = vunpack.c.h.b16 %v16
  %v255 = vunpack.c.l.b16 %v17
  %v256 = vunpack.c.l.b16 %v18
  %v257 = vunpack.c.h.b16 %v18
  %v258 = vunpack.c.l.b16 %v19
  %v259 = vunpack.c.h.b16 %v19
  %v260 = vunpack.c.l.b16 %v20
  %v261 = vunpack.c.l.b16 %v21
  %v262 = vunpack.c.h.b16 %v21
  %v263 = vunpack.c.l.b16 %v22
  %v264 = vunpack.c.h.b16 %v22
  %v265 = vunpack.c.l.b16 %v23
  %v266 = vunpack.c.l.b16 %v24
  %v267 = vunpack.c.h.b16 %v24
  %v268 = vunpack.c.l.b16 %v25
  %v269 = vunpack.c.h.b16 %v25
  %v270 = vunpack.c.l.b16 %v26
  %v271 = vunpack.c.l.b16 %v27
  %v272 = vunpack.c.h.b16 %v27
  %v273 = vunpack.c.l.b16 %v28
  %v274 = vunpack.c.h.b16 %v28
  %v275 = vunpack.c.l.b16 %v29
  %v276 = vunpack.c.l.b16 %v30
  %v277 = vunpack.c.h.b16 %v30
  %v278 = vunpack.c.l.b16 %v31
  %v279 = vunpack.c.h.b16 %v31
  %v280 = vunpack.c.l.b16 %v32
  %v281 = vunpack.c.l.b16 %v33
  %v282 = vunpack.c.h.b16 %v33
  %v283 = vunpack.c.l.b16 %v34
  %v284 = vunpack.c.h.b16 %v34
  %v285 = vunpack.c.l.b16 %v35
  %v286 = vunpack.c.l.b16 %v36
  %v287 = vunpack.c.h.b16 %v36
  %v288 = vunpack.c.l.b16 %v37
  %v289 = vunpack.c.h.b16 %v37
  %v290 = vunpack.c.l.b16 %v38
  %v291 = vunpack.c.l.b16 %v39
  %v292 = vunpack.c.h.b16 %v39
  %v293 = vunpack.c.l.b16 %v40
  %v294 = vunpack.c.h.b16 %v40
  %v295 = vunpack.c.l.b16 %v41
  %v296 = vunpack.c.l.b16 %v42
  %v297 = vunpack.c.h.b16 %v42
  %v298 = vunpack.c.l.b16 %v43
  %v299 = vunpack.c.h.b16 %v43
  %v300 = vunpack.c.l.b16 %v44
  %v301 = vunpack.c.l.b16 %v45
  %v302 = vunpack.c.h.b16 %v45
  %v303 = vunpack.c.l.b16 %v46
  %v304 = vunpack.c.h.b16 %v46
  %v305 = vunpack.c.l.b16 %v47
  %v306 = vunpack.c.l.b16 %v48
  %v307 = vunpack.c.h.b16 %v48
  %v308 = vunpack.c.l.b16 %v49
  %v309 = vunpack.c.h.b16 %v49
  %v310 = vunpack.c.l.b16 %v50
  %v311 = vunpack.c.l.b16 %v51
  %v312 = vunpack.c.h.b16 %v51
  %v313 = vunpack.c.l.b16 %v52
  %v314 = vunpack.c.h.b16 %v52
  %v315 = vunpack.c.l.b16 %v53
  %v316 = vunpack.c.l.b16 %v54
  %v317 = vunpack.c.h.b16 %v54
  %v318 = vunpack.c.l.b16 %v55
  %v319 = vunpack.c.h.b16 %v55
  %v320 = vunpack.c.l.b16 %v56
  %v321 = vunpack.c.l.b16 %v57
  %v322 = vunpack.c.h.b16 %v57
  %v323 = vunpack.c.l.b16 %v58
  %v324 = vunpack.c.h.b16 %v58
  %v325 = vunpack.c.l.b16 %v59
  %v326 = vunpack.c.l.b16 %v60
  %v327 = vunpack.c.h.b16 %v60
  %v328 = vunpack.c.l.b16 %v61
  %v329 = vunpack.c.h.b16 %v61
  %v330 = vunpack.c.l.b16 %v62
  %v331 = vunpack.c.l.b16 %v63
  %v332 = vunpack.c.h.b16 %v63
  %v333 = vunpack.c.l.b16 %v64
  %v334 = vunpack.c.h.b16 %v64
  %v335 = vunpack.c.l.b16 %v65
  %v336 = vunpack.c.l.b16 %v66
  %v337 = vunpack.c.h.b16 %v66
  %v338 = vunpack.c.l.b16 %v67
  %v339 = vunpack.c.h.b16 %v67
  %v340 = vunpack.c.l.b16 %v68
  %v341 = vunpack.c.l.b16 %v69
  %v342 = vunpack.c.h.b16 %v69
  %v343 = vunpack.c.l.b16 %v70
  %v344 = vunpack.c.h.b16 %v70
  %v345 = vunpack.c.l.b16 %v71
  %v346 = vunpack.c.l.b16 %v72
  %v347 = vunpack.c.h.b16 %v72
  %v348 = vunpack.c.l.b16 %v73
  %v349 = vunpack.c.h.b16 %v73
  %v350 = vunpack.c.l.b16 %v74
  %v351 = vunpack.c.l.b16 %v75
  %v352 = vunpack.c.h.b16 %v75
  %v353 = vunpack.c.l.b16 %v76
  %v354 = vunpack.c.h.b16 %v76
  %v355 = vunpack.c.l.b16 %v77
  %v356 = vunpack.c.l.b16 %v78
  %v357 = vunpack.c.h.b16 %v78
  %v358 = vunpack.c.l.b16 %v79
  %v359 = vunpack.c.h.b16 %v79
  %v360 = vunpack.c.l.b16 %v80
  %v361 = vunpack.c.l.b16 %v81
  %v362 = vunpack.c.h.b16 %v81
  %v363 = vunpack.c.l.b16 %v82
  %v364 = vunpack.c.h.b16 %v82
  %v365 = vunpack.c.l.b16 %v83
  %v366 = vunpack.c.l.b16 %v84
  %v367 = vunpack.c.h.b16 %v84
  %v368 = vunpack.c.l.b16 %v85
  %v369 = vunpack.c.h.b16 %v85
  %v370 = vunpack.c.l.b16 %v86
  %v371 = vpack.c.b16 %v256, %v251
  %v372 = vpack.c.b16 %v257, %v252
  %v373 = vpack.c.b16 %v258, %v253
  %v374 = vpack.c.b16 %v259, %v254
  %v375 = vpack.c.b16 %v260, %v255
  %v376 = vpack.c.b16 %v266, %v261
  %v377 = vpack.c.b16 %v267, %v262
  %v378 = vpack.c.b16 %v268, %v263
  %v379 = vpack.c.b16 %v269, %v264
  %v380 = vpack.c.b16 %v270, %v265
  %v381 = vpack.c.b16 %v276, %v271
  %v382 = vpack.c.b16 %v277, %v272
  %v383 = vpack.c.b16 %v278, %v273
  %v384 = vpack.c.b16 %v279, %v274
  %v385 = vpack.c.b16 %v280, %v275
  %v386 = vpack.c.b16 %v286, %v281
  %v387 = vpack.c.b16 %v287, %v282
  %v388 = vpack.c.b16 %v288, %v283
  %v389 = vpack.c.b16 %v289, %v284
  %v390 = vpack.c.b16 %v290, %v285
  %v391 = vpack.c.b16 %v296, %v291
  %v392 = vpack.c.b16 %v297, %v292
  %v393 = vpack.c.b16 %v298, %v293
  %v394 = vpack.c.b16 %v299, %v294
  %v395 = vpack.c.b16 %v300, %v295
  %v396 = vpack.c.b16 %v306, %v301
  %v397 = vpack.c.b16 %v307, %v302
  %v398 = vpack.c.b16 %v308, %v303
  %v399 = vpack.c.b16 %v309, %v304
  %v400 = vpack.c.b16 %v310, %v305
  %v401 = vpack.c.b16 %v316, %v311
  %v402 = vpack.c.b16 %v317, %v312
  %v403 = vpack.c.b16 %v318, %v313
  %v404 = vpack.c.b16 %v319, %v314
  %v405 = vpack.c.b16 %v320, %v315
  %v406 = vpack.c.b16 %v326, %v321
  %v407 = vpack.c.b16 %v327, %v322
  %v408 = vpack.c.b16 %v328, %v323
  %v409 = vpack.c.b16 %v329, %v324
  %v410 = vpack.c.b16 %v330, %v325
  %v411 = vpack.c.b16 %v336, %v331
  %v412 = vpack.c.b16 %v337, %v332
  %v413 = vpack.c.b16 %v338, %v333
  %v414 = vpack.c.b16 %v339, %v334
  %v415 = vpack.c.b16 %v340, %v335
  %v416 = vpack.c.b16 %v346, %v341
  %v417 = vpack.c.b16 %v347, %v342
  %v418 = vpack.c.b16 %v348, %v343
  %v419 = vpack.c.b16 %v349, %v344
  %v420 = vpack.c.b16 %v350, %v345
  %v421 = vpack.c.b16 %v356, %v351
  %v422 = vpack.c.b16 %v357, %v352
  %v423 = vpack.c.b16 %v358, %v353
  %v424 = vpack.c.b16 %v359, %v354
  %v425 = vpack.c.b16 %v360, %v355
  %v426 = vpack.c.b16 %v366, %v361
  %v427 = vpack.c.b16 %v367, %v362
  %v428 = vpack.c.b16 %v368, %v363
  %v429 = vpack.c.b16 %v369, %v364
  %v430 = vpack.c.b16 %v370, %v365
  %v571 = vunpack.c.l.b16 %v87
  %v572 = vunpack.c.h.b16 %v87
  %v573 = vunpack.c.l.b16 %v88
  %v574 = vunpack.c.h.b16 %v88
  %v575 = vunpack.c.l.b16 %v89
  %v576 = vunpack.c.h.b16 %v89
  %v577 = vunpack.c.l.b16 %v90
  %v578 = vunpack.c.h.b16 %v90
  %v579 = vunpack.c.l.b16 %v91
  %v580 = vunpack.c.h.b16 %v91
  %v581 = vunpack.c.l.b16 %v92
  %v582 = vunpack.c.h.b16 %v92
  %v583 = vunpack.c.l.b16 %v93
  %v584 = vunpack.c.h.b16 %v93
  %v585 = vunpack.c.l.b16 %v94
  %v586 = vunpack.c.h.b16 %v94
  %v587 = vunpack.c.l.b16 %v95
  %v588 = vunpack.c.h.b16 %v95
  %v589 = vunpack.c.l.b16 %v96
  %v590 = vunpack.c.h.b16 %v96
  %v591 = vunpack.c.l.b16 %v97
  %v592 = vunpack.c.h.b16 %v97
  %v593 = vunpack.c.l.b16 %v98
  %v594 = vunpack.c.h.b16 %v98
  %v595 = vunpack.c.l.b16 %v99
  %v596 = vunpack.c.h.b16 %v99
  %v597 = vunpack.c.l.b16 %v100
  %v598 = vunpack.c.h.b16 %v100
  %v599 = vunpack.c.l.b16 %v101
  %v600 = vunpack.c.h.b16 %v101
  %v601 = vunpack.c.l.b16 %v102
  %v602 = vunpack.c.h.b16 %v102
  %v603 = vunpack.c.l.b16 %v103
  %v604 = vunpack.c.h.b16 %v103
  %v605 = vunpack.c.l.b16 %v104
  %v606 = vunpack.c.h.b16 %v104
  %v607 = vunpack.c.l.b16 %v105
  %v608 = vunpack.c.h.b16 %v105
  %v609 = vunpack.c.l.b16 %v106
  %v610 = vunpack.c.h.b16 %v106
  %v611 = vunpack.c.l.b16 %v107
  %v612 = vunpack.c.h.b16 %v107
  %v613 = vunpack.c.l.b16 %v108
  %v614 = vunpack.c.h.b16 %v108
  %v615 = vunpack.c.l.b16 %v109
  %v616 = vunpack.c.h.b16 %v109
  %v617 = vunpack.c.l.b16 %v110
  %v618 = vunpack.c.h.b16 %v110
  %v619 = vunpack.c.l.b16 %v111
  %v620 = vunpack.c.h.b16 %v111
  %v621 = vunpack.c.l.b16 %v112
  %v622 = vunpack.c.h.b16 %v112
  %v623 = vunpack.c.l.b16 %v113
  %v624 = vunpack.c.h.b16 %v113
  %v625 = vunpack.c.l.b16 %v114
  %v626 = vunpack.c.h.b16 %v114
  %v627 = vunpack.c.l.b16 %v115
  %v628 = vunpack.c.h.b16 %v115
  %v629 = vunpack.c.l.b16 %v116
  %v630 = vunpack.c.h.b16 %v116
  %v631 = vunpack.c.l.b16 %v117
  %v632 = vunpack.c.h.b16 %v117
  %v633 = vunpack.c.l.b16 %v118
  %v634 = vunpack.c.h.b16 %v118
  %v635 = vunpack.c.l.b16 %v119
  %v636 = vunpack.c.h.b16 %v119
  %v637 = vunpack.c.l.b16 %v120
  %v638 = vunpack.c.h.b16 %v120
  %v639 = vunpack.c.l.b16 %v121
  %v640 = vunpack.c.h.b16 %v121
  %v641 = vunpack.c.l.b16 %v122
  %v642 = vunpack.c.h.b16 %v122
  %v643 = vunpack.c.l.b16 %v123
  %v644 = vunpack.c.h.b16 %v123
  %v645 = vunpack.c.l.b16 %v124
  %v646 = vunpack.c.h.b16 %v124
  %v647 = vunpack.c.l.b16 %v125
  %v648 = vunpack.c.h.b16 %v125
  %v649 = vunpack.c.l.b16 %v126
  %v650 = vunpack.c.h.b16 %v126
  %v651 = vunpack.c.l.b16 %v127
  %v652 = vunpack.c.h.b16 %v127
  %v653 = vunpack.c.l.b16 %v128
  %v654 = vunpack.c.h.b16 %v128
  %v655 = vunpack.c.l.b16 %v129
  %v656 = vunpack.c.h.b16 %v129
  %v657 = vunpack.c.l.b16 %v130
  %v658 = vunpack.c.h.b16 %v130
  %v659 = vunpack.c.l.b16 %v131
  %v660 = vunpack.c.h.b16 %v131
  %v661 = vunpack.c.l.b16 %v132
  %v662 = vunpack.c.h.b16 %v132
  %v663 = vunpack.c.l.b16 %v133
  %v664 = vunpack.c.h.b16 %v133
  %v665 = vunpack.c.l.b16 %v134
  %v666 = vunpack.c.h.b16 %v134
  %v667 = vunpack.c.l.b16 %v135
  %v668 = vunpack.c.h.b16 %v135
  %v669 = vunpack.c.l.b16 %v136
  %v670 = vunpack.c.h.b16 %v136
  %v671 = vunpack.c.l.b16 %v137
  %v672 = vunpack.c.h.b16 %v137
  %v673 = vunpack.c.l.b16 %v138
  %v674 = vunpack.c.h.b16 %v138
  %v675 = vunpack.c.l.b16 %v139
  %v676 = vunpack.c.h.b16 %v139
  %v677 = vunpack.c.l.b16 %v140
  %v678 = vunpack.c.h.b16 %v140
  %v679 = vunpack.c.l.b16 %v141
  %v680 = vunpack.c.h.b16 %v141
  %v681 = vunpack.c.l.b16 %v142
  %v682 = vunpack.c.h.b16 %v142
  %v683 = vunpack.c.l.b16 %v143
  %v684 = vunpack.c.h.b16 %v143
  %v685 = vunpack.c.l.b16 %v144
  %v686 = vunpack.c.h.b16 %v144
  %v687 = vunpack.c.l.b16 %v145
  %v688 = vunpack.c.h.b16 %v145
  %v689 = vunpack.c.l.b16 %v146
  %v690 = vunpack.c.h.b16 %v146
  %v691 = vunpack.c.l.b16 %v147
  %v692 = vunpack.c.h.b16 %v147
  %v693 = vunpack.c.l.b16 %v148
  %v694 = vunpack.c.h.b16 %v148
  %v695 = vunpack.c.l.b16 %v149
  %v696 = vunpack.c.h.b16 %v149
  %v697 = vunpack.c.l.b16 %v150
  %v698 = vunpack.c.h.b16 %v150
  %v699 = vunpack.c.l.b16 %v151
  %v700 = vunpack.c.h.b16 %v151
  %v701 = vunpack.c.l.b16 %v152
  %v702 = vunpack.c.h.b16 %v152
  %v703 = vunpack.c.l.b16 %v153
  %v704 = vunpack.c.h.b16 %v153
  %v705 = vunpack.c.l.b16 %v154
  %v706 = vunpack.c.h.b16 %v154
  %v707 = vunpack.c.l.b16 %v155
  %v708 = vunpack.c.h.b16 %v155
  %v709 = vunpack.c.l.b16 %v156
  %v710 = vunpack.c.h.b16 %v156
  %v711 = vunpack.c.l.b16 %v157
  %v712 = vunpack.c.h.b16 %v157
  %v713 = vunpack.c.l.b16 %v158
  %v714 = vunpack.c.h.b16 %v158
  %v715 = vunpack.c.l.b16 %v159
  %v716 = vunpack.c.h.b16 %v159
  %v717 = vunpack.c.l.b16 %v160
  %v718 = vunpack.c.h.b16 %v160
  %v719 = vunpack.c.l.b16 %v161
  %v720 = vunpack.c.h.b16 %v161
  %v721 = vunpack.c.l.b16 %v162
  %v722 = vunpack.c.h.b16 %v162
  %v723 = vunpack.c.l.b16 %v163
  %v724 = vunpack.c.h.b16 %v163
  %v725 = vunpack.c.l.b16 %v164
  %v726 = vunpack.c.h.b16 %v164
  %v727 = vunpack.c.l.b16 %v165
  %v728 = vunpack.c.h.b16 %v165
  %v729 = vunpack.c.l.b16 %v166
  %v730 = vunpack.c.h.b16 %v166
  %v731 = vpack.c.b16 %v573, %v571
  %v732 = vpack.c.b16 %v574, %v572
  %v733 = vpack.c.b16 %v577, %v575
  %v734 = vpack.c.b16 %v578, %v576
  %v735 = vpack.c.b16 %v581, %v579
  %v736 = vpack.c.b16 %v582, %v580
  %v737 = vpack.c.b16 %v585, %v583
  %v738 = vpack.c.b16 %v586, %v584
  %v739 = vpack.c.b16 %v589, %v587
  %v740 = vpack.c.b16 %v590, %v588
  %v741 = vpack.c.b16 %v593, %v591
  %v742 = vpack.c.b16 %v594, %v592
  %v743 = vpack.c.b16 %v597, %v595
  %v744 = vpack.c.b16 %v598, %v596
  %v745 = vpack.c.b16 %v601, %v599
  %v746 = vpack.c.b16 %v602, %v600
  %v747 = vpack.c.b16 %v605, %v603
  %v748 = vpack.c.b16 %v606, %v604
  %v749 = vpack.c.b16 %v609, %v607
  %v750 = vpack.c.b16 %v610, %v608
  %v751 = vpack.c.b16 %v613, %v611
  %v752 = vpack.c.b16 %v614, %v612
  %v753 = vpack.c.b16 %v617, %v615
  %v754 = vpack.c.b16 %v618, %v616
  %v755 = vpack.c.b16 %v621, %v619
  %v756 = vpack.c.b16 %v622, %v620
  %v757 = vpack.c.b16 %v625, %v623
  %v758 = vpack.c.b16 %v626, %v624
  %v759 = vpack.c.b16 %v629, %v627
  %v760 = vpack.c.b16 %v630, %v628
  %v761 = vpack.c.b16 %v633, %v631
  %v762 = vpack.c.b16 %v634, %v632
  %v763 = vpack.c.b16 %v637, %v635
  %v764 = vpack.c.b16 %v638, %v636
  %v765 = vpack.c.b16 %v641, %v639
  %v766 = vpack.c.b16 %v642, %v640
  %v767 = vpack.c.b16 %v645, %v643
  %v768 = vpack.c.b16 %v646, %v644
  %v769 = vpack.c.b16 %v649, %v647
  %v770 = vpack.c.b16 %v650, %v648
  %v771 = vpack.c.b16 %v653, %v651
  %v772 = vpack.c.b16 %v654, %v652
  %v773 = vpack.c.b16 %v657, %v655
  %v774 = vpack.c.b16 %v658, %v656
  %v775 = vpack.c.b16 %v661, %v659
  %v776 = vpack.c.b16 %v662, %v660
  %v777 = vpack.c.b16 %v665, %v663
  %v778 = vpack.c.b16 %v666, %v664
  %v779 = vpack.c.b16 %v669, %v667
  %v780 = vpack.c.b16 %v670, %v668
  %v781 = vpack.c.b16 %v673, %v671
  %v782 = vpack.c.b16 %v674, %v672
  %v783 = vpack.c.b16 %v677, %v675
  %v784 = vpack.c.b16 %v678, %v676
  %v785 = vpack.c.b16 %v681, %v679
  %v786 = vpack.c.b16 %v682, %v680
  %v787 = vpack.c.b16 %v685, %v683
  %v788 = vpack.c.b16 %v686, %v684
  %v789 = vpack.c.b16 %v689, %v687
  %v790 = vpack.c.b16 %v690, %v688
  %v791 = vpack.c.b16 %v693, %v691
  %v792 = vpack.c.b16 %v694, %v692
  %v793 = vpack.c.b16 %v697, %v695
  %v794 = vpack.c.b16 %v698, %v696
  %v795 = vpack.c.b16 %v701, %v699
  %v796 = vpack.c.b16 %v702, %v700
  %v797 = vpack.c.b16 %v705, %v703
  %v798 = vpack.c.b16 %v706, %v704
  %v799 = vpack.c.b16 %v709, %v707
  %v800 = vpack.c.b16 %v710, %v708
  %v801 = vpack.c.b16 %v713, %v711
  %v802 = vpack.c.b16 %v714, %v712
  %v803 = vpack.c.b16 %v717, %v715
  %v804 = vpack.c.b16 %v718, %v716
  %v805 = vpack.c.b16 %v721, %v719
  %v806 = vpack.c.b16 %v722, %v720
  %v807 = vpack.c.b16 %v725, %v723
  %v808 = vpack.c.b16 %v726, %v724
  %v809 = vpack.c.b16 %v729, %v727
  %v810 = vpack.c.b16 %v730, %v728
  %891 = vmatprep.subr.bf16.mxu0 %v732
  %892 = vmatpush1.bf16.msra.mxu0 %v731
  %893 = vmatprep.subr.bf16.mxu0 %v734
  %894 = vmatpush1.bf16.msra.mxu0 %v733
  %895 = vmatprep.subr.bf16.mxu0 %v736
  %896 = vmatpush1.bf16.msra.mxu0 %v735
  %897 = vmatprep.subr.bf16.mxu0 %v738
  %898 = vmatpush1.bf16.msra.mxu0 %v737
  %899 = vmatprep.subr.bf16.mxu0 %v740
  %900 = vmatpush1.bf16.msra.mxu0 %v739
  %901 = vmatprep.subr.bf16.mxu0 %v742
  %902 = vmatpush1.bf16.msra.mxu0 %v741
  %903 = vmatprep.subr.bf16.mxu0 %v744
  %904 = vmatpush1.bf16.msra.mxu0 %v743
  %905 = vmatprep.subr.bf16.mxu0 %v746
  %906 = vmatpush1.bf16.msra.mxu0 %v745
  %907 = vmatprep.subr.bf16.mxu0 %v748
  %908 = vmatpush1.bf16.msra.mxu0 %v747
  %909 = vmatprep.subr.bf16.mxu0 %v750
  %910 = vmatpush1.bf16.msra.mxu0 %v749
  %911 = vmatprep.subr.bf16.mxu0 %v752
  %912 = vmatpush1.bf16.msra.mxu0 %v751
  %913 = vmatprep.subr.bf16.mxu0 %v754
  %914 = vmatpush1.bf16.msra.mxu0 %v753
  %915 = vmatprep.subr.bf16.mxu0 %v756
  %916 = vmatpush1.bf16.msra.mxu0 %v755
  %917 = vmatprep.subr.bf16.mxu0 %v758
  %918 = vmatpush1.bf16.msra.mxu0 %v757
  %919 = vmatprep.subr.bf16.mxu0 %v760
  %920 = vmatpush1.bf16.msra.mxu0 %v759
  %921 = vmatprep.subr.bf16.mxu0 %v762
  %922 = vmatpush1.bf16.msra.mxu0 %v761
  %923 = vmatprep.mubr.bf16.mxu0 %v372
  %924 = vmatmul.mubr.bf16.gmra.mrb[0].mxu0 %v371
  %v925 = vpop.f32.mrb[0].mxu0
  %v926 = vadd.f32 %v172, %v925
  %v927 = vpop.f32.mrb[0].mxu0
  %v928 = vadd.f32 %v176, %v927
  %v929 = vpop.f32.mrb[0].mxu0
  %v930 = vadd.f32 %v172, %v929
  %v931 = vpop.f32.mrb[0].mxu0
  %v932 = vadd.f32 %v176, %v931
  %933 = vmatprep.mubr.bf16.mxu0 %v377
  %934 = vmatmul.mubr.bf16.gmra.mrb[0].mxu0 %v376
  %v935 = vpop.f32.mrb[0].mxu0
  %v936 = vadd.f32 %v172, %v935
  %v937 = vpop.f32.mrb[0].mxu0
  %v938 = vadd.f32 %v176, %v937
  %v939 = vpop.f32.mrb[0].mxu0
  %v940 = vadd.f32 %v172, %v939
  %v941 = vpop.f32.mrb[0].mxu0
  %v942 = vadd.f32 %v176, %v941
  %943 = vmatprep.mubr.bf16.mxu0 %v382
  %944 = vmatmul.mubr.bf16.gmra.mrb[0].mxu0 %v381
  %v945 = vpop.f32.mrb[0].mxu0
  %v946 = vadd.f32 %v172, %v945
  %v947 = vpop.f32.mrb[0].mxu0
  %v948 = vadd.f32 %v176, %v947
  %v949 = vpop.f32.mrb[0].mxu0
  %v950 = vadd.f32 %v172, %v949
  %v951 = vpop.f32.mrb[0].mxu0
  %v952 = vadd.f32 %v176, %v951
  %953 = vmatprep.mubr.bf16.mxu0 %v387
  %954 = vmatmul.mubr.bf16.gmra.mrb[0].mxu0 %v386
  %v955 = vpop.f32.mrb[0].mxu0
  %v956 = vadd.f32 %v172, %v955
  %v957 = vpop.f32.mrb[0].mxu0
  %v958 = vadd.f32 %v176, %v957
  %v959 = vpop.f32.mrb[0].mxu0
  %v960 = vadd.f32 %v172, %v959
  %v961 = vpop.f32.mrb[0].mxu0
  %v962 = vadd.f32 %v176, %v961
  %963 = vmatprep.mubr.bf16.mxu0 %v392
  %964 = vmatmul.mubr.bf16.gmra.mrb[0].mxu0 %v391
  %v965 = vpop.f32.mrb[0].mxu0
  %v966 = vadd.f32 %v172, %v965
  %v967 = vpop.f32.mrb[0].mxu0
  %v968 = vadd.f32 %v176, %v967
  %v969 = vpop.f32.mrb[0].mxu0
  %v970 = vadd.f32 %v172, %v969
  %v971 = vpop.f32.mrb[0].mxu0
  %v972 = vadd.f32 %v176, %v971
  %973 = vmatprep.mubr.bf16.mxu0 %v397
  %974 = vmatmul.mubr.bf16.gmra.mrb[0].mxu0 %v396
  %v975 = vpop.f32.mrb[0].mxu0
  %v976 = vadd.f32 %v172, %v975
  %v977 = vpop.f32.mrb[0].mxu0
  %v978 = vadd.f32 %v176, %v977
  %v979 = vpop.f32.mrb[0].mxu0
  %v980 = vadd.f32 %v172, %v979
  %v981 = vpop.f32.mrb[0].mxu0
  %v982 = vadd.f32 %v176, %v981
  %983 = vmatprep.mubr.bf16.mxu0 %v402
  %984 = vmatmul.mubr.bf16.gmra.mrb[0].mxu0 %v401
  %v985 = vpop.f32.mrb[0].mxu0
  %v986 = vadd.f32 %v172, %v985
  %v987 = vpop.f32.mrb[0].mxu0
  %v988 = vadd.f32 %v176, %v987
  %v989 = vpop.f32.mrb[0].mxu0
  %v990 = vadd.f32 %v172, %v989
  %v991 = vpop.f32.mrb[0].mxu0
  %v992 = vadd.f32 %v176, %v991
  %993 = vmatprep.mubr.bf16.mxu0 %v407
  %994 = vmatmul.mubr.bf16.gmra.mrb[0].mxu0 %v406
  %v995 = vpop.f32.mrb[0].mxu0
  %v996 = vadd.f32 %v172, %v995
  %v997 = vpop.f32.mrb[0].mxu0
  %v998 = vadd.f32 %v176, %v997
  %v999 = vpop.f32.mrb[0].mxu0
  %v1000 = vadd.f32 %v172, %v999
  %v1001 = vpop.f32.mrb[0].mxu0
  %v1002 = vadd.f32 %v176, %v1001
  %1003 = vmatprep.mubr.bf16.mxu0 %v412
  %1004 = vmatmul.mubr.bf16.gmra.mrb[0].mxu0 %v411
  %v1005 = vpop.f32.mrb[0].mxu0
  %v1006 = vadd.f32 %v172, %v1005
  %v1007 = vpop.f32.mrb[0].mxu0
  %v1008 = vadd.f32 %v176, %v1007
  %v1009 = vpop.f32.mrb[0].mxu0
  %v1010 = vadd.f32 %v172, %v1009
  %v1011 = vpop.f32.mrb[0].mxu0
  %v1012 = vadd.f32 %v176, %v1011
  %1013 = vmatprep.mubr.bf16.mxu0 %v417
  %1014 = vmatmul.mubr.bf16.gmra.mrb[0].mxu0 %v416
  %v1015 = vpop.f32.mrb[0].mxu0
  %v1016 = vadd.f32 %v172, %v1015
  %v1017 = vpop.f32.mrb[0].mxu0
  %v1018 = vadd.f32 %v176, %v1017
  %v1019 = vpop.f32.mrb[0].mxu0
  %v1020 = vadd.f32 %v172, %v1019
  %v1021 = vpop.f32.mrb[0].mxu0
  %v1022 = vadd.f32 %v176, %v1021
  %1023 = vmatprep.mubr.bf16.mxu0 %v422
  %1024 = vmatmul.mubr.bf16.gmra.mrb[0].mxu0 %v421
  %v1025 = vpop.f32.mrb[0].mxu0
  %v1026 = vadd.f32 %v172, %v1025
  %v1027 = vpop.f32.mrb[0].mxu0
  %v1028 = vadd.f32 %v176, %v1027
  %v1029 = vpop.f32.mrb[0].mxu0
  %v1030 = vadd.f32 %v172, %v1029
  %v1031 = vpop.f32.mrb[0].mxu0
  %v1032 = vadd.f32 %v176, %v1031
  %1033 = vmatprep.mubr.bf16.mxu0 %v427
  %1034 = vmatmul.mubr.bf16.gmra.mrb[0].mxu0 %v426
  %v1035 = vpop.f32.mrb[0].mxu0
  %v1036 = vadd.f32 %v172, %v1035
  %v1037 = vpop.f32.mrb[0].mxu0
  %v1038 = vadd.f32 %v176, %v1037
  %v1039 = vpop.f32.mrb[0].mxu0
  %v1040 = vadd.f32 %v172, %v1039
  %v1041 = vpop.f32.mrb[0].mxu0
  %v1042 = vadd.f32 %v176, %v1041
  %1043 = vdwg.mxu0
  %1044 = vmatprep.subr.bf16.mxu0 %v764
  %1045 = vmatpush1.bf16.msra.mxu0 %v763
  %1046 = vmatprep.subr.bf16.mxu0 %v766
  %1047 = vmatpush1.bf16.msra.mxu0 %v765
  %1048 = vmatprep.subr.bf16.mxu0 %v768
  %1049 = vmatpush1.bf16.msra.mxu0 %v767
  %1050 = vmatprep.subr.bf16.mxu0 %v770
  %1051 = vmatpush1.bf16.msra.mxu0 %v769
  %1052 = vmatprep.subr.bf16.mxu0 %v772
  %1053 = vmatpush1.bf16.msra.mxu0 %v771
  %1054 = vmatprep.subr.bf16.mxu0 %v774
  %1055 = vmatpush1.bf16.msra.mxu0 %v773
  %1056 = vmatprep.subr.bf16.mxu0 %v776
  %1057 = vmatpush1.bf16.msra.mxu0 %v775
  %1058 = vmatprep.subr.bf16.mxu0 %v778
  %1059 = vmatpush1.bf16.msra.mxu0 %v777
  %1060 = vmatprep.subr.bf16.mxu0 %v780
  %1061 = vmatpush1.bf16.msra.mxu0 %v779
  %1062 = vmatprep.subr.bf16.mxu0 %v782
  %1063 = vmatpush1.bf16.msra.mxu0 %v781
  %1064 = vmatprep.subr.bf16.mxu0 %v784
  %1065 = vmatpush1.bf16.msra.mxu0 %v783
  %1066 = vmatprep.subr.bf16.mxu0 %v786
  %1067 = vmatpush1.bf16.msra.mxu0 %v785
  %1068 = vmatprep.subr.bf16.mxu0 %v788
  %1069 = vmatpush1.bf16.msra.mxu0 %v787
  %1070 = vmatprep.subr.bf16.mxu0 %v790
  %1071 = vmatpush1.bf16.msra.mxu0 %v789
  %1072 = vmatprep.subr.bf16.mxu0 %v792
  %1073 = vmatpush1.bf16.msra.mxu0 %v791
  %1074 = vmatprep.subr.bf16.mxu0 %v794
  %1075 = vmatpush1.bf16.msra.mxu0 %v793
  %1076 = vmatprep.mubr.bf16.mxu0 %v374
  %1077 = vmatmul.mubr.bf16.gmra.mrb[0].mxu0 %v373
  %v1078 = vpop.f32.mrb[0].mxu0
  %v1079 = vadd.f32 %v926, %v1078
  %v1080 = vpop.f32.mrb[0].mxu0
  %v1081 = vadd.f32 %v928, %v1080
  %v1082 = vpop.f32.mrb[0].mxu0
  %v1083 = vadd.f32 %v930, %v1082
  %v1084 = vpop.f32.mrb[0].mxu0
  %v1085 = vadd.f32 %v932, %v1084
  %1086 = vmatprep.mubr.bf16.mxu0 %v379
  %1087 = vmatmul.mubr.bf16.gmra.mrb[0].mxu0 %v378
  %v1088 = vpop.f32.mrb[0].mxu0
  %v1089 = vadd.f32 %v936, %v1088
  %v1090 = vpop.f32.mrb[0].mxu0
  %v1091 = vadd.f32 %v938, %v1090
  %v1092 = vpop.f32.mrb[0].mxu0
  %v1093 = vadd.f32 %v940, %v1092
  %v1094 = vpop.f32.mrb[0].mxu0
  %v1095 = vadd.f32 %v942, %v1094
  %1096 = vmatprep.mubr.bf16.mxu0 %v384
  %1097 = vmatmul.mubr.bf16.gmra.mrb[0].mxu0 %v383
  %v1098 = vpop.f32.mrb[0].mxu0
  %v1099 = vadd.f32 %v946, %v1098
  %v1100 = vpop.f32.mrb[0].mxu0
  %v1101 = vadd.f32 %v948, %v1100
  %v1102 = vpop.f32.mrb[0].mxu0
  %v1103 = vadd.f32 %v950, %v1102
  %v1104 = vpop.f32.mrb[0].mxu0
  %v1105 = vadd.f32 %v952, %v1104
  %1106 = vmatprep.mubr.bf16.mxu0 %v389
  %1107 = vmatmul.mubr.bf16.gmra.mrb[0].mxu0 %v388
  %v1108 = vpop.f32.mrb[0].mxu0
  %v1109 = vadd.f32 %v956, %v1108
  %v1110 = vpop.f32.mrb[0].mxu0
  %v1111 = vadd.f32 %v958, %v1110
  %v1112 = vpop.f32.mrb[0].mxu0
  %v1113 = vadd.f32 %v960, %v1112
  %v1114 = vpop.f32.mrb[0].mxu0
  %v1115 = vadd.f32 %v962, %v1114
  %1116 = vmatprep.mubr.bf16.mxu0 %v394
  %1117 = vmatmul.mubr.bf16.gmra.mrb[0].mxu0 %v393
  %v1118 = vpop.f32.mrb[0].mxu0
  %v1119 = vadd.f32 %v966, %v1118
  %v1120 = vpop.f32.mrb[0].mxu0
  %v1121 = vadd.f32 %v968, %v1120
  %v1122 = vpop.f32.mrb[0].mxu0
  %v1123 = vadd.f32 %v970, %v1122
  %v1124 = vpop.f32.mrb[0].mxu0
  %v1125 = vadd.f32 %v972, %v1124
  %1126 = vmatprep.mubr.bf16.mxu0 %v399
  %1127 = vmatmul.mubr.bf16.gmra.mrb[0].mxu0 %v398
  %v1128 = vpop.f32.mrb[0].mxu0
  %v1129 = vadd.f32 %v976, %v1128
  %v1130 = vpop.f32.mrb[0].mxu0
  %v1131 = vadd.f32 %v978, %v1130
  %v1132 = vpop.f32.mrb[0].mxu0
  %v1133 = vadd.f32 %v980, %v1132
  %v1134 = vpop.f32.mrb[0].mxu0
  %v1135 = vadd.f32 %v982, %v1134
  %1136 = vmatprep.mubr.bf16.mxu0 %v404
  %1137 = vmatmul.mubr.bf16.gmra.mrb[0].mxu0 %v403
  %v1138 = vpop.f32.mrb[0].mxu0
  %v1139 = vadd.f32 %v986, %v1138
  %v1140 = vpop.f32.mrb[0].mxu0
  %v1141 = vadd.f32 %v988, %v1140
  %v1142 = vpop.f32.mrb[0].mxu0
  %v1143 = vadd.f32 %v990, %v1142
  %v1144 = vpop.f32.mrb[0].mxu0
  %v1145 = vadd.f32 %v992, %v1144
  %1146 = vmatprep.mubr.bf16.mxu0 %v409
  %1147 = vmatmul.mubr.bf16.gmra.mrb[0].mxu0 %v408
  %v1148 = vpop.f32.mrb[0].mxu0
  %v1149 = vadd.f32 %v996, %v1148
  %v1150 = vpop.f32.mrb[0].mxu0
  %v1151 = vadd.f32 %v998, %v1150
  %v1152 = vpop.f32.mrb[0].mxu0
  %v1153 = vadd.f32 %v1000, %v1152
  %v1154 = vpop.f32.mrb[0].mxu0
  %v1155 = vadd.f32 %v1002, %v1154
  %1156 = vmatprep.mubr.bf16.mxu0 %v414
  %1157 = vmatmul.mubr.bf16.gmra.mrb[0].mxu0 %v413
  %v1158 = vpop.f32.mrb[0].mxu0
  %v1159 = vadd.f32 %v1006, %v1158
  %v1160 = vpop.f32.mrb[0].mxu0
  %v1161 = vadd.f32 %v1008, %v1160
  %v1162 = vpop.f32.mrb[0].mxu0
  %v1163 = vadd.f32 %v1010, %v1162
  %v1164 = vpop.f32.mrb[0].mxu0
  %v1165 = vadd.f32 %v1012, %v1164
  %1166 = vmatprep.mubr.bf16.mxu0 %v419
  %1167 = vmatmul.mubr.bf16.gmra.mrb[0].mxu0 %v418
  %v1168 = vpop.f32.mrb[0].mxu0
  %v1169 = vadd.f32 %v1016, %v1168
  %v1170 = vpop.f32.mrb[0].mxu0
  %v1171 = vadd.f32 %v1018, %v1170
  %v1172 = vpop.f32.mrb[0].mxu0
  %v1173 = vadd.f32 %v1020, %v1172
  %v1174 = vpop.f32.mrb[0].mxu0
  %v1175 = vadd.f32 %v1022, %v1174
  %1176 = vmatprep.mubr.bf16.mxu0 %v424
  %1177 = vmatmul.mubr.bf16.gmra.mrb[0].mxu0 %v423
  %v1178 = vpop.f32.mrb[0].mxu0
  %v1179 = vadd.f32 %v1026, %v1178
  %v1180 = vpop.f32.mrb[0].mxu0
  %v1181 = vadd.f32 %v1028, %v1180
  %v1182 = vpop.f32.mrb[0].mxu0
  %v1183 = vadd.f32 %v1030, %v1182
  %v1184 = vpop.f32.mrb[0].mxu0
  %v1185 = vadd.f32 %v1032, %v1184
  %1186 = vmatprep.mubr.bf16.mxu0 %v429
  %1187 = vmatmul.mubr.bf16.gmra.mrb[0].mxu0 %v428
  %v1188 = vpop.f32.mrb[0].mxu0
  %v1189 = vadd.f32 %v1036, %v1188
  %v1190 = vpop.f32.mrb[0].mxu0
  %v1191 = vadd.f32 %v1038, %v1190
  %v1192 = vpop.f32.mrb[0].mxu0
  %v1193 = vadd.f32 %v1040, %v1192
  %v1194 = vpop.f32.mrb[0].mxu0
  %v1195 = vadd.f32 %v1042, %v1194
  %1196 = vdwg.mxu0
  %1197 = vmatprep.subr.bf16.mxu0 %v796
  %1198 = vmatpush1.bf16.msra.mxu0 %v795
  %1199 = vmatprep.subr.bf16.mxu0 %v798
  %1200 = vmatpush1.bf16.msra.mxu0 %v797
  %1201 = vmatprep.subr.bf16.mxu0 %v800
  %1202 = vmatpush1.bf16.msra.mxu0 %v799
  %1203 = vmatprep.subr.bf16.mxu0 %v802
  %1204 = vmatpush1.bf16.msra.mxu0 %v801
  %1205 = vmatprep.subr.bf16.mxu0 %v804
  %1206 = vmatpush1.bf16.msra.mxu0 %v803
  %1207 = vmatprep.subr.bf16.mxu0 %v806
  %1208 = vmatpush1.bf16.msra.mxu0 %v805
  %1209 = vmatprep.subr.bf16.mxu0 %v808
  %1210 = vmatpush1.bf16.msra.mxu0 %v807
  %1211 = vmatprep.subr.bf16.mxu0 %v810
  %1212 = vmatpush1.bf16.msra.mxu0 %v809
  %1213 = vmatprep.subr.bf16.mxu0 0
  %1214 = vmatpush1.bf16.msra.mxu0 0
  %1215 = vmatprep.subr.bf16.mxu0 0
  %1216 = vmatpush1.bf16.msra.mxu0 0
  %1217 = vmatprep.subr.bf16.mxu0 0
  %1218 = vmatpush1.bf16.msra.mxu0 0
  %1219 = vmatprep.subr.bf16.mxu0 0
  %1220 = vmatpush1.bf16.msra.mxu0 0
  %1221 = vmatprep.subr.bf16.mxu0 0
  %1222 = vmatpush1.bf16.msra.mxu0 0
  %1223 = vmatprep.subr.bf16.mxu0 0
  %1224 = vmatpush1.bf16.msra.mxu0 0
  %1225 = vmatprep.subr.bf16.mxu0 0
  %1226 = vmatpush1.bf16.msra.mxu0 0
  %1227 = vmatprep.subr.bf16.mxu0 0
  %1228 = vmatpush1.bf16.msra.mxu0 0
  %1229 = vmatprep.mubr.bf16.mxu0 0
  %1230 = vmatmul.mubr.bf16.gmra.mrb[0].mxu0 %v375
  %v1231 = vpop.f32.mrb[0].mxu0
  %v1232 = vadd.f32 %v1079, %v1231
  %v1233 = vpop.f32.mrb[0].mxu0
  %v1234 = vadd.f32 %v1081, %v1233
  %v1235 = vpop.f32.mrb[0].mxu0
  %v1236 = vadd.f32 %v1083, %v1235
  %v1237 = vpop.f32.mrb[0].mxu0
  %v1238 = vadd.f32 %v1085, %v1237
  %1239 = vmatprep.mubr.bf16.mxu0 0
  %1240 = vmatmul.mubr.bf16.gmra.mrb[0].mxu0 %v380
  %v1241 = vpop.f32.mrb[0].mxu0
  %v1242 = vadd.f32 %v1089, %v1241
  %v1243 = vpop.f32.mrb[0].mxu0
  %v1244 = vadd.f32 %v1091, %v1243
  %v1245 = vpop.f32.mrb[0].mxu0
  %v1246 = vadd.f32 %v1093, %v1245
  %v1247 = vpop.f32.mrb[0].mxu0
  %v1248 = vadd.f32 %v1095, %v1247
  %1249 = vmatprep.mubr.bf16.mxu0 0
  %1250 = vmatmul.mubr.bf16.gmra.mrb[0].mxu0 %v385
  %v1251 = vpop.f32.mrb[0].mxu0
  %v1252 = vadd.f32 %v1099, %v1251
  %v1253 = vpop.f32.mrb[0].mxu0
  %v1254 = vadd.f32 %v1101, %v1253
  %v1255 = vpop.f32.mrb[0].mxu0
  %v1256 = vadd.f32 %v1103, %v1255
  %v1257 = vpop.f32.mrb[0].mxu0
  %v1258 = vadd.f32 %v1105, %v1257
  %1259 = vmatprep.mubr.bf16.mxu0 0
  %1260 = vmatmul.mubr.bf16.gmra.mrb[0].mxu0 %v390
  %v1261 = vpop.f32.mrb[0].mxu0
  %v1262 = vadd.f32 %v1109, %v1261
  %v1263 = vpop.f32.mrb[0].mxu0
  %v1264 = vadd.f32 %v1111, %v1263
  %v1265 = vpop.f32.mrb[0].mxu0
  %v1266 = vadd.f32 %v1113, %v1265
  %v1267 = vpop.f32.mrb[0].mxu0
  %v1268 = vadd.f32 %v1115, %v1267
  %1269 = vmatprep.mubr.bf16.mxu0 0
  %1270 = vmatmul.mubr.bf16.gmra.mrb[0].mxu0 %v395
  %v1271 = vpop.f32.mrb[0].mxu0
  %v1272 = vadd.f32 %v1119, %v1271
  %v1273 = vpop.f32.mrb[0].mxu0
  %v1274 = vadd.f32 %v1121, %v1273
  %v1275 = vpop.f32.mrb[0].mxu0
  %v1276 = vadd.f32 %v1123, %v1275
  %v1277 = vpop.f32.mrb[0].mxu0
  %v1278 = vadd.f32 %v1125, %v1277
  %1279 = vmatprep.mubr.bf16.mxu0 0
  %1280 = vmatmul.mubr.bf16.gmra.mrb[0].mxu0 %v400
  %v1281 = vpop.f32.mrb[0].mxu0
  %v1282 = vadd.f32 %v1129, %v1281
  %v1283 = vpop.f32.mrb[0].mxu0
  %v1284 = vadd.f32 %v1131, %v1283
  %v1285 = vpop.f32.mrb[0].mxu0
  %v1286 = vadd.f32 %v1133, %v1285
  %v1287 = vpop.f32.mrb[0].mxu0
  %v1288 = vadd.f32 %v1135, %v1287
  %1289 = vmatprep.mubr.bf16.mxu0 0
  %1290 = vmatmul.mubr.bf16.gmra.mrb[0].mxu0 %v405
  %v1291 = vpop.f32.mrb[0].mxu0
  %v1292 = vadd.f32 %v1139, %v1291
  %v1293 = vpop.f32.mrb[0].mxu0
  %v1294 = vadd.f32 %v1141, %v1293
  %v1295 = vpop.f32.mrb[0].mxu0
  %v1296 = vadd.f32 %v1143, %v1295
  %v1297 = vpop.f32.mrb[0].mxu0
  %v1298 = vadd.f32 %v1145, %v1297
  %1299 = vmatprep.mubr.bf16.mxu0 0
  %1300 = vmatmul.mubr.bf16.gmra.mrb[0].mxu0 %v410
  %v1301 = vpop.f32.mrb[0].mxu0
  %v1302 = vadd.f32 %v1149, %v1301
  %v1303 = vpop.f32.mrb[0].mxu0
  %v1304 = vadd.f32 %v1151, %v1303
  %v1305 = vpop.f32.mrb[0].mxu0
  %v1306 = vadd.f32 %v1153, %v1305
  %v1307 = vpop.f32.mrb[0].mxu0
  %v1308 = vadd.f32 %v1155, %v1307
  %1309 = vmatprep.mubr.bf16.mxu0 0
  %1310 = vmatmul.mubr.bf16.gmra.mrb[0].mxu0 %v415
  %v1311 = vpop.f32.mrb[0].mxu0
  %v1312 = vadd.f32 %v1159, %v1311
  %v1313 = vpop.f32.mrb[0].mxu0
  %v1314 = vadd.f32 %v1161, %v1313
  %v1315 = vpop.f32.mrb[0].mxu0
  %v1316 = vadd.f32 %v1163, %v1315
  %v1317 = vpop.f32.mrb[0].mxu0
  %v1318 = vadd.f32 %v1165, %v1317
  %1319 = vmatprep.mubr.bf16.mxu0 0
  %1320 = vmatmul.mubr.bf16.gmra.mrb[0].mxu0 %v420
  %v1321 = vpop.f32.mrb[0].mxu0
  %v1322 = vadd.f32 %v1169, %v1321
  %v1323 = vpop.f32.mrb[0].mxu0
  %v1324 = vadd.f32 %v1171, %v1323
  %v1325 = vpop.f32.mrb[0].mxu0
  %v1326 = vadd.f32 %v1173, %v1325
  %v1327 = vpop.f32.mrb[0].mxu0
  %v1328 = vadd.f32 %v1175, %v1327
  %1329 = vmatprep.mubr.bf16.mxu0 0
  %1330 = vmatmul.mubr.bf16.gmra.mrb[0].mxu0 %v425
  %v1331 = vpop.f32.mrb[0].mxu0
  %v1332 = vadd.f32 %v1179, %v1331
  %v1333 = vpop.f32.mrb[0].mxu0
  %v1334 = vadd.f32 %v1181, %v1333
  %v1335 = vpop.f32.mrb[0].mxu0
  %v1336 = vadd.f32 %v1183, %v1335
  %v1337 = vpop.f32.mrb[0].mxu0
  %v1338 = vadd.f32 %v1185, %v1337
  %1339 = vmatprep.mubr.bf16.mxu0 0
  %1340 = vmatmul.mubr.bf16.gmra.mrb[0].mxu0 %v430
  %v1341 = vpop.f32.mrb[0].mxu0
  %v1342 = vadd.f32 %v1189, %v1341
  %v1343 = vpop.f32.mrb[0].mxu0
  %v1344 = vadd.f32 %v1191, %v1343
  %v1345 = vpop.f32.mrb[0].mxu0
  %v1346 = vadd.f32 %v1193, %v1345
  %v1347 = vpop.f32.mrb[0].mxu0
  %v1348 = vadd.f32 %v1195, %v1347
  %1349 = vdwg.mxu0
  %vm1350 = vcmp.ge.f32.partialorder %v1232, 0.0
  %vm1351 = vcmp.ge.f32.partialorder %v1234, 0.0
  %vm1352 = vcmp.ge.f32.partialorder %v1236, 0.0
  %vm1353 = vcmp.ge.f32.partialorder %v1238, 0.0
  %vm1354 = vcmp.ge.f32.partialorder %v1242, 0.0
  %vm1355 = vcmp.ge.f32.partialorder %v1244, 0.0
  %vm1356 = vcmp.ge.f32.partialorder %v1246, 0.0
  %vm1357 = vcmp.ge.f32.partialorder %v1248, 0.0
  %vm1358 = vcmp.ge.f32.partialorder %v1252, 0.0
  %vm1359 = vcmp.ge.f32.partialorder %v1254, 0.0
  %vm1360 = vcmp.ge.f32.partialorder %v1256, 0.0
  %vm1361 = vcmp.ge.f32.partialorder %v1258, 0.0
  %vm1362 = vcmp.ge.f32.partialorder %v1262, 0.0
  %vm1363 = vcmp.ge.f32.partialorder %v1264, 0.0
  %vm1364 = vcmp.ge.f32.partialorder %v1266, 0.0
  %vm1365 = vcmp.ge.f32.partialorder %v1268, 0.0
  %vm1366 = vcmp.ge.f32.partialorder %v1272, 0.0
  %vm1367 = vcmp.ge.f32.partialorder %v1274, 0.0
  %vm1368 = vcmp.ge.f32.partialorder %v1276, 0.0
  %vm1369 = vcmp.ge.f32.partialorder %v1278, 0.0
  %vm1370 = vcmp.ge.f32.partialorder %v1282, 0.0
  %vm1371 = vcmp.ge.f32.partialorder %v1284, 0.0
  %vm1372 = vcmp.ge.f32.partialorder %v1286, 0.0
  %vm1373 = vcmp.ge.f32.partialorder %v1288, 0.0
  %vm1374 = vcmp.ge.f32.partialorder %v1292, 0.0
  %vm1375 = vcmp.ge.f32.partialorder %v1294, 0.0
  %vm1376 = vcmp.ge.f32.partialorder %v1296, 0.0
  %vm1377 = vcmp.ge.f32.partialorder %v1298, 0.0
  %vm1378 = vcmp.ge.f32.partialorder %v1302, 0.0
  %vm1379 = vcmp.ge.f32.partialorder %v1304, 0.0
  %vm1380 = vcmp.ge.f32.partialorder %v1306, 0.0
  %vm1381 = vcmp.ge.f32.partialorder %v1308, 0.0
  %vm1382 = vcmp.ge.f32.partialorder %v1312, 0.0
  %vm1383 = vcmp.ge.f32.partialorder %v1314, 0.0
  %vm1384 = vcmp.ge.f32.partialorder %v1316, 0.0
  %vm1385 = vcmp.ge.f32.partialorder %v1318, 0.0
  %vm1386 = vcmp.ge.f32.partialorder %v1322, 0.0
  %vm1387 = vcmp.ge.f32.partialorder %v1324, 0.0
  %vm1388 = vcmp.ge.f32.partialorder %v1326, 0.0
  %vm1389 = vcmp.ge.f32.partialorder %v1328, 0.0
  %vm1390 = vcmp.ge.f32.partialorder %v1332, 0.0
  %vm1391 = vcmp.ge.f32.partialorder %v1334, 0.0
  %vm1392 = vcmp.ge.f32.partialorder %v1336, 0.0
  %vm1393 = vcmp.ge.f32.partialorder %v1338, 0.0
  %vm1394 = vcmp.ge.f32.partialorder %v1342, 0.0
  %vm1395 = vcmp.ge.f32.partialorder %v1344, 0.0
  %vm1396 = vcmp.ge.f32.partialorder %v1346, 0.0
  %vm1397 = vcmp.ge.f32.partialorder %v1348, 0.0
  %v1398 = vmul.f32 %v1232, 0.01
  %v1399 = vmul.f32 %v1234, 0.01
  %v1400 = vmul.f32 %v1236, 0.01
  %v1401 = vmul.f32 %v1238, 0.01
  %v1402 = vmul.f32 %v1242, 0.01
  %v1403 = vmul.f32 %v1244, 0.01
  %v1404 = vmul.f32 %v1246, 0.01
  %v1405 = vmul.f32 %v1248, 0.01
  %v1406 = vmul.f32 %v1252, 0.01
  %v1407 = vmul.f32 %v1254, 0.01
  %v1408 = vmul.f32 %v1256, 0.01
  %v1409 = vmul.f32 %v1258, 0.01
  %v1410 = vmul.f32 %v1262, 0.01
  %v1411 = vmul.f32 %v1264, 0.01
  %v1412 = vmul.f32 %v1266, 0.01
  %v1413 = vmul.f32 %v1268, 0.01
  %v1414 = vmul.f32 %v1272, 0.01
  %v1415 = vmul.f32 %v1274, 0.01
  %v1416 = vmul.f32 %v1276, 0.01
  %v1417 = vmul.f32 %v1278, 0.01
  %v1418 = vmul.f32 %v1282, 0.01
  %v1419 = vmul.f32 %v1284, 0.01
  %v1420 = vmul.f32 %v1286, 0.01
  %v1421 = vmul.f32 %v1288, 0.01
  %v1422 = vmul.f32 %v1292, 0.01
  %v1423 = vmul.f32 %v1294, 0.01
  %v1424 = vmul.f32 %v1296, 0.01
  %v1425 = vmul.f32 %v1298, 0.01
  %v1426 = vmul.f32 %v1302, 0.01
  %v1427 = vmul.f32 %v1304, 0.01
  %v1428 = vmul.f32 %v1306, 0.01
  %v1429 = vmul.f32 %v1308, 0.01
  %v1430 = vmul.f32 %v1312, 0.01
  %v1431 = vmul.f32 %v1314, 0.01
  %v1432 = vmul.f32 %v1316, 0.01
  %v1433 = vmul.f32 %v1318, 0.01
  %v1434 = vmul.f32 %v1322, 0.01
  %v1435 = vmul.f32 %v1324, 0.01
  %v1436 = vmul.f32 %v1326, 0.01
  %v1437 = vmul.f32 %v1328, 0.01
  %v1438 = vmul.f32 %v1332, 0.01
  %v1439 = vmul.f32 %v1334, 0.01
  %v1440 = vmul.f32 %v1336, 0.01
  %v1441 = vmul.f32 %v1338, 0.01
  %v1442 = vmul.f32 %v1342, 0.01
  %v1443 = vmul.f32 %v1344, 0.01
  %v1444 = vmul.f32 %v1346, 0.01
  %v1445 = vmul.f32 %v1348, 0.01
  %v1446 = vsel %vm1350, %v1232, %v1398
  %v1447 = vsel %vm1351, %v1234, %v1399
  %v1448 = vsel %vm1352, %v1236, %v1400
  %v1449 = vsel %vm1353, %v1238, %v1401
  %v1450 = vsel %vm1354, %v1242, %v1402
  %v1451 = vsel %vm1355, %v1244, %v1403
  %v1452 = vsel %vm1356, %v1246, %v1404
  %v1453 = vsel %vm1357, %v1248, %v1405
  %v1454 = vsel %vm1358, %v1252, %v1406
  %v1455 = vsel %vm1359, %v1254, %v1407
  %v1456 = vsel %vm1360, %v1256, %v1408
  %v1457 = vsel %vm1361, %v1258, %v1409
  %v1458 = vsel %vm1362, %v1262, %v1410
  %v1459 = vsel %vm1363, %v1264, %v1411
  %v1460 = vsel %vm1364, %v1266, %v1412
  %v1461 = vsel %vm1365, %v1268, %v1413
  %v1462 = vsel %vm1366, %v1272, %v1414
  %v1463 = vsel %vm1367, %v1274, %v1415
  %v1464 = vsel %vm1368, %v1276, %v1416
  %v1465 = vsel %vm1369, %v1278, %v1417
  %v1466 = vsel %vm1370, %v1282, %v1418
  %v1467 = vsel %vm1371, %v1284, %v1419
  %v1468 = vsel %vm1372, %v1286, %v1420
  %v1469 = vsel %vm1373, %v1288, %v1421
  %v1470 = vsel %vm1374, %v1292, %v1422
  %v1471 = vsel %vm1375, %v1294, %v1423
  %v1472 = vsel %vm1376, %v1296, %v1424
  %v1473 = vsel %vm1377, %v1298, %v1425
  %v1474 = vsel %vm1378, %v1302, %v1426
  %v1475 = vsel %vm1379, %v1304, %v1427
  %v1476 = vsel %vm1380, %v1306, %v1428
  %v1477 = vsel %vm1381, %v1308, %v1429
  %v1478 = vsel %vm1382, %v1312, %v1430
  %v1479 = vsel %vm1383, %v1314, %v1431
  %v1480 = vsel %vm1384, %v1316, %v1432
  %v1481 = vsel %vm1385, %v1318, %v1433
  %v1482 = vsel %vm1386, %v1322, %v1434
  %v1483 = vsel %vm1387, %v1324, %v1435
  %v1484 = vsel %vm1388, %v1326, %v1436
  %v1485 = vsel %vm1389, %v1328, %v1437
  %v1486 = vsel %vm1390, %v1332, %v1438
  %v1487 = vsel %vm1391, %v1334, %v1439
  %v1488 = vsel %vm1392, %v1336, %v1440
  %v1489 = vsel %vm1393, %v1338, %v1441
  %v1490 = vsel %vm1394, %v1342, %v1442
  %v1491 = vsel %vm1395, %v1344, %v1443
  %v1492 = vsel %vm1396, %v1346, %v1444
  %v1493 = vsel %vm1397, %v1348, %v1445
  %1494 = vst [vmem:[%s3] sm:$0xff] %v1446
  %1495 = vst [vmem:[%s3 + $0x8] sm:$0xff] %v1447
  %1496 = vst [vmem:[%s3 + $0x10] sm:$0xff] %v1448
  %1497 = vst [vmem:[%s3 + $0x18] sm:$0xff] %v1449
  %1498 = vst [vmem:[%s3 + $0x20] sm:$0xff] %v1450
  %1499 = vst [vmem:[%s3 + $0x28] sm:$0xff] %v1451
  %1500 = vst [vmem:[%s3 + $0x30] sm:$0xff] %v1452
  %1501 = vst [vmem:[%s3 + $0x38] sm:$0xff] %v1453
  %1502 = vst [vmem:[%s3 + $0x40] sm:$0xff] %v1454
  %1503 = vst [vmem:[%s3 + $0x48] sm:$0xff] %v1455
  %1504 = vst [vmem:[%s3 + $0x50] sm:$0xff] %v1456
  %1505 = vst [vmem:[%s3 + $0x58] sm:$0xff] %v1457
  %1506 = vst [vmem:[%s3 + $0x60] sm:$0xff] %v1458
  %1507 = vst [vmem:[%s3 + $0x68] sm:$0xff] %v1459
  %1508 = vst [vmem:[%s3 + $0x70] sm:$0xff] %v1460
  %1509 = vst [vmem:[%s3 + $0x78] sm:$0xff] %v1461
  %1510 = vst [vmem:[%s3 + $0x80] sm:$0xff] %v1462
  %1511 = vst [vmem:[%s3 + $0x88] sm:$0xff] %v1463
  %1512 = vst [vmem:[%s3 + $0x90] sm:$0xff] %v1464
  %1513 = vst [vmem:[%s3 + $0x98] sm:$0xff] %v1465
  %1514 = vst [vmem:[%s3 + $0xa0] sm:$0xff] %v1466
  %1515 = vst [vmem:[%s3 + $0xa8] sm:$0xff] %v1467
  %1516 = vst [vmem:[%s3 + $0xb0] sm:$0xff] %v1468
  %1517 = vst [vmem:[%s3 + $0xb8] sm:$0xff] %v1469
  %1518 = vst [vmem:[%s3 + $0xc0] sm:$0xff] %v1470
  %1519 = vst [vmem:[%s3 + $0xc8] sm:$0xff] %v1471
  %1520 = vst [vmem:[%s3 + $0xd0] sm:$0xff] %v1472
  %1521 = vst [vmem:[%s3 + $0xd8] sm:$0xff] %v1473
  %1522 = vst [vmem:[%s3 + $0xe0] sm:$0xff] %v1474
  %1523 = vst [vmem:[%s3 + $0xe8] sm:$0xff] %v1475
  %1524 = vst [vmem:[%s3 + $0xf0] sm:$0xff] %v1476
  %1525 = vst [vmem:[%s3 + $0xf8] sm:$0xff] %v1477
  %1526 = vst [vmem:[%s3 + $0x100] sm:$0xff] %v1478
  %1527 = vst [vmem:[%s3 + $0x108] sm:$0xff] %v1479
  %1528 = vst [vmem:[%s3 + $0x110] sm:$0xff] %v1480
  %1529 = vst [vmem:[%s3 + $0x118] sm:$0xff] %v1481
  %1530 = vst [vmem:[%s3 + $0x120] sm:$0xff] %v1482
  %1531 = vst [vmem:[%s3 + $0x128] sm:$0xff] %v1483
  %1532 = vst [vmem:[%s3 + $0x130] sm:$0xff] %v1484
  %1533 = vst [vmem:[%s3 + $0x138] sm:$0xff] %v1485
  %1534 = vst [vmem:[%s3 + $0x140] sm:$0xff] %v1486
  %1535 = vst [vmem:[%s3 + $0x148] sm:$0xff] %v1487
  %1536 = vst [vmem:[%s3 + $0x150] sm:$0xff] %v1488
  %1537 = vst [vmem:[%s3 + $0x158] sm:$0xff] %v1489
  %1538 = vst [vmem:[%s3 + $0x160] sm:$0xff] %v1490
  %1539 = vst [vmem:[%s3 + $0x168] sm:$0xff] %v1491
  %1540 = vst [vmem:[%s3 + $0x170] sm:$0xff] %v1492
  %1541 = vst [vmem:[%s3 + $0x178] sm:$0xff] %v1493
  // Predicated region
  $region14: #{_lambda_.8} parent=0 // pred_check
    _
  $region15: #{_lambda_.8} parent=0 // pred_check_branch
    %1543 = sbr.rel (0) target = $region17
  $region16: #{_lambda_.8} parent=0 // pred_region
    _
  $region17: #{_lambda_.8} parent=0 // pred_fallthru
    _
  // Predicated region
  $region18: #{_lambda_.8} parent=0 // pred_check
    _
  $region19: #{_lambda_.8} parent=0 // pred_check_branch
    %1545 = sbr.rel (0) target = $region21
  $region20: #{_lambda_.8} parent=0 // pred_region
    _
  $region21: #{_lambda_.8} parent=0 // pred_fallthru
    _

// kernel: _lambda_.9
$region0: #{_lambda_.9}
  #allocation0 [shape = 'u32[]', space=smem, size = 0x4, offset = 0x4, fixed_abs, tag = 'smem constant byte address 0x4 - core index']
  #allocation1 [shape = 'u32[144,128]{1,0:T(1,128)}', space=vmem, size = 0x12000, scoped, tag = 'internal scratch']
  %s0 = inlined_call_operand.vmem [shape: bf16[96,768], index: 0, kind: input, shape index: {}]
  %s1 = inlined_call_operand.vmem [shape: bf16[768,512], index: 1, kind: input, shape index: {}]
  %s2 = inlined_call_operand.vmem [shape: f32[1,512], index: 2, kind: input, shape index: {}]
  %s3 = inlined_call_operand.vmem [shape: f32[96,512], index: 3, kind: output, shape index: {}]
  %s4 = sld [smem:[#allocation0]]
  $region102: #{_lambda_.9} parent=0
    _
  %s6 = ssub.s32 1, %s4
  %s7 = scalar_select 0, %s6, %s4
  $region1: #{_lambda_.9} parent=0
    #allocation2 [shape = 'u8[786432]{0}', space=vmem, size = 0xc0000, scoped, tag = 'input window, operand 1']
    #allocation3 [shape = 'u8[196608]{0}', space=vmem, size = 0x30000, scoped, tag = 'output window, operand 0']
    loop: start=0, step=1, limit=4
    $region2: #{_lambda_.9} parent=1 // loop_pre_header
      _
    $region3: #{_lambda_.9} parent=1 // loop_header
      %s9 = sphi 0, %s13
      %p10 = scmp.ge.s32.totalorder %s9, 4
      %s16 = sphi 0, %s28
      %s17 = sphi 0, %s24
      %s18 = sphi 0, %s16
      %s19 = sphi 0, %s17
      %s20 = sphi 0, %s18
      %s21 = sphi 0, %s19
      %s31 = sphi 0, %s33
      %s34 = sphi 0, %s31
      %s35 = sphi 0, %s34
      %s51 = sphi 0, %s35
      %s57 = sphi 0, %s59
      %s60 = sphi 0, %s57
      %s61 = sphi 0, %s60
      %s77 = sphi 0, %s61
      %s83 = sphi 0, %s85
      %s86 = sphi 0, %s83
      %s87 = sphi 0, %s86
      %s103 = sphi 0, %s87
      %s111 = sphi 0, %s113
      %s114 = sphi 0, %s111
      %s115 = sphi 0, %s114
      %s131 = sphi 0, %s115
    $region4: #{_lambda_.9} parent=1 // loop_header_branch
      %12 = sbr.rel (%p10) target = $region8
    $region5: #{_lambda_.9} parent=1 // loop_body
      %s14 = ssub.s32 %s9, 1
      %s15 = ssub.s32 %s9, 2
      %s22 = sadd.s32 1, %s17
      %p23 = scmp.ge.s32.totalorder %s22, 2
      %s24 = scalar_select %p23, 0, %s22
      %s25 = sadd.s32 1, %s16
      %s26 = scalar_select %p23, %s25, %s16
      %p27 = scmp.ge.s32.totalorder %s26, 1
      %s28 = scalar_select %p27, 0, %s26
      %s29 = ssub.s32 %s16, %s28
      %p30 = scmp.eq.s32.totalorder %s29, 0
      %s32 = sadd.s32 %s31, 1
      %s33 = scalar_select %p30, %s31, %s32
      %p36 = pneg %p30
      %p37 = scmp.eq.s32.totalorder %s9, 1
      %p38 = por %p36, %p37
      %p39 = scmp.ne.s32.totalorder %s31, %s34
      %p40 = scmp.eq.s32.totalorder %s9, 0
      %p41 = por %p39, %p40
      %p42 = scmp.ne.s32.totalorder %s31, %s34
      %p43 = scmp.eq.s32.totalorder %s14, 1
      %p44 = por %p42, %p43
      %p45 = scmp.ne.s32.totalorder %s34, %s35
      %p46 = scmp.eq.s32.totalorder %s14, 0
      %p47 = por %p45, %p46
      %p48 = scmp.ne.s32.totalorder %s34, %s35
      %p49 = scmp.eq.s32.totalorder %s15, 1
      %p50 = por %p48, %p49
      %p52 = scmp.ne.s32.totalorder %s35, %s51
      %p53 = scmp.eq.s32.totalorder %s15, 0
      %p54 = por %p52, %p53
      %s55 = ssub.s32 %s17, %s24
      %p56 = scmp.eq.s32.totalorder %s55, 0
      %s58 = sadd.s32 %s57, 1
      %s59 = scalar_select %p56, %s57, %s58
      %p62 = pneg %p56
      %p63 = scmp.eq.s32.totalorder %s9, 1
      %p64 = por %p62, %p63
      %p65 = scmp.ne.s32.totalorder %s57, %s60
      %p66 = scmp.eq.s32.totalorder %s9, 0
      %p67 = por %p65, %p66
      %p68 = scmp.ne.s32.totalorder %s57, %s60
      %p69 = scmp.eq.s32.totalorder %s14, 1
      %p70 = por %p68, %p69
      %p71 = scmp.ne.s32.totalorder %s60, %s61
      %p72 = scmp.eq.s32.totalorder %s14, 0
      %p73 = por %p71, %p72
      %p74 = scmp.ne.s32.totalorder %s60, %s61
      %p75 = scmp.eq.s32.totalorder %s15, 1
      %p76 = por %p74, %p75
      %p78 = scmp.ne.s32.totalorder %s61, %s77
      %p79 = scmp.eq.s32.totalorder %s15, 0
      %p80 = por %p78, %p79
      %s81 = ssub.s32 %s17, %s24
      %p82 = scmp.eq.s32.totalorder %s81, 0
      %s84 = sadd.s32 %s83, 1
      %s85 = scalar_select %p82, %s83, %s84
      %p88 = pneg %p82
      %p89 = scmp.eq.s32.totalorder %s9, 1
      %p90 = por %p88, %p89
      %p91 = scmp.ne.s32.totalorder %s83, %s86
      %p92 = scmp.eq.s32.totalorder %s9, 0
      %p93 = por %p91, %p92
      %p94 = scmp.ne.s32.totalorder %s83, %s86
      %p95 = scmp.eq.s32.totalorder %s14, 1
      %p96 = por %p94, %p95
      %p97 = scmp.ne.s32.totalorder %s86, %s87
      %p98 = scmp.eq.s32.totalorder %s14, 0
      %p99 = por %p97, %p98
      %p100 = scmp.ne.s32.totalorder %s86, %s87
      %p101 = scmp.eq.s32.totalorder %s15, 1
      %p102 = por %p100, %p101
      %p104 = scmp.ne.s32.totalorder %s87, %s103
      %p105 = scmp.eq.s32.totalorder %s15, 0
      %p106 = por %p104, %p105
      %s107 = ssub.s32 %s16, %s28
      %s108 = ssub.s32 %s17, %s24
      %s109 = sor.u32 %s107, %s108
      %p110 = scmp.eq.s32.totalorder %s109, 0
      %s112 = sadd.s32 %s111, 1
      %s113 = scalar_select %p110, %s111, %s112
      %p116 = pneg %p110
      %p117 = scmp.eq.s32.totalorder %s9, 1
      %p118 = por %p116, %p117
      %p119 = scmp.ne.s32.totalorder %s111, %s114
      %p120 = scmp.eq.s32.totalorder %s9, 0
      %p121 = por %p119, %p120
      %p122 = scmp.ne.s32.totalorder %s111, %s114
      %p123 = scmp.eq.s32.totalorder %s14, 1
      %p124 = por %p122, %p123
      %p125 = scmp.ne.s32.totalorder %s114, %s115
      %p126 = scmp.eq.s32.totalorder %s14, 0
      %p127 = por %p125, %p126
      %p128 = scmp.ne.s32.totalorder %s114, %s115
      %p129 = scmp.eq.s32.totalorder %s15, 1
      %p130 = por %p128, %p129
      %p132 = scmp.ne.s32.totalorder %s115, %s131
      %p133 = scmp.eq.s32.totalorder %s15, 0
      %p134 = por %p132, %p133
      %p135 = scmp.le.s32.totalorder 1, %s9
      %p136 = scmp.lt.s32.totalorder %s9, 3
      %p137 = pnand %p135, %p136
      %p138 = pneg %p137
      // Predicated region
      $region9: #{_lambda_.9} parent=5 // pred_check
        _
      $region10: #{_lambda_.9} parent=5 // pred_check_branch
        %140 = sbr.rel (%p137) target = $region12
      $region11: #{_lambda_.9} parent=5 // pred_region
        %s141 = ssub.s32 %s9, 1
        // Predicated region
        $region13: #{_lambda_.9} parent=11 // pred_check
          %p142 = pneg %p47
        $region14: #{_lambda_.9} parent=11 // pred_check_branch
          %144 = sbr.rel (%p142) target = $region16
        $region15: #{_lambda_.9} parent=11 // pred_region
          %s145 = smul.u32 12, %s18
          %p146 = scmp.lt.s32.totalorder %s145, 11
          %s147 = scalar_select %p146, %s145, 11
          %s148 = smul.addr %s147, 6
          %s149 = smul.addr %s148, 4
          %s150 = scalar_lea.vmem %s0, %s149
          %s151 = smul.u32 12, %s18
        $region16: #{_lambda_.9} parent=11 // pred_fallthru
          _
      $region12: #{_lambda_.9} parent=5 // pred_fallthru
        _
      %p152 = scmp.lt.s32.totalorder %s9, 2
      // Predicated region
      $region17: #{_lambda_.9} parent=5 // pred_check
        %p153 = pneg %p152
      $region18: #{_lambda_.9} parent=5 // pred_check_branch
        %155 = sbr.rel (%p153) target = $region20
      $region19: #{_lambda_.9} parent=5 // pred_region
        // Predicated region
        $region21: #{_lambda_.9} parent=19 // pred_check
          %p156 = pneg %p67
        $region22: #{_lambda_.9} parent=19 // pred_check_branch
          %158 = sbr.rel (%p156) target = $region24
        $region23: #{_lambda_.9} parent=19 // pred_region
          %s159 = sand.u32 %s57, 1
          %s160 = sand.u32 %s57, 1
          %s161 = smul.addr %s160, 768
          %s162 = scalar_lea.vmem [#allocation2], %s161
          %s163 = smul.u32 2, %s17
          %s164 = smul.addr %s163, 4
          %s165 = scalar_lea.vmem %s1, %s164
          // Predicated region
          $region25: #{_lambda_.9} parent=23 // pred_check
            _
          $region26: #{_lambda_.9} parent=23 // pred_check_branch
            %167 = sbr.rel (0) target = $region28
          $region27: #{_lambda_.9} parent=23 // pred_region
            // Predicated region
            $region29: #{_lambda_.9} parent=27 // pred_check
              _
            $region30: #{_lambda_.9} parent=27 // pred_check_branch
              %169 = sbr.rel (0) target = $region32
            $region31: #{_lambda_.9} parent=27 // pred_region
              // Predicated region
              $region44: #{_lambda_.9} parent=31 // pred_check
                _
              $region45: #{_lambda_.9} parent=31 // pred_check_branch
                %374 = sbr.rel (0) target = $region47
              $region46: #{_lambda_.9} parent=31 // pred_region
                loop: start=0, step=1, limit=1
                $region48: #{_lambda_.9} parent=46 // loop_pre_header
                  _
                $region49: #{_lambda_.9} parent=46 // loop_header
                  %s376 = sphi 0, %s380
                  %p377 = scmp.ge.s32.totalorder %s376, 1
                  %s381 = sphi %s165, %s165
                  %s382 = sphi %s162, %s162
                $region50: #{_lambda_.9} parent=46 // loop_header_branch
                  %379 = sbr.rel (%p377) target = $region54
                $region51: #{_lambda_.9} parent=46 // loop_body
                  %v383 = vld [vmem:[%s381] sm:$0xff]
                  %384 = vst [vmem:[%s382] sm:$0xff] %v383
                  %v385 = vld [vmem:[%s381 + $0x10] sm:$0xff]
                  %386 = vst [vmem:[%s382 + $0x8] sm:$0xff] %v385
                  %v387 = vld [vmem:[%s381 + $0x20] sm:$0xff]
                  %388 = vst [vmem:[%s382 + $0x10] sm:$0xff] %v387
                  %v389 = vld [vmem:[%s381 + $0x30] sm:$0xff]
                  %390 = vst [vmem:[%s382 + $0x18] sm:$0xff] %v389
                  %v391 = vld [vmem:[%s381 + $0x40] sm:$0xff]
                  %392 = vst [vmem:[%s382 + $0x20] sm:$0xff] %v391
                  %v393 = vld [vmem:[%s381 + $0x50] sm:$0xff]
                  %394 = vst [vmem:[%s382 + $0x28] sm:$0xff] %v393
                  %v395 = vld [vmem:[%s381 + $0x60] sm:$0xff]
                  %396 = vst [vmem:[%s382 + $0x30] sm:$0xff] %v395
                  %v397 = vld [vmem:[%s381 + $0x70] sm:$0xff]
                  %398 = vst [vmem:[%s382 + $0x38] sm:$0xff] %v397
                  %v399 = vld [vmem:[%s381 + $0x80] sm:$0xff]
                  %400 = vst [vmem:[%s382 + $0x40] sm:$0xff] %v399
                  %v401 = vld [vmem:[%s381 + $0x90] sm:$0xff]
                  %402 = vst [vmem:[%s382 + $0x48] sm:$0xff] %v401
                  %v403 = vld [vmem:[%s381 + $0xa0] sm:$0xff]
                  %404 = vst [vmem:[%s382 + $0x50] sm:$0xff] %v403
                  %v405 = vld [vmem:[%s381 + $0xb0] sm:$0xff]
                  %406 = vst [vmem:[%s382 + $0x58] sm:$0xff] %v405
                  %v407 = vld [vmem:[%s381 + $0xc0] sm:$0xff]
                  %408 = vst [vmem:[%s382 + $0x60] sm:$0xff] %v407
                  %v409 = vld [vmem:[%s381 + $0xd0] sm:$0xff]
                  %410 = vst [vmem:[%s382 + $0x68] sm:$0xff] %v409
                  %v411 = vld [vmem:[%s381 + $0xe0] sm:$0xff]
                  %412 = vst [vmem:[%s382 + $0x70] sm:$0xff] %v411
                  %v413 = vld [vmem:[%s381 + $0xf0] sm:$0xff]
                  %414 = vst [vmem:[%s382 + $0x78] sm:$0xff] %v413
                  %v415 = vld [vmem:[%s381 + $0x100] sm:$0xff]
                  %416 = vst [vmem:[%s382 + $0x80] sm:$0xff] %v415
                  %v417 = vld [vmem:[%s381 + $0x110] sm:$0xff]
                  %418 = vst [vmem:[%s382 + $0x88] sm:$0xff] %v417
                  %v419 = vld [vmem:[%s381 + $0x120] sm:$0xff]
                  %420 = vst [vmem:[%s382 + $0x90] sm:$0xff] %v419
                  %v421 = vld [vmem:[%s381 + $0x130] sm:$0xff]
                  %422 = vst [vmem:[%s382 + $0x98] sm:$0xff] %v421
                  %v423 = vld [vmem:[%s381 + $0x140] sm:$0xff]
                  %424 = vst [vmem:[%s382 + $0xa0] sm:$0xff] %v423
                  %v425 = vld [vmem:[%s381 + $0x150] sm:$0xff]
                  %426 = vst [vmem:[%s382 + $0xa8] sm:$0xff] %v425
                  %v427 = vld [vmem:[%s381 + $0x160] sm:$0xff]
                  %428 = vst [vmem:[%s382 + $0xb0] sm:$0xff] %v427
                  %v429 = vld [vmem:[%s381 + $0x170] sm:$0xff]
                  %430 = vst [vmem:[%s382 + $0xb8] sm:$0xff] %v429
                  %v431 = vld [vmem:[%s381 + $0x180] sm:$0xff]
                  %432 = vst [vmem:[%s382 + $0xc0] sm:$0xff] %v431
                  %v433 = vld [vmem:[%s381 + $0x190] sm:$0xff]
                  %434 = vst [vmem:[%s382 + $0xc8] sm:$0xff] %v433
                  %v435 = vld [vmem:[%s381 + $0x1a0] sm:$0xff]
                  %436 = vst [vmem:[%s382 + $0xd0] sm:$0xff] %v435
                  %v437 = vld [vmem:[%s381 + $0x1b0] sm:$0xff]
                  %438 = vst [vmem:[%s382 + $0xd8] sm:$0xff] %v437
                  %v439 = vld [vmem:[%s381 + $0x1c0] sm:$0xff]
                  %440 = vst [vmem:[%s382 + $0xe0] sm:$0xff] %v439
                  %v441 = vld [vmem:[%s381 + $0x1d0] sm:$0xff]
                  %442 = vst [vmem:[%s382 + $0xe8] sm:$0xff] %v441
                  %v443 = vld [vmem:[%s381 + $0x1e0] sm:$0xff]
                  %444 = vst [vmem:[%s382 + $0xf0] sm:$0xff] %v443
                  %v445 = vld [vmem:[%s381 + $0x1f0] sm:$0xff]
                  %446 = vst [vmem:[%s382 + $0xf8] sm:$0xff] %v445
                  %v447 = vld [vmem:[%s381 + $0x200] sm:$0xff]
                  %448 = vst [vmem:[%s382 + $0x100] sm:$0xff] %v447
                  %v449 = vld [vmem:[%s381 + $0x210] sm:$0xff]
                  %450 = vst [vmem:[%s382 + $0x108] sm:$0xff] %v449
                  %v451 = vld [vmem:[%s381 + $0x220] sm:$0xff]
                  %452 = vst [vmem:[%s382 + $0x110] sm:$0xff] %v451
                  %v453 = vld [vmem:[%s381 + $0x230] sm:$0xff]
                  %454 = vst [vmem:[%s382 + $0x118] sm:$0xff] %v453
                  %v455 = vld [vmem:[%s381 + $0x240] sm:$0xff]
                  %456 = vst [vmem:[%s382 + $0x120] sm:$0xff] %v455
                  %v457 = vld [vmem:[%s381 + $0x250] sm:$0xff]
                  %458 = vst [vmem:[%s382 + $0x128] sm:$0xff] %v457
                  %v459 = vld [vmem:[%s381 + $0x260] sm:$0xff]
                  %460 = vst [vmem:[%s382 + $0x130] sm:$0xff] %v459
                  %v461 = vld [vmem:[%s381 + $0x270] sm:$0xff]
                  %462 = vst [vmem:[%s382 + $0x138] sm:$0xff] %v461
                  %v463 = vld [vmem:[%s381 + $0x280] sm:$0xff]
                  %464 = vst [vmem:[%s382 + $0x140] sm:$0xff] %v463
                  %v465 = vld [vmem:[%s381 + $0x290] sm:$0xff]
                  %466 = vst [vmem:[%s382 + $0x148] sm:$0xff] %v465
                  %v467 = vld [vmem:[%s381 + $0x2a0] sm:$0xff]
                  %468 = vst [vmem:[%s382 + $0x150] sm:$0xff] %v467
                  %v469 = vld [vmem:[%s381 + $0x2b0] sm:$0xff]
                  %470 = vst [vmem:[%s382 + $0x158] sm:$0xff] %v469
                  %v471 = vld [vmem:[%s381 + $0x2c0] sm:$0xff]
                  %472 = vst [vmem:[%s382 + $0x160] sm:$0xff] %v471
                  %v473 = vld [vmem:[%s381 + $0x2d0] sm:$0xff]
                  %474 = vst [vmem:[%s382 + $0x168] sm:$0xff] %v473
                  %v475 = vld [vmem:[%s381 + $0x2e0] sm:$0xff]
                  %476 = vst [vmem:[%s382 + $0x170] sm:$0xff] %v475
                  %v477 = vld [vmem:[%s381 + $0x2f0] sm:$0xff]
                  %478 = vst [vmem:[%s382 + $0x178] sm:$0xff] %v477
                  %v479 = vld [vmem:[%s381 + $0x300] sm:$0xff]
                  %480 = vst [vmem:[%s382 + $0x180] sm:$0xff] %v479
                  %v481 = vld [vmem:[%s381 + $0x310] sm:$0xff]
                  %482 = vst [vmem:[%s382 + $0x188] sm:$0xff] %v481
                  %v483 = vld [vmem:[%s381 + $0x320] sm:$0xff]
                  %484 = vst [vmem:[%s382 + $0x190] sm:$0xff] %v483
                  %v485 = vld [vmem:[%s381 + $0x330] sm:$0xff]
                  %486 = vst [vmem:[%s382 + $0x198] sm:$0xff] %v485
                  %v487 = vld [vmem:[%s381 + $0x340] sm:$0xff]
                  %488 = vst [vmem:[%s382 + $0x1a0] sm:$0xff] %v487
                  %v489 = vld [vmem:[%s381 + $0x350] sm:$0xff]
                  %490 = vst [vmem:[%s382 + $0x1a8] sm:$0xff] %v489
                  %v491 = vld [vmem:[%s381 + $0x360] sm:$0xff]
                  %492 = vst [vmem:[%s382 + $0x1b0] sm:$0xff] %v491
                  %v493 = vld [vmem:[%s381 + $0x370] sm:$0xff]
                  %494 = vst [vmem:[%s382 + $0x1b8] sm:$0xff] %v493
                  %v495 = vld [vmem:[%s381 + $0x380] sm:$0xff]
                  %496 = vst [vmem:[%s382 + $0x1c0] sm:$0xff] %v495
                  %v497 = vld [vmem:[%s381 + $0x390] sm:$0xff]
                  %498 = vst [vmem:[%s382 + $0x1c8] sm:$0xff] %v497
                  %v499 = vld [vmem:[%s381 + $0x3a0] sm:$0xff]
                  %500 = vst [vmem:[%s382 + $0x1d0] sm:$0xff] %v499
                  %v501 = vld [vmem:[%s381 + $0x3b0] sm:$0xff]
                  %502 = vst [vmem:[%s382 + $0x1d8] sm:$0xff] %v501
                  %v503 = vld [vmem:[%s381 + $0x3c0] sm:$0xff]
                  %504 = vst [vmem:[%s382 + $0x1e0] sm:$0xff] %v503
                  %v505 = vld [vmem:[%s381 + $0x3d0] sm:$0xff]
                  %506 = vst [vmem:[%s382 + $0x1e8] sm:$0xff] %v505
                  %v507 = vld [vmem:[%s381 + $0x3e0] sm:$0xff]
                  %508 = vst [vmem:[%s382 + $0x1f0] sm:$0xff] %v507
                  %v509 = vld [vmem:[%s381 + $0x3f0] sm:$0xff]
                  %510 = vst [vmem:[%s382 + $0x1f8] sm:$0xff] %v509
                  %v511 = vld [vmem:[%s381 + $0x400] sm:$0xff]
                  %512 = vst [vmem:[%s382 + $0x200] sm:$0xff] %v511
                  %v513 = vld [vmem:[%s381 + $0x410] sm:$0xff]
                  %514 = vst [vmem:[%s382 + $0x208] sm:$0xff] %v513
                  %v515 = vld [vmem:[%s381 + $0x420] sm:$0xff]
                  %516 = vst [vmem:[%s382 + $0x210] sm:$0xff] %v515
                  %v517 = vld [vmem:[%s381 + $0x430] sm:$0xff]
                  %518 = vst [vmem:[%s382 + $0x218] sm:$0xff] %v517
                  %v519 = vld [vmem:[%s381 + $0x440] sm:$0xff]
                  %520 = vst [vmem:[%s382 + $0x220] sm:$0xff] %v519
                  %v521 = vld [vmem:[%s381 + $0x450] sm:$0xff]
                  %522 = vst [vmem:[%s382 + $0x228] sm:$0xff] %v521
                  %v523 = vld [vmem:[%s381 + $0x460] sm:$0xff]
                  %524 = vst [vmem:[%s382 + $0x230] sm:$0xff] %v523
                  %v525 = vld [vmem:[%s381 + $0x470] sm:$0xff]
                  %526 = vst [vmem:[%s382 + $0x238] sm:$0xff] %v525
                  %v527 = vld [vmem:[%s381 + $0x480] sm:$0xff]
                  %528 = vst [vmem:[%s382 + $0x240] sm:$0xff] %v527
                  %v529 = vld [vmem:[%s381 + $0x490] sm:$0xff]
                  %530 = vst [vmem:[%s382 + $0x248] sm:$0xff] %v529
                  %v531 = vld [vmem:[%s381 + $0x4a0] sm:$0xff]
                  %532 = vst [vmem:[%s382 + $0x250] sm:$0xff] %v531
                  %v533 = vld [vmem:[%s381 + $0x4b0] sm:$0xff]
                  %534 = vst [vmem:[%s382 + $0x258] sm:$0xff] %v533
                  %v535 = vld [vmem:[%s381 + $0x4c0] sm:$0xff]
                  %536 = vst [vmem:[%s382 + $0x260] sm:$0xff] %v535
                  %v537 = vld [vmem:[%s381 + $0x4d0] sm:$0xff]
                  %538 = vst [vmem:[%s382 + $0x268] sm:$0xff] %v537
                  %v539 = vld [vmem:[%s381 + $0x4e0] sm:$0xff]
                  %540 = vst [vmem:[%s382 + $0x270] sm:$0xff] %v539
                  %v541 = vld [vmem:[%s381 + $0x4f0] sm:$0xff]
                  %542 = vst [vmem:[%s382 + $0x278] sm:$0xff] %v541
                  %v543 = vld [vmem:[%s381 + $0x500] sm:$0xff]
                  %544 = vst [vmem:[%s382 + $0x280] sm:$0xff] %v543
                  %v545 = vld [vmem:[%s381 + $0x510] sm:$0xff]
                  %546 = vst [vmem:[%s382 + $0x288] sm:$0xff] %v545
                  %v547 = vld [vmem:[%s381 + $0x520] sm:$0xff]
                  %548 = vst [vmem:[%s382 + $0x290] sm:$0xff] %v547
                  %v549 = vld [vmem:[%s381 + $0x530] sm:$0xff]
                  %550 = vst [vmem:[%s382 + $0x298] sm:$0xff] %v549
                  %v551 = vld [vmem:[%s381 + $0x540] sm:$0xff]
                  %552 = vst [vmem:[%s382 + $0x2a0] sm:$0xff] %v551
                  %v553 = vld [vmem:[%s381 + $0x550] sm:$0xff]
                  %554 = vst [vmem:[%s382 + $0x2a8] sm:$0xff] %v553
                  %v555 = vld [vmem:[%s381 + $0x560] sm:$0xff]
                  %556 = vst [vmem:[%s382 + $0x2b0] sm:$0xff] %v555
                  %v557 = vld [vmem:[%s381 + $0x570] sm:$0xff]
                  %558 = vst [vmem:[%s382 + $0x2b8] sm:$0xff] %v557
                  %v559 = vld [vmem:[%s381 + $0x580] sm:$0xff]
                  %560 = vst [vmem:[%s382 + $0x2c0] sm:$0xff] %v559
                  %v561 = vld [vmem:[%s381 + $0x590] sm:$0xff]
                  %562 = vst [vmem:[%s382 + $0x2c8] sm:$0xff] %v561
                  %v563 = vld [vmem:[%s381 + $0x5a0] sm:$0xff]
                  %564 = vst [vmem:[%s382 + $0x2d0] sm:$0xff] %v563
                  %v565 = vld [vmem:[%s381 + $0x5b0] sm:$0xff]
                  %566 = vst [vmem:[%s382 + $0x2d8] sm:$0xff] %v565
                  %v567 = vld [vmem:[%s381 + $0x5c0] sm:$0xff]
                  %568 = vst [vmem:[%s382 + $0x2e0] sm:$0xff] %v567
                  %v569 = vld [vmem:[%s381 + $0x5d0] sm:$0xff]
                  %570 = vst [vmem:[%s382 + $0x2e8] sm:$0xff] %v569
                  %v571 = vld [vmem:[%s381 + $0x5e0] sm:$0xff]
                  %572 = vst [vmem:[%s382 + $0x2f0] sm:$0xff] %v571
                  %v573 = vld [vmem:[%s381 + $0x5f0] sm:$0xff]
                  %574 = vst [vmem:[%s382 + $0x2f8] sm:$0xff] %v573
                $region52: #{_lambda_.9} parent=46 // loop_footer
                  %s380 = sadd.s32 1, %s376
                $region53: #{_lambda_.9} parent=46 // loop_footer_branch
                  %375 = sbr.rel target = $region49
                $region54: #{_lambda_.9} parent=46 // loop_exit
                  _
              $region47: #{_lambda_.9} parent=31 // pred_fallthru
                _
              // Predicated region
              $region55: #{_lambda_.9} parent=31 // pred_check
                _
              $region56: #{_lambda_.9} parent=31 // pred_check_branch
                %576 = sbr.rel target = $region58
              $region57: #{_lambda_.9} parent=31 // pred_region
                _
              $region58: #{_lambda_.9} parent=31 // pred_fallthru
                _
            $region32: #{_lambda_.9} parent=27 // pred_fallthru
              _
            // Predicated region
            $region33: #{_lambda_.9} parent=27 // pred_check
              _
            $region34: #{_lambda_.9} parent=27 // pred_check_branch
              %171 = sbr.rel target = $region36
            $region35: #{_lambda_.9} parent=27 // pred_region
              loop: start=0, step=1, limit=1
              $region37: #{_lambda_.9} parent=35 // loop_pre_header
                _
              $region38: #{_lambda_.9} parent=35 // loop_header
                %s174 = sphi 0, %s178
                %p175 = scmp.ge.s32.totalorder %s174, 1
                %s179 = sphi %s165, %s165
                %s180 = sphi %s162, %s162
              $region39: #{_lambda_.9} parent=35 // loop_header_branch
                %177 = sbr.rel (%p175) target = $region43
              $region40: #{_lambda_.9} parent=35 // loop_body
                %v181 = vld [vmem:[%s179] sm:$0xff]
                %182 = vst [vmem:[%s180] sm:$0xff] %v181
                %v183 = vld [vmem:[%s179 + $0x10] sm:$0xff]
                %184 = vst [vmem:[%s180 + $0x8] sm:$0xff] %v183
                %v185 = vld [vmem:[%s179 + $0x20] sm:$0xff]
                %186 = vst [vmem:[%s180 + $0x10] sm:$0xff] %v185
                %v187 = vld [vmem:[%s179 + $0x30] sm:$0xff]
                %188 = vst [vmem:[%s180 + $0x18] sm:$0xff] %v187
                %v189 = vld [vmem:[%s179 + $0x40] sm:$0xff]
                %190 = vst [vmem:[%s180 + $0x20] sm:$0xff] %v189
                %v191 = vld [vmem:[%s179 + $0x50] sm:$0xff]
                %192 = vst [vmem:[%s180 + $0x28] sm:$0xff] %v191
                %v193 = vld [vmem:[%s179 + $0x60] sm:$0xff]
                %194 = vst [vmem:[%s180 + $0x30] sm:$0xff] %v193
                %v195 = vld [vmem:[%s179 + $0x70] sm:$0xff]
                %196 = vst [vmem:[%s180 + $0x38] sm:$0xff] %v195
                %v197 = vld [vmem:[%s179 + $0x80] sm:$0xff]
                %198 = vst [vmem:[%s180 + $0x40] sm:$0xff] %v197
                %v199 = vld [vmem:[%s179 + $0x90] sm:$0xff]
                %200 = vst [vmem:[%s180 + $0x48] sm:$0xff] %v199
                %v201 = vld [vmem:[%s179 + $0xa0] sm:$0xff]
                %202 = vst [vmem:[%s180 + $0x50] sm:$0xff] %v201
                %v203 = vld [vmem:[%s179 + $0xb0] sm:$0xff]
                %204 = vst [vmem:[%s180 + $0x58] sm:$0xff] %v203
                %v205 = vld [vmem:[%s179 + $0xc0] sm:$0xff]
                %206 = vst [vmem:[%s180 + $0x60] sm:$0xff] %v205
                %v207 = vld [vmem:[%s179 + $0xd0] sm:$0xff]
                %208 = vst [vmem:[%s180 + $0x68] sm:$0xff] %v207
                %v209 = vld [vmem:[%s179 + $0xe0] sm:$0xff]
                %210 = vst [vmem:[%s180 + $0x70] sm:$0xff] %v209
                %v211 = vld [vmem:[%s179 + $0xf0] sm:$0xff]
                %212 = vst [vmem:[%s180 + $0x78] sm:$0xff] %v211
                %v213 = vld [vmem:[%s179 + $0x100] sm:$0xff]
                %214 = vst [vmem:[%s180 + $0x80] sm:$0xff] %v213
                %v215 = vld [vmem:[%s179 + $0x110] sm:$0xff]
                %216 = vst [vmem:[%s180 + $0x88] sm:$0xff] %v215
                %v217 = vld [vmem:[%s179 + $0x120] sm:$0xff]
                %218 = vst [vmem:[%s180 + $0x90] sm:$0xff] %v217
                %v219 = vld [vmem:[%s179 + $0x130] sm:$0xff]
                %220 = vst [vmem:[%s180 + $0x98] sm:$0xff] %v219
                %v221 = vld [vmem:[%s179 + $0x140] sm:$0xff]
                %222 = vst [vmem:[%s180 + $0xa0] sm:$0xff] %v221
                %v223 = vld [vmem:[%s179 + $0x150] sm:$0xff]
                %224 = vst [vmem:[%s180 + $0xa8] sm:$0xff] %v223
                %v225 = vld [vmem:[%s179 + $0x160] sm:$0xff]
                %226 = vst [vmem:[%s180 + $0xb0] sm:$0xff] %v225
                %v227 = vld [vmem:[%s179 + $0x170] sm:$0xff]
                %228 = vst [vmem:[%s180 + $0xb8] sm:$0xff] %v227
                %v229 = vld [vmem:[%s179 + $0x180] sm:$0xff]
                %230 = vst [vmem:[%s180 + $0xc0] sm:$0xff] %v229
                %v231 = vld [vmem:[%s179 + $0x190] sm:$0xff]
                %232 = vst [vmem:[%s180 + $0xc8] sm:$0xff] %v231
                %v233 = vld [vmem:[%s179 + $0x1a0] sm:$0xff]
                %234 = vst [vmem:[%s180 + $0xd0] sm:$0xff] %v233
                %v235 = vld [vmem:[%s179 + $0x1b0] sm:$0xff]
                %236 = vst [vmem:[%s180 + $0xd8] sm:$0xff] %v235
                %v237 = vld [vmem:[%s179 + $0x1c0] sm:$0xff]
                %238 = vst [vmem:[%s180 + $0xe0] sm:$0xff] %v237
                %v239 = vld [vmem:[%s179 + $0x1d0] sm:$0xff]
                %240 = vst [vmem:[%s180 + $0xe8] sm:$0xff] %v239
                %v241 = vld [vmem:[%s179 + $0x1e0] sm:$0xff]
                %242 = vst [vmem:[%s180 + $0xf0] sm:$0xff] %v241
                %v243 = vld [vmem:[%s179 + $0x1f0] sm:$0xff]
                %244 = vst [vmem:[%s180 + $0xf8] sm:$0xff] %v243
                %v245 = vld [vmem:[%s179 + $0x200] sm:$0xff]
                %246 = vst [vmem:[%s180 + $0x100] sm:$0xff] %v245
                %v247 = vld [vmem:[%s179 + $0x210] sm:$0xff]
                %248 = vst [vmem:[%s180 + $0x108] sm:$0xff] %v247
                %v249 = vld [vmem:[%s179 + $0x220] sm:$0xff]
                %250 = vst [vmem:[%s180 + $0x110] sm:$0xff] %v249
                %v251 = vld [vmem:[%s179 + $0x230] sm:$0xff]
                %252 = vst [vmem:[%s180 + $0x118] sm:$0xff] %v251
                %v253 = vld [vmem:[%s179 + $0x240] sm:$0xff]
                %254 = vst [vmem:[%s180 + $0x120] sm:$0xff] %v253
                %v255 = vld [vmem:[%s179 + $0x250] sm:$0xff]
                %256 = vst [vmem:[%s180 + $0x128] sm:$0xff] %v255
                %v257 = vld [vmem:[%s179 + $0x260] sm:$0xff]
                %258 = vst [vmem:[%s180 + $0x130] sm:$0xff] %v257
                %v259 = vld [vmem:[%s179 + $0x270] sm:$0xff]
                %260 = vst [vmem:[%s180 + $0x138] sm:$0xff] %v259
                %v261 = vld [vmem:[%s179 + $0x280] sm:$0xff]
                %262 = vst [vmem:[%s180 + $0x140] sm:$0xff] %v261
                %v263 = vld [vmem:[%s179 + $0x290] sm:$0xff]
                %264 = vst [vmem:[%s180 + $0x148] sm:$0xff] %v263
                %v265 = vld [vmem:[%s179 + $0x2a0] sm:$0xff]
                %266 = vst [vmem:[%s180 + $0x150] sm:$0xff] %v265
                %v267 = vld [vmem:[%s179 + $0x2b0] sm:$0xff]
                %268 = vst [vmem:[%s180 + $0x158] sm:$0xff] %v267
                %v269 = vld [vmem:[%s179 + $0x2c0] sm:$0xff]
                %270 = vst [vmem:[%s180 + $0x160] sm:$0xff] %v269
                %v271 = vld [vmem:[%s179 + $0x2d0] sm:$0xff]
                %272 = vst [vmem:[%s180 + $0x168] sm:$0xff] %v271
                %v273 = vld [vmem:[%s179 + $0x2e0] sm:$0xff]
                %274 = vst [vmem:[%s180 + $0x170] sm:$0xff] %v273
                %v275 = vld [vmem:[%s179 + $0x2f0] sm:$0xff]
                %276 = vst [vmem:[%s180 + $0x178] sm:$0xff] %v275
                %v277 = vld [vmem:[%s179 + $0x300] sm:$0xff]
                %278 = vst [vmem:[%s180 + $0x180] sm:$0xff] %v277
                %v279 = vld [vmem:[%s179 + $0x310] sm:$0xff]
                %280 = vst [vmem:[%s180 + $0x188] sm:$0xff] %v279
                %v281 = vld [vmem:[%s179 + $0x320] sm:$0xff]
                %282 = vst [vmem:[%s180 + $0x190] sm:$0xff] %v281
                %v283 = vld [vmem:[%s179 + $0x330] sm:$0xff]
                %284 = vst [vmem:[%s180 + $0x198] sm:$0xff] %v283
                %v285 = vld [vmem:[%s179 + $0x340] sm:$0xff]
                %286 = vst [vmem:[%s180 + $0x1a0] sm:$0xff] %v285
                %v287 = vld [vmem:[%s179 + $0x350] sm:$0xff]
                %288 = vst [vmem:[%s180 + $0x1a8] sm:$0xff] %v287
                %v289 = vld [vmem:[%s179 + $0x360] sm:$0xff]
                %290 = vst [vmem:[%s180 + $0x1b0] sm:$0xff] %v289
                %v291 = vld [vmem:[%s179 + $0x370] sm:$0xff]
                %292 = vst [vmem:[%s180 + $0x1b8] sm:$0xff] %v291
                %v293 = vld [vmem:[%s179 + $0x380] sm:$0xff]
                %294 = vst [vmem:[%s180 + $0x1c0] sm:$0xff] %v293
                %v295 = vld [vmem:[%s179 + $0x390] sm:$0xff]
                %296 = vst [vmem:[%s180 + $0x1c8] sm:$0xff] %v295
                %v297 = vld [vmem:[%s179 + $0x3a0] sm:$0xff]
                %298 = vst [vmem:[%s180 + $0x1d0] sm:$0xff] %v297
                %v299 = vld [vmem:[%s179 + $0x3b0] sm:$0xff]
                %300 = vst [vmem:[%s180 + $0x1d8] sm:$0xff] %v299
                %v301 = vld [vmem:[%s179 + $0x3c0] sm:$0xff]
                %302 = vst [vmem:[%s180 + $0x1e0] sm:$0xff] %v301
                %v303 = vld [vmem:[%s179 + $0x3d0] sm:$0xff]
                %304 = vst [vmem:[%s180 + $0x1e8] sm:$0xff] %v303
                %v305 = vld [vmem:[%s179 + $0x3e0] sm:$0xff]
                %306 = vst [vmem:[%s180 + $0x1f0] sm:$0xff] %v305
                %v307 = vld [vmem:[%s179 + $0x3f0] sm:$0xff]
                %308 = vst [vmem:[%s180 + $0x1f8] sm:$0xff] %v307
                %v309 = vld [vmem:[%s179 + $0x400] sm:$0xff]
                %310 = vst [vmem:[%s180 + $0x200] sm:$0xff] %v309
                %v311 = vld [vmem:[%s179 + $0x410] sm:$0xff]
                %312 = vst [vmem:[%s180 + $0x208] sm:$0xff] %v311
                %v313 = vld [vmem:[%s179 + $0x420] sm:$0xff]
                %314 = vst [vmem:[%s180 + $0x210] sm:$0xff] %v313
                %v315 = vld [vmem:[%s179 + $0x430] sm:$0xff]
                %316 = vst [vmem:[%s180 + $0x218] sm:$0xff] %v315
                %v317 = vld [vmem:[%s179 + $0x440] sm:$0xff]
                %318 = vst [vmem:[%s180 + $0x220] sm:$0xff] %v317
                %v319 = vld [vmem:[%s179 + $0x450] sm:$0xff]
                %320 = vst [vmem:[%s180 + $0x228] sm:$0xff] %v319
                %v321 = vld [vmem:[%s179 + $0x460] sm:$0xff]
                %322 = vst [vmem:[%s180 + $0x230] sm:$0xff] %v321
                %v323 = vld [vmem:[%s179 + $0x470] sm:$0xff]
                %324 = vst [vmem:[%s180 + $0x238] sm:$0xff] %v323
                %v325 = vld [vmem:[%s179 + $0x480] sm:$0xff]
                %326 = vst [vmem:[%s180 + $0x240] sm:$0xff] %v325
                %v327 = vld [vmem:[%s179 + $0x490] sm:$0xff]
                %328 = vst [vmem:[%s180 + $0x248] sm:$0xff] %v327
                %v329 = vld [vmem:[%s179 + $0x4a0] sm:$0xff]
                %330 = vst [vmem:[%s180 + $0x250] sm:$0xff] %v329
                %v331 = vld [vmem:[%s179 + $0x4b0] sm:$0xff]
                %332 = vst [vmem:[%s180 + $0x258] sm:$0xff] %v331
                %v333 = vld [vmem:[%s179 + $0x4c0] sm:$0xff]
                %334 = vst [vmem:[%s180 + $0x260] sm:$0xff] %v333
                %v335 = vld [vmem:[%s179 + $0x4d0] sm:$0xff]
                %336 = vst [vmem:[%s180 + $0x268] sm:$0xff] %v335
                %v337 = vld [vmem:[%s179 + $0x4e0] sm:$0xff]
                %338 = vst [vmem:[%s180 + $0x270] sm:$0xff] %v337
                %v339 = vld [vmem:[%s179 + $0x4f0] sm:$0xff]
                %340 = vst [vmem:[%s180 + $0x278] sm:$0xff] %v339
                %v341 = vld [vmem:[%s179 + $0x500] sm:$0xff]
                %342 = vst [vmem:[%s180 + $0x280] sm:$0xff] %v341
                %v343 = vld [vmem:[%s179 + $0x510] sm:$0xff]
                %344 = vst [vmem:[%s180 + $0x288] sm:$0xff] %v343
                %v345 = vld [vmem:[%s179 + $0x520] sm:$0xff]
                %346 = vst [vmem:[%s180 + $0x290] sm:$0xff] %v345
                %v347 = vld [vmem:[%s179 + $0x530] sm:$0xff]
                %348 = vst [vmem:[%s180 + $0x298] sm:$0xff] %v347
                %v349 = vld [vmem:[%s179 + $0x540] sm:$0xff]
                %350 = vst [vmem:[%s180 + $0x2a0] sm:$0xff] %v349
                %v351 = vld [vmem:[%s179 + $0x550] sm:$0xff]
                %352 = vst [vmem:[%s180 + $0x2a8] sm:$0xff] %v351
                %v353 = vld [vmem:[%s179 + $0x560] sm:$0xff]
                %354 = vst [vmem:[%s180 + $0x2b0] sm:$0xff] %v353
                %v355 = vld [vmem:[%s179 + $0x570] sm:$0xff]
                %356 = vst [vmem:[%s180 + $0x2b8] sm:$0xff] %v355
                %v357 = vld [vmem:[%s179 + $0x580] sm:$0xff]
                %358 = vst [vmem:[%s180 + $0x2c0] sm:$0xff] %v357
                %v359 = vld [vmem:[%s179 + $0x590] sm:$0xff]
                %360 = vst [vmem:[%s180 + $0x2c8] sm:$0xff] %v359
                %v361 = vld [vmem:[%s179 + $0x5a0] sm:$0xff]
                %362 = vst [vmem:[%s180 + $0x2d0] sm:$0xff] %v361
                %v363 = vld [vmem:[%s179 + $0x5b0] sm:$0xff]
                %364 = vst [vmem:[%s180 + $0x2d8] sm:$0xff] %v363
                %v365 = vld [vmem:[%s179 + $0x5c0] sm:$0xff]
                %366 = vst [vmem:[%s180 + $0x2e0] sm:$0xff] %v365
                %v367 = vld [vmem:[%s179 + $0x5d0] sm:$0xff]
                %368 = vst [vmem:[%s180 + $0x2e8] sm:$0xff] %v367
                %v369 = vld [vmem:[%s179 + $0x5e0] sm:$0xff]
                %370 = vst [vmem:[%s180 + $0x2f0] sm:$0xff] %v369
                %v371 = vld [vmem:[%s179 + $0x5f0] sm:$0xff]
                %372 = vst [vmem:[%s180 + $0x2f8] sm:$0xff] %v371
              $region41: #{_lambda_.9} parent=35 // loop_footer
                %s178 = sadd.s32 1, %s174
              $region42: #{_lambda_.9} parent=35 // loop_footer_branch
                %173 = sbr.rel target = $region38
              $region43: #{_lambda_.9} parent=35 // loop_exit
                _
            $region36: #{_lambda_.9} parent=27 // pred_fallthru
              _
          $region28: #{_lambda_.9} parent=23 // pred_fallthru
            _
          %577 = vnop
        $region24: #{_lambda_.9} parent=19 // pred_fallthru
          _
        // Predicated region
        $region59: #{_lambda_.9} parent=19 // pred_check
          %p578 = pneg %p93
        $region60: #{_lambda_.9} parent=19 // pred_check_branch
          %580 = sbr.rel (%p578) target = $region62
        $region61: #{_lambda_.9} parent=19 // pred_region
          %s581 = smul.u32 2, %s17
          %p582 = scmp.lt.s32.totalorder %s581, 3
          %s583 = scalar_select %p582, %s581, 3
          %s584 = scalar_lea.vmem %s2, %s583
          %s585 = smul.u32 2, %s17
        $region62: #{_lambda_.9} parent=19 // pred_fallthru
          _
      $region20: #{_lambda_.9} parent=5 // pred_fallthru
        _
      %p586 = scmp.le.s32.totalorder 1, %s9
      %p587 = scmp.lt.s32.totalorder %s9, 3
      %p588 = pnand %p586, %p587
      %p589 = pneg %p588
      // Predicated region
      $region63: #{_lambda_.9} parent=5 // pred_check
        _
      $region64: #{_lambda_.9} parent=5 // pred_check_branch
        %591 = sbr.rel (%p588) target = $region66
      $region65: #{_lambda_.9} parent=5 // pred_region
        %s592 = ssub.s32 %s9, 1
        %s593 = sand.u32 %s60, 1
        %s594 = sand.u32 %s60, 1
        %s595 = smul.addr %s594, 768
        %s596 = scalar_lea.vmem [#allocation2], %s595
        // Predicated region
        $region67: #{_lambda_.9} parent=65 // pred_check
          %p597 = pneg %p73
        $region68: #{_lambda_.9} parent=65 // pred_check_branch
          %599 = sbr.rel (%p597) target = $region70
        $region69: #{_lambda_.9} parent=65 // pred_region
          _
        $region70: #{_lambda_.9} parent=65 // pred_fallthru
          _
        %s600 = smul.u32 12, %s18
        %p601 = scmp.lt.s32.totalorder %s600, 11
        %s602 = scalar_select %p601, %s600, 11
        %s603 = smul.addr %s602, 6
        %s604 = smul.addr %s603, 4
        %s605 = scalar_lea.vmem %s0, %s604
        %p606 = pneg %p47
        %p607 = pneg %p44
        %s608 = sand.u32 %s60, 1
        %s609 = sand.u32 %s60, 1
        %s610 = smul.addr %s609, 768
        %s611 = scalar_lea.vmem [#allocation2], %s610
        %p612 = pneg %p73
        %p613 = pneg %p70
        %s614 = smul.u32 2, %s19
        %p615 = scmp.lt.s32.totalorder %s614, 3
        %s616 = scalar_select %p615, %s614, 3
        %s617 = scalar_lea.vmem %s2, %s616
        %p618 = pneg %p99
        %p619 = pneg %p96
        %p620 = pneg %p127
        %p621 = pneg %p124
        %s622 = sand.u32 %s114, 1
        %s623 = sand.u32 %s114, 1
        %s624 = smul.addr %s623, 192
        %s625 = scalar_lea.vmem [#allocation3], %s624
        %s626 = smul.u32 12, %s18
        %p627 = scmp.lt.s32.totalorder %s626, 11
        %s628 = scalar_select %p627, %s626, 11
        %s629 = smul.addr %s628, 6
        %s630 = smul.addr %s629, 4
        %s631 = scalar_lea.vmem %s0, %s630
        %s632 = smul.u32 12, %s18
        %s633 = smul.u32 2, %s19
        %s634 = smul.u32 2, %s19
        %p635 = scmp.lt.s32.totalorder %s634, 3
        %s636 = scalar_select %p635, %s634, 3
        %s637 = scalar_lea.vmem %s2, %s636
        %s638 = smul.u32 2, %s19
        %s639 = smul.u32 12, %s18
        %s640 = smul.u32 2, %s19
        %v641 = vld [vmem:[%s631] sm:$0xff]
        %v642 = vld [vmem:[%s631 + $0x8] sm:$0xff]
        %v643 = vld [vmem:[%s631 + $0x10] sm:$0xff]
        %v644 = vld [vmem:[%s631 + $0x18] sm:$0xff]
        %v645 = vld [vmem:[%s631 + $0x20] sm:$0xff]
        %v646 = vld [vmem:[%s631 + $0x28] sm:$0xff]
        %v647 = vld [vmem:[%s631 + $0x30] sm:$0xff]
        %v648 = vld [vmem:[%s631 + $0x38] sm:$0xff]
        %v649 = vld [vmem:[%s631 + $0x40] sm:$0xff]
        %v650 = vld [vmem:[%s631 + $0x48] sm:$0xff]
        %v651 = vld [vmem:[%s631 + $0x50] sm:$0xff]
        %v652 = vld [vmem:[%s631 + $0x58] sm:$0xff]
        %v653 = vld [vmem:[%s631 + $0x60] sm:$0xff]
        %v654 = vld [vmem:[%s631 + $0x68] sm:$0xff]
        %v655 = vld [vmem:[%s631 + $0x70] sm:$0xff]
        %v656 = vld [vmem:[%s631 + $0x78] sm:$0xff]
        %v657 = vld [vmem:[%s631 + $0x80] sm:$0xff]
        %v658 = vld [vmem:[%s631 + $0x88] sm:$0xff]
        %v659 = vld [vmem:[%s631 + $0x90] sm:$0xff]
        %v660 = vld [vmem:[%s631 + $0x98] sm:$0xff]
        %v661 = vld [vmem:[%s631 + $0xa0] sm:$0xff]
        %v662 = vld [vmem:[%s631 + $0xa8] sm:$0xff]
        %v663 = vld [vmem:[%s631 + $0xb0] sm:$0xff]
        %v664 = vld [vmem:[%s631 + $0xb8] sm:$0xff]
        %v665 = vld [vmem:[%s631 + $0xc0] sm:$0xff]
        %v666 = vld [vmem:[%s631 + $0xc8] sm:$0xff]
        %v667 = vld [vmem:[%s631 + $0xd0] sm:$0xff]
        %v668 = vld [vmem:[%s631 + $0xd8] sm:$0xff]
        %v669 = vld [vmem:[%s631 + $0xe0] sm:$0xff]
        %v670 = vld [vmem:[%s631 + $0xe8] sm:$0xff]
        %v671 = vld [vmem:[%s631 + $0xf0] sm:$0xff]
        %v672 = vld [vmem:[%s631 + $0xf8] sm:$0xff]
        %v673 = vld [vmem:[%s631 + $0x100] sm:$0xff]
        %v674 = vld [vmem:[%s631 + $0x108] sm:$0xff]
        %v675 = vld [vmem:[%s631 + $0x110] sm:$0xff]
        %v676 = vld [vmem:[%s631 + $0x118] sm:$0xff]
        %v677 = vld [vmem:[%s596] sm:$0xff]
        %v678 = vld [vmem:[%s596 + $0x8] sm:$0xff]
        %v679 = vld [vmem:[%s596 + $0x10] sm:$0xff]
        %v680 = vld [vmem:[%s596 + $0x18] sm:$0xff]
        %v681 = vld [vmem:[%s596 + $0x20] sm:$0xff]
        %v682 = vld [vmem:[%s596 + $0x28] sm:$0xff]
        %v683 = vld [vmem:[%s596 + $0x30] sm:$0xff]
        %v684 = vld [vmem:[%s596 + $0x38] sm:$0xff]
        %v685 = vld [vmem:[%s596 + $0x40] sm:$0xff]
        %v686 = vld [vmem:[%s596 + $0x48] sm:$0xff]
        %v687 = vld [vmem:[%s596 + $0x50] sm:$0xff]
        %v688 = vld [vmem:[%s596 + $0x58] sm:$0xff]
        %v689 = vld [vmem:[%s596 + $0x60] sm:$0xff]
        %v690 = vld [vmem:[%s596 + $0x68] sm:$0xff]
        %v691 = vld [vmem:[%s596 + $0x70] sm:$0xff]
        %v692 = vld [vmem:[%s596 + $0x78] sm:$0xff]
        %v693 = vld [vmem:[%s596 + $0x80] sm:$0xff]
        %v694 = vld [vmem:[%s596 + $0x88] sm:$0xff]
        %v695 = vld [vmem:[%s596 + $0x90] sm:$0xff]
        %v696 = vld [vmem:[%s596 + $0x98] sm:$0xff]
        %v697 = vld [vmem:[%s596 + $0xa0] sm:$0xff]
        %v698 = vld [vmem:[%s596 + $0xa8] sm:$0xff]
        %v699 = vld [vmem:[%s596 + $0xb0] sm:$0xff]
        %v700 = vld [vmem:[%s596 + $0xb8] sm:$0xff]
        %v701 = vld [vmem:[%s596 + $0xc0] sm:$0xff]
        %v702 = vld [vmem:[%s596 + $0xc8] sm:$0xff]
        %v703 = vld [vmem:[%s596 + $0xd0] sm:$0xff]
        %v704 = vld [vmem:[%s596 + $0xd8] sm:$0xff]
        %v705 = vld [vmem:[%s596 + $0xe0] sm:$0xff]
        %v706 = vld [vmem:[%s596 + $0xe8] sm:$0xff]
        %v707 = vld [vmem:[%s596 + $0xf0] sm:$0xff]
        %v708 = vld [vmem:[%s596 + $0xf8] sm:$0xff]
        %v709 = vld [vmem:[%s596 + $0x100] sm:$0xff]
        %v710 = vld [vmem:[%s596 + $0x108] sm:$0xff]
        %v711 = vld [vmem:[%s596 + $0x110] sm:$0xff]
        %v712 = vld [vmem:[%s596 + $0x118] sm:$0xff]
        %v713 = vld [vmem:[%s596 + $0x120] sm:$0xff]
        %v714 = vld [vmem:[%s596 + $0x128] sm:$0xff]
        %v715 = vld [vmem:[%s596 + $0x130] sm:$0xff]
        %v716 = vld [vmem:[%s596 + $0x138] sm:$0xff]
        %v717 = vld [vmem:[%s596 + $0x140] sm:$0xff]
        %v718 = vld [vmem:[%s596 + $0x148] sm:$0xff]
        %v719 = vld [vmem:[%s596 + $0x150] sm:$0xff]
        %v720 = vld [vmem:[%s596 + $0x158] sm:$0xff]
        %v721 = vld [vmem:[%s596 + $0x160] sm:$0xff]
        %v722 = vld [vmem:[%s596 + $0x168] sm:$0xff]
        %v723 = vld [vmem:[%s596 + $0x170] sm:$0xff]
        %v724 = vld [vmem:[%s596 + $0x178] sm:$0xff]
        %v725 = vld [vmem:[%s596 + $0x180] sm:$0xff]
        %v726 = vld [vmem:[%s596 + $0x188] sm:$0xff]
        %v727 = vld [vmem:[%s596 + $0x190] sm:$0xff]
        %v728 = vld [vmem:[%s596 + $0x198] sm:$0xff]
        %v729 = vld [vmem:[%s596 + $0x1a0] sm:$0xff]
        %v730 = vld [vmem:[%s596 + $0x1a8] sm:$0xff]
        %v731 = vld [vmem:[%s596 + $0x1b0] sm:$0xff]
        %v732 = vld [vmem:[%s596 + $0x1b8] sm:$0xff]
        %v733 = vld [vmem:[%s596 + $0x1c0] sm:$0xff]
        %v734 = vld [vmem:[%s596 + $0x1c8] sm:$0xff]
        %v735 = vld [vmem:[%s596 + $0x1d0] sm:$0xff]
        %v736 = vld [vmem:[%s596 + $0x1d8] sm:$0xff]
        %v737 = vld [vmem:[%s596 + $0x1e0] sm:$0xff]
        %v738 = vld [vmem:[%s596 + $0x1e8] sm:$0xff]
        %v739 = vld [vmem:[%s596 + $0x1f0] sm:$0xff]
        %v740 = vld [vmem:[%s596 + $0x1f8] sm:$0xff]
        %v741 = vld [vmem:[%s596 + $0x200] sm:$0xff]
        %v742 = vld [vmem:[%s596 + $0x208] sm:$0xff]
        %v743 = vld [vmem:[%s596 + $0x210] sm:$0xff]
        %v744 = vld [vmem:[%s596 + $0x218] sm:$0xff]
        %v745 = vld [vmem:[%s596 + $0x220] sm:$0xff]
        %v746 = vld [vmem:[%s596 + $0x228] sm:$0xff]
        %v747 = vld [vmem:[%s596 + $0x230] sm:$0xff]
        %v748 = vld [vmem:[%s596 + $0x238] sm:$0xff]
        %v749 = vld [vmem:[%s596 + $0x240] sm:$0xff]
        %v750 = vld [vmem:[%s596 + $0x248] sm:$0xff]
        %v751 = vld [vmem:[%s596 + $0x250] sm:$0xff]
        %v752 = vld [vmem:[%s596 + $0x258] sm:$0xff]
        %v753 = vld [vmem:[%s596 + $0x260] sm:$0xff]
        %v754 = vld [vmem:[%s596 + $0x268] sm:$0xff]
        %v755 = vld [vmem:[%s596 + $0x270] sm:$0xff]
        %v756 = vld [vmem:[%s596 + $0x278] sm:$0xff]
        %v757 = vld [vmem:[%s596 + $0x280] sm:$0xff]
        %v758 = vld [vmem:[%s596 + $0x288] sm:$0xff]
        %v759 = vld [vmem:[%s596 + $0x290] sm:$0xff]
        %v760 = vld [vmem:[%s596 + $0x298] sm:$0xff]
        %v761 = vld [vmem:[%s596 + $0x2a0] sm:$0xff]
        %v762 = vld [vmem:[%s596 + $0x2a8] sm:$0xff]
        %v763 = vld [vmem:[%s596 + $0x2b0] sm:$0xff]
        %v764 = vld [vmem:[%s596 + $0x2b8] sm:$0xff]
        %v765 = vld [vmem:[%s596 + $0x2c0] sm:$0xff]
        %v766 = vld [vmem:[%s596 + $0x2c8] sm:$0xff]
        %v767 = vld [vmem:[%s596 + $0x2d0] sm:$0xff]
        %v768 = vld [vmem:[%s596 + $0x2d8] sm:$0xff]
        %v769 = vld [vmem:[%s596 + $0x2e0] sm:$0xff]
        %v770 = vld [vmem:[%s596 + $0x2e8] sm:$0xff]
        %v771 = vld [vmem:[%s596 + $0x2f0] sm:$0xff]
        %v772 = vld [vmem:[%s596 + $0x2f8] sm:$0xff]
        %v773 = vld [vmem:[%s637] sm:$0x3]
        %v775 = vlaneseq
        %v776 = vshrl.u32 %v775, 7
        %v777 = vsub.s32 0, %v776
        %v778 = vrot.slane %v773, %v777
        %v779 = vlaneseq
        %v780 = vshrl.u32 %v779, 7
        %v781 = vsub.s32 1, %v780
        %v782 = vrot.slane %v773, %v781
        %v821 = vunpack.c.l.b16 %v641
        %v822 = vunpack.c.h.b16 %v641
        %v823 = vunpack.c.l.b16 %v642
        %v824 = vunpack.c.h.b16 %v642
        %v825 = vunpack.c.l.b16 %v643
        %v826 = vunpack.c.h.b16 %v643
        %v827 = vunpack.c.l.b16 %v644
        %v828 = vunpack.c.h.b16 %v644
        %v829 = vunpack.c.l.b16 %v645
        %v830 = vunpack.c.h.b16 %v645
        %v831 = vunpack.c.l.b16 %v646
        %v832 = vunpack.c.h.b16 %v646
        %v833 = vunpack.c.l.b16 %v647
        %v834 = vunpack.c.h.b16 %v647
        %v835 = vunpack.c.l.b16 %v648
        %v836 = vunpack.c.h.b16 %v648
        %v837 = vunpack.c.l.b16 %v649
        %v838 = vunpack.c.h.b16 %v649
        %v839 = vunpack.c.l.b16 %v650
        %v840 = vunpack.c.h.b16 %v650
        %v841 = vunpack.c.l.b16 %v651
        %v842 = vunpack.c.h.b16 %v651
        %v843 = vunpack.c.l.b16 %v652
        %v844 = vunpack.c.h.b16 %v652
        %v845 = vunpack.c.l.b16 %v653
        %v846 = vunpack.c.h.b16 %v653
        %v847 = vunpack.c.l.b16 %v654
        %v848 = vunpack.c.h.b16 %v654
        %v849 = vunpack.c.l.b16 %v655
        %v850 = vunpack.c.h.b16 %v655
        %v851 = vunpack.c.l.b16 %v656
        %v852 = vunpack.c.h.b16 %v656
        %v853 = vunpack.c.l.b16 %v657
        %v854 = vunpack.c.h.b16 %v657
        %v855 = vunpack.c.l.b16 %v658
        %v856 = vunpack.c.h.b16 %v658
        %v857 = vunpack.c.l.b16 %v659
        %v858 = vunpack.c.h.b16 %v659
        %v859 = vunpack.c.l.b16 %v660
        %v860 = vunpack.c.h.b16 %v660
        %v861 = vunpack.c.l.b16 %v661
        %v862 = vunpack.c.h.b16 %v661
        %v863 = vunpack.c.l.b16 %v662
        %v864 = vunpack.c.h.b16 %v662
        %v865 = vunpack.c.l.b16 %v663
        %v866 = vunpack.c.h.b16 %v663
        %v867 = vunpack.c.l.b16 %v664
        %v868 = vunpack.c.h.b16 %v664
        %v869 = vunpack.c.l.b16 %v665
        %v870 = vunpack.c.h.b16 %v665
        %v871 = vunpack.c.l.b16 %v666
        %v872 = vunpack.c.h.b16 %v666
        %v873 = vunpack.c.l.b16 %v667
        %v874 = vunpack.c.h.b16 %v667
        %v875 = vunpack.c.l.b16 %v668
        %v876 = vunpack.c.h.b16 %v668
        %v877 = vunpack.c.l.b16 %v669
        %v878 = vunpack.c.h.b16 %v669
        %v879 = vunpack.c.l.b16 %v670
        %v880 = vunpack.c.h.b16 %v670
        %v881 = vunpack.c.l.b16 %v671
        %v882 = vunpack.c.h.b16 %v671
        %v883 = vunpack.c.l.b16 %v672
        %v884 = vunpack.c.h.b16 %v672
        %v885 = vunpack.c.l.b16 %v673
        %v886 = vunpack.c.h.b16 %v673
        %v887 = vunpack.c.l.b16 %v674
        %v888 = vunpack.c.h.b16 %v674
        %v889 = vunpack.c.l.b16 %v675
        %v890 = vunpack.c.h.b16 %v675
        %v891 = vunpack.c.l.b16 %v676
        %v892 = vunpack.c.h.b16 %v676
        %v893 = vpack.c.b16 %v827, %v821
        %v894 = vpack.c.b16 %v828, %v822
        %v895 = vpack.c.b16 %v829, %v823
        %v896 = vpack.c.b16 %v830, %v824
        %v897 = vpack.c.b16 %v831, %v825
        %v898 = vpack.c.b16 %v832, %v826
        %v899 = vpack.c.b16 %v839, %v833
        %v900 = vpack.c.b16 %v840, %v834
        %v901 = vpack.c.b16 %v841, %v835
        %v902 = vpack.c.b16 %v842, %v836
        %v903 = vpack.c.b16 %v843, %v837
        %v904 = vpack.c.b16 %v844, %v838
        %v905 = vpack.c.b16 %v851, %v845
        %v906 = vpack.c.b16 %v852, %v846
        %v907 = vpack.c.b16 %v853, %v847
        %v908 = vpack.c.b16 %v854, %v848
        %v909 = vpack.c.b16 %v855, %v849
        %v910 = vpack.c.b16 %v856, %v850
        %v911 = vpack.c.b16 %v863, %v857
        %v912 = vpack.c.b16 %v864, %v858
        %v913 = vpack.c.b16 %v865, %v859
        %v914 = vpack.c.b16 %v866, %v860
        %v915 = vpack.c.b16 %v867, %v861
        %v916 = vpack.c.b16 %v868, %v862
        %v917 = vpack.c.b16 %v875, %v869
        %v918 = vpack.c.b16 %v876, %v870
        %v919 = vpack.c.b16 %v877, %v871
        %v920 = vpack.c.b16 %v878, %v872
        %v921 = vpack.c.b16 %v879, %v873
        %v922 = vpack.c.b16 %v880, %v874
        %v923 = vpack.c.b16 %v887, %v881
        %v924 = vpack.c.b16 %v888, %v882
        %v925 = vpack.c.b16 %v889, %v883
        %v926 = vpack.c.b16 %v890, %v884
        %v927 = vpack.c.b16 %v891, %v885
        %v928 = vpack.c.b16 %v892, %v886
        %v1061 = vunpack.c.l.b16 %v677
        %v1062 = vunpack.c.h.b16 %v677
        %v1063 = vunpack.c.l.b16 %v678
        %v1064 = vunpack.c.h.b16 %v678
        %v1065 = vunpack.c.l.b16 %v679
        %v1066 = vunpack.c.h.b16 %v679
        %v1067 = vunpack.c.l.b16 %v680
        %v1068 = vunpack.c.h.b16 %v680
        %v1069 = vunpack.c.l.b16 %v681
        %v1070 = vunpack.c.h.b16 %v681
        %v1071 = vunpack.c.l.b16 %v682
        %v1072 = vunpack.c.h.b16 %v682
        %v1073 = vunpack.c.l.b16 %v683
        %v1074 = vunpack.c.h.b16 %v683
        %v1075 = vunpack.c.l.b16 %v684
        %v1076 = vunpack.c.h.b16 %v684
        %v1077 = vunpack.c.l.b16 %v685
        %v1078 = vunpack.c.h.b16 %v685
        %v1079 = vunpack.c.l.b16 %v686
        %v1080 = vunpack.c.h.b16 %v686
        %v1081 = vunpack.c.l.b16 %v687
        %v1082 = vunpack.c.h.b16 %v687
        %v1083 = vunpack.c.l.b16 %v688
        %v1084 = vunpack.c.h.b16 %v688
        %v1085 = vunpack.c.l.b16 %v689
        %v1086 = vunpack.c.h.b16 %v689
        %v1087 = vunpack.c.l.b16 %v690
        %v1088 = vunpack.c.h.b16 %v690
        %v1089 = vunpack.c.l.b16 %v691
        %v1090 = vunpack.c.h.b16 %v691
        %v1091 = vunpack.c.l.b16 %v692
        %v1092 = vunpack.c.h.b16 %v692
        %v1093 = vunpack.c.l.b16 %v693
        %v1094 = vunpack.c.h.b16 %v693
        %v1095 = vunpack.c.l.b16 %v694
        %v1096 = vunpack.c.h.b16 %v694
        %v1097 = vunpack.c.l.b16 %v695
        %v1098 = vunpack.c.h.b16 %v695
        %v1099 = vunpack.c.l.b16 %v696
        %v1100 = vunpack.c.h.b16 %v696
        %v1101 = vunpack.c.l.b16 %v697
        %v1102 = vunpack.c.h.b16 %v697
        %v1103 = vunpack.c.l.b16 %v698
        %v1104 = vunpack.c.h.b16 %v698
        %v1105 = vunpack.c.l.b16 %v699
        %v1106 = vunpack.c.h.b16 %v699
        %v1107 = vunpack.c.l.b16 %v700
        %v1108 = vunpack.c.h.b16 %v700
        %v1109 = vunpack.c.l.b16 %v701
        %v1110 = vunpack.c.h.b16 %v701
        %v1111 = vunpack.c.l.b16 %v702
        %v1112 = vunpack.c.h.b16 %v702
        %v1113 = vunpack.c.l.b16 %v703
        %v1114 = vunpack.c.h.b16 %v703
        %v1115 = vunpack.c.l.b16 %v704
        %v1116 = vunpack.c.h.b16 %v704
        %v1117 = vunpack.c.l.b16 %v705
        %v1118 = vunpack.c.h.b16 %v705
        %v1119 = vunpack.c.l.b16 %v706
        %v1120 = vunpack.c.h.b16 %v706
        %v1121 = vunpack.c.l.b16 %v707
        %v1122 = vunpack.c.h.b16 %v707
        %v1123 = vunpack.c.l.b16 %v708
        %v1124 = vunpack.c.h.b16 %v708
        %v1125 = vunpack.c.l.b16 %v709
        %v1126 = vunpack.c.h.b16 %v709
        %v1127 = vunpack.c.l.b16 %v710
        %v1128 = vunpack.c.h.b16 %v710
        %v1129 = vunpack.c.l.b16 %v711
        %v1130 = vunpack.c.h.b16 %v711
        %v1131 = vunpack.c.l.b16 %v712
        %v1132 = vunpack.c.h.b16 %v712
        %v1133 = vunpack.c.l.b16 %v713
        %v1134 = vunpack.c.h.b16 %v713
        %v1135 = vunpack.c.l.b16 %v714
        %v1136 = vunpack.c.h.b16 %v714
        %v1137 = vunpack.c.l.b16 %v715
        %v1138 = vunpack.c.h.b16 %v715
        %v1139 = vunpack.c.l.b16 %v716
        %v1140 = vunpack.c.h.b16 %v716
        %v1141 = vunpack.c.l.b16 %v717
        %v1142 = vunpack.c.h.b16 %v717
        %v1143 = vunpack.c.l.b16 %v718
        %v1144 = vunpack.c.h.b16 %v718
        %v1145 = vunpack.c.l.b16 %v719
        %v1146 = vunpack.c.h.b16 %v719
        %v1147 = vunpack.c.l.b16 %v720
        %v1148 = vunpack.c.h.b16 %v720
        %v1149 = vunpack.c.l.b16 %v721
        %v1150 = vunpack.c.h.b16 %v721
        %v1151 = vunpack.c.l.b16 %v722
        %v1152 = vunpack.c.h.b16 %v722
        %v1153 = vunpack.c.l.b16 %v723
        %v1154 = vunpack.c.h.b16 %v723
        %v1155 = vunpack.c.l.b16 %v724
        %v1156 = vunpack.c.h.b16 %v724
        %v1157 = vunpack.c.l.b16 %v725
        %v1158 = vunpack.c.h.b16 %v725
        %v1159 = vunpack.c.l.b16 %v726
        %v1160 = vunpack.c.h.b16 %v726
        %v1161 = vunpack.c.l.b16 %v727
        %v1162 = vunpack.c.h.b16 %v727
        %v1163 = vunpack.c.l.b16 %v728
        %v1164 = vunpack.c.h.b16 %v728
        %v1165 = vunpack.c.l.b16 %v729
        %v1166 = vunpack.c.h.b16 %v729
        %v1167 = vunpack.c.l.b16 %v730
        %v1168 = vunpack.c.h.b16 %v730
        %v1169 = vunpack.c.l.b16 %v731
        %v1170 = vunpack.c.h.b16 %v731
        %v1171 = vunpack.c.l.b16 %v732
        %v1172 = vunpack.c.h.b16 %v732
        %v1173 = vunpack.c.l.b16 %v733
        %v1174 = vunpack.c.h.b16 %v733
        %v1175 = vunpack.c.l.b16 %v734
        %v1176 = vunpack.c.h.b16 %v734
        %v1177 = vunpack.c.l.b16 %v735
        %v1178 = vunpack.c.h.b16 %v735
        %v1179 = vunpack.c.l.b16 %v736
        %v1180 = vunpack.c.h.b16 %v736
        %v1181 = vunpack.c.l.b16 %v737
        %v1182 = vunpack.c.h.b16 %v737
        %v1183 = vunpack.c.l.b16 %v738
        %v1184 = vunpack.c.h.b16 %v738
        %v1185 = vunpack.c.l.b16 %v739
        %v1186 = vunpack.c.h.b16 %v739
        %v1187 = vunpack.c.l.b16 %v740
        %v1188 = vunpack.c.h.b16 %v740
        %v1189 = vunpack.c.l.b16 %v741
        %v1190 = vunpack.c.h.b16 %v741
        %v1191 = vunpack.c.l.b16 %v742
        %v1192 = vunpack.c.h.b16 %v742
        %v1193 = vunpack.c.l.b16 %v743
        %v1194 = vunpack.c.h.b16 %v743
        %v1195 = vunpack.c.l.b16 %v744
        %v1196 = vunpack.c.h.b16 %v744
        %v1197 = vunpack.c.l.b16 %v745
        %v1198 = vunpack.c.h.b16 %v745
        %v1199 = vunpack.c.l.b16 %v746
        %v1200 = vunpack.c.h.b16 %v746
        %v1201 = vunpack.c.l.b16 %v747
        %v1202 = vunpack.c.h.b16 %v747
        %v1203 = vunpack.c.l.b16 %v748
        %v1204 = vunpack.c.h.b16 %v748
        %v1205 = vunpack.c.l.b16 %v749
        %v1206 = vunpack.c.h.b16 %v749
        %v1207 = vunpack.c.l.b16 %v750
        %v1208 = vunpack.c.h.b16 %v750
        %v1209 = vunpack.c.l.b16 %v751
        %v1210 = vunpack.c.h.b16 %v751
        %v1211 = vunpack.c.l.b16 %v752
        %v1212 = vunpack.c.h.b16 %v752
        %v1213 = vunpack.c.l.b16 %v753
        %v1214 = vunpack.c.h.b16 %v753
        %v1215 = vunpack.c.l.b16 %v754
        %v1216 = vunpack.c.h.b16 %v754
        %v1217 = vunpack.c.l.b16 %v755
        %v1218 = vunpack.c.h.b16 %v755
        %v1219 = vunpack.c.l.b16 %v756
        %v1220 = vunpack.c.h.b16 %v756
        %v1221 = vunpack.c.l.b16 %v757
        %v1222 = vunpack.c.h.b16 %v757
        %v1223 = vunpack.c.l.b16 %v758
        %v1224 = vunpack.c.h.b16 %v758
        %v1225 = vunpack.c.l.b16 %v759
        %v1226 = vunpack.c.h.b16 %v759
        %v1227 = vunpack.c.l.b16 %v760
        %v1228 = vunpack.c.h.b16 %v760
        %v1229 = vunpack.c.l.b16 %v761
        %v1230 = vunpack.c.h.b16 %v761
        %v1231 = vunpack.c.l.b16 %v762
        %v1232 = vunpack.c.h.b16 %v762
        %v1233 = vunpack.c.l.b16 %v763
        %v1234 = vunpack.c.h.b16 %v763
        %v1235 = vunpack.c.l.b16 %v764
        %v1236 = vunpack.c.h.b16 %v764
        %v1237 = vunpack.c.l.b16 %v765
        %v1238 = vunpack.c.h.b16 %v765
        %v1239 = vunpack.c.l.b16 %v766
        %v1240 = vunpack.c.h.b16 %v766
        %v1241 = vunpack.c.l.b16 %v767
        %v1242 = vunpack.c.h.b16 %v767
        %v1243 = vunpack.c.l.b16 %v768
        %v1244 = vunpack.c.h.b16 %v768
        %v1245 = vunpack.c.l.b16 %v769
        %v1246 = vunpack.c.h.b16 %v769
        %v1247 = vunpack.c.l.b16 %v770
        %v1248 = vunpack.c.h.b16 %v770
        %v1249 = vunpack.c.l.b16 %v771
        %v1250 = vunpack.c.h.b16 %v771
        %v1251 = vunpack.c.l.b16 %v772
        %v1252 = vunpack.c.h.b16 %v772
        %v1253 = vpack.c.b16 %v1063, %v1061
        %v1254 = vpack.c.b16 %v1064, %v1062
        %v1255 = vpack.c.b16 %v1067, %v1065
        %v1256 = vpack.c.b16 %v1068, %v1066
        %v1257 = vpack.c.b16 %v1071, %v1069
        %v1258 = vpack.c.b16 %v1072, %v1070
        %v1259 = vpack.c.b16 %v1075, %v1073
        %v1260 = vpack.c.b16 %v1076, %v1074
        %v1261 = vpack.c.b16 %v1079, %v1077
        %v1262 = vpack.c.b16 %v1080, %v1078
        %v1263 = vpack.c.b16 %v1083, %v1081
        %v1264 = vpack.c.b16 %v1084, %v1082
        %v1265 = vpack.c.b16 %v1087, %v1085
        %v1266 = vpack.c.b16 %v1088, %v1086
        %v1267 = vpack.c.b16 %v1091, %v1089
        %v1268 = vpack.c.b16 %v1092, %v1090
        %v1269 = vpack.c.b16 %v1095, %v1093
        %v1270 = vpack.c.b16 %v1096, %v1094
        %v1271 = vpack.c.b16 %v1099, %v1097
        %v1272 = vpack.c.b16 %v1100, %v1098
        %v1273 = vpack.c.b16 %v1103, %v1101
        %v1274 = vpack.c.b16 %v1104, %v1102
        %v1275 = vpack.c.b16 %v1107, %v1105
        %v1276 = vpack.c.b16 %v1108, %v1106
        %v1277 = vpack.c.b16 %v1111, %v1109
        %v1278 = vpack.c.b16 %v1112, %v1110
        %v1279 = vpack.c.b16 %v1115, %v1113
        %v1280 = vpack.c.b16 %v1116, %v1114
        %v1281 = vpack.c.b16 %v1119, %v1117
        %v1282 = vpack.c.b16 %v1120, %v1118
        %v1283 = vpack.c.b16 %v1123, %v1121
        %v1284 = vpack.c.b16 %v1124, %v1122
        %v1285 = vpack.c.b16 %v1127, %v1125
        %v1286 = vpack.c.b16 %v1128, %v1126
        %v1287 = vpack.c.b16 %v1131, %v1129
        %v1288 = vpack.c.b16 %v1132, %v1130
        %v1289 = vpack.c.b16 %v1135, %v1133
        %v1290 = vpack.c.b16 %v1136, %v1134
        %v1291 = vpack.c.b16 %v1139, %v1137
        %v1292 = vpack.c.b16 %v1140, %v1138
        %v1293 = vpack.c.b16 %v1143, %v1141
        %v1294 = vpack.c.b16 %v1144, %v1142
        %v1295 = vpack.c.b16 %v1147, %v1145
        %v1296 = vpack.c.b16 %v1148, %v1146
        %v1297 = vpack.c.b16 %v1151, %v1149
        %v1298 = vpack.c.b16 %v1152, %v1150
        %v1299 = vpack.c.b16 %v1155, %v1153
        %v1300 = vpack.c.b16 %v1156, %v1154
        %v1301 = vpack.c.b16 %v1159, %v1157
        %v1302 = vpack.c.b16 %v1160, %v1158
        %v1303 = vpack.c.b16 %v1163, %v1161
        %v1304 = vpack.c.b16 %v1164, %v1162
        %v1305 = vpack.c.b16 %v1167, %v1165
        %v1306 = vpack.c.b16 %v1168, %v1166
        %v1307 = vpack.c.b16 %v1171, %v1169
        %v1308 = vpack.c.b16 %v1172, %v1170
        %v1309 = vpack.c.b16 %v1175, %v1173
        %v1310 = vpack.c.b16 %v1176, %v1174
        %v1311 = vpack.c.b16 %v1179, %v1177
        %v1312 = vpack.c.b16 %v1180, %v1178
        %v1313 = vpack.c.b16 %v1183, %v1181
        %v1314 = vpack.c.b16 %v1184, %v1182
        %v1315 = vpack.c.b16 %v1187, %v1185
        %v1316 = vpack.c.b16 %v1188, %v1186
        %v1317 = vpack.c.b16 %v1191, %v1189
        %v1318 = vpack.c.b16 %v1192, %v1190
        %v1319 = vpack.c.b16 %v1195, %v1193
        %v1320 = vpack.c.b16 %v1196, %v1194
        %v1321 = vpack.c.b16 %v1199, %v1197
        %v1322 = vpack.c.b16 %v1200, %v1198
        %v1323 = vpack.c.b16 %v1203, %v1201
        %v1324 = vpack.c.b16 %v1204, %v1202
        %v1325 = vpack.c.b16 %v1207, %v1205
        %v1326 = vpack.c.b16 %v1208, %v1206
        %v1327 = vpack.c.b16 %v1211, %v1209
        %v1328 = vpack.c.b16 %v1212, %v1210
        %v1329 = vpack.c.b16 %v1215, %v1213
        %v1330 = vpack.c.b16 %v1216, %v1214
        %v1331 = vpack.c.b16 %v1219, %v1217
        %v1332 = vpack.c.b16 %v1220, %v1218
        %v1333 = vpack.c.b16 %v1223, %v1221
        %v1334 = vpack.c.b16 %v1224, %v1222
        %v1335 = vpack.c.b16 %v1227, %v1225
        %v1336 = vpack.c.b16 %v1228, %v1226
        %v1337 = vpack.c.b16 %v1231, %v1229
        %v1338 = vpack.c.b16 %v1232, %v1230
        %v1339 = vpack.c.b16 %v1235, %v1233
        %v1340 = vpack.c.b16 %v1236, %v1234
        %v1341 = vpack.c.b16 %v1239, %v1237
        %v1342 = vpack.c.b16 %v1240, %v1238
        %v1343 = vpack.c.b16 %v1243, %v1241
        %v1344 = vpack.c.b16 %v1244, %v1242
        %v1345 = vpack.c.b16 %v1247, %v1245
        %v1346 = vpack.c.b16 %v1248, %v1246
        %v1347 = vpack.c.b16 %v1251, %v1249
        %v1348 = vpack.c.b16 %v1252, %v1250
        %1445 = vmatprep.subr.bf16.mxu0 %v1254
        %1446 = vmatpush1.bf16.msra.mxu0 %v1253
        %1447 = vmatprep.subr.bf16.mxu0 %v1256
        %1448 = vmatpush1.bf16.msra.mxu0 %v1255
        %1449 = vmatprep.subr.bf16.mxu0 %v1258
        %1450 = vmatpush1.bf16.msra.mxu0 %v1257
        %1451 = vmatprep.subr.bf16.mxu0 %v1260
        %1452 = vmatpush1.bf16.msra.mxu0 %v1259
        %1453 = vmatprep.subr.bf16.mxu0 %v1262
        %1454 = vmatpush1.bf16.msra.mxu0 %v1261
        %1455 = vmatprep.subr.bf16.mxu0 %v1264
        %1456 = vmatpush1.bf16.msra.mxu0 %v1263
        %1457 = vmatprep.subr.bf16.mxu0 %v1266
        %1458 = vmatpush1.bf16.msra.mxu0 %v1265
        %1459 = vmatprep.subr.bf16.mxu0 %v1268
        %1460 = vmatpush1.bf16.msra.mxu0 %v1267
        %1461 = vmatprep.subr.bf16.mxu0 %v1270
        %1462 = vmatpush1.bf16.msra.mxu0 %v1269
        %1463 = vmatprep.subr.bf16.mxu0 %v1272
        %1464 = vmatpush1.bf16.msra.mxu0 %v1271
        %1465 = vmatprep.subr.bf16.mxu0 %v1274
        %1466 = vmatpush1.bf16.msra.mxu0 %v1273
        %1467 = vmatprep.subr.bf16.mxu0 %v1276
        %1468 = vmatpush1.bf16.msra.mxu0 %v1275
        %1469 = vmatprep.subr.bf16.mxu0 %v1278
        %1470 = vmatpush1.bf16.msra.mxu0 %v1277
        %1471 = vmatprep.subr.bf16.mxu0 %v1280
        %1472 = vmatpush1.bf16.msra.mxu0 %v1279
        %1473 = vmatprep.subr.bf16.mxu0 %v1282
        %1474 = vmatpush1.bf16.msra.mxu0 %v1281
        %1475 = vmatprep.subr.bf16.mxu0 %v1284
        %1476 = vmatpush1.bf16.msra.mxu0 %v1283
        %1477 = vmatprep.mubr.bf16.mxu0 %v894
        %1478 = vmatmul.mubr.bf16.gmra.mrb[0].mxu0 %v893
        %v1479 = vpop.f32.mrb[0].mxu0
        %v1480 = vadd.f32 %v778, %v1479
        %v1481 = vpop.f32.mrb[0].mxu0
        %v1482 = vadd.f32 %v782, %v1481
        %v1483 = vpop.f32.mrb[0].mxu0
        %v1484 = vadd.f32 %v778, %v1483
        %v1485 = vpop.f32.mrb[0].mxu0
        %v1486 = vadd.f32 %v782, %v1485
        %1487 = vmatprep.mubr.bf16.mxu0 %v900
        %1488 = vmatmul.mubr.bf16.gmra.mrb[0].mxu0 %v899
        %v1489 = vpop.f32.mrb[0].mxu0
        %v1490 = vadd.f32 %v778, %v1489
        %v1491 = vpop.f32.mrb[0].mxu0
        %v1492 = vadd.f32 %v782, %v1491
        %v1493 = vpop.f32.mrb[0].mxu0
        %v1494 = vadd.f32 %v778, %v1493
        %v1495 = vpop.f32.mrb[0].mxu0
        %v1496 = vadd.f32 %v782, %v1495
        %1497 = vmatprep.mubr.bf16.mxu0 %v906
        %1498 = vmatmul.mubr.bf16.gmra.mrb[0].mxu0 %v905
        %v1499 = vpop.f32.mrb[0].mxu0
        %v1500 = vadd.f32 %v778, %v1499
        %v1501 = vpop.f32.mrb[0].mxu0
        %v1502 = vadd.f32 %v782, %v1501
        %v1503 = vpop.f32.mrb[0].mxu0
        %v1504 = vadd.f32 %v778, %v1503
        %v1505 = vpop.f32.mrb[0].mxu0
        %v1506 = vadd.f32 %v782, %v1505
        %1507 = vmatprep.mubr.bf16.mxu0 %v912
        %1508 = vmatmul.mubr.bf16.gmra.mrb[0].mxu0 %v911
        %v1509 = vpop.f32.mrb[0].mxu0
        %v1510 = vadd.f32 %v778, %v1509
        %v1511 = vpop.f32.mrb[0].mxu0
        %v1512 = vadd.f32 %v782, %v1511
        %v1513 = vpop.f32.mrb[0].mxu0
        %v1514 = vadd.f32 %v778, %v1513
        %v1515 = vpop.f32.mrb[0].mxu0
        %v1516 = vadd.f32 %v782, %v1515
        %1517 = vmatprep.mubr.bf16.mxu0 %v918
        %1518 = vmatmul.mubr.bf16.gmra.mrb[0].mxu0 %v917
        %v1519 = vpop.f32.mrb[0].mxu0
        %v1520 = vadd.f32 %v778, %v1519
        %v1521 = vpop.f32.mrb[0].mxu0
        %v1522 = vadd.f32 %v782, %v1521
        %v1523 = vpop.f32.mrb[0].mxu0
        %v1524 = vadd.f32 %v778, %v1523
        %v1525 = vpop.f32.mrb[0].mxu0
        %v1526 = vadd.f32 %v782, %v1525
        %1527 = vmatprep.mubr.bf16.mxu0 %v924
        %1528 = vmatmul.mubr.bf16.gmra.mrb[0].mxu0 %v923
        %v1529 = vpop.f32.mrb[0].mxu0
        %v1530 = vadd.f32 %v778, %v1529
        %v1531 = vpop.f32.mrb[0].mxu0
        %v1532 = vadd.f32 %v782, %v1531
        %v1533 = vpop.f32.mrb[0].mxu0
        %v1534 = vadd.f32 %v778, %v1533
        %v1535 = vpop.f32.mrb[0].mxu0
        %v1536 = vadd.f32 %v782, %v1535
        %1537 = vdwg.mxu0
        %1538 = vmatprep.subr.bf16.mxu0 %v1286
        %1539 = vmatpush1.bf16.msra.mxu0 %v1285
        %1540 = vmatprep.subr.bf16.mxu0 %v1288
        %1541 = vmatpush1.bf16.msra.mxu0 %v1287
        %1542 = vmatprep.subr.bf16.mxu0 %v1290
        %1543 = vmatpush1.bf16.msra.mxu0 %v1289
        %1544 = vmatprep.subr.bf16.mxu0 %v1292
        %1545 = vmatpush1.bf16.msra.mxu0 %v1291
        %1546 = vmatprep.subr.bf16.mxu0 %v1294
        %1547 = vmatpush1.bf16.msra.mxu0 %v1293
        %1548 = vmatprep.subr.bf16.mxu0 %v1296
        %1549 = vmatpush1.bf16.msra.mxu0 %v1295
        %1550 = vmatprep.subr.bf16.mxu0 %v1298
        %1551 = vmatpush1.bf16.msra.mxu0 %v1297
        %1552 = vmatprep.subr.bf16.mxu0 %v1300
        %1553 = vmatpush1.bf16.msra.mxu0 %v1299
        %1554 = vmatprep.subr.bf16.mxu0 %v1302
        %1555 = vmatpush1.bf16.msra.mxu0 %v1301
        %1556 = vmatprep.subr.bf16.mxu0 %v1304
        %1557 = vmatpush1.bf16.msra.mxu0 %v1303
        %1558 = vmatprep.subr.bf16.mxu0 %v1306
        %1559 = vmatpush1.bf16.msra.mxu0 %v1305
        %1560 = vmatprep.subr.bf16.mxu0 %v1308
        %1561 = vmatpush1.bf16.msra.mxu0 %v1307
        %1562 = vmatprep.subr.bf16.mxu0 %v1310
        %1563 = vmatpush1.bf16.msra.mxu0 %v1309
        %1564 = vmatprep.subr.bf16.mxu0 %v1312
        %1565 = vmatpush1.bf16.msra.mxu0 %v1311
        %1566 = vmatprep.subr.bf16.mxu0 %v1314
        %1567 = vmatpush1.bf16.msra.mxu0 %v1313
        %1568 = vmatprep.subr.bf16.mxu0 %v1316
        %1569 = vmatpush1.bf16.msra.mxu0 %v1315
        %1570 = vmatprep.mubr.bf16.mxu0 %v896
        %1571 = vmatmul.mubr.bf16.gmra.mrb[0].mxu0 %v895
        %v1572 = vpop.f32.mrb[0].mxu0
        %v1573 = vadd.f32 %v1480, %v1572
        %v1574 = vpop.f32.mrb[0].mxu0
        %v1575 = vadd.f32 %v1482, %v1574
        %v1576 = vpop.f32.mrb[0].mxu0
        %v1577 = vadd.f32 %v1484, %v1576
        %v1578 = vpop.f32.mrb[0].mxu0
        %v1579 = vadd.f32 %v1486, %v1578
        %1580 = vmatprep.mubr.bf16.mxu0 %v902
        %1581 = vmatmul.mubr.bf16.gmra.mrb[0].mxu0 %v901
        %v1582 = vpop.f32.mrb[0].mxu0
        %v1583 = vadd.f32 %v1490, %v1582
        %v1584 = vpop.f32.mrb[0].mxu0
        %v1585 = vadd.f32 %v1492, %v1584
        %v1586 = vpop.f32.mrb[0].mxu0
        %v1587 = vadd.f32 %v1494, %v1586
        %v1588 = vpop.f32.mrb[0].mxu0
        %v1589 = vadd.f32 %v1496, %v1588
        %1590 = vmatprep.mubr.bf16.mxu0 %v908
        %1591 = vmatmul.mubr.bf16.gmra.mrb[0].mxu0 %v907
        %v1592 = vpop.f32.mrb[0].mxu0
        %v1593 = vadd.f32 %v1500, %v1592
        %v1594 = vpop.f32.mrb[0].mxu0
        %v1595 = vadd.f32 %v1502, %v1594
        %v1596 = vpop.f32.mrb[0].mxu0
        %v1597 = vadd.f32 %v1504, %v1596
        %v1598 = vpop.f32.mrb[0].mxu0
        %v1599 = vadd.f32 %v1506, %v1598
        %1600 = vmatprep.mubr.bf16.mxu0 %v914
        %1601 = vmatmul.mubr.bf16.gmra.mrb[0].mxu0 %v913
        %v1602 = vpop.f32.mrb[0].mxu0
        %v1603 = vadd.f32 %v1510, %v1602
        %v1604 = vpop.f32.mrb[0].mxu0
        %v1605 = vadd.f32 %v1512, %v1604
        %v1606 = vpop.f32.mrb[0].mxu0
        %v1607 = vadd.f32 %v1514, %v1606
        %v1608 = vpop.f32.mrb[0].mxu0
        %v1609 = vadd.f32 %v1516, %v1608
        %1610 = vmatprep.mubr.bf16.mxu0 %v920
        %1611 = vmatmul.mubr.bf16.gmra.mrb[0].mxu0 %v919
        %v1612 = vpop.f32.mrb[0].mxu0
        %v1613 = vadd.f32 %v1520, %v1612
        %v1614 = vpop.f32.mrb[0].mxu0
        %v1615 = vadd.f32 %v1522, %v1614
        %v1616 = vpop.f32.mrb[0].mxu0
        %v1617 = vadd.f32 %v1524, %v1616
        %v1618 = vpop.f32.mrb[0].mxu0
        %v1619 = vadd.f32 %v1526, %v1618
        %1620 = vmatprep.mubr.bf16.mxu0 %v926
        %1621 = vmatmul.mubr.bf16.gmra.mrb[0].mxu0 %v925
        %v1622 = vpop.f32.mrb[0].mxu0
        %v1623 = vadd.f32 %v1530, %v1622
        %v1624 = vpop.f32.mrb[0].mxu0
        %v1625 = vadd.f32 %v1532, %v1624
        %v1626 = vpop.f32.mrb[0].mxu0
        %v1627 = vadd.f32 %v1534, %v1626
        %v1628 = vpop.f32.mrb[0].mxu0
        %v1629 = vadd.f32 %v1536, %v1628
        %1630 = vdwg.mxu0
        %1631 = vmatprep.subr.bf16.mxu0 %v1318
        %1632 = vmatpush1.bf16.msra.mxu0 %v1317
        %1633 = vmatprep.subr.bf16.mxu0 %v1320
        %1634 = vmatpush1.bf16.msra.mxu0 %v1319
        %1635 = vmatprep.subr.bf16.mxu0 %v1322
        %1636 = vmatpush1.bf16.msra.mxu0 %v1321
        %1637 = vmatprep.subr.bf16.mxu0 %v1324
        %1638 = vmatpush1.bf16.msra.mxu0 %v1323
        %1639 = vmatprep.subr.bf16.mxu0 %v1326
        %1640 = vmatpush1.bf16.msra.mxu0 %v1325
        %1641 = vmatprep.subr.bf16.mxu0 %v1328
        %1642 = vmatpush1.bf16.msra.mxu0 %v1327
        %1643 = vmatprep.subr.bf16.mxu0 %v1330
        %1644 = vmatpush1.bf16.msra.mxu0 %v1329
        %1645 = vmatprep.subr.bf16.mxu0 %v1332
        %1646 = vmatpush1.bf16.msra.mxu0 %v1331
        %1647 = vmatprep.subr.bf16.mxu0 %v1334
        %1648 = vmatpush1.bf16.msra.mxu0 %v1333
        %1649 = vmatprep.subr.bf16.mxu0 %v1336
        %1650 = vmatpush1.bf16.msra.mxu0 %v1335
        %1651 = vmatprep.subr.bf16.mxu0 %v1338
        %1652 = vmatpush1.bf16.msra.mxu0 %v1337
        %1653 = vmatprep.subr.bf16.mxu0 %v1340
        %1654 = vmatpush1.bf16.msra.mxu0 %v1339
        %1655 = vmatprep.subr.bf16.mxu0 %v1342
        %1656 = vmatpush1.bf16.msra.mxu0 %v1341
        %1657 = vmatprep.subr.bf16.mxu0 %v1344
        %1658 = vmatpush1.bf16.msra.mxu0 %v1343
        %1659 = vmatprep.subr.bf16.mxu0 %v1346
        %1660 = vmatpush1.bf16.msra.mxu0 %v1345
        %1661 = vmatprep.subr.bf16.mxu0 %v1348
        %1662 = vmatpush1.bf16.msra.mxu0 %v1347
        %1663 = vmatprep.mubr.bf16.mxu0 %v898
        %1664 = vmatmul.mubr.bf16.gmra.mrb[0].mxu0 %v897
        %v1665 = vpop.f32.mrb[0].mxu0
        %v1666 = vadd.f32 %v1573, %v1665
        %v1667 = vpop.f32.mrb[0].mxu0
        %v1668 = vadd.f32 %v1575, %v1667
        %v1669 = vpop.f32.mrb[0].mxu0
        %v1670 = vadd.f32 %v1577, %v1669
        %v1671 = vpop.f32.mrb[0].mxu0
        %v1672 = vadd.f32 %v1579, %v1671
        %1673 = vmatprep.mubr.bf16.mxu0 %v904
        %1674 = vmatmul.mubr.bf16.gmra.mrb[0].mxu0 %v903
        %v1675 = vpop.f32.mrb[0].mxu0
        %v1676 = vadd.f32 %v1583, %v1675
        %v1677 = vpop.f32.mrb[0].mxu0
        %v1678 = vadd.f32 %v1585, %v1677
        %v1679 = vpop.f32.mrb[0].mxu0
        %v1680 = vadd.f32 %v1587, %v1679
        %v1681 = vpop.f32.mrb[0].mxu0
        %v1682 = vadd.f32 %v1589, %v1681
        %1683 = vmatprep.mubr.bf16.mxu0 %v910
        %1684 = vmatmul.mubr.bf16.gmra.mrb[0].mxu0 %v909
        %v1685 = vpop.f32.mrb[0].mxu0
        %v1686 = vadd.f32 %v1593, %v1685
        %v1687 = vpop.f32.mrb[0].mxu0
        %v1688 = vadd.f32 %v1595, %v1687
        %v1689 = vpop.f32.mrb[0].mxu0
        %v1690 = vadd.f32 %v1597, %v1689
        %v1691 = vpop.f32.mrb[0].mxu0
        %v1692 = vadd.f32 %v1599, %v1691
        %1693 = vmatprep.mubr.bf16.mxu0 %v916
        %1694 = vmatmul.mubr.bf16.gmra.mrb[0].mxu0 %v915
        %v1695 = vpop.f32.mrb[0].mxu0
        %v1696 = vadd.f32 %v1603, %v1695
        %v1697 = vpop.f32.mrb[0].mxu0
        %v1698 = vadd.f32 %v1605, %v1697
        %v1699 = vpop.f32.mrb[0].mxu0
        %v1700 = vadd.f32 %v1607, %v1699
        %v1701 = vpop.f32.mrb[0].mxu0
        %v1702 = vadd.f32 %v1609, %v1701
        %1703 = vmatprep.mubr.bf16.mxu0 %v922
        %1704 = vmatmul.mubr.bf16.gmra.mrb[0].mxu0 %v921
        %v1705 = vpop.f32.mrb[0].mxu0
        %v1706 = vadd.f32 %v1613, %v1705
        %v1707 = vpop.f32.mrb[0].mxu0
        %v1708 = vadd.f32 %v1615, %v1707
        %v1709 = vpop.f32.mrb[0].mxu0
        %v1710 = vadd.f32 %v1617, %v1709
        %v1711 = vpop.f32.mrb[0].mxu0
        %v1712 = vadd.f32 %v1619, %v1711
        %1713 = vmatprep.mubr.bf16.mxu0 %v928
        %1714 = vmatmul.mubr.bf16.gmra.mrb[0].mxu0 %v927
        %v1715 = vpop.f32.mrb[0].mxu0
        %v1716 = vadd.f32 %v1623, %v1715
        %v1717 = vpop.f32.mrb[0].mxu0
        %v1718 = vadd.f32 %v1625, %v1717
        %v1719 = vpop.f32.mrb[0].mxu0
        %v1720 = vadd.f32 %v1627, %v1719
        %v1721 = vpop.f32.mrb[0].mxu0
        %v1722 = vadd.f32 %v1629, %v1721
        %1723 = vdwg.mxu0
        %vm1724 = vcmp.ge.f32.partialorder %v1666, 0.0
        %vm1725 = vcmp.ge.f32.partialorder %v1668, 0.0
        %vm1726 = vcmp.ge.f32.partialorder %v1670, 0.0
        %vm1727 = vcmp.ge.f32.partialorder %v1672, 0.0
        %vm1728 = vcmp.ge.f32.partialorder %v1676, 0.0
        %vm1729 = vcmp.ge.f32.partialorder %v1678, 0.0
        %vm1730 = vcmp.ge.f32.partialorder %v1680, 0.0
        %vm1731 = vcmp.ge.f32.partialorder %v1682, 0.0
        %vm1732 = vcmp.ge.f32.partialorder %v1686, 0.0
        %vm1733 = vcmp.ge.f32.partialorder %v1688, 0.0
        %vm1734 = vcmp.ge.f32.partialorder %v1690, 0.0
        %vm1735 = vcmp.ge.f32.partialorder %v1692, 0.0
        %vm1736 = vcmp.ge.f32.partialorder %v1696, 0.0
        %vm1737 = vcmp.ge.f32.partialorder %v1698, 0.0
        %vm1738 = vcmp.ge.f32.partialorder %v1700, 0.0
        %vm1739 = vcmp.ge.f32.partialorder %v1702, 0.0
        %vm1740 = vcmp.ge.f32.partialorder %v1706, 0.0
        %vm1741 = vcmp.ge.f32.partialorder %v1708, 0.0
        %vm1742 = vcmp.ge.f32.partialorder %v1710, 0.0
        %vm1743 = vcmp.ge.f32.partialorder %v1712, 0.0
        %vm1744 = vcmp.ge.f32.partialorder %v1716, 0.0
        %vm1745 = vcmp.ge.f32.partialorder %v1718, 0.0
        %vm1746 = vcmp.ge.f32.partialorder %v1720, 0.0
        %vm1747 = vcmp.ge.f32.partialorder %v1722, 0.0
        %v1748 = vmul.f32 %v1666, 0.01
        %v1749 = vmul.f32 %v1668, 0.01
        %v1750 = vmul.f32 %v1670, 0.01
        %v1751 = vmul.f32 %v1672, 0.01
        %v1752 = vmul.f32 %v1676, 0.01
        %v1753 = vmul.f32 %v1678, 0.01
        %v1754 = vmul.f32 %v1680, 0.01
        %v1755 = vmul.f32 %v1682, 0.01
        %v1756 = vmul.f32 %v1686, 0.01
        %v1757 = vmul.f32 %v1688, 0.01
        %v1758 = vmul.f32 %v1690, 0.01
        %v1759 = vmul.f32 %v1692, 0.01
        %v1760 = vmul.f32 %v1696, 0.01
        %v1761 = vmul.f32 %v1698, 0.01
        %v1762 = vmul.f32 %v1700, 0.01
        %v1763 = vmul.f32 %v1702, 0.01
        %v1764 = vmul.f32 %v1706, 0.01
        %v1765 = vmul.f32 %v1708, 0.01
        %v1766 = vmul.f32 %v1710, 0.01
        %v1767 = vmul.f32 %v1712, 0.01
        %v1768 = vmul.f32 %v1716, 0.01
        %v1769 = vmul.f32 %v1718, 0.01
        %v1770 = vmul.f32 %v1720, 0.01
        %v1771 = vmul.f32 %v1722, 0.01
        %v1772 = vsel %vm1724, %v1666, %v1748
        %v1773 = vsel %vm1725, %v1668, %v1749
        %v1774 = vsel %vm1726, %v1670, %v1750
        %v1775 = vsel %vm1727, %v1672, %v1751
        %v1776 = vsel %vm1728, %v1676, %v1752
        %v1777 = vsel %vm1729, %v1678, %v1753
        %v1778 = vsel %vm1730, %v1680, %v1754
        %v1779 = vsel %vm1731, %v1682, %v1755
        %v1780 = vsel %vm1732, %v1686, %v1756
        %v1781 = vsel %vm1733, %v1688, %v1757
        %v1782 = vsel %vm1734, %v1690, %v1758
        %v1783 = vsel %vm1735, %v1692, %v1759
        %v1784 = vsel %vm1736, %v1696, %v1760
        %v1785 = vsel %vm1737, %v1698, %v1761
        %v1786 = vsel %vm1738, %v1700, %v1762
        %v1787 = vsel %vm1739, %v1702, %v1763
        %v1788 = vsel %vm1740, %v1706, %v1764
        %v1789 = vsel %vm1741, %v1708, %v1765
        %v1790 = vsel %vm1742, %v1710, %v1766
        %v1791 = vsel %vm1743, %v1712, %v1767
        %v1792 = vsel %vm1744, %v1716, %v1768
        %v1793 = vsel %vm1745, %v1718, %v1769
        %v1794 = vsel %vm1746, %v1720, %v1770
        %v1795 = vsel %vm1747, %v1722, %v1771
        %1796 = vst [vmem:[%s625] sm:$0xff] %v1772
        %1797 = vst [vmem:[%s625 + $0x8] sm:$0xff] %v1773
        %1798 = vst [vmem:[%s625 + $0x10] sm:$0xff] %v1774
        %1799 = vst [vmem:[%s625 + $0x18] sm:$0xff] %v1775
        %1800 = vst [vmem:[%s625 + $0x20] sm:$0xff] %v1776
        %1801 = vst [vmem:[%s625 + $0x28] sm:$0xff] %v1777
        %1802 = vst [vmem:[%s625 + $0x30] sm:$0xff] %v1778
        %1803 = vst [vmem:[%s625 + $0x38] sm:$0xff] %v1779
        %1804 = vst [vmem:[%s625 + $0x40] sm:$0xff] %v1780
        %1805 = vst [vmem:[%s625 + $0x48] sm:$0xff] %v1781
        %1806 = vst [vmem:[%s625 + $0x50] sm:$0xff] %v1782
        %1807 = vst [vmem:[%s625 + $0x58] sm:$0xff] %v1783
        %1808 = vst [vmem:[%s625 + $0x60] sm:$0xff] %v1784
        %1809 = vst [vmem:[%s625 + $0x68] sm:$0xff] %v1785
        %1810 = vst [vmem:[%s625 + $0x70] sm:$0xff] %v1786
        %1811 = vst [vmem:[%s625 + $0x78] sm:$0xff] %v1787
        %1812 = vst [vmem:[%s625 + $0x80] sm:$0xff] %v1788
        %1813 = vst [vmem:[%s625 + $0x88] sm:$0xff] %v1789
        %1814 = vst [vmem:[%s625 + $0x90] sm:$0xff] %v1790
        %1815 = vst [vmem:[%s625 + $0x98] sm:$0xff] %v1791
        %1816 = vst [vmem:[%s625 + $0xa0] sm:$0xff] %v1792
        %1817 = vst [vmem:[%s625 + $0xa8] sm:$0xff] %v1793
        %1818 = vst [vmem:[%s625 + $0xb0] sm:$0xff] %v1794
        %1819 = vst [vmem:[%s625 + $0xb8] sm:$0xff] %v1795
        %s1820 = sand.u32 %s114, 1
        %s1821 = sand.u32 %s114, 1
        %s1822 = smul.addr %s1821, 192
        %s1823 = scalar_lea.vmem [#allocation3], %s1822
        // Predicated region
        $region71: #{_lambda_.9} parent=65 // pred_check
          %p1824 = pneg %p124
        $region72: #{_lambda_.9} parent=65 // pred_check_branch
          %1826 = sbr.rel (%p1824) target = $region74
        $region73: #{_lambda_.9} parent=65 // pred_region
          %s1827 = smul.u32 12, %s18
          %s1828 = smul.u32 2, %s19
          %s1829 = smul.addr %s1827, 4
          %s1830 = sadd.s32 %s1828, %s1829
          %s1831 = smul.addr %s1830, 8
          %s1832 = scalar_lea.vmem %s3, %s1831
          // Predicated region
          $region75: #{_lambda_.9} parent=73 // pred_check
            _
          $region76: #{_lambda_.9} parent=73 // pred_check_branch
            %1834 = sbr.rel (0) target = $region78
          $region77: #{_lambda_.9} parent=73 // pred_region
            // Predicated region
            $region79: #{_lambda_.9} parent=77 // pred_check
              _
            $region80: #{_lambda_.9} parent=77 // pred_check_branch
              %1836 = sbr.rel (0) target = $region82
            $region81: #{_lambda_.9} parent=77 // pred_region
              loop: start=0, step=1, limit=1
              $region83: #{_lambda_.9} parent=81 // loop_pre_header
                _
              $region84: #{_lambda_.9} parent=81 // loop_header
                %s1838 = sphi 0, %s1842
                %p1839 = scmp.ge.s32.totalorder %s1838, 1
                %s1843 = sphi %s1823, %s1823
                %s1844 = sphi %s1832, %s1832
              $region85: #{_lambda_.9} parent=81 // loop_header_branch
                %1841 = sbr.rel (%p1839) target = $region89
              $region86: #{_lambda_.9} parent=81 // loop_body
                %v1845 = vld [vmem:[%s1843] sm:$0xff]
                %1846 = vst [vmem:[%s1844] sm:$0xff] %v1845
                %v1847 = vld [vmem:[%s1843 + $0x8] sm:$0xff]
                %1848 = vst [vmem:[%s1844 + $0x8] sm:$0xff] %v1847
                %v1849 = vld [vmem:[%s1843 + $0x10] sm:$0xff]
                %1850 = vst [vmem:[%s1844 + $0x20] sm:$0xff] %v1849
                %v1851 = vld [vmem:[%s1843 + $0x18] sm:$0xff]
                %1852 = vst [vmem:[%s1844 + $0x28] sm:$0xff] %v1851
                %v1853 = vld [vmem:[%s1843 + $0x20] sm:$0xff]
                %1854 = vst [vmem:[%s1844 + $0x40] sm:$0xff] %v1853
                %v1855 = vld [vmem:[%s1843 + $0x28] sm:$0xff]
                %1856 = vst [vmem:[%s1844 + $0x48] sm:$0xff] %v1855
                %v1857 = vld [vmem:[%s1843 + $0x30] sm:$0xff]
                %1858 = vst [vmem:[%s1844 + $0x60] sm:$0xff] %v1857
                %v1859 = vld [vmem:[%s1843 + $0x38] sm:$0xff]
                %1860 = vst [vmem:[%s1844 + $0x68] sm:$0xff] %v1859
                %v1861 = vld [vmem:[%s1843 + $0x40] sm:$0xff]
                %1862 = vst [vmem:[%s1844 + $0x80] sm:$0xff] %v1861
                %v1863 = vld [vmem:[%s1843 + $0x48] sm:$0xff]
                %1864 = vst [vmem:[%s1844 + $0x88] sm:$0xff] %v1863
                %v1865 = vld [vmem:[%s1843 + $0x50] sm:$0xff]
                %1866 = vst [vmem:[%s1844 + $0xa0] sm:$0xff] %v1865
                %v1867 = vld [vmem:[%s1843 + $0x58] sm:$0xff]
                %1868 = vst [vmem:[%s1844 + $0xa8] sm:$0xff] %v1867
                %v1869 = vld [vmem:[%s1843 + $0x60] sm:$0xff]
                %1870 = vst [vmem:[%s1844 + $0xc0] sm:$0xff] %v1869
                %v1871 = vld [vmem:[%s1843 + $0x68] sm:$0xff]
                %1872 = vst [vmem:[%s1844 + $0xc8] sm:$0xff] %v1871
                %v1873 = vld [vmem:[%s1843 + $0x70] sm:$0xff]
                %1874 = vst [vmem:[%s1844 + $0xe0] sm:$0xff] %v1873
                %v1875 = vld [vmem:[%s1843 + $0x78] sm:$0xff]
                %1876 = vst [vmem:[%s1844 + $0xe8] sm:$0xff] %v1875
                %v1877 = vld [vmem:[%s1843 + $0x80] sm:$0xff]
                %1878 = vst [vmem:[%s1844 + $0x100] sm:$0xff] %v1877
                %v1879 = vld [vmem:[%s1843 + $0x88] sm:$0xff]
                %1880 = vst [vmem:[%s1844 + $0x108] sm:$0xff] %v1879
                %v1881 = vld [vmem:[%s1843 + $0x90] sm:$0xff]
                %1882 = vst [vmem:[%s1844 + $0x120] sm:$0xff] %v1881
                %v1883 = vld [vmem:[%s1843 + $0x98] sm:$0xff]
                %1884 = vst [vmem:[%s1844 + $0x128] sm:$0xff] %v1883
                %v1885 = vld [vmem:[%s1843 + $0xa0] sm:$0xff]
                %1886 = vst [vmem:[%s1844 + $0x140] sm:$0xff] %v1885
                %v1887 = vld [vmem:[%s1843 + $0xa8] sm:$0xff]
                %1888 = vst [vmem:[%s1844 + $0x148] sm:$0xff] %v1887
                %v1889 = vld [vmem:[%s1843 + $0xb0] sm:$0xff]
                %1890 = vst [vmem:[%s1844 + $0x160] sm:$0xff] %v1889
                %v1891 = vld [vmem:[%s1843 + $0xb8] sm:$0xff]
                %1892 = vst [vmem:[%s1844 + $0x168] sm:$0xff] %v1891
              $region87: #{_lambda_.9} parent=81 // loop_footer
                %s1842 = sadd.s32 1, %s1838
              $region88: #{_lambda_.9} parent=81 // loop_footer_branch
                %1837 = sbr.rel target = $region84
              $region89: #{_lambda_.9} parent=81 // loop_exit
                _
            $region82: #{_lambda_.9} parent=77 // pred_fallthru
              _
            // Predicated region
            $region90: #{_lambda_.9} parent=77 // pred_check
              _
            $region91: #{_lambda_.9} parent=77 // pred_check_branch
              %1894 = sbr.rel target = $region93
            $region92: #{_lambda_.9} parent=77 // pred_region
              _
            $region93: #{_lambda_.9} parent=77 // pred_fallthru
              _
          $region78: #{_lambda_.9} parent=73 // pred_fallthru
            _
          %1895 = vnop
        $region74: #{_lambda_.9} parent=65 // pred_fallthru
          _
      $region66: #{_lambda_.9} parent=5 // pred_fallthru
        _
      %p1896 = scmp.le.s32.totalorder 2, %s9
      // Predicated region
      $region94: #{_lambda_.9} parent=5 // pred_check
        %p1897 = pneg %p1896
      $region95: #{_lambda_.9} parent=5 // pred_check_branch
        %1899 = sbr.rel (%p1897) target = $region97
      $region96: #{_lambda_.9} parent=5 // pred_region
        %s1900 = ssub.s32 %s9, 2
        // Predicated region
        $region98: #{_lambda_.9} parent=96 // pred_check
          %p1901 = pneg %p130
        $region99: #{_lambda_.9} parent=96 // pred_check_branch
          %1903 = sbr.rel (%p1901) target = $region101
        $region100: #{_lambda_.9} parent=96 // pred_region
          %s1904 = sand.u32 %s115, 1
          %s1905 = sand.u32 %s115, 1
          %s1906 = smul.addr %s1905, 192
          %s1907 = scalar_lea.vmem [#allocation3], %s1906
        $region101: #{_lambda_.9} parent=96 // pred_fallthru
          _
      $region97: #{_lambda_.9} parent=5 // pred_fallthru
        _
    $region6: #{_lambda_.9} parent=1 // loop_footer
      %s13 = sadd.s32 1, %s9
    $region7: #{_lambda_.9} parent=1 // loop_footer_branch
      %8 = sbr.rel target = $region3
    $region8: #{_lambda_.9} parent=1 // loop_exit
      _

// kernel: _lambda_.10
$region0: #{_lambda_.10}
  #allocation0 [shape = 'u32[]', space=smem, size = 0x4, offset = 0x4, fixed_abs, tag = 'smem constant byte address 0x4 - core index']
  #allocation1 [shape = 'u32[144,128]{1,0:T(1,128)}', space=vmem, size = 0x12000, scoped, tag = 'internal scratch']
  %s0 = inlined_call_operand.vmem [shape: bf16[48,1536], index: 0, kind: input, shape index: {}]
  %s1 = inlined_call_operand.vmem [shape: bf16[1536,512], index: 1, kind: input, shape index: {}]
  %s2 = inlined_call_operand.vmem [shape: f32[1,512], index: 2, kind: input, shape index: {}]
  %s3 = inlined_call_operand.vmem [shape: f32[48,512], index: 3, kind: output, shape index: {}]
  %s4 = sld [smem:[#allocation0]]
  $region102: #{_lambda_.10} parent=0
    _
  %s6 = ssub.s32 1, %s4
  %s7 = scalar_select 0, %s6, %s4
  $region1: #{_lambda_.10} parent=0
    #allocation2 [shape = 'u8[1572864]{0}', space=vmem, size = 0x180000, scoped, tag = 'input window, operand 1']
    #allocation3 [shape = 'u8[98304]{0}', space=vmem, size = 0x18000, scoped, tag = 'output window, operand 0']
    loop: start=0, step=1, limit=4
    $region2: #{_lambda_.10} parent=1 // loop_pre_header
      _
    $region3: #{_lambda_.10} parent=1 // loop_header
      %s9 = sphi 0, %s13
      %p10 = scmp.ge.s32.totalorder %s9, 4
      %s16 = sphi 0, %s28
      %s17 = sphi 0, %s24
      %s18 = sphi 0, %s16
      %s19 = sphi 0, %s17
      %s20 = sphi 0, %s18
      %s21 = sphi 0, %s19
      %s31 = sphi 0, %s33
      %s34 = sphi 0, %s31
      %s35 = sphi 0, %s34
      %s51 = sphi 0, %s35
      %s57 = sphi 0, %s59
      %s60 = sphi 0, %s57
      %s61 = sphi 0, %s60
      %s77 = sphi 0, %s61
      %s83 = sphi 0, %s85
      %s86 = sphi 0, %s83
      %s87 = sphi 0, %s86
      %s103 = sphi 0, %s87
      %s111 = sphi 0, %s113
      %s114 = sphi 0, %s111
      %s115 = sphi 0, %s114
      %s131 = sphi 0, %s115
    $region4: #{_lambda_.10} parent=1 // loop_header_branch
      %12 = sbr.rel (%p10) target = $region8
    $region5: #{_lambda_.10} parent=1 // loop_body
      %s14 = ssub.s32 %s9, 1
      %s15 = ssub.s32 %s9, 2
      %s22 = sadd.s32 1, %s17
      %p23 = scmp.ge.s32.totalorder %s22, 2
      %s24 = scalar_select %p23, 0, %s22
      %s25 = sadd.s32 1, %s16
      %s26 = scalar_select %p23, %s25, %s16
      %p27 = scmp.ge.s32.totalorder %s26, 1
      %s28 = scalar_select %p27, 0, %s26
      %s29 = ssub.s32 %s16, %s28
      %p30 = scmp.eq.s32.totalorder %s29, 0
      %s32 = sadd.s32 %s31, 1
      %s33 = scalar_select %p30, %s31, %s32
      %p36 = pneg %p30
      %p37 = scmp.eq.s32.totalorder %s9, 1
      %p38 = por %p36, %p37
      %p39 = scmp.ne.s32.totalorder %s31, %s34
      %p40 = scmp.eq.s32.totalorder %s9, 0
      %p41 = por %p39, %p40
      %p42 = scmp.ne.s32.totalorder %s31, %s34
      %p43 = scmp.eq.s32.totalorder %s14, 1
      %p44 = por %p42, %p43
      %p45 = scmp.ne.s32.totalorder %s34, %s35
      %p46 = scmp.eq.s32.totalorder %s14, 0
      %p47 = por %p45, %p46
      %p48 = scmp.ne.s32.totalorder %s34, %s35
      %p49 = scmp.eq.s32.totalorder %s15, 1
      %p50 = por %p48, %p49
      %p52 = scmp.ne.s32.totalorder %s35, %s51
      %p53 = scmp.eq.s32.totalorder %s15, 0
      %p54 = por %p52, %p53
      %s55 = ssub.s32 %s17, %s24
      %p56 = scmp.eq.s32.totalorder %s55, 0
      %s58 = sadd.s32 %s57, 1
      %s59 = scalar_select %p56, %s57, %s58
      %p62 = pneg %p56
      %p63 = scmp.eq.s32.totalorder %s9, 1
      %p64 = por %p62, %p63
      %p65 = scmp.ne.s32.totalorder %s57, %s60
      %p66 = scmp.eq.s32.totalorder %s9, 0
      %p67 = por %p65, %p66
      %p68 = scmp.ne.s32.totalorder %s57, %s60
      %p69 = scmp.eq.s32.totalorder %s14, 1
      %p70 = por %p68, %p69
      %p71 = scmp.ne.s32.totalorder %s60, %s61
      %p72 = scmp.eq.s32.totalorder %s14, 0
      %p73 = por %p71, %p72
      %p74 = scmp.ne.s32.totalorder %s60, %s61
      %p75 = scmp.eq.s32.totalorder %s15, 1
      %p76 = por %p74, %p75
      %p78 = scmp.ne.s32.totalorder %s61, %s77
      %p79 = scmp.eq.s32.totalorder %s15, 0
      %p80 = por %p78, %p79
      %s81 = ssub.s32 %s17, %s24
      %p82 = scmp.eq.s32.totalorder %s81, 0
      %s84 = sadd.s32 %s83, 1
      %s85 = scalar_select %p82, %s83, %s84
      %p88 = pneg %p82
      %p89 = scmp.eq.s32.totalorder %s9, 1
      %p90 = por %p88, %p89
      %p91 = scmp.ne.s32.totalorder %s83, %s86
      %p92 = scmp.eq.s32.totalorder %s9, 0
      %p93 = por %p91, %p92
      %p94 = scmp.ne.s32.totalorder %s83, %s86
      %p95 = scmp.eq.s32.totalorder %s14, 1
      %p96 = por %p94, %p95
      %p97 = scmp.ne.s32.totalorder %s86, %s87
      %p98 = scmp.eq.s32.totalorder %s14, 0
      %p99 = por %p97, %p98
      %p100 = scmp.ne.s32.totalorder %s86, %s87
      %p101 = scmp.eq.s32.totalorder %s15, 1
      %p102 = por %p100, %p101
      %p104 = scmp.ne.s32.totalorder %s87, %s103
      %p105 = scmp.eq.s32.totalorder %s15, 0
      %p106 = por %p104, %p105
      %s107 = ssub.s32 %s16, %s28
      %s108 = ssub.s32 %s17, %s24
      %s109 = sor.u32 %s107, %s108
      %p110 = scmp.eq.s32.totalorder %s109, 0
      %s112 = sadd.s32 %s111, 1
      %s113 = scalar_select %p110, %s111, %s112
      %p116 = pneg %p110
      %p117 = scmp.eq.s32.totalorder %s9, 1
      %p118 = por %p116, %p117
      %p119 = scmp.ne.s32.totalorder %s111, %s114
      %p120 = scmp.eq.s32.totalorder %s9, 0
      %p121 = por %p119, %p120
      %p122 = scmp.ne.s32.totalorder %s111, %s114
      %p123 = scmp.eq.s32.totalorder %s14, 1
      %p124 = por %p122, %p123
      %p125 = scmp.ne.s32.totalorder %s114, %s115
      %p126 = scmp.eq.s32.totalorder %s14, 0
      %p127 = por %p125, %p126
      %p128 = scmp.ne.s32.totalorder %s114, %s115
      %p129 = scmp.eq.s32.totalorder %s15, 1
      %p130 = por %p128, %p129
      %p132 = scmp.ne.s32.totalorder %s115, %s131
      %p133 = scmp.eq.s32.totalorder %s15, 0
      %p134 = por %p132, %p133
      %p135 = scmp.le.s32.totalorder 1, %s9
      %p136 = scmp.lt.s32.totalorder %s9, 3
      %p137 = pnand %p135, %p136
      %p138 = pneg %p137
      // Predicated region
      $region9: #{_lambda_.10} parent=5 // pred_check
        _
      $region10: #{_lambda_.10} parent=5 // pred_check_branch
        %140 = sbr.rel (%p137) target = $region12
      $region11: #{_lambda_.10} parent=5 // pred_region
        %s141 = ssub.s32 %s9, 1
        // Predicated region
        $region13: #{_lambda_.10} parent=11 // pred_check
          %p142 = pneg %p47
        $region14: #{_lambda_.10} parent=11 // pred_check_branch
          %144 = sbr.rel (%p142) target = $region16
        $region15: #{_lambda_.10} parent=11 // pred_region
          %s145 = smul.u32 6, %s18
          %p146 = scmp.lt.s32.totalorder %s145, 5
          %s147 = scalar_select %p146, %s145, 5
          %s148 = smul.addr %s147, 12
          %s149 = smul.addr %s148, 4
          %s150 = scalar_lea.vmem %s0, %s149
          %s151 = smul.u32 6, %s18
        $region16: #{_lambda_.10} parent=11 // pred_fallthru
          _
      $region12: #{_lambda_.10} parent=5 // pred_fallthru
        _
      %p152 = scmp.lt.s32.totalorder %s9, 2
      // Predicated region
      $region17: #{_lambda_.10} parent=5 // pred_check
        %p153 = pneg %p152
      $region18: #{_lambda_.10} parent=5 // pred_check_branch
        %155 = sbr.rel (%p153) target = $region20
      $region19: #{_lambda_.10} parent=5 // pred_region
        // Predicated region
        $region21: #{_lambda_.10} parent=19 // pred_check
          %p156 = pneg %p67
        $region22: #{_lambda_.10} parent=19 // pred_check_branch
          %158 = sbr.rel (%p156) target = $region24
        $region23: #{_lambda_.10} parent=19 // pred_region
          %s159 = sand.u32 %s57, 1
          %s160 = sand.u32 %s57, 1
          %s161 = smul.addr %s160, 1536
          %s162 = scalar_lea.vmem [#allocation2], %s161
          %s163 = smul.u32 2, %s17
          %s164 = smul.addr %s163, 4
          %s165 = scalar_lea.vmem %s1, %s164
          // Predicated region
          $region25: #{_lambda_.10} parent=23 // pred_check
            _
          $region26: #{_lambda_.10} parent=23 // pred_check_branch
            %167 = sbr.rel (0) target = $region28
          $region27: #{_lambda_.10} parent=23 // pred_region
            // Predicated region
            $region29: #{_lambda_.10} parent=27 // pred_check
              _
            $region30: #{_lambda_.10} parent=27 // pred_check_branch
              %169 = sbr.rel (0) target = $region32
            $region31: #{_lambda_.10} parent=27 // pred_region
              // Predicated region
              $region44: #{_lambda_.10} parent=31 // pred_check
                _
              $region45: #{_lambda_.10} parent=31 // pred_check_branch
                %566 = sbr.rel (0) target = $region47
              $region46: #{_lambda_.10} parent=31 // pred_region
                loop: start=0, step=1, limit=1
                $region48: #{_lambda_.10} parent=46 // loop_pre_header
                  _
                $region49: #{_lambda_.10} parent=46 // loop_header
                  %s568 = sphi 0, %s572
                  %p569 = scmp.ge.s32.totalorder %s568, 1
                  %s573 = sphi %s165, %s165
                  %s574 = sphi %s162, %s162
                $region50: #{_lambda_.10} parent=46 // loop_header_branch
                  %571 = sbr.rel (%p569) target = $region54
                $region51: #{_lambda_.10} parent=46 // loop_body
                  %v575 = vld [vmem:[%s573] sm:$0xff]
                  %576 = vst [vmem:[%s574] sm:$0xff] %v575
                  %v577 = vld [vmem:[%s573 + $0x10] sm:$0xff]
                  %578 = vst [vmem:[%s574 + $0x8] sm:$0xff] %v577
                  %v579 = vld [vmem:[%s573 + $0x20] sm:$0xff]
                  %580 = vst [vmem:[%s574 + $0x10] sm:$0xff] %v579
                  %v581 = vld [vmem:[%s573 + $0x30] sm:$0xff]
                  %582 = vst [vmem:[%s574 + $0x18] sm:$0xff] %v581
                  %v583 = vld [vmem:[%s573 + $0x40] sm:$0xff]
                  %584 = vst [vmem:[%s574 + $0x20] sm:$0xff] %v583
                  %v585 = vld [vmem:[%s573 + $0x50] sm:$0xff]
                  %586 = vst [vmem:[%s574 + $0x28] sm:$0xff] %v585
                  %v587 = vld [vmem:[%s573 + $0x60] sm:$0xff]
                  %588 = vst [vmem:[%s574 + $0x30] sm:$0xff] %v587
                  %v589 = vld [vmem:[%s573 + $0x70] sm:$0xff]
                  %590 = vst [vmem:[%s574 + $0x38] sm:$0xff] %v589
                  %v591 = vld [vmem:[%s573 + $0x80] sm:$0xff]
                  %592 = vst [vmem:[%s574 + $0x40] sm:$0xff] %v591
                  %v593 = vld [vmem:[%s573 + $0x90] sm:$0xff]
                  %594 = vst [vmem:[%s574 + $0x48] sm:$0xff] %v593
                  %v595 = vld [vmem:[%s573 + $0xa0] sm:$0xff]
                  %596 = vst [vmem:[%s574 + $0x50] sm:$0xff] %v595
                  %v597 = vld [vmem:[%s573 + $0xb0] sm:$0xff]
                  %598 = vst [vmem:[%s574 + $0x58] sm:$0xff] %v597
                  %v599 = vld [vmem:[%s573 + $0xc0] sm:$0xff]
                  %600 = vst [vmem:[%s574 + $0x60] sm:$0xff] %v599
                  %v601 = vld [vmem:[%s573 + $0xd0] sm:$0xff]
                  %602 = vst [vmem:[%s574 + $0x68] sm:$0xff] %v601
                  %v603 = vld [vmem:[%s573 + $0xe0] sm:$0xff]
                  %604 = vst [vmem:[%s574 + $0x70] sm:$0xff] %v603
                  %v605 = vld [vmem:[%s573 + $0xf0] sm:$0xff]
                  %606 = vst [vmem:[%s574 + $0x78] sm:$0xff] %v605
                  %v607 = vld [vmem:[%s573 + $0x100] sm:$0xff]
                  %608 = vst [vmem:[%s574 + $0x80] sm:$0xff] %v607
                  %v609 = vld [vmem:[%s573 + $0x110] sm:$0xff]
                  %610 = vst [vmem:[%s574 + $0x88] sm:$0xff] %v609
                  %v611 = vld [vmem:[%s573 + $0x120] sm:$0xff]
                  %612 = vst [vmem:[%s574 + $0x90] sm:$0xff] %v611
                  %v613 = vld [vmem:[%s573 + $0x130] sm:$0xff]
                  %614 = vst [vmem:[%s574 + $0x98] sm:$0xff] %v613
                  %v615 = vld [vmem:[%s573 + $0x140] sm:$0xff]
                  %616 = vst [vmem:[%s574 + $0xa0] sm:$0xff] %v615
                  %v617 = vld [vmem:[%s573 + $0x150] sm:$0xff]
                  %618 = vst [vmem:[%s574 + $0xa8] sm:$0xff] %v617
                  %v619 = vld [vmem:[%s573 + $0x160] sm:$0xff]
                  %620 = vst [vmem:[%s574 + $0xb0] sm:$0xff] %v619
                  %v621 = vld [vmem:[%s573 + $0x170] sm:$0xff]
                  %622 = vst [vmem:[%s574 + $0xb8] sm:$0xff] %v621
                  %v623 = vld [vmem:[%s573 + $0x180] sm:$0xff]
                  %624 = vst [vmem:[%s574 + $0xc0] sm:$0xff] %v623
                  %v625 = vld [vmem:[%s573 + $0x190] sm:$0xff]
                  %626 = vst [vmem:[%s574 + $0xc8] sm:$0xff] %v625
                  %v627 = vld [vmem:[%s573 + $0x1a0] sm:$0xff]
                  %628 = vst [vmem:[%s574 + $0xd0] sm:$0xff] %v627
                  %v629 = vld [vmem:[%s573 + $0x1b0] sm:$0xff]
                  %630 = vst [vmem:[%s574 + $0xd8] sm:$0xff] %v629
                  %v631 = vld [vmem:[%s573 + $0x1c0] sm:$0xff]
                  %632 = vst [vmem:[%s574 + $0xe0] sm:$0xff] %v631
                  %v633 = vld [vmem:[%s573 + $0x1d0] sm:$0xff]
                  %634 = vst [vmem:[%s574 + $0xe8] sm:$0xff] %v633
                  %v635 = vld [vmem:[%s573 + $0x1e0] sm:$0xff]
                  %636 = vst [vmem:[%s574 + $0xf0] sm:$0xff] %v635
                  %v637 = vld [vmem:[%s573 + $0x1f0] sm:$0xff]
                  %638 = vst [vmem:[%s574 + $0xf8] sm:$0xff] %v637
                  %v639 = vld [vmem:[%s573 + $0x200] sm:$0xff]
                  %640 = vst [vmem:[%s574 + $0x100] sm:$0xff] %v639
                  %v641 = vld [vmem:[%s573 + $0x210] sm:$0xff]
                  %642 = vst [vmem:[%s574 + $0x108] sm:$0xff] %v641
                  %v643 = vld [vmem:[%s573 + $0x220] sm:$0xff]
                  %644 = vst [vmem:[%s574 + $0x110] sm:$0xff] %v643
                  %v645 = vld [vmem:[%s573 + $0x230] sm:$0xff]
                  %646 = vst [vmem:[%s574 + $0x118] sm:$0xff] %v645
                  %v647 = vld [vmem:[%s573 + $0x240] sm:$0xff]
                  %648 = vst [vmem:[%s574 + $0x120] sm:$0xff] %v647
                  %v649 = vld [vmem:[%s573 + $0x250] sm:$0xff]
                  %650 = vst [vmem:[%s574 + $0x128] sm:$0xff] %v649
                  %v651 = vld [vmem:[%s573 + $0x260] sm:$0xff]
                  %652 = vst [vmem:[%s574 + $0x130] sm:$0xff] %v651
                  %v653 = vld [vmem:[%s573 + $0x270] sm:$0xff]
                  %654 = vst [vmem:[%s574 + $0x138] sm:$0xff] %v653
                  %v655 = vld [vmem:[%s573 + $0x280] sm:$0xff]
                  %656 = vst [vmem:[%s574 + $0x140] sm:$0xff] %v655
                  %v657 = vld [vmem:[%s573 + $0x290] sm:$0xff]
                  %658 = vst [vmem:[%s574 + $0x148] sm:$0xff] %v657
                  %v659 = vld [vmem:[%s573 + $0x2a0] sm:$0xff]
                  %660 = vst [vmem:[%s574 + $0x150] sm:$0xff] %v659
                  %v661 = vld [vmem:[%s573 + $0x2b0] sm:$0xff]
                  %662 = vst [vmem:[%s574 + $0x158] sm:$0xff] %v661
                  %v663 = vld [vmem:[%s573 + $0x2c0] sm:$0xff]
                  %664 = vst [vmem:[%s574 + $0x160] sm:$0xff] %v663
                  %v665 = vld [vmem:[%s573 + $0x2d0] sm:$0xff]
                  %666 = vst [vmem:[%s574 + $0x168] sm:$0xff] %v665
                  %v667 = vld [vmem:[%s573 + $0x2e0] sm:$0xff]
                  %668 = vst [vmem:[%s574 + $0x170] sm:$0xff] %v667
                  %v669 = vld [vmem:[%s573 + $0x2f0] sm:$0xff]
                  %670 = vst [vmem:[%s574 + $0x178] sm:$0xff] %v669
                  %v671 = vld [vmem:[%s573 + $0x300] sm:$0xff]
                  %672 = vst [vmem:[%s574 + $0x180] sm:$0xff] %v671
                  %v673 = vld [vmem:[%s573 + $0x310] sm:$0xff]
                  %674 = vst [vmem:[%s574 + $0x188] sm:$0xff] %v673
                  %v675 = vld [vmem:[%s573 + $0x320] sm:$0xff]
                  %676 = vst [vmem:[%s574 + $0x190] sm:$0xff] %v675
                  %v677 = vld [vmem:[%s573 + $0x330] sm:$0xff]
                  %678 = vst [vmem:[%s574 + $0x198] sm:$0xff] %v677
                  %v679 = vld [vmem:[%s573 + $0x340] sm:$0xff]
                  %680 = vst [vmem:[%s574 + $0x1a0] sm:$0xff] %v679
                  %v681 = vld [vmem:[%s573 + $0x350] sm:$0xff]
                  %682 = vst [vmem:[%s574 + $0x1a8] sm:$0xff] %v681
                  %v683 = vld [vmem:[%s573 + $0x360] sm:$0xff]
                  %684 = vst [vmem:[%s574 + $0x1b0] sm:$0xff] %v683
                  %v685 = vld [vmem:[%s573 + $0x370] sm:$0xff]
                  %686 = vst [vmem:[%s574 + $0x1b8] sm:$0xff] %v685
                  %v687 = vld [vmem:[%s573 + $0x380] sm:$0xff]
                  %688 = vst [vmem:[%s574 + $0x1c0] sm:$0xff] %v687
                  %v689 = vld [vmem:[%s573 + $0x390] sm:$0xff]
                  %690 = vst [vmem:[%s574 + $0x1c8] sm:$0xff] %v689
                  %v691 = vld [vmem:[%s573 + $0x3a0] sm:$0xff]
                  %692 = vst [vmem:[%s574 + $0x1d0] sm:$0xff] %v691
                  %v693 = vld [vmem:[%s573 + $0x3b0] sm:$0xff]
                  %694 = vst [vmem:[%s574 + $0x1d8] sm:$0xff] %v693
                  %v695 = vld [vmem:[%s573 + $0x3c0] sm:$0xff]
                  %696 = vst [vmem:[%s574 + $0x1e0] sm:$0xff] %v695
                  %v697 = vld [vmem:[%s573 + $0x3d0] sm:$0xff]
                  %698 = vst [vmem:[%s574 + $0x1e8] sm:$0xff] %v697
                  %v699 = vld [vmem:[%s573 + $0x3e0] sm:$0xff]
                  %700 = vst [vmem:[%s574 + $0x1f0] sm:$0xff] %v699
                  %v701 = vld [vmem:[%s573 + $0x3f0] sm:$0xff]
                  %702 = vst [vmem:[%s574 + $0x1f8] sm:$0xff] %v701
                  %v703 = vld [vmem:[%s573 + $0x400] sm:$0xff]
                  %704 = vst [vmem:[%s574 + $0x200] sm:$0xff] %v703
                  %v705 = vld [vmem:[%s573 + $0x410] sm:$0xff]
                  %706 = vst [vmem:[%s574 + $0x208] sm:$0xff] %v705
                  %v707 = vld [vmem:[%s573 + $0x420] sm:$0xff]
                  %708 = vst [vmem:[%s574 + $0x210] sm:$0xff] %v707
                  %v709 = vld [vmem:[%s573 + $0x430] sm:$0xff]
                  %710 = vst [vmem:[%s574 + $0x218] sm:$0xff] %v709
                  %v711 = vld [vmem:[%s573 + $0x440] sm:$0xff]
                  %712 = vst [vmem:[%s574 + $0x220] sm:$0xff] %v711
                  %v713 = vld [vmem:[%s573 + $0x450] sm:$0xff]
                  %714 = vst [vmem:[%s574 + $0x228] sm:$0xff] %v713
                  %v715 = vld [vmem:[%s573 + $0x460] sm:$0xff]
                  %716 = vst [vmem:[%s574 + $0x230] sm:$0xff] %v715
                  %v717 = vld [vmem:[%s573 + $0x470] sm:$0xff]
                  %718 = vst [vmem:[%s574 + $0x238] sm:$0xff] %v717
                  %v719 = vld [vmem:[%s573 + $0x480] sm:$0xff]
                  %720 = vst [vmem:[%s574 + $0x240] sm:$0xff] %v719
                  %v721 = vld [vmem:[%s573 + $0x490] sm:$0xff]
                  %722 = vst [vmem:[%s574 + $0x248] sm:$0xff] %v721
                  %v723 = vld [vmem:[%s573 + $0x4a0] sm:$0xff]
                  %724 = vst [vmem:[%s574 + $0x250] sm:$0xff] %v723
                  %v725 = vld [vmem:[%s573 + $0x4b0] sm:$0xff]
                  %726 = vst [vmem:[%s574 + $0x258] sm:$0xff] %v725
                  %v727 = vld [vmem:[%s573 + $0x4c0] sm:$0xff]
                  %728 = vst [vmem:[%s574 + $0x260] sm:$0xff] %v727
                  %v729 = vld [vmem:[%s573 + $0x4d0] sm:$0xff]
                  %730 = vst [vmem:[%s574 + $0x268] sm:$0xff] %v729
                  %v731 = vld [vmem:[%s573 + $0x4e0] sm:$0xff]
                  %732 = vst [vmem:[%s574 + $0x270] sm:$0xff] %v731
                  %v733 = vld [vmem:[%s573 + $0x4f0] sm:$0xff]
                  %734 = vst [vmem:[%s574 + $0x278] sm:$0xff] %v733
                  %v735 = vld [vmem:[%s573 + $0x500] sm:$0xff]
                  %736 = vst [vmem:[%s574 + $0x280] sm:$0xff] %v735
                  %v737 = vld [vmem:[%s573 + $0x510] sm:$0xff]
                  %738 = vst [vmem:[%s574 + $0x288] sm:$0xff] %v737
                  %v739 = vld [vmem:[%s573 + $0x520] sm:$0xff]
                  %740 = vst [vmem:[%s574 + $0x290] sm:$0xff] %v739
                  %v741 = vld [vmem:[%s573 + $0x530] sm:$0xff]
                  %742 = vst [vmem:[%s574 + $0x298] sm:$0xff] %v741
                  %v743 = vld [vmem:[%s573 + $0x540] sm:$0xff]
                  %744 = vst [vmem:[%s574 + $0x2a0] sm:$0xff] %v743
                  %v745 = vld [vmem:[%s573 + $0x550] sm:$0xff]
                  %746 = vst [vmem:[%s574 + $0x2a8] sm:$0xff] %v745
                  %v747 = vld [vmem:[%s573 + $0x560] sm:$0xff]
                  %748 = vst [vmem:[%s574 + $0x2b0] sm:$0xff] %v747
                  %v749 = vld [vmem:[%s573 + $0x570] sm:$0xff]
                  %750 = vst [vmem:[%s574 + $0x2b8] sm:$0xff] %v749
                  %v751 = vld [vmem:[%s573 + $0x580] sm:$0xff]
                  %752 = vst [vmem:[%s574 + $0x2c0] sm:$0xff] %v751
                  %v753 = vld [vmem:[%s573 + $0x590] sm:$0xff]
                  %754 = vst [vmem:[%s574 + $0x2c8] sm:$0xff] %v753
                  %v755 = vld [vmem:[%s573 + $0x5a0] sm:$0xff]
                  %756 = vst [vmem:[%s574 + $0x2d0] sm:$0xff] %v755
                  %v757 = vld [vmem:[%s573 + $0x5b0] sm:$0xff]
                  %758 = vst [vmem:[%s574 + $0x2d8] sm:$0xff] %v757
                  %v759 = vld [vmem:[%s573 + $0x5c0] sm:$0xff]
                  %760 = vst [vmem:[%s574 + $0x2e0] sm:$0xff] %v759
                  %v761 = vld [vmem:[%s573 + $0x5d0] sm:$0xff]
                  %762 = vst [vmem:[%s574 + $0x2e8] sm:$0xff] %v761
                  %v763 = vld [vmem:[%s573 + $0x5e0] sm:$0xff]
                  %764 = vst [vmem:[%s574 + $0x2f0] sm:$0xff] %v763
                  %v765 = vld [vmem:[%s573 + $0x5f0] sm:$0xff]
                  %766 = vst [vmem:[%s574 + $0x2f8] sm:$0xff] %v765
                  %v767 = vld [vmem:[%s573 + $0x600] sm:$0xff]
                  %768 = vst [vmem:[%s574 + $0x300] sm:$0xff] %v767
                  %v769 = vld [vmem:[%s573 + $0x610] sm:$0xff]
                  %770 = vst [vmem:[%s574 + $0x308] sm:$0xff] %v769
                  %v771 = vld [vmem:[%s573 + $0x620] sm:$0xff]
                  %772 = vst [vmem:[%s574 + $0x310] sm:$0xff] %v771
                  %v773 = vld [vmem:[%s573 + $0x630] sm:$0xff]
                  %774 = vst [vmem:[%s574 + $0x318] sm:$0xff] %v773
                  %v775 = vld [vmem:[%s573 + $0x640] sm:$0xff]
                  %776 = vst [vmem:[%s574 + $0x320] sm:$0xff] %v775
                  %v777 = vld [vmem:[%s573 + $0x650] sm:$0xff]
                  %778 = vst [vmem:[%s574 + $0x328] sm:$0xff] %v777
                  %v779 = vld [vmem:[%s573 + $0x660] sm:$0xff]
                  %780 = vst [vmem:[%s574 + $0x330] sm:$0xff] %v779
                  %v781 = vld [vmem:[%s573 + $0x670] sm:$0xff]
                  %782 = vst [vmem:[%s574 + $0x338] sm:$0xff] %v781
                  %v783 = vld [vmem:[%s573 + $0x680] sm:$0xff]
                  %784 = vst [vmem:[%s574 + $0x340] sm:$0xff] %v783
                  %v785 = vld [vmem:[%s573 + $0x690] sm:$0xff]
                  %786 = vst [vmem:[%s574 + $0x348] sm:$0xff] %v785
                  %v787 = vld [vmem:[%s573 + $0x6a0] sm:$0xff]
                  %788 = vst [vmem:[%s574 + $0x350] sm:$0xff] %v787
                  %v789 = vld [vmem:[%s573 + $0x6b0] sm:$0xff]
                  %790 = vst [vmem:[%s574 + $0x358] sm:$0xff] %v789
                  %v791 = vld [vmem:[%s573 + $0x6c0] sm:$0xff]
                  %792 = vst [vmem:[%s574 + $0x360] sm:$0xff] %v791
                  %v793 = vld [vmem:[%s573 + $0x6d0] sm:$0xff]
                  %794 = vst [vmem:[%s574 + $0x368] sm:$0xff] %v793
                  %v795 = vld [vmem:[%s573 + $0x6e0] sm:$0xff]
                  %796 = vst [vmem:[%s574 + $0x370] sm:$0xff] %v795
                  %v797 = vld [vmem:[%s573 + $0x6f0] sm:$0xff]
                  %798 = vst [vmem:[%s574 + $0x378] sm:$0xff] %v797
                  %v799 = vld [vmem:[%s573 + $0x700] sm:$0xff]
                  %800 = vst [vmem:[%s574 + $0x380] sm:$0xff] %v799
                  %v801 = vld [vmem:[%s573 + $0x710] sm:$0xff]
                  %802 = vst [vmem:[%s574 + $0x388] sm:$0xff] %v801
                  %v803 = vld [vmem:[%s573 + $0x720] sm:$0xff]
                  %804 = vst [vmem:[%s574 + $0x390] sm:$0xff] %v803
                  %v805 = vld [vmem:[%s573 + $0x730] sm:$0xff]
                  %806 = vst [vmem:[%s574 + $0x398] sm:$0xff] %v805
                  %v807 = vld [vmem:[%s573 + $0x740] sm:$0xff]
                  %808 = vst [vmem:[%s574 + $0x3a0] sm:$0xff] %v807
                  %v809 = vld [vmem:[%s573 + $0x750] sm:$0xff]
                  %810 = vst [vmem:[%s574 + $0x3a8] sm:$0xff] %v809
                  %v811 = vld [vmem:[%s573 + $0x760] sm:$0xff]
                  %812 = vst [vmem:[%s574 + $0x3b0] sm:$0xff] %v811
                  %v813 = vld [vmem:[%s573 + $0x770] sm:$0xff]
                  %814 = vst [vmem:[%s574 + $0x3b8] sm:$0xff] %v813
                  %v815 = vld [vmem:[%s573 + $0x780] sm:$0xff]
                  %816 = vst [vmem:[%s574 + $0x3c0] sm:$0xff] %v815
                  %v817 = vld [vmem:[%s573 + $0x790] sm:$0xff]
                  %818 = vst [vmem:[%s574 + $0x3c8] sm:$0xff] %v817
                  %v819 = vld [vmem:[%s573 + $0x7a0] sm:$0xff]
                  %820 = vst [vmem:[%s574 + $0x3d0] sm:$0xff] %v819
                  %v821 = vld [vmem:[%s573 + $0x7b0] sm:$0xff]
                  %822 = vst [vmem:[%s574 + $0x3d8] sm:$0xff] %v821
                  %v823 = vld [vmem:[%s573 + $0x7c0] sm:$0xff]
                  %824 = vst [vmem:[%s574 + $0x3e0] sm:$0xff] %v823
                  %v825 = vld [vmem:[%s573 + $0x7d0] sm:$0xff]
                  %826 = vst [vmem:[%s574 + $0x3e8] sm:$0xff] %v825
                  %v827 = vld [vmem:[%s573 + $0x7e0] sm:$0xff]
                  %828 = vst [vmem:[%s574 + $0x3f0] sm:$0xff] %v827
                  %v829 = vld [vmem:[%s573 + $0x7f0] sm:$0xff]
                  %830 = vst [vmem:[%s574 + $0x3f8] sm:$0xff] %v829
                  %v831 = vld [vmem:[%s573 + $0x800] sm:$0xff]
                  %832 = vst [vmem:[%s574 + $0x400] sm:$0xff] %v831
                  %v833 = vld [vmem:[%s573 + $0x810] sm:$0xff]
                  %834 = vst [vmem:[%s574 + $0x408] sm:$0xff] %v833
                  %v835 = vld [vmem:[%s573 + $0x820] sm:$0xff]
                  %836 = vst [vmem:[%s574 + $0x410] sm:$0xff] %v835
                  %v837 = vld [vmem:[%s573 + $0x830] sm:$0xff]
                  %838 = vst [vmem:[%s574 + $0x418] sm:$0xff] %v837
                  %v839 = vld [vmem:[%s573 + $0x840] sm:$0xff]
                  %840 = vst [vmem:[%s574 + $0x420] sm:$0xff] %v839
                  %v841 = vld [vmem:[%s573 + $0x850] sm:$0xff]
                  %842 = vst [vmem:[%s574 + $0x428] sm:$0xff] %v841
                  %v843 = vld [vmem:[%s573 + $0x860] sm:$0xff]
                  %844 = vst [vmem:[%s574 + $0x430] sm:$0xff] %v843
                  %v845 = vld [vmem:[%s573 + $0x870] sm:$0xff]
                  %846 = vst [vmem:[%s574 + $0x438] sm:$0xff] %v845
                  %v847 = vld [vmem:[%s573 + $0x880] sm:$0xff]
                  %848 = vst [vmem:[%s574 + $0x440] sm:$0xff] %v847
                  %v849 = vld [vmem:[%s573 + $0x890] sm:$0xff]
                  %850 = vst [vmem:[%s574 + $0x448] sm:$0xff] %v849
                  %v851 = vld [vmem:[%s573 + $0x8a0] sm:$0xff]
                  %852 = vst [vmem:[%s574 + $0x450] sm:$0xff] %v851
                  %v853 = vld [vmem:[%s573 + $0x8b0] sm:$0xff]
                  %854 = vst [vmem:[%s574 + $0x458] sm:$0xff] %v853
                  %v855 = vld [vmem:[%s573 + $0x8c0] sm:$0xff]
                  %856 = vst [vmem:[%s574 + $0x460] sm:$0xff] %v855
                  %v857 = vld [vmem:[%s573 + $0x8d0] sm:$0xff]
                  %858 = vst [vmem:[%s574 + $0x468] sm:$0xff] %v857
                  %v859 = vld [vmem:[%s573 + $0x8e0] sm:$0xff]
                  %860 = vst [vmem:[%s574 + $0x470] sm:$0xff] %v859
                  %v861 = vld [vmem:[%s573 + $0x8f0] sm:$0xff]
                  %862 = vst [vmem:[%s574 + $0x478] sm:$0xff] %v861
                  %v863 = vld [vmem:[%s573 + $0x900] sm:$0xff]
                  %864 = vst [vmem:[%s574 + $0x480] sm:$0xff] %v863
                  %v865 = vld [vmem:[%s573 + $0x910] sm:$0xff]
                  %866 = vst [vmem:[%s574 + $0x488] sm:$0xff] %v865
                  %v867 = vld [vmem:[%s573 + $0x920] sm:$0xff]
                  %868 = vst [vmem:[%s574 + $0x490] sm:$0xff] %v867
                  %v869 = vld [vmem:[%s573 + $0x930] sm:$0xff]
                  %870 = vst [vmem:[%s574 + $0x498] sm:$0xff] %v869
                  %v871 = vld [vmem:[%s573 + $0x940] sm:$0xff]
                  %872 = vst [vmem:[%s574 + $0x4a0] sm:$0xff] %v871
                  %v873 = vld [vmem:[%s573 + $0x950] sm:$0xff]
                  %874 = vst [vmem:[%s574 + $0x4a8] sm:$0xff] %v873
                  %v875 = vld [vmem:[%s573 + $0x960] sm:$0xff]
                  %876 = vst [vmem:[%s574 + $0x4b0] sm:$0xff] %v875
                  %v877 = vld [vmem:[%s573 + $0x970] sm:$0xff]
                  %878 = vst [vmem:[%s574 + $0x4b8] sm:$0xff] %v877
                  %v879 = vld [vmem:[%s573 + $0x980] sm:$0xff]
                  %880 = vst [vmem:[%s574 + $0x4c0] sm:$0xff] %v879
                  %v881 = vld [vmem:[%s573 + $0x990] sm:$0xff]
                  %882 = vst [vmem:[%s574 + $0x4c8] sm:$0xff] %v881
                  %v883 = vld [vmem:[%s573 + $0x9a0] sm:$0xff]
                  %884 = vst [vmem:[%s574 + $0x4d0] sm:$0xff] %v883
                  %v885 = vld [vmem:[%s573 + $0x9b0] sm:$0xff]
                  %886 = vst [vmem:[%s574 + $0x4d8] sm:$0xff] %v885
                  %v887 = vld [vmem:[%s573 + $0x9c0] sm:$0xff]
                  %888 = vst [vmem:[%s574 + $0x4e0] sm:$0xff] %v887
                  %v889 = vld [vmem:[%s573 + $0x9d0] sm:$0xff]
                  %890 = vst [vmem:[%s574 + $0x4e8] sm:$0xff] %v889
                  %v891 = vld [vmem:[%s573 + $0x9e0] sm:$0xff]
                  %892 = vst [vmem:[%s574 + $0x4f0] sm:$0xff] %v891
                  %v893 = vld [vmem:[%s573 + $0x9f0] sm:$0xff]
                  %894 = vst [vmem:[%s574 + $0x4f8] sm:$0xff] %v893
                  %v895 = vld [vmem:[%s573 + $0xa00] sm:$0xff]
                  %896 = vst [vmem:[%s574 + $0x500] sm:$0xff] %v895
                  %v897 = vld [vmem:[%s573 + $0xa10] sm:$0xff]
                  %898 = vst [vmem:[%s574 + $0x508] sm:$0xff] %v897
                  %v899 = vld [vmem:[%s573 + $0xa20] sm:$0xff]
                  %900 = vst [vmem:[%s574 + $0x510] sm:$0xff] %v899
                  %v901 = vld [vmem:[%s573 + $0xa30] sm:$0xff]
                  %902 = vst [vmem:[%s574 + $0x518] sm:$0xff] %v901
                  %v903 = vld [vmem:[%s573 + $0xa40] sm:$0xff]
                  %904 = vst [vmem:[%s574 + $0x520] sm:$0xff] %v903
                  %v905 = vld [vmem:[%s573 + $0xa50] sm:$0xff]
                  %906 = vst [vmem:[%s574 + $0x528] sm:$0xff] %v905
                  %v907 = vld [vmem:[%s573 + $0xa60] sm:$0xff]
                  %908 = vst [vmem:[%s574 + $0x530] sm:$0xff] %v907
                  %v909 = vld [vmem:[%s573 + $0xa70] sm:$0xff]
                  %910 = vst [vmem:[%s574 + $0x538] sm:$0xff] %v909
                  %v911 = vld [vmem:[%s573 + $0xa80] sm:$0xff]
                  %912 = vst [vmem:[%s574 + $0x540] sm:$0xff] %v911
                  %v913 = vld [vmem:[%s573 + $0xa90] sm:$0xff]
                  %914 = vst [vmem:[%s574 + $0x548] sm:$0xff] %v913
                  %v915 = vld [vmem:[%s573 + $0xaa0] sm:$0xff]
                  %916 = vst [vmem:[%s574 + $0x550] sm:$0xff] %v915
                  %v917 = vld [vmem:[%s573 + $0xab0] sm:$0xff]
                  %918 = vst [vmem:[%s574 + $0x558] sm:$0xff] %v917
                  %v919 = vld [vmem:[%s573 + $0xac0] sm:$0xff]
                  %920 = vst [vmem:[%s574 + $0x560] sm:$0xff] %v919
                  %v921 = vld [vmem:[%s573 + $0xad0] sm:$0xff]
                  %922 = vst [vmem:[%s574 + $0x568] sm:$0xff] %v921
                  %v923 = vld [vmem:[%s573 + $0xae0] sm:$0xff]
                  %924 = vst [vmem:[%s574 + $0x570] sm:$0xff] %v923
                  %v925 = vld [vmem:[%s573 + $0xaf0] sm:$0xff]
                  %926 = vst [vmem:[%s574 + $0x578] sm:$0xff] %v925
                  %v927 = vld [vmem:[%s573 + $0xb00] sm:$0xff]
                  %928 = vst [vmem:[%s574 + $0x580] sm:$0xff] %v927
                  %v929 = vld [vmem:[%s573 + $0xb10] sm:$0xff]
                  %930 = vst [vmem:[%s574 + $0x588] sm:$0xff] %v929
                  %v931 = vld [vmem:[%s573 + $0xb20] sm:$0xff]
                  %932 = vst [vmem:[%s574 + $0x590] sm:$0xff] %v931
                  %v933 = vld [vmem:[%s573 + $0xb30] sm:$0xff]
                  %934 = vst [vmem:[%s574 + $0x598] sm:$0xff] %v933
                  %v935 = vld [vmem:[%s573 + $0xb40] sm:$0xff]
                  %936 = vst [vmem:[%s574 + $0x5a0] sm:$0xff] %v935
                  %v937 = vld [vmem:[%s573 + $0xb50] sm:$0xff]
                  %938 = vst [vmem:[%s574 + $0x5a8] sm:$0xff] %v937
                  %v939 = vld [vmem:[%s573 + $0xb60] sm:$0xff]
                  %940 = vst [vmem:[%s574 + $0x5b0] sm:$0xff] %v939
                  %v941 = vld [vmem:[%s573 + $0xb70] sm:$0xff]
                  %942 = vst [vmem:[%s574 + $0x5b8] sm:$0xff] %v941
                  %v943 = vld [vmem:[%s573 + $0xb80] sm:$0xff]
                  %944 = vst [vmem:[%s574 + $0x5c0] sm:$0xff] %v943
                  %v945 = vld [vmem:[%s573 + $0xb90] sm:$0xff]
                  %946 = vst [vmem:[%s574 + $0x5c8] sm:$0xff] %v945
                  %v947 = vld [vmem:[%s573 + $0xba0] sm:$0xff]
                  %948 = vst [vmem:[%s574 + $0x5d0] sm:$0xff] %v947
                  %v949 = vld [vmem:[%s573 + $0xbb0] sm:$0xff]
                  %950 = vst [vmem:[%s574 + $0x5d8] sm:$0xff] %v949
                  %v951 = vld [vmem:[%s573 + $0xbc0] sm:$0xff]
                  %952 = vst [vmem:[%s574 + $0x5e0] sm:$0xff] %v951
                  %v953 = vld [vmem:[%s573 + $0xbd0] sm:$0xff]
                  %954 = vst [vmem:[%s574 + $0x5e8] sm:$0xff] %v953
                  %v955 = vld [vmem:[%s573 + $0xbe0] sm:$0xff]
                  %956 = vst [vmem:[%s574 + $0x5f0] sm:$0xff] %v955
                  %v957 = vld [vmem:[%s573 + $0xbf0] sm:$0xff]
                  %958 = vst [vmem:[%s574 + $0x5f8] sm:$0xff] %v957
                $region52: #{_lambda_.10} parent=46 // loop_footer
                  %s572 = sadd.s32 1, %s568
                $region53: #{_lambda_.10} parent=46 // loop_footer_branch
                  %567 = sbr.rel target = $region49
                $region54: #{_lambda_.10} parent=46 // loop_exit
                  _
              $region47: #{_lambda_.10} parent=31 // pred_fallthru
                _
              // Predicated region
              $region55: #{_lambda_.10} parent=31 // pred_check
                _
              $region56: #{_lambda_.10} parent=31 // pred_check_branch
                %960 = sbr.rel target = $region58
              $region57: #{_lambda_.10} parent=31 // pred_region
                _
              $region58: #{_lambda_.10} parent=31 // pred_fallthru
                _
            $region32: #{_lambda_.10} parent=27 // pred_fallthru
              _
            // Predicated region
            $region33: #{_lambda_.10} parent=27 // pred_check
              _
            $region34: #{_lambda_.10} parent=27 // pred_check_branch
              %171 = sbr.rel target = $region36
            $region35: #{_lambda_.10} parent=27 // pred_region
              loop: start=0, step=1, limit=1
              $region37: #{_lambda_.10} parent=35 // loop_pre_header
                _
              $region38: #{_lambda_.10} parent=35 // loop_header
                %s174 = sphi 0, %s178
                %p175 = scmp.ge.s32.totalorder %s174, 1
                %s179 = sphi %s165, %s165
                %s180 = sphi %s162, %s162
              $region39: #{_lambda_.10} parent=35 // loop_header_branch
                %177 = sbr.rel (%p175) target = $region43
              $region40: #{_lambda_.10} parent=35 // loop_body
                %v181 = vld [vmem:[%s179] sm:$0xff]
                %182 = vst [vmem:[%s180] sm:$0xff] %v181
                %v183 = vld [vmem:[%s179 + $0x10] sm:$0xff]
                %184 = vst [vmem:[%s180 + $0x8] sm:$0xff] %v183
                %v185 = vld [vmem:[%s179 + $0x20] sm:$0xff]
                %186 = vst [vmem:[%s180 + $0x10] sm:$0xff] %v185
                %v187 = vld [vmem:[%s179 + $0x30] sm:$0xff]
                %188 = vst [vmem:[%s180 + $0x18] sm:$0xff] %v187
                %v189 = vld [vmem:[%s179 + $0x40] sm:$0xff]
                %190 = vst [vmem:[%s180 + $0x20] sm:$0xff] %v189
                %v191 = vld [vmem:[%s179 + $0x50] sm:$0xff]
                %192 = vst [vmem:[%s180 + $0x28] sm:$0xff] %v191
                %v193 = vld [vmem:[%s179 + $0x60] sm:$0xff]
                %194 = vst [vmem:[%s180 + $0x30] sm:$0xff] %v193
                %v195 = vld [vmem:[%s179 + $0x70] sm:$0xff]
                %196 = vst [vmem:[%s180 + $0x38] sm:$0xff] %v195
                %v197 = vld [vmem:[%s179 + $0x80] sm:$0xff]
                %198 = vst [vmem:[%s180 + $0x40] sm:$0xff] %v197
                %v199 = vld [vmem:[%s179 + $0x90] sm:$0xff]
                %200 = vst [vmem:[%s180 + $0x48] sm:$0xff] %v199
                %v201 = vld [vmem:[%s179 + $0xa0] sm:$0xff]
                %202 = vst [vmem:[%s180 + $0x50] sm:$0xff] %v201
                %v203 = vld [vmem:[%s179 + $0xb0] sm:$0xff]
                %204 = vst [vmem:[%s180 + $0x58] sm:$0xff] %v203
                %v205 = vld [vmem:[%s179 + $0xc0] sm:$0xff]
                %206 = vst [vmem:[%s180 + $0x60] sm:$0xff] %v205
                %v207 = vld [vmem:[%s179 + $0xd0] sm:$0xff]
                %208 = vst [vmem:[%s180 + $0x68] sm:$0xff] %v207
                %v209 = vld [vmem:[%s179 + $0xe0] sm:$0xff]
                %210 = vst [vmem:[%s180 + $0x70] sm:$0xff] %v209
                %v211 = vld [vmem:[%s179 + $0xf0] sm:$0xff]
                %212 = vst [vmem:[%s180 + $0x78] sm:$0xff] %v211
                %v213 = vld [vmem:[%s179 + $0x100] sm:$0xff]
                %214 = vst [vmem:[%s180 + $0x80] sm:$0xff] %v213
                %v215 = vld [vmem:[%s179 + $0x110] sm:$0xff]
                %216 = vst [vmem:[%s180 + $0x88] sm:$0xff] %v215
                %v217 = vld [vmem:[%s179 + $0x120] sm:$0xff]
                %218 = vst [vmem:[%s180 + $0x90] sm:$0xff] %v217
                %v219 = vld [vmem:[%s179 + $0x130] sm:$0xff]
                %220 = vst [vmem:[%s180 + $0x98] sm:$0xff] %v219
                %v221 = vld [vmem:[%s179 + $0x140] sm:$0xff]
                %222 = vst [vmem:[%s180 + $0xa0] sm:$0xff] %v221
                %v223 = vld [vmem:[%s179 + $0x150] sm:$0xff]
                %224 = vst [vmem:[%s180 + $0xa8] sm:$0xff] %v223
                %v225 = vld [vmem:[%s179 + $0x160] sm:$0xff]
                %226 = vst [vmem:[%s180 + $0xb0] sm:$0xff] %v225
                %v227 = vld [vmem:[%s179 + $0x170] sm:$0xff]
                %228 = vst [vmem:[%s180 + $0xb8] sm:$0xff] %v227
                %v229 = vld [vmem:[%s179 + $0x180] sm:$0xff]
                %230 = vst [vmem:[%s180 + $0xc0] sm:$0xff] %v229
                %v231 = vld [vmem:[%s179 + $0x190] sm:$0xff]
                %232 = vst [vmem:[%s180 + $0xc8] sm:$0xff] %v231
                %v233 = vld [vmem:[%s179 + $0x1a0] sm:$0xff]
                %234 = vst [vmem:[%s180 + $0xd0] sm:$0xff] %v233
                %v235 = vld [vmem:[%s179 + $0x1b0] sm:$0xff]
                %236 = vst [vmem:[%s180 + $0xd8] sm:$0xff] %v235
                %v237 = vld [vmem:[%s179 + $0x1c0] sm:$0xff]
                %238 = vst [vmem:[%s180 + $0xe0] sm:$0xff] %v237
                %v239 = vld [vmem:[%s179 + $0x1d0] sm:$0xff]
                %240 = vst [vmem:[%s180 + $0xe8] sm:$0xff] %v239
                %v241 = vld [vmem:[%s179 + $0x1e0] sm:$0xff]
                %242 = vst [vmem:[%s180 + $0xf0] sm:$0xff] %v241
                %v243 = vld [vmem:[%s179 + $0x1f0] sm:$0xff]
                %244 = vst [vmem:[%s180 + $0xf8] sm:$0xff] %v243
                %v245 = vld [vmem:[%s179 + $0x200] sm:$0xff]
                %246 = vst [vmem:[%s180 + $0x100] sm:$0xff] %v245
                %v247 = vld [vmem:[%s179 + $0x210] sm:$0xff]
                %248 = vst [vmem:[%s180 + $0x108] sm:$0xff] %v247
                %v249 = vld [vmem:[%s179 + $0x220] sm:$0xff]
                %250 = vst [vmem:[%s180 + $0x110] sm:$0xff] %v249
                %v251 = vld [vmem:[%s179 + $0x230] sm:$0xff]
                %252 = vst [vmem:[%s180 + $0x118] sm:$0xff] %v251
                %v253 = vld [vmem:[%s179 + $0x240] sm:$0xff]
                %254 = vst [vmem:[%s180 + $0x120] sm:$0xff] %v253
                %v255 = vld [vmem:[%s179 + $0x250] sm:$0xff]
                %256 = vst [vmem:[%s180 + $0x128] sm:$0xff] %v255
                %v257 = vld [vmem:[%s179 + $0x260] sm:$0xff]
                %258 = vst [vmem:[%s180 + $0x130] sm:$0xff] %v257
                %v259 = vld [vmem:[%s179 + $0x270] sm:$0xff]
                %260 = vst [vmem:[%s180 + $0x138] sm:$0xff] %v259
                %v261 = vld [vmem:[%s179 + $0x280] sm:$0xff]
                %262 = vst [vmem:[%s180 + $0x140] sm:$0xff] %v261
                %v263 = vld [vmem:[%s179 + $0x290] sm:$0xff]
                %264 = vst [vmem:[%s180 + $0x148] sm:$0xff] %v263
                %v265 = vld [vmem:[%s179 + $0x2a0] sm:$0xff]
                %266 = vst [vmem:[%s180 + $0x150] sm:$0xff] %v265
                %v267 = vld [vmem:[%s179 + $0x2b0] sm:$0xff]
                %268 = vst [vmem:[%s180 + $0x158] sm:$0xff] %v267
                %v269 = vld [vmem:[%s179 + $0x2c0] sm:$0xff]
                %270 = vst [vmem:[%s180 + $0x160] sm:$0xff] %v269
                %v271 = vld [vmem:[%s179 + $0x2d0] sm:$0xff]
                %272 = vst [vmem:[%s180 + $0x168] sm:$0xff] %v271
                %v273 = vld [vmem:[%s179 + $0x2e0] sm:$0xff]
                %274 = vst [vmem:[%s180 + $0x170] sm:$0xff] %v273
                %v275 = vld [vmem:[%s179 + $0x2f0] sm:$0xff]
                %276 = vst [vmem:[%s180 + $0x178] sm:$0xff] %v275
                %v277 = vld [vmem:[%s179 + $0x300] sm:$0xff]
                %278 = vst [vmem:[%s180 + $0x180] sm:$0xff] %v277
                %v279 = vld [vmem:[%s179 + $0x310] sm:$0xff]
                %280 = vst [vmem:[%s180 + $0x188] sm:$0xff] %v279
                %v281 = vld [vmem:[%s179 + $0x320] sm:$0xff]
                %282 = vst [vmem:[%s180 + $0x190] sm:$0xff] %v281
                %v283 = vld [vmem:[%s179 + $0x330] sm:$0xff]
                %284 = vst [vmem:[%s180 + $0x198] sm:$0xff] %v283
                %v285 = vld [vmem:[%s179 + $0x340] sm:$0xff]
                %286 = vst [vmem:[%s180 + $0x1a0] sm:$0xff] %v285
                %v287 = vld [vmem:[%s179 + $0x350] sm:$0xff]
                %288 = vst [vmem:[%s180 + $0x1a8] sm:$0xff] %v287
                %v289 = vld [vmem:[%s179 + $0x360] sm:$0xff]
                %290 = vst [vmem:[%s180 + $0x1b0] sm:$0xff] %v289
                %v291 = vld [vmem:[%s179 + $0x370] sm:$0xff]
                %292 = vst [vmem:[%s180 + $0x1b8] sm:$0xff] %v291
                %v293 = vld [vmem:[%s179 + $0x380] sm:$0xff]
                %294 = vst [vmem:[%s180 + $0x1c0] sm:$0xff] %v293
                %v295 = vld [vmem:[%s179 + $0x390] sm:$0xff]
                %296 = vst [vmem:[%s180 + $0x1c8] sm:$0xff] %v295
                %v297 = vld [vmem:[%s179 + $0x3a0] sm:$0xff]
                %298 = vst [vmem:[%s180 + $0x1d0] sm:$0xff] %v297
                %v299 = vld [vmem:[%s179 + $0x3b0] sm:$0xff]
                %300 = vst [vmem:[%s180 + $0x1d8] sm:$0xff] %v299
                %v301 = vld [vmem:[%s179 + $0x3c0] sm:$0xff]
                %302 = vst [vmem:[%s180 + $0x1e0] sm:$0xff] %v301
                %v303 = vld [vmem:[%s179 + $0x3d0] sm:$0xff]
                %304 = vst [vmem:[%s180 + $0x1e8] sm:$0xff] %v303
                %v305 = vld [vmem:[%s179 + $0x3e0] sm:$0xff]
                %306 = vst [vmem:[%s180 + $0x1f0] sm:$0xff] %v305
                %v307 = vld [vmem:[%s179 + $0x3f0] sm:$0xff]
                %308 = vst [vmem:[%s180 + $0x1f8] sm:$0xff] %v307
                %v309 = vld [vmem:[%s179 + $0x400] sm:$0xff]
                %310 = vst [vmem:[%s180 + $0x200] sm:$0xff] %v309
                %v311 = vld [vmem:[%s179 + $0x410] sm:$0xff]
                %312 = vst [vmem:[%s180 + $0x208] sm:$0xff] %v311
                %v313 = vld [vmem:[%s179 + $0x420] sm:$0xff]
                %314 = vst [vmem:[%s180 + $0x210] sm:$0xff] %v313
                %v315 = vld [vmem:[%s179 + $0x430] sm:$0xff]
                %316 = vst [vmem:[%s180 + $0x218] sm:$0xff] %v315
                %v317 = vld [vmem:[%s179 + $0x440] sm:$0xff]
                %318 = vst [vmem:[%s180 + $0x220] sm:$0xff] %v317
                %v319 = vld [vmem:[%s179 + $0x450] sm:$0xff]
                %320 = vst [vmem:[%s180 + $0x228] sm:$0xff] %v319
                %v321 = vld [vmem:[%s179 + $0x460] sm:$0xff]
                %322 = vst [vmem:[%s180 + $0x230] sm:$0xff] %v321
                %v323 = vld [vmem:[%s179 + $0x470] sm:$0xff]
                %324 = vst [vmem:[%s180 + $0x238] sm:$0xff] %v323
                %v325 = vld [vmem:[%s179 + $0x480] sm:$0xff]
                %326 = vst [vmem:[%s180 + $0x240] sm:$0xff] %v325
                %v327 = vld [vmem:[%s179 + $0x490] sm:$0xff]
                %328 = vst [vmem:[%s180 + $0x248] sm:$0xff] %v327
                %v329 = vld [vmem:[%s179 + $0x4a0] sm:$0xff]
                %330 = vst [vmem:[%s180 + $0x250] sm:$0xff] %v329
                %v331 = vld [vmem:[%s179 + $0x4b0] sm:$0xff]
                %332 = vst [vmem:[%s180 + $0x258] sm:$0xff] %v331
                %v333 = vld [vmem:[%s179 + $0x4c0] sm:$0xff]
                %334 = vst [vmem:[%s180 + $0x260] sm:$0xff] %v333
                %v335 = vld [vmem:[%s179 + $0x4d0] sm:$0xff]
                %336 = vst [vmem:[%s180 + $0x268] sm:$0xff] %v335
                %v337 = vld [vmem:[%s179 + $0x4e0] sm:$0xff]
                %338 = vst [vmem:[%s180 + $0x270] sm:$0xff] %v337
                %v339 = vld [vmem:[%s179 + $0x4f0] sm:$0xff]
                %340 = vst [vmem:[%s180 + $0x278] sm:$0xff] %v339
                %v341 = vld [vmem:[%s179 + $0x500] sm:$0xff]
                %342 = vst [vmem:[%s180 + $0x280] sm:$0xff] %v341
                %v343 = vld [vmem:[%s179 + $0x510] sm:$0xff]
                %344 = vst [vmem:[%s180 + $0x288] sm:$0xff] %v343
                %v345 = vld [vmem:[%s179 + $0x520] sm:$0xff]
                %346 = vst [vmem:[%s180 + $0x290] sm:$0xff] %v345
                %v347 = vld [vmem:[%s179 + $0x530] sm:$0xff]
                %348 = vst [vmem:[%s180 + $0x298] sm:$0xff] %v347
                %v349 = vld [vmem:[%s179 + $0x540] sm:$0xff]
                %350 = vst [vmem:[%s180 + $0x2a0] sm:$0xff] %v349
                %v351 = vld [vmem:[%s179 + $0x550] sm:$0xff]
                %352 = vst [vmem:[%s180 + $0x2a8] sm:$0xff] %v351
                %v353 = vld [vmem:[%s179 + $0x560] sm:$0xff]
                %354 = vst [vmem:[%s180 + $0x2b0] sm:$0xff] %v353
                %v355 = vld [vmem:[%s179 + $0x570] sm:$0xff]
                %356 = vst [vmem:[%s180 + $0x2b8] sm:$0xff] %v355
                %v357 = vld [vmem:[%s179 + $0x580] sm:$0xff]
                %358 = vst [vmem:[%s180 + $0x2c0] sm:$0xff] %v357
                %v359 = vld [vmem:[%s179 + $0x590] sm:$0xff]
                %360 = vst [vmem:[%s180 + $0x2c8] sm:$0xff] %v359
                %v361 = vld [vmem:[%s179 + $0x5a0] sm:$0xff]
                %362 = vst [vmem:[%s180 + $0x2d0] sm:$0xff] %v361
                %v363 = vld [vmem:[%s179 + $0x5b0] sm:$0xff]
                %364 = vst [vmem:[%s180 + $0x2d8] sm:$0xff] %v363
                %v365 = vld [vmem:[%s179 + $0x5c0] sm:$0xff]
                %366 = vst [vmem:[%s180 + $0x2e0] sm:$0xff] %v365
                %v367 = vld [vmem:[%s179 + $0x5d0] sm:$0xff]
                %368 = vst [vmem:[%s180 + $0x2e8] sm:$0xff] %v367
                %v369 = vld [vmem:[%s179 + $0x5e0] sm:$0xff]
                %370 = vst [vmem:[%s180 + $0x2f0] sm:$0xff] %v369
                %v371 = vld [vmem:[%s179 + $0x5f0] sm:$0xff]
                %372 = vst [vmem:[%s180 + $0x2f8] sm:$0xff] %v371
                %v373 = vld [vmem:[%s179 + $0x600] sm:$0xff]
                %374 = vst [vmem:[%s180 + $0x300] sm:$0xff] %v373
                %v375 = vld [vmem:[%s179 + $0x610] sm:$0xff]
                %376 = vst [vmem:[%s180 + $0x308] sm:$0xff] %v375
                %v377 = vld [vmem:[%s179 + $0x620] sm:$0xff]
                %378 = vst [vmem:[%s180 + $0x310] sm:$0xff] %v377
                %v379 = vld [vmem:[%s179 + $0x630] sm:$0xff]
                %380 = vst [vmem:[%s180 + $0x318] sm:$0xff] %v379
                %v381 = vld [vmem:[%s179 + $0x640] sm:$0xff]
                %382 = vst [vmem:[%s180 + $0x320] sm:$0xff] %v381
                %v383 = vld [vmem:[%s179 + $0x650] sm:$0xff]
                %384 = vst [vmem:[%s180 + $0x328] sm:$0xff] %v383
                %v385 = vld [vmem:[%s179 + $0x660] sm:$0xff]
                %386 = vst [vmem:[%s180 + $0x330] sm:$0xff] %v385
                %v387 = vld [vmem:[%s179 + $0x670] sm:$0xff]
                %388 = vst [vmem:[%s180 + $0x338] sm:$0xff] %v387
                %v389 = vld [vmem:[%s179 + $0x680] sm:$0xff]
                %390 = vst [vmem:[%s180 + $0x340] sm:$0xff] %v389
                %v391 = vld [vmem:[%s179 + $0x690] sm:$0xff]
                %392 = vst [vmem:[%s180 + $0x348] sm:$0xff] %v391
                %v393 = vld [vmem:[%s179 + $0x6a0] sm:$0xff]
                %394 = vst [vmem:[%s180 + $0x350] sm:$0xff] %v393
                %v395 = vld [vmem:[%s179 + $0x6b0] sm:$0xff]
                %396 = vst [vmem:[%s180 + $0x358] sm:$0xff] %v395
                %v397 = vld [vmem:[%s179 + $0x6c0] sm:$0xff]
                %398 = vst [vmem:[%s180 + $0x360] sm:$0xff] %v397
                %v399 = vld [vmem:[%s179 + $0x6d0] sm:$0xff]
                %400 = vst [vmem:[%s180 + $0x368] sm:$0xff] %v399
                %v401 = vld [vmem:[%s179 + $0x6e0] sm:$0xff]
                %402 = vst [vmem:[%s180 + $0x370] sm:$0xff] %v401
                %v403 = vld [vmem:[%s179 + $0x6f0] sm:$0xff]
                %404 = vst [vmem:[%s180 + $0x378] sm:$0xff] %v403
                %v405 = vld [vmem:[%s179 + $0x700] sm:$0xff]
                %406 = vst [vmem:[%s180 + $0x380] sm:$0xff] %v405
                %v407 = vld [vmem:[%s179 + $0x710] sm:$0xff]
                %408 = vst [vmem:[%s180 + $0x388] sm:$0xff] %v407
                %v409 = vld [vmem:[%s179 + $0x720] sm:$0xff]
                %410 = vst [vmem:[%s180 + $0x390] sm:$0xff] %v409
                %v411 = vld [vmem:[%s179 + $0x730] sm:$0xff]
                %412 = vst [vmem:[%s180 + $0x398] sm:$0xff] %v411
                %v413 = vld [vmem:[%s179 + $0x740] sm:$0xff]
                %414 = vst [vmem:[%s180 + $0x3a0] sm:$0xff] %v413
                %v415 = vld [vmem:[%s179 + $0x750] sm:$0xff]
                %416 = vst [vmem:[%s180 + $0x3a8] sm:$0xff] %v415
                %v417 = vld [vmem:[%s179 + $0x760] sm:$0xff]
                %418 = vst [vmem:[%s180 + $0x3b0] sm:$0xff] %v417
                %v419 = vld [vmem:[%s179 + $0x770] sm:$0xff]
                %420 = vst [vmem:[%s180 + $0x3b8] sm:$0xff] %v419
                %v421 = vld [vmem:[%s179 + $0x780] sm:$0xff]
                %422 = vst [vmem:[%s180 + $0x3c0] sm:$0xff] %v421
                %v423 = vld [vmem:[%s179 + $0x790] sm:$0xff]
                %424 = vst [vmem:[%s180 + $0x3c8] sm:$0xff] %v423
                %v425 = vld [vmem:[%s179 + $0x7a0] sm:$0xff]
                %426 = vst [vmem:[%s180 + $0x3d0] sm:$0xff] %v425
                %v427 = vld [vmem:[%s179 + $0x7b0] sm:$0xff]
                %428 = vst [vmem:[%s180 + $0x3d8] sm:$0xff] %v427
                %v429 = vld [vmem:[%s179 + $0x7c0] sm:$0xff]
                %430 = vst [vmem:[%s180 + $0x3e0] sm:$0xff] %v429
                %v431 = vld [vmem:[%s179 + $0x7d0] sm:$0xff]
                %432 = vst [vmem:[%s180 + $0x3e8] sm:$0xff] %v431
                %v433 = vld [vmem:[%s179 + $0x7e0] sm:$0xff]
                %434 = vst [vmem:[%s180 + $0x3f0] sm:$0xff] %v433
                %v435 = vld [vmem:[%s179 + $0x7f0] sm:$0xff]
                %436 = vst [vmem:[%s180 + $0x3f8] sm:$0xff] %v435
                %v437 = vld [vmem:[%s179 + $0x800] sm:$0xff]
                %438 = vst [vmem:[%s180 + $0x400] sm:$0xff] %v437
                %v439 = vld [vmem:[%s179 + $0x810] sm:$0xff]
                %440 = vst [vmem:[%s180 + $0x408] sm:$0xff] %v439
                %v441 = vld [vmem:[%s179 + $0x820] sm:$0xff]
                %442 = vst [vmem:[%s180 + $0x410] sm:$0xff] %v441
                %v443 = vld [vmem:[%s179 + $0x830] sm:$0xff]
                %444 = vst [vmem:[%s180 + $0x418] sm:$0xff] %v443
                %v445 = vld [vmem:[%s179 + $0x840] sm:$0xff]
                %446 = vst [vmem:[%s180 + $0x420] sm:$0xff] %v445
                %v447 = vld [vmem:[%s179 + $0x850] sm:$0xff]
                %448 = vst [vmem:[%s180 + $0x428] sm:$0xff] %v447
                %v449 = vld [vmem:[%s179 + $0x860] sm:$0xff]
                %450 = vst [vmem:[%s180 + $0x430] sm:$0xff] %v449
                %v451 = vld [vmem:[%s179 + $0x870] sm:$0xff]
                %452 = vst [vmem:[%s180 + $0x438] sm:$0xff] %v451
                %v453 = vld [vmem:[%s179 + $0x880] sm:$0xff]
                %454 = vst [vmem:[%s180 + $0x440] sm:$0xff] %v453
                %v455 = vld [vmem:[%s179 + $0x890] sm:$0xff]
                %456 = vst [vmem:[%s180 + $0x448] sm:$0xff] %v455
                %v457 = vld [vmem:[%s179 + $0x8a0] sm:$0xff]
                %458 = vst [vmem:[%s180 + $0x450] sm:$0xff] %v457
                %v459 = vld [vmem:[%s179 + $0x8b0] sm:$0xff]
                %460 = vst [vmem:[%s180 + $0x458] sm:$0xff] %v459
                %v461 = vld [vmem:[%s179 + $0x8c0] sm:$0xff]
                %462 = vst [vmem:[%s180 + $0x460] sm:$0xff] %v461
                %v463 = vld [vmem:[%s179 + $0x8d0] sm:$0xff]
                %464 = vst [vmem:[%s180 + $0x468] sm:$0xff] %v463
                %v465 = vld [vmem:[%s179 + $0x8e0] sm:$0xff]
                %466 = vst [vmem:[%s180 + $0x470] sm:$0xff] %v465
                %v467 = vld [vmem:[%s179 + $0x8f0] sm:$0xff]
                %468 = vst [vmem:[%s180 + $0x478] sm:$0xff] %v467
                %v469 = vld [vmem:[%s179 + $0x900] sm:$0xff]
                %470 = vst [vmem:[%s180 + $0x480] sm:$0xff] %v469
                %v471 = vld [vmem:[%s179 + $0x910] sm:$0xff]
                %472 = vst [vmem:[%s180 + $0x488] sm:$0xff] %v471
                %v473 = vld [vmem:[%s179 + $0x920] sm:$0xff]
                %474 = vst [vmem:[%s180 + $0x490] sm:$0xff] %v473
                %v475 = vld [vmem:[%s179 + $0x930] sm:$0xff]
                %476 = vst [vmem:[%s180 + $0x498] sm:$0xff] %v475
                %v477 = vld [vmem:[%s179 + $0x940] sm:$0xff]
                %478 = vst [vmem:[%s180 + $0x4a0] sm:$0xff] %v477
                %v479 = vld [vmem:[%s179 + $0x950] sm:$0xff]
                %480 = vst [vmem:[%s180 + $0x4a8] sm:$0xff] %v479
                %v481 = vld [vmem:[%s179 + $0x960] sm:$0xff]
                %482 = vst [vmem:[%s180 + $0x4b0] sm:$0xff] %v481
                %v483 = vld [vmem:[%s179 + $0x970] sm:$0xff]
                %484 = vst [vmem:[%s180 + $0x4b8] sm:$0xff] %v483
                %v485 = vld [vmem:[%s179 + $0x980] sm:$0xff]
                %486 = vst [vmem:[%s180 + $0x4c0] sm:$0xff] %v485
                %v487 = vld [vmem:[%s179 + $0x990] sm:$0xff]
                %488 = vst [vmem:[%s180 + $0x4c8] sm:$0xff] %v487
                %v489 = vld [vmem:[%s179 + $0x9a0] sm:$0xff]
                %490 = vst [vmem:[%s180 + $0x4d0] sm:$0xff] %v489
                %v491 = vld [vmem:[%s179 + $0x9b0] sm:$0xff]
                %492 = vst [vmem:[%s180 + $0x4d8] sm:$0xff] %v491
                %v493 = vld [vmem:[%s179 + $0x9c0] sm:$0xff]
                %494 = vst [vmem:[%s180 + $0x4e0] sm:$0xff] %v493
                %v495 = vld [vmem:[%s179 + $0x9d0] sm:$0xff]
                %496 = vst [vmem:[%s180 + $0x4e8] sm:$0xff] %v495
                %v497 = vld [vmem:[%s179 + $0x9e0] sm:$0xff]
                %498 = vst [vmem:[%s180 + $0x4f0] sm:$0xff] %v497
                %v499 = vld [vmem:[%s179 + $0x9f0] sm:$0xff]
                %500 = vst [vmem:[%s180 + $0x4f8] sm:$0xff] %v499
                %v501 = vld [vmem:[%s179 + $0xa00] sm:$0xff]
                %502 = vst [vmem:[%s180 + $0x500] sm:$0xff] %v501
                %v503 = vld [vmem:[%s179 + $0xa10] sm:$0xff]
                %504 = vst [vmem:[%s180 + $0x508] sm:$0xff] %v503
                %v505 = vld [vmem:[%s179 + $0xa20] sm:$0xff]
                %506 = vst [vmem:[%s180 + $0x510] sm:$0xff] %v505
                %v507 = vld [vmem:[%s179 + $0xa30] sm:$0xff]
                %508 = vst [vmem:[%s180 + $0x518] sm:$0xff] %v507
                %v509 = vld [vmem:[%s179 + $0xa40] sm:$0xff]
                %510 = vst [vmem:[%s180 + $0x520] sm:$0xff] %v509
                %v511 = vld [vmem:[%s179 + $0xa50] sm:$0xff]
                %512 = vst [vmem:[%s180 + $0x528] sm:$0xff] %v511
                %v513 = vld [vmem:[%s179 + $0xa60] sm:$0xff]
                %514 = vst [vmem:[%s180 + $0x530] sm:$0xff] %v513
                %v515 = vld [vmem:[%s179 + $0xa70] sm:$0xff]
                %516 = vst [vmem:[%s180 + $0x538] sm:$0xff] %v515
                %v517 = vld [vmem:[%s179 + $0xa80] sm:$0xff]
                %518 = vst [vmem:[%s180 + $0x540] sm:$0xff] %v517
                %v519 = vld [vmem:[%s179 + $0xa90] sm:$0xff]
                %520 = vst [vmem:[%s180 + $0x548] sm:$0xff] %v519
                %v521 = vld [vmem:[%s179 + $0xaa0] sm:$0xff]
                %522 = vst [vmem:[%s180 + $0x550] sm:$0xff] %v521
                %v523 = vld [vmem:[%s179 + $0xab0] sm:$0xff]
                %524 = vst [vmem:[%s180 + $0x558] sm:$0xff] %v523
                %v525 = vld [vmem:[%s179 + $0xac0] sm:$0xff]
                %526 = vst [vmem:[%s180 + $0x560] sm:$0xff] %v525
                %v527 = vld [vmem:[%s179 + $0xad0] sm:$0xff]
                %528 = vst [vmem:[%s180 + $0x568] sm:$0xff] %v527
                %v529 = vld [vmem:[%s179 + $0xae0] sm:$0xff]
                %530 = vst [vmem:[%s180 + $0x570] sm:$0xff] %v529
                %v531 = vld [vmem:[%s179 + $0xaf0] sm:$0xff]
                %532 = vst [vmem:[%s180 + $0x578] sm:$0xff] %v531
                %v533 = vld [vmem:[%s179 + $0xb00] sm:$0xff]
                %534 = vst [vmem:[%s180 + $0x580] sm:$0xff] %v533
                %v535 = vld [vmem:[%s179 + $0xb10] sm:$0xff]
                %536 = vst [vmem:[%s180 + $0x588] sm:$0xff] %v535
                %v537 = vld [vmem:[%s179 + $0xb20] sm:$0xff]
                %538 = vst [vmem:[%s180 + $0x590] sm:$0xff] %v537
                %v539 = vld [vmem:[%s179 + $0xb30] sm:$0xff]
                %540 = vst [vmem:[%s180 + $0x598] sm:$0xff] %v539
                %v541 = vld [vmem:[%s179 + $0xb40] sm:$0xff]
                %542 = vst [vmem:[%s180 + $0x5a0] sm:$0xff] %v541
                %v543 = vld [vmem:[%s179 + $0xb50] sm:$0xff]
                %544 = vst [vmem:[%s180 + $0x5a8] sm:$0xff] %v543
                %v545 = vld [vmem:[%s179 + $0xb60] sm:$0xff]
                %546 = vst [vmem:[%s180 + $0x5b0] sm:$0xff] %v545
                %v547 = vld [vmem:[%s179 + $0xb70] sm:$0xff]
                %548 = vst [vmem:[%s180 + $0x5b8] sm:$0xff] %v547
                %v549 = vld [vmem:[%s179 + $0xb80] sm:$0xff]
                %550 = vst [vmem:[%s180 + $0x5c0] sm:$0xff] %v549
                %v551 = vld [vmem:[%s179 + $0xb90] sm:$0xff]
                %552 = vst [vmem:[%s180 + $0x5c8] sm:$0xff] %v551
                %v553 = vld [vmem:[%s179 + $0xba0] sm:$0xff]
                %554 = vst [vmem:[%s180 + $0x5d0] sm:$0xff] %v553
                %v555 = vld [vmem:[%s179 + $0xbb0] sm:$0xff]
                %556 = vst [vmem:[%s180 + $0x5d8] sm:$0xff] %v555
                %v557 = vld [vmem:[%s179 + $0xbc0] sm:$0xff]
                %558 = vst [vmem:[%s180 + $0x5e0] sm:$0xff] %v557
                %v559 = vld [vmem:[%s179 + $0xbd0] sm:$0xff]
                %560 = vst [vmem:[%s180 + $0x5e8] sm:$0xff] %v559
                %v561 = vld [vmem:[%s179 + $0xbe0] sm:$0xff]
                %562 = vst [vmem:[%s180 + $0x5f0] sm:$0xff] %v561
                %v563 = vld [vmem:[%s179 + $0xbf0] sm:$0xff]
                %564 = vst [vmem:[%s180 + $0x5f8] sm:$0xff] %v563
              $region41: #{_lambda_.10} parent=35 // loop_footer
                %s178 = sadd.s32 1, %s174
              $region42: #{_lambda_.10} parent=35 // loop_footer_branch
                %173 = sbr.rel target = $region38
              $region43: #{_lambda_.10} parent=35 // loop_exit
                _
            $region36: #{_lambda_.10} parent=27 // pred_fallthru
              _
          $region28: #{_lambda_.10} parent=23 // pred_fallthru
            _
          %961 = vnop
        $region24: #{_lambda_.10} parent=19 // pred_fallthru
          _
        // Predicated region
        $region59: #{_lambda_.10} parent=19 // pred_check
          %p962 = pneg %p93
        $region60: #{_lambda_.10} parent=19 // pred_check_branch
          %964 = sbr.rel (%p962) target = $region62
        $region61: #{_lambda_.10} parent=19 // pred_region
          %s965 = smul.u32 2, %s17
          %p966 = scmp.lt.s32.totalorder %s965, 3
          %s967 = scalar_select %p966, %s965, 3
          %s968 = scalar_lea.vmem %s2, %s967
          %s969 = smul.u32 2, %s17
        $region62: #{_lambda_.10} parent=19 // pred_fallthru
          _
      $region20: #{_lambda_.10} parent=5 // pred_fallthru
        _
      %p970 = scmp.le.s32.totalorder 1, %s9
      %p971 = scmp.lt.s32.totalorder %s9, 3
      %p972 = pnand %p970, %p971
      %p973 = pneg %p972
      // Predicated region
      $region63: #{_lambda_.10} parent=5 // pred_check
        _
      $region64: #{_lambda_.10} parent=5 // pred_check_branch
        %975 = sbr.rel (%p972) target = $region66
      $region65: #{_lambda_.10} parent=5 // pred_region
        %s976 = ssub.s32 %s9, 1
        %s977 = sand.u32 %s60, 1
        %s978 = sand.u32 %s60, 1
        %s979 = smul.addr %s978, 1536
        %s980 = scalar_lea.vmem [#allocation2], %s979
        // Predicated region
        $region67: #{_lambda_.10} parent=65 // pred_check
          %p981 = pneg %p73
        $region68: #{_lambda_.10} parent=65 // pred_check_branch
          %983 = sbr.rel (%p981) target = $region70
        $region69: #{_lambda_.10} parent=65 // pred_region
          _
        $region70: #{_lambda_.10} parent=65 // pred_fallthru
          _
        %s984 = smul.u32 6, %s18
        %p985 = scmp.lt.s32.totalorder %s984, 5
        %s986 = scalar_select %p985, %s984, 5
        %s987 = smul.addr %s986, 12
        %s988 = smul.addr %s987, 4
        %s989 = scalar_lea.vmem %s0, %s988
        %p990 = pneg %p47
        %p991 = pneg %p44
        %s992 = sand.u32 %s60, 1
        %s993 = sand.u32 %s60, 1
        %s994 = smul.addr %s993, 1536
        %s995 = scalar_lea.vmem [#allocation2], %s994
        %p996 = pneg %p73
        %p997 = pneg %p70
        %s998 = smul.u32 2, %s19
        %p999 = scmp.lt.s32.totalorder %s998, 3
        %s1000 = scalar_select %p999, %s998, 3
        %s1001 = scalar_lea.vmem %s2, %s1000
        %p1002 = pneg %p99
        %p1003 = pneg %p96
        %p1004 = pneg %p127
        %p1005 = pneg %p124
        %s1006 = sand.u32 %s114, 1
        %s1007 = sand.u32 %s114, 1
        %s1008 = smul.addr %s1007, 96
        %s1009 = scalar_lea.vmem [#allocation3], %s1008
        %s1010 = smul.u32 6, %s18
        %p1011 = scmp.lt.s32.totalorder %s1010, 5
        %s1012 = scalar_select %p1011, %s1010, 5
        %s1013 = smul.addr %s1012, 12
        %s1014 = smul.addr %s1013, 4
        %s1015 = scalar_lea.vmem %s0, %s1014
        %s1016 = smul.u32 6, %s18
        %s1017 = smul.u32 2, %s19
        %s1018 = smul.u32 2, %s19
        %p1019 = scmp.lt.s32.totalorder %s1018, 3
        %s1020 = scalar_select %p1019, %s1018, 3
        %s1021 = scalar_lea.vmem %s2, %s1020
        %s1022 = smul.u32 2, %s19
        %s1023 = smul.u32 6, %s18
        %s1024 = smul.u32 2, %s19
        %v1025 = vld [vmem:[%s1015] sm:$0xff]
        %v1026 = vld [vmem:[%s1015 + $0x8] sm:$0xff]
        %v1027 = vld [vmem:[%s1015 + $0x10] sm:$0xff]
        %v1028 = vld [vmem:[%s1015 + $0x18] sm:$0xff]
        %v1029 = vld [vmem:[%s1015 + $0x20] sm:$0xff]
        %v1030 = vld [vmem:[%s1015 + $0x28] sm:$0xff]
        %v1031 = vld [vmem:[%s1015 + $0x30] sm:$0xff]
        %v1032 = vld [vmem:[%s1015 + $0x38] sm:$0xff]
        %v1033 = vld [vmem:[%s1015 + $0x40] sm:$0xff]
        %v1034 = vld [vmem:[%s1015 + $0x48] sm:$0xff]
        %v1035 = vld [vmem:[%s1015 + $0x50] sm:$0xff]
        %v1036 = vld [vmem:[%s1015 + $0x58] sm:$0xff]
        %v1037 = vld [vmem:[%s1015 + $0x60] sm:$0xff]
        %v1038 = vld [vmem:[%s1015 + $0x68] sm:$0xff]
        %v1039 = vld [vmem:[%s1015 + $0x70] sm:$0xff]
        %v1040 = vld [vmem:[%s1015 + $0x78] sm:$0xff]
        %v1041 = vld [vmem:[%s1015 + $0x80] sm:$0xff]
        %v1042 = vld [vmem:[%s1015 + $0x88] sm:$0xff]
        %v1043 = vld [vmem:[%s1015 + $0x90] sm:$0xff]
        %v1044 = vld [vmem:[%s1015 + $0x98] sm:$0xff]
        %v1045 = vld [vmem:[%s1015 + $0xa0] sm:$0xff]
        %v1046 = vld [vmem:[%s1015 + $0xa8] sm:$0xff]
        %v1047 = vld [vmem:[%s1015 + $0xb0] sm:$0xff]
        %v1048 = vld [vmem:[%s1015 + $0xb8] sm:$0xff]
        %v1049 = vld [vmem:[%s1015 + $0xc0] sm:$0xff]
        %v1050 = vld [vmem:[%s1015 + $0xc8] sm:$0xff]
        %v1051 = vld [vmem:[%s1015 + $0xd0] sm:$0xff]
        %v1052 = vld [vmem:[%s1015 + $0xd8] sm:$0xff]
        %v1053 = vld [vmem:[%s1015 + $0xe0] sm:$0xff]
        %v1054 = vld [vmem:[%s1015 + $0xe8] sm:$0xff]
        %v1055 = vld [vmem:[%s1015 + $0xf0] sm:$0xff]
        %v1056 = vld [vmem:[%s1015 + $0xf8] sm:$0xff]
        %v1057 = vld [vmem:[%s1015 + $0x100] sm:$0xff]
        %v1058 = vld [vmem:[%s1015 + $0x108] sm:$0xff]
        %v1059 = vld [vmem:[%s1015 + $0x110] sm:$0xff]
        %v1060 = vld [vmem:[%s1015 + $0x118] sm:$0xff]
        %v1061 = vld [vmem:[%s980] sm:$0xff]
        %v1062 = vld [vmem:[%s980 + $0x8] sm:$0xff]
        %v1063 = vld [vmem:[%s980 + $0x10] sm:$0xff]
        %v1064 = vld [vmem:[%s980 + $0x18] sm:$0xff]
        %v1065 = vld [vmem:[%s980 + $0x20] sm:$0xff]
        %v1066 = vld [vmem:[%s980 + $0x28] sm:$0xff]
        %v1067 = vld [vmem:[%s980 + $0x30] sm:$0xff]
        %v1068 = vld [vmem:[%s980 + $0x38] sm:$0xff]
        %v1069 = vld [vmem:[%s980 + $0x40] sm:$0xff]
        %v1070 = vld [vmem:[%s980 + $0x48] sm:$0xff]
        %v1071 = vld [vmem:[%s980 + $0x50] sm:$0xff]
        %v1072 = vld [vmem:[%s980 + $0x58] sm:$0xff]
        %v1073 = vld [vmem:[%s980 + $0x60] sm:$0xff]
        %v1074 = vld [vmem:[%s980 + $0x68] sm:$0xff]
        %v1075 = vld [vmem:[%s980 + $0x70] sm:$0xff]
        %v1076 = vld [vmem:[%s980 + $0x78] sm:$0xff]
        %v1077 = vld [vmem:[%s980 + $0x80] sm:$0xff]
        %v1078 = vld [vmem:[%s980 + $0x88] sm:$0xff]
        %v1079 = vld [vmem:[%s980 + $0x90] sm:$0xff]
        %v1080 = vld [vmem:[%s980 + $0x98] sm:$0xff]
        %v1081 = vld [vmem:[%s980 + $0xa0] sm:$0xff]
        %v1082 = vld [vmem:[%s980 + $0xa8] sm:$0xff]
        %v1083 = vld [vmem:[%s980 + $0xb0] sm:$0xff]
        %v1084 = vld [vmem:[%s980 + $0xb8] sm:$0xff]
        %v1085 = vld [vmem:[%s980 + $0xc0] sm:$0xff]
        %v1086 = vld [vmem:[%s980 + $0xc8] sm:$0xff]
        %v1087 = vld [vmem:[%s980 + $0xd0] sm:$0xff]
        %v1088 = vld [vmem:[%s980 + $0xd8] sm:$0xff]
        %v1089 = vld [vmem:[%s980 + $0xe0] sm:$0xff]
        %v1090 = vld [vmem:[%s980 + $0xe8] sm:$0xff]
        %v1091 = vld [vmem:[%s980 + $0xf0] sm:$0xff]
        %v1092 = vld [vmem:[%s980 + $0xf8] sm:$0xff]
        %v1093 = vld [vmem:[%s980 + $0x100] sm:$0xff]
        %v1094 = vld [vmem:[%s980 + $0x108] sm:$0xff]
        %v1095 = vld [vmem:[%s980 + $0x110] sm:$0xff]
        %v1096 = vld [vmem:[%s980 + $0x118] sm:$0xff]
        %v1097 = vld [vmem:[%s980 + $0x120] sm:$0xff]
        %v1098 = vld [vmem:[%s980 + $0x128] sm:$0xff]
        %v1099 = vld [vmem:[%s980 + $0x130] sm:$0xff]
        %v1100 = vld [vmem:[%s980 + $0x138] sm:$0xff]
        %v1101 = vld [vmem:[%s980 + $0x140] sm:$0xff]
        %v1102 = vld [vmem:[%s980 + $0x148] sm:$0xff]
        %v1103 = vld [vmem:[%s980 + $0x150] sm:$0xff]
        %v1104 = vld [vmem:[%s980 + $0x158] sm:$0xff]
        %v1105 = vld [vmem:[%s980 + $0x160] sm:$0xff]
        %v1106 = vld [vmem:[%s980 + $0x168] sm:$0xff]
        %v1107 = vld [vmem:[%s980 + $0x170] sm:$0xff]
        %v1108 = vld [vmem:[%s980 + $0x178] sm:$0xff]
        %v1109 = vld [vmem:[%s980 + $0x180] sm:$0xff]
        %v1110 = vld [vmem:[%s980 + $0x188] sm:$0xff]
        %v1111 = vld [vmem:[%s980 + $0x190] sm:$0xff]
        %v1112 = vld [vmem:[%s980 + $0x198] sm:$0xff]
        %v1113 = vld [vmem:[%s980 + $0x1a0] sm:$0xff]
        %v1114 = vld [vmem:[%s980 + $0x1a8] sm:$0xff]
        %v1115 = vld [vmem:[%s980 + $0x1b0] sm:$0xff]
        %v1116 = vld [vmem:[%s980 + $0x1b8] sm:$0xff]
        %v1117 = vld [vmem:[%s980 + $0x1c0] sm:$0xff]
        %v1118 = vld [vmem:[%s980 + $0x1c8] sm:$0xff]
        %v1119 = vld [vmem:[%s980 + $0x1d0] sm:$0xff]
        %v1120 = vld [vmem:[%s980 + $0x1d8] sm:$0xff]
        %v1121 = vld [vmem:[%s980 + $0x1e0] sm:$0xff]
        %v1122 = vld [vmem:[%s980 + $0x1e8] sm:$0xff]
        %v1123 = vld [vmem:[%s980 + $0x1f0] sm:$0xff]
        %v1124 = vld [vmem:[%s980 + $0x1f8] sm:$0xff]
        %v1125 = vld [vmem:[%s980 + $0x200] sm:$0xff]
        %v1126 = vld [vmem:[%s980 + $0x208] sm:$0xff]
        %v1127 = vld [vmem:[%s980 + $0x210] sm:$0xff]
        %v1128 = vld [vmem:[%s980 + $0x218] sm:$0xff]
        %v1129 = vld [vmem:[%s980 + $0x220] sm:$0xff]
        %v1130 = vld [vmem:[%s980 + $0x228] sm:$0xff]
        %v1131 = vld [vmem:[%s980 + $0x230] sm:$0xff]
        %v1132 = vld [vmem:[%s980 + $0x238] sm:$0xff]
        %v1133 = vld [vmem:[%s980 + $0x240] sm:$0xff]
        %v1134 = vld [vmem:[%s980 + $0x248] sm:$0xff]
        %v1135 = vld [vmem:[%s980 + $0x250] sm:$0xff]
        %v1136 = vld [vmem:[%s980 + $0x258] sm:$0xff]
        %v1137 = vld [vmem:[%s980 + $0x260] sm:$0xff]
        %v1138 = vld [vmem:[%s980 + $0x268] sm:$0xff]
        %v1139 = vld [vmem:[%s980 + $0x270] sm:$0xff]
        %v1140 = vld [vmem:[%s980 + $0x278] sm:$0xff]
        %v1141 = vld [vmem:[%s980 + $0x280] sm:$0xff]
        %v1142 = vld [vmem:[%s980 + $0x288] sm:$0xff]
        %v1143 = vld [vmem:[%s980 + $0x290] sm:$0xff]
        %v1144 = vld [vmem:[%s980 + $0x298] sm:$0xff]
        %v1145 = vld [vmem:[%s980 + $0x2a0] sm:$0xff]
        %v1146 = vld [vmem:[%s980 + $0x2a8] sm:$0xff]
        %v1147 = vld [vmem:[%s980 + $0x2b0] sm:$0xff]
        %v1148 = vld [vmem:[%s980 + $0x2b8] sm:$0xff]
        %v1149 = vld [vmem:[%s980 + $0x2c0] sm:$0xff]
        %v1150 = vld [vmem:[%s980 + $0x2c8] sm:$0xff]
        %v1151 = vld [vmem:[%s980 + $0x2d0] sm:$0xff]
        %v1152 = vld [vmem:[%s980 + $0x2d8] sm:$0xff]
        %v1153 = vld [vmem:[%s980 + $0x2e0] sm:$0xff]
        %v1154 = vld [vmem:[%s980 + $0x2e8] sm:$0xff]
        %v1155 = vld [vmem:[%s980 + $0x2f0] sm:$0xff]
        %v1156 = vld [vmem:[%s980 + $0x2f8] sm:$0xff]
        %v1157 = vld [vmem:[%s980 + $0x300] sm:$0xff]
        %v1158 = vld [vmem:[%s980 + $0x308] sm:$0xff]
        %v1159 = vld [vmem:[%s980 + $0x310] sm:$0xff]
        %v1160 = vld [vmem:[%s980 + $0x318] sm:$0xff]
        %v1161 = vld [vmem:[%s980 + $0x320] sm:$0xff]
        %v1162 = vld [vmem:[%s980 + $0x328] sm:$0xff]
        %v1163 = vld [vmem:[%s980 + $0x330] sm:$0xff]
        %v1164 = vld [vmem:[%s980 + $0x338] sm:$0xff]
        %v1165 = vld [vmem:[%s980 + $0x340] sm:$0xff]
        %v1166 = vld [vmem:[%s980 + $0x348] sm:$0xff]
        %v1167 = vld [vmem:[%s980 + $0x350] sm:$0xff]
        %v1168 = vld [vmem:[%s980 + $0x358] sm:$0xff]
        %v1169 = vld [vmem:[%s980 + $0x360] sm:$0xff]
        %v1170 = vld [vmem:[%s980 + $0x368] sm:$0xff]
        %v1171 = vld [vmem:[%s980 + $0x370] sm:$0xff]
        %v1172 = vld [vmem:[%s980 + $0x378] sm:$0xff]
        %v1173 = vld [vmem:[%s980 + $0x380] sm:$0xff]
        %v1174 = vld [vmem:[%s980 + $0x388] sm:$0xff]
        %v1175 = vld [vmem:[%s980 + $0x390] sm:$0xff]
        %v1176 = vld [vmem:[%s980 + $0x398] sm:$0xff]
        %v1177 = vld [vmem:[%s980 + $0x3a0] sm:$0xff]
        %v1178 = vld [vmem:[%s980 + $0x3a8] sm:$0xff]
        %v1179 = vld [vmem:[%s980 + $0x3b0] sm:$0xff]
        %v1180 = vld [vmem:[%s980 + $0x3b8] sm:$0xff]
        %v1181 = vld [vmem:[%s980 + $0x3c0] sm:$0xff]
        %v1182 = vld [vmem:[%s980 + $0x3c8] sm:$0xff]
        %v1183 = vld [vmem:[%s980 + $0x3d0] sm:$0xff]
        %v1184 = vld [vmem:[%s980 + $0x3d8] sm:$0xff]
        %v1185 = vld [vmem:[%s980 + $0x3e0] sm:$0xff]
        %v1186 = vld [vmem:[%s980 + $0x3e8] sm:$0xff]
        %v1187 = vld [vmem:[%s980 + $0x3f0] sm:$0xff]
        %v1188 = vld [vmem:[%s980 + $0x3f8] sm:$0xff]
        %v1189 = vld [vmem:[%s980 + $0x400] sm:$0xff]
        %v1190 = vld [vmem:[%s980 + $0x408] sm:$0xff]
        %v1191 = vld [vmem:[%s980 + $0x410] sm:$0xff]
        %v1192 = vld [vmem:[%s980 + $0x418] sm:$0xff]
        %v1193 = vld [vmem:[%s980 + $0x420] sm:$0xff]
        %v1194 = vld [vmem:[%s980 + $0x428] sm:$0xff]
        %v1195 = vld [vmem:[%s980 + $0x430] sm:$0xff]
        %v1196 = vld [vmem:[%s980 + $0x438] sm:$0xff]
        %v1197 = vld [vmem:[%s980 + $0x440] sm:$0xff]
        %v1198 = vld [vmem:[%s980 + $0x448] sm:$0xff]
        %v1199 = vld [vmem:[%s980 + $0x450] sm:$0xff]
        %v1200 = vld [vmem:[%s980 + $0x458] sm:$0xff]
        %v1201 = vld [vmem:[%s980 + $0x460] sm:$0xff]
        %v1202 = vld [vmem:[%s980 + $0x468] sm:$0xff]
        %v1203 = vld [vmem:[%s980 + $0x470] sm:$0xff]
        %v1204 = vld [vmem:[%s980 + $0x478] sm:$0xff]
        %v1205 = vld [vmem:[%s980 + $0x480] sm:$0xff]
        %v1206 = vld [vmem:[%s980 + $0x488] sm:$0xff]
        %v1207 = vld [vmem:[%s980 + $0x490] sm:$0xff]
        %v1208 = vld [vmem:[%s980 + $0x498] sm:$0xff]
        %v1209 = vld [vmem:[%s980 + $0x4a0] sm:$0xff]
        %v1210 = vld [vmem:[%s980 + $0x4a8] sm:$0xff]
        %v1211 = vld [vmem:[%s980 + $0x4b0] sm:$0xff]
        %v1212 = vld [vmem:[%s980 + $0x4b8] sm:$0xff]
        %v1213 = vld [vmem:[%s980 + $0x4c0] sm:$0xff]
        %v1214 = vld [vmem:[%s980 + $0x4c8] sm:$0xff]
        %v1215 = vld [vmem:[%s980 + $0x4d0] sm:$0xff]
        %v1216 = vld [vmem:[%s980 + $0x4d8] sm:$0xff]
        %v1217 = vld [vmem:[%s980 + $0x4e0] sm:$0xff]
        %v1218 = vld [vmem:[%s980 + $0x4e8] sm:$0xff]
        %v1219 = vld [vmem:[%s980 + $0x4f0] sm:$0xff]
        %v1220 = vld [vmem:[%s980 + $0x4f8] sm:$0xff]
        %v1221 = vld [vmem:[%s980 + $0x500] sm:$0xff]
        %v1222 = vld [vmem:[%s980 + $0x508] sm:$0xff]
        %v1223 = vld [vmem:[%s980 + $0x510] sm:$0xff]
        %v1224 = vld [vmem:[%s980 + $0x518] sm:$0xff]
        %v1225 = vld [vmem:[%s980 + $0x520] sm:$0xff]
        %v1226 = vld [vmem:[%s980 + $0x528] sm:$0xff]
        %v1227 = vld [vmem:[%s980 + $0x530] sm:$0xff]
        %v1228 = vld [vmem:[%s980 + $0x538] sm:$0xff]
        %v1229 = vld [vmem:[%s980 + $0x540] sm:$0xff]
        %v1230 = vld [vmem:[%s980 + $0x548] sm:$0xff]
        %v1231 = vld [vmem:[%s980 + $0x550] sm:$0xff]
        %v1232 = vld [vmem:[%s980 + $0x558] sm:$0xff]
        %v1233 = vld [vmem:[%s980 + $0x560] sm:$0xff]
        %v1234 = vld [vmem:[%s980 + $0x568] sm:$0xff]
        %v1235 = vld [vmem:[%s980 + $0x570] sm:$0xff]
        %v1236 = vld [vmem:[%s980 + $0x578] sm:$0xff]
        %v1237 = vld [vmem:[%s980 + $0x580] sm:$0xff]
        %v1238 = vld [vmem:[%s980 + $0x588] sm:$0xff]
        %v1239 = vld [vmem:[%s980 + $0x590] sm:$0xff]
        %v1240 = vld [vmem:[%s980 + $0x598] sm:$0xff]
        %v1241 = vld [vmem:[%s980 + $0x5a0] sm:$0xff]
        %v1242 = vld [vmem:[%s980 + $0x5a8] sm:$0xff]
        %v1243 = vld [vmem:[%s980 + $0x5b0] sm:$0xff]
        %v1244 = vld [vmem:[%s980 + $0x5b8] sm:$0xff]
        %v1245 = vld [vmem:[%s980 + $0x5c0] sm:$0xff]
        %v1246 = vld [vmem:[%s980 + $0x5c8] sm:$0xff]
        %v1247 = vld [vmem:[%s980 + $0x5d0] sm:$0xff]
        %v1248 = vld [vmem:[%s980 + $0x5d8] sm:$0xff]
        %v1249 = vld [vmem:[%s980 + $0x5e0] sm:$0xff]
        %v1250 = vld [vmem:[%s980 + $0x5e8] sm:$0xff]
        %v1251 = vld [vmem:[%s980 + $0x5f0] sm:$0xff]
        %v1252 = vld [vmem:[%s980 + $0x5f8] sm:$0xff]
        %v1253 = vld [vmem:[%s1021] sm:$0x3]
        %v1255 = vlaneseq
        %v1256 = vshrl.u32 %v1255, 7
        %v1257 = vsub.s32 0, %v1256
        %v1258 = vrot.slane %v1253, %v1257
        %v1259 = vlaneseq
        %v1260 = vshrl.u32 %v1259, 7
        %v1261 = vsub.s32 1, %v1260
        %v1262 = vrot.slane %v1253, %v1261
        %v1301 = vunpack.c.l.b16 %v1025
        %v1302 = vunpack.c.h.b16 %v1025
        %v1303 = vunpack.c.l.b16 %v1026
        %v1304 = vunpack.c.h.b16 %v1026
        %v1305 = vunpack.c.l.b16 %v1027
        %v1306 = vunpack.c.h.b16 %v1027
        %v1307 = vunpack.c.l.b16 %v1028
        %v1308 = vunpack.c.h.b16 %v1028
        %v1309 = vunpack.c.l.b16 %v1029
        %v1310 = vunpack.c.h.b16 %v1029
        %v1311 = vunpack.c.l.b16 %v1030
        %v1312 = vunpack.c.h.b16 %v1030
        %v1313 = vunpack.c.l.b16 %v1031
        %v1314 = vunpack.c.h.b16 %v1031
        %v1315 = vunpack.c.l.b16 %v1032
        %v1316 = vunpack.c.h.b16 %v1032
        %v1317 = vunpack.c.l.b16 %v1033
        %v1318 = vunpack.c.h.b16 %v1033
        %v1319 = vunpack.c.l.b16 %v1034
        %v1320 = vunpack.c.h.b16 %v1034
        %v1321 = vunpack.c.l.b16 %v1035
        %v1322 = vunpack.c.h.b16 %v1035
        %v1323 = vunpack.c.l.b16 %v1036
        %v1324 = vunpack.c.h.b16 %v1036
        %v1325 = vunpack.c.l.b16 %v1037
        %v1326 = vunpack.c.h.b16 %v1037
        %v1327 = vunpack.c.l.b16 %v1038
        %v1328 = vunpack.c.h.b16 %v1038
        %v1329 = vunpack.c.l.b16 %v1039
        %v1330 = vunpack.c.h.b16 %v1039
        %v1331 = vunpack.c.l.b16 %v1040
        %v1332 = vunpack.c.h.b16 %v1040
        %v1333 = vunpack.c.l.b16 %v1041
        %v1334 = vunpack.c.h.b16 %v1041
        %v1335 = vunpack.c.l.b16 %v1042
        %v1336 = vunpack.c.h.b16 %v1042
        %v1337 = vunpack.c.l.b16 %v1043
        %v1338 = vunpack.c.h.b16 %v1043
        %v1339 = vunpack.c.l.b16 %v1044
        %v1340 = vunpack.c.h.b16 %v1044
        %v1341 = vunpack.c.l.b16 %v1045
        %v1342 = vunpack.c.h.b16 %v1045
        %v1343 = vunpack.c.l.b16 %v1046
        %v1344 = vunpack.c.h.b16 %v1046
        %v1345 = vunpack.c.l.b16 %v1047
        %v1346 = vunpack.c.h.b16 %v1047
        %v1347 = vunpack.c.l.b16 %v1048
        %v1348 = vunpack.c.h.b16 %v1048
        %v1349 = vunpack.c.l.b16 %v1049
        %v1350 = vunpack.c.h.b16 %v1049
        %v1351 = vunpack.c.l.b16 %v1050
        %v1352 = vunpack.c.h.b16 %v1050
        %v1353 = vunpack.c.l.b16 %v1051
        %v1354 = vunpack.c.h.b16 %v1051
        %v1355 = vunpack.c.l.b16 %v1052
        %v1356 = vunpack.c.h.b16 %v1052
        %v1357 = vunpack.c.l.b16 %v1053
        %v1358 = vunpack.c.h.b16 %v1053
        %v1359 = vunpack.c.l.b16 %v1054
        %v1360 = vunpack.c.h.b16 %v1054
        %v1361 = vunpack.c.l.b16 %v1055
        %v1362 = vunpack.c.h.b16 %v1055
        %v1363 = vunpack.c.l.b16 %v1056
        %v1364 = vunpack.c.h.b16 %v1056
        %v1365 = vunpack.c.l.b16 %v1057
        %v1366 = vunpack.c.h.b16 %v1057
        %v1367 = vunpack.c.l.b16 %v1058
        %v1368 = vunpack.c.h.b16 %v1058
        %v1369 = vunpack.c.l.b16 %v1059
        %v1370 = vunpack.c.h.b16 %v1059
        %v1371 = vunpack.c.l.b16 %v1060
        %v1372 = vunpack.c.h.b16 %v1060
        %v1373 = vpack.c.b16 %v1313, %v1301
        %v1374 = vpack.c.b16 %v1314, %v1302
        %v1375 = vpack.c.b16 %v1315, %v1303
        %v1376 = vpack.c.b16 %v1316, %v1304
        %v1377 = vpack.c.b16 %v1317, %v1305
        %v1378 = vpack.c.b16 %v1318, %v1306
        %v1379 = vpack.c.b16 %v1319, %v1307
        %v1380 = vpack.c.b16 %v1320, %v1308
        %v1381 = vpack.c.b16 %v1321, %v1309
        %v1382 = vpack.c.b16 %v1322, %v1310
        %v1383 = vpack.c.b16 %v1323, %v1311
        %v1384 = vpack.c.b16 %v1324, %v1312
        %v1385 = vpack.c.b16 %v1337, %v1325
        %v1386 = vpack.c.b16 %v1338, %v1326
        %v1387 = vpack.c.b16 %v1339, %v1327
        %v1388 = vpack.c.b16 %v1340, %v1328
        %v1389 = vpack.c.b16 %v1341, %v1329
        %v1390 = vpack.c.b16 %v1342, %v1330
        %v1391 = vpack.c.b16 %v1343, %v1331
        %v1392 = vpack.c.b16 %v1344, %v1332
        %v1393 = vpack.c.b16 %v1345, %v1333
        %v1394 = vpack.c.b16 %v1346, %v1334
        %v1395 = vpack.c.b16 %v1347, %v1335
        %v1396 = vpack.c.b16 %v1348, %v1336
        %v1397 = vpack.c.b16 %v1361, %v1349
        %v1398 = vpack.c.b16 %v1362, %v1350
        %v1399 = vpack.c.b16 %v1363, %v1351
        %v1400 = vpack.c.b16 %v1364, %v1352
        %v1401 = vpack.c.b16 %v1365, %v1353
        %v1402 = vpack.c.b16 %v1366, %v1354
        %v1403 = vpack.c.b16 %v1367, %v1355
        %v1404 = vpack.c.b16 %v1368, %v1356
        %v1405 = vpack.c.b16 %v1369, %v1357
        %v1406 = vpack.c.b16 %v1370, %v1358
        %v1407 = vpack.c.b16 %v1371, %v1359
        %v1408 = vpack.c.b16 %v1372, %v1360
        %v1637 = vunpack.c.l.b16 %v1061
        %v1638 = vunpack.c.h.b16 %v1061
        %v1639 = vunpack.c.l.b16 %v1062
        %v1640 = vunpack.c.h.b16 %v1062
        %v1641 = vunpack.c.l.b16 %v1063
        %v1642 = vunpack.c.h.b16 %v1063
        %v1643 = vunpack.c.l.b16 %v1064
        %v1644 = vunpack.c.h.b16 %v1064
        %v1645 = vunpack.c.l.b16 %v1065
        %v1646 = vunpack.c.h.b16 %v1065
        %v1647 = vunpack.c.l.b16 %v1066
        %v1648 = vunpack.c.h.b16 %v1066
        %v1649 = vunpack.c.l.b16 %v1067
        %v1650 = vunpack.c.h.b16 %v1067
        %v1651 = vunpack.c.l.b16 %v1068
        %v1652 = vunpack.c.h.b16 %v1068
        %v1653 = vunpack.c.l.b16 %v1069
        %v1654 = vunpack.c.h.b16 %v1069
        %v1655 = vunpack.c.l.b16 %v1070
        %v1656 = vunpack.c.h.b16 %v1070
        %v1657 = vunpack.c.l.b16 %v1071
        %v1658 = vunpack.c.h.b16 %v1071
        %v1659 = vunpack.c.l.b16 %v1072
        %v1660 = vunpack.c.h.b16 %v1072
        %v1661 = vunpack.c.l.b16 %v1073
        %v1662 = vunpack.c.h.b16 %v1073
        %v1663 = vunpack.c.l.b16 %v1074
        %v1664 = vunpack.c.h.b16 %v1074
        %v1665 = vunpack.c.l.b16 %v1075
        %v1666 = vunpack.c.h.b16 %v1075
        %v1667 = vunpack.c.l.b16 %v1076
        %v1668 = vunpack.c.h.b16 %v1076
        %v1669 = vunpack.c.l.b16 %v1077
        %v1670 = vunpack.c.h.b16 %v1077
        %v1671 = vunpack.c.l.b16 %v1078
        %v1672 = vunpack.c.h.b16 %v1078
        %v1673 = vunpack.c.l.b16 %v1079
        %v1674 = vunpack.c.h.b16 %v1079
        %v1675 = vunpack.c.l.b16 %v1080
        %v1676 = vunpack.c.h.b16 %v1080
        %v1677 = vunpack.c.l.b16 %v1081
        %v1678 = vunpack.c.h.b16 %v1081
        %v1679 = vunpack.c.l.b16 %v1082
        %v1680 = vunpack.c.h.b16 %v1082
        %v1681 = vunpack.c.l.b16 %v1083
        %v1682 = vunpack.c.h.b16 %v1083
        %v1683 = vunpack.c.l.b16 %v1084
        %v1684 = vunpack.c.h.b16 %v1084
        %v1685 = vunpack.c.l.b16 %v1085
        %v1686 = vunpack.c.h.b16 %v1085
        %v1687 = vunpack.c.l.b16 %v1086
        %v1688 = vunpack.c.h.b16 %v1086
        %v1689 = vunpack.c.l.b16 %v1087
        %v1690 = vunpack.c.h.b16 %v1087
        %v1691 = vunpack.c.l.b16 %v1088
        %v1692 = vunpack.c.h.b16 %v1088
        %v1693 = vunpack.c.l.b16 %v1089
        %v1694 = vunpack.c.h.b16 %v1089
        %v1695 = vunpack.c.l.b16 %v1090
        %v1696 = vunpack.c.h.b16 %v1090
        %v1697 = vunpack.c.l.b16 %v1091
        %v1698 = vunpack.c.h.b16 %v1091
        %v1699 = vunpack.c.l.b16 %v1092
        %v1700 = vunpack.c.h.b16 %v1092
        %v1701 = vunpack.c.l.b16 %v1093
        %v1702 = vunpack.c.h.b16 %v1093
        %v1703 = vunpack.c.l.b16 %v1094
        %v1704 = vunpack.c.h.b16 %v1094
        %v1705 = vunpack.c.l.b16 %v1095
        %v1706 = vunpack.c.h.b16 %v1095
        %v1707 = vunpack.c.l.b16 %v1096
        %v1708 = vunpack.c.h.b16 %v1096
        %v1709 = vunpack.c.l.b16 %v1097
        %v1710 = vunpack.c.h.b16 %v1097
        %v1711 = vunpack.c.l.b16 %v1098
        %v1712 = vunpack.c.h.b16 %v1098
        %v1713 = vunpack.c.l.b16 %v1099
        %v1714 = vunpack.c.h.b16 %v1099
        %v1715 = vunpack.c.l.b16 %v1100
        %v1716 = vunpack.c.h.b16 %v1100
        %v1717 = vunpack.c.l.b16 %v1101
        %v1718 = vunpack.c.h.b16 %v1101
        %v1719 = vunpack.c.l.b16 %v1102
        %v1720 = vunpack.c.h.b16 %v1102
        %v1721 = vunpack.c.l.b16 %v1103
        %v1722 = vunpack.c.h.b16 %v1103
        %v1723 = vunpack.c.l.b16 %v1104
        %v1724 = vunpack.c.h.b16 %v1104
        %v1725 = vunpack.c.l.b16 %v1105
        %v1726 = vunpack.c.h.b16 %v1105
        %v1727 = vunpack.c.l.b16 %v1106
        %v1728 = vunpack.c.h.b16 %v1106
        %v1729 = vunpack.c.l.b16 %v1107
        %v1730 = vunpack.c.h.b16 %v1107
        %v1731 = vunpack.c.l.b16 %v1108
        %v1732 = vunpack.c.h.b16 %v1108
        %v1733 = vunpack.c.l.b16 %v1109
        %v1734 = vunpack.c.h.b16 %v1109
        %v1735 = vunpack.c.l.b16 %v1110
        %v1736 = vunpack.c.h.b16 %v1110
        %v1737 = vunpack.c.l.b16 %v1111
        %v1738 = vunpack.c.h.b16 %v1111
        %v1739 = vunpack.c.l.b16 %v1112
        %v1740 = vunpack.c.h.b16 %v1112
        %v1741 = vunpack.c.l.b16 %v1113
        %v1742 = vunpack.c.h.b16 %v1113
        %v1743 = vunpack.c.l.b16 %v1114
        %v1744 = vunpack.c.h.b16 %v1114
        %v1745 = vunpack.c.l.b16 %v1115
        %v1746 = vunpack.c.h.b16 %v1115
        %v1747 = vunpack.c.l.b16 %v1116
        %v1748 = vunpack.c.h.b16 %v1116
        %v1749 = vunpack.c.l.b16 %v1117
        %v1750 = vunpack.c.h.b16 %v1117
        %v1751 = vunpack.c.l.b16 %v1118
        %v1752 = vunpack.c.h.b16 %v1118
        %v1753 = vunpack.c.l.b16 %v1119
        %v1754 = vunpack.c.h.b16 %v1119
        %v1755 = vunpack.c.l.b16 %v1120
        %v1756 = vunpack.c.h.b16 %v1120
        %v1757 = vunpack.c.l.b16 %v1121
        %v1758 = vunpack.c.h.b16 %v1121
        %v1759 = vunpack.c.l.b16 %v1122
        %v1760 = vunpack.c.h.b16 %v1122
        %v1761 = vunpack.c.l.b16 %v1123
        %v1762 = vunpack.c.h.b16 %v1123
        %v1763 = vunpack.c.l.b16 %v1124
        %v1764 = vunpack.c.h.b16 %v1124
        %v1765 = vunpack.c.l.b16 %v1125
        %v1766 = vunpack.c.h.b16 %v1125
        %v1767 = vunpack.c.l.b16 %v1126
        %v1768 = vunpack.c.h.b16 %v1126
        %v1769 = vunpack.c.l.b16 %v1127
        %v1770 = vunpack.c.h.b16 %v1127
        %v1771 = vunpack.c.l.b16 %v1128
        %v1772 = vunpack.c.h.b16 %v1128
        %v1773 = vunpack.c.l.b16 %v1129
        %v1774 = vunpack.c.h.b16 %v1129
        %v1775 = vunpack.c.l.b16 %v1130
        %v1776 = vunpack.c.h.b16 %v1130
        %v1777 = vunpack.c.l.b16 %v1131
        %v1778 = vunpack.c.h.b16 %v1131
        %v1779 = vunpack.c.l.b16 %v1132
        %v1780 = vunpack.c.h.b16 %v1132
        %v1781 = vunpack.c.l.b16 %v1133
        %v1782 = vunpack.c.h.b16 %v1133
        %v1783 = vunpack.c.l.b16 %v1134
        %v1784 = vunpack.c.h.b16 %v1134
        %v1785 = vunpack.c.l.b16 %v1135
        %v1786 = vunpack.c.h.b16 %v1135
        %v1787 = vunpack.c.l.b16 %v1136
        %v1788 = vunpack.c.h.b16 %v1136
        %v1789 = vunpack.c.l.b16 %v1137
        %v1790 = vunpack.c.h.b16 %v1137
        %v1791 = vunpack.c.l.b16 %v1138
        %v1792 = vunpack.c.h.b16 %v1138
        %v1793 = vunpack.c.l.b16 %v1139
        %v1794 = vunpack.c.h.b16 %v1139
        %v1795 = vunpack.c.l.b16 %v1140
        %v1796 = vunpack.c.h.b16 %v1140
        %v1797 = vunpack.c.l.b16 %v1141
        %v1798 = vunpack.c.h.b16 %v1141
        %v1799 = vunpack.c.l.b16 %v1142
        %v1800 = vunpack.c.h.b16 %v1142
        %v1801 = vunpack.c.l.b16 %v1143
        %v1802 = vunpack.c.h.b16 %v1143
        %v1803 = vunpack.c.l.b16 %v1144
        %v1804 = vunpack.c.h.b16 %v1144
        %v1805 = vunpack.c.l.b16 %v1145
        %v1806 = vunpack.c.h.b16 %v1145
        %v1807 = vunpack.c.l.b16 %v1146
        %v1808 = vunpack.c.h.b16 %v1146
        %v1809 = vunpack.c.l.b16 %v1147
        %v1810 = vunpack.c.h.b16 %v1147
        %v1811 = vunpack.c.l.b16 %v1148
        %v1812 = vunpack.c.h.b16 %v1148
        %v1813 = vunpack.c.l.b16 %v1149
        %v1814 = vunpack.c.h.b16 %v1149
        %v1815 = vunpack.c.l.b16 %v1150
        %v1816 = vunpack.c.h.b16 %v1150
        %v1817 = vunpack.c.l.b16 %v1151
        %v1818 = vunpack.c.h.b16 %v1151
        %v1819 = vunpack.c.l.b16 %v1152
        %v1820 = vunpack.c.h.b16 %v1152
        %v1821 = vunpack.c.l.b16 %v1153
        %v1822 = vunpack.c.h.b16 %v1153
        %v1823 = vunpack.c.l.b16 %v1154
        %v1824 = vunpack.c.h.b16 %v1154
        %v1825 = vunpack.c.l.b16 %v1155
        %v1826 = vunpack.c.h.b16 %v1155
        %v1827 = vunpack.c.l.b16 %v1156
        %v1828 = vunpack.c.h.b16 %v1156
        %v1829 = vunpack.c.l.b16 %v1157
        %v1830 = vunpack.c.h.b16 %v1157
        %v1831 = vunpack.c.l.b16 %v1158
        %v1832 = vunpack.c.h.b16 %v1158
        %v1833 = vunpack.c.l.b16 %v1159
        %v1834 = vunpack.c.h.b16 %v1159
        %v1835 = vunpack.c.l.b16 %v1160
        %v1836 = vunpack.c.h.b16 %v1160
        %v1837 = vunpack.c.l.b16 %v1161
        %v1838 = vunpack.c.h.b16 %v1161
        %v1839 = vunpack.c.l.b16 %v1162
        %v1840 = vunpack.c.h.b16 %v1162
        %v1841 = vunpack.c.l.b16 %v1163
        %v1842 = vunpack.c.h.b16 %v1163
        %v1843 = vunpack.c.l.b16 %v1164
        %v1844 = vunpack.c.h.b16 %v1164
        %v1845 = vunpack.c.l.b16 %v1165
        %v1846 = vunpack.c.h.b16 %v1165
        %v1847 = vunpack.c.l.b16 %v1166
        %v1848 = vunpack.c.h.b16 %v1166
        %v1849 = vunpack.c.l.b16 %v1167
        %v1850 = vunpack.c.h.b16 %v1167
        %v1851 = vunpack.c.l.b16 %v1168
        %v1852 = vunpack.c.h.b16 %v1168
        %v1853 = vunpack.c.l.b16 %v1169
        %v1854 = vunpack.c.h.b16 %v1169
        %v1855 = vunpack.c.l.b16 %v1170
        %v1856 = vunpack.c.h.b16 %v1170
        %v1857 = vunpack.c.l.b16 %v1171
        %v1858 = vunpack.c.h.b16 %v1171
        %v1859 = vunpack.c.l.b16 %v1172
        %v1860 = vunpack.c.h.b16 %v1172
        %v1861 = vunpack.c.l.b16 %v1173
        %v1862 = vunpack.c.h.b16 %v1173
        %v1863 = vunpack.c.l.b16 %v1174
        %v1864 = vunpack.c.h.b16 %v1174
        %v1865 = vunpack.c.l.b16 %v1175
        %v1866 = vunpack.c.h.b16 %v1175
        %v1867 = vunpack.c.l.b16 %v1176
        %v1868 = vunpack.c.h.b16 %v1176
        %v1869 = vunpack.c.l.b16 %v1177
        %v1870 = vunpack.c.h.b16 %v1177
        %v1871 = vunpack.c.l.b16 %v1178
        %v1872 = vunpack.c.h.b16 %v1178
        %v1873 = vunpack.c.l.b16 %v1179
        %v1874 = vunpack.c.h.b16 %v1179
        %v1875 = vunpack.c.l.b16 %v1180
        %v1876 = vunpack.c.h.b16 %v1180
        %v1877 = vunpack.c.l.b16 %v1181
        %v1878 = vunpack.c.h.b16 %v1181
        %v1879 = vunpack.c.l.b16 %v1182
        %v1880 = vunpack.c.h.b16 %v1182
        %v1881 = vunpack.c.l.b16 %v1183
        %v1882 = vunpack.c.h.b16 %v1183
        %v1883 = vunpack.c.l.b16 %v1184
        %v1884 = vunpack.c.h.b16 %v1184
        %v1885 = vunpack.c.l.b16 %v1185
        %v1886 = vunpack.c.h.b16 %v1185
        %v1887 = vunpack.c.l.b16 %v1186
        %v1888 = vunpack.c.h.b16 %v1186
        %v1889 = vunpack.c.l.b16 %v1187
        %v1890 = vunpack.c.h.b16 %v1187
        %v1891 = vunpack.c.l.b16 %v1188
        %v1892 = vunpack.c.h.b16 %v1188
        %v1893 = vunpack.c.l.b16 %v1189
        %v1894 = vunpack.c.h.b16 %v1189
        %v1895 = vunpack.c.l.b16 %v1190
        %v1896 = vunpack.c.h.b16 %v1190
        %v1897 = vunpack.c.l.b16 %v1191
        %v1898 = vunpack.c.h.b16 %v1191
        %v1899 = vunpack.c.l.b16 %v1192
        %v1900 = vunpack.c.h.b16 %v1192
        %v1901 = vunpack.c.l.b16 %v1193
        %v1902 = vunpack.c.h.b16 %v1193
        %v1903 = vunpack.c.l.b16 %v1194
        %v1904 = vunpack.c.h.b16 %v1194
        %v1905 = vunpack.c.l.b16 %v1195
        %v1906 = vunpack.c.h.b16 %v1195
        %v1907 = vunpack.c.l.b16 %v1196
        %v1908 = vunpack.c.h.b16 %v1196
        %v1909 = vunpack.c.l.b16 %v1197
        %v1910 = vunpack.c.h.b16 %v1197
        %v1911 = vunpack.c.l.b16 %v1198
        %v1912 = vunpack.c.h.b16 %v1198
        %v1913 = vunpack.c.l.b16 %v1199
        %v1914 = vunpack.c.h.b16 %v1199
        %v1915 = vunpack.c.l.b16 %v1200
        %v1916 = vunpack.c.h.b16 %v1200
        %v1917 = vunpack.c.l.b16 %v1201
        %v1918 = vunpack.c.h.b16 %v1201
        %v1919 = vunpack.c.l.b16 %v1202
        %v1920 = vunpack.c.h.b16 %v1202
        %v1921 = vunpack.c.l.b16 %v1203
        %v1922 = vunpack.c.h.b16 %v1203
        %v1923 = vunpack.c.l.b16 %v1204
        %v1924 = vunpack.c.h.b16 %v1204
        %v1925 = vunpack.c.l.b16 %v1205
        %v1926 = vunpack.c.h.b16 %v1205
        %v1927 = vunpack.c.l.b16 %v1206
        %v1928 = vunpack.c.h.b16 %v1206
        %v1929 = vunpack.c.l.b16 %v1207
        %v1930 = vunpack.c.h.b16 %v1207
        %v1931 = vunpack.c.l.b16 %v1208
        %v1932 = vunpack.c.h.b16 %v1208
        %v1933 = vunpack.c.l.b16 %v1209
        %v1934 = vunpack.c.h.b16 %v1209
        %v1935 = vunpack.c.l.b16 %v1210
        %v1936 = vunpack.c.h.b16 %v1210
        %v1937 = vunpack.c.l.b16 %v1211
        %v1938 = vunpack.c.h.b16 %v1211
        %v1939 = vunpack.c.l.b16 %v1212
        %v1940 = vunpack.c.h.b16 %v1212
        %v1941 = vunpack.c.l.b16 %v1213
        %v1942 = vunpack.c.h.b16 %v1213
        %v1943 = vunpack.c.l.b16 %v1214
        %v1944 = vunpack.c.h.b16 %v1214
        %v1945 = vunpack.c.l.b16 %v1215
        %v1946 = vunpack.c.h.b16 %v1215
        %v1947 = vunpack.c.l.b16 %v1216
        %v1948 = vunpack.c.h.b16 %v1216
        %v1949 = vunpack.c.l.b16 %v1217
        %v1950 = vunpack.c.h.b16 %v1217
        %v1951 = vunpack.c.l.b16 %v1218
        %v1952 = vunpack.c.h.b16 %v1218
        %v1953 = vunpack.c.l.b16 %v1219
        %v1954 = vunpack.c.h.b16 %v1219
        %v1955 = vunpack.c.l.b16 %v1220
        %v1956 = vunpack.c.h.b16 %v1220
        %v1957 = vunpack.c.l.b16 %v1221
        %v1958 = vunpack.c.h.b16 %v1221
        %v1959 = vunpack.c.l.b16 %v1222
        %v1960 = vunpack.c.h.b16 %v1222
        %v1961 = vunpack.c.l.b16 %v1223
        %v1962 = vunpack.c.h.b16 %v1223
        %v1963 = vunpack.c.l.b16 %v1224
        %v1964 = vunpack.c.h.b16 %v1224
        %v1965 = vunpack.c.l.b16 %v1225
        %v1966 = vunpack.c.h.b16 %v1225
        %v1967 = vunpack.c.l.b16 %v1226
        %v1968 = vunpack.c.h.b16 %v1226
        %v1969 = vunpack.c.l.b16 %v1227
        %v1970 = vunpack.c.h.b16 %v1227
        %v1971 = vunpack.c.l.b16 %v1228
        %v1972 = vunpack.c.h.b16 %v1228
        %v1973 = vunpack.c.l.b16 %v1229
        %v1974 = vunpack.c.h.b16 %v1229
        %v1975 = vunpack.c.l.b16 %v1230
        %v1976 = vunpack.c.h.b16 %v1230
        %v1977 = vunpack.c.l.b16 %v1231
        %v1978 = vunpack.c.h.b16 %v1231
        %v1979 = vunpack.c.l.b16 %v1232
        %v1980 = vunpack.c.h.b16 %v1232
        %v1981 = vunpack.c.l.b16 %v1233
        %v1982 = vunpack.c.h.b16 %v1233
        %v1983 = vunpack.c.l.b16 %v1234
        %v1984 = vunpack.c.h.b16 %v1234
        %v1985 = vunpack.c.l.b16 %v1235
        %v1986 = vunpack.c.h.b16 %v1235
        %v1987 = vunpack.c.l.b16 %v1236
        %v1988 = vunpack.c.h.b16 %v1236
        %v1989 = vunpack.c.l.b16 %v1237
        %v1990 = vunpack.c.h.b16 %v1237
        %v1991 = vunpack.c.l.b16 %v1238
        %v1992 = vunpack.c.h.b16 %v1238
        %v1993 = vunpack.c.l.b16 %v1239
        %v1994 = vunpack.c.h.b16 %v1239
        %v1995 = vunpack.c.l.b16 %v1240
        %v1996 = vunpack.c.h.b16 %v1240
        %v1997 = vunpack.c.l.b16 %v1241
        %v1998 = vunpack.c.h.b16 %v1241
        %v1999 = vunpack.c.l.b16 %v1242
        %v2000 = vunpack.c.h.b16 %v1242
        %v2001 = vunpack.c.l.b16 %v1243
        %v2002 = vunpack.c.h.b16 %v1243
        %v2003 = vunpack.c.l.b16 %v1244
        %v2004 = vunpack.c.h.b16 %v1244
        %v2005 = vunpack.c.l.b16 %v1245
        %v2006 = vunpack.c.h.b16 %v1245
        %v2007 = vunpack.c.l.b16 %v1246
        %v2008 = vunpack.c.h.b16 %v1246
        %v2009 = vunpack.c.l.b16 %v1247
        %v2010 = vunpack.c.h.b16 %v1247
        %v2011 = vunpack.c.l.b16 %v1248
        %v2012 = vunpack.c.h.b16 %v1248
        %v2013 = vunpack.c.l.b16 %v1249
        %v2014 = vunpack.c.h.b16 %v1249
        %v2015 = vunpack.c.l.b16 %v1250
        %v2016 = vunpack.c.h.b16 %v1250
        %v2017 = vunpack.c.l.b16 %v1251
        %v2018 = vunpack.c.h.b16 %v1251
        %v2019 = vunpack.c.l.b16 %v1252
        %v2020 = vunpack.c.h.b16 %v1252
        %v2021 = vpack.c.b16 %v1639, %v1637
        %v2022 = vpack.c.b16 %v1640, %v1638
        %v2023 = vpack.c.b16 %v1643, %v1641
        %v2024 = vpack.c.b16 %v1644, %v1642
        %v2025 = vpack.c.b16 %v1647, %v1645
        %v2026 = vpack.c.b16 %v1648, %v1646
        %v2027 = vpack.c.b16 %v1651, %v1649
        %v2028 = vpack.c.b16 %v1652, %v1650
        %v2029 = vpack.c.b16 %v1655, %v1653
        %v2030 = vpack.c.b16 %v1656, %v1654
        %v2031 = vpack.c.b16 %v1659, %v1657
        %v2032 = vpack.c.b16 %v1660, %v1658
        %v2033 = vpack.c.b16 %v1663, %v1661
        %v2034 = vpack.c.b16 %v1664, %v1662
        %v2035 = vpack.c.b16 %v1667, %v1665
        %v2036 = vpack.c.b16 %v1668, %v1666
        %v2037 = vpack.c.b16 %v1671, %v1669
        %v2038 = vpack.c.b16 %v1672, %v1670
        %v2039 = vpack.c.b16 %v1675, %v1673
        %v2040 = vpack.c.b16 %v1676, %v1674
        %v2041 = vpack.c.b16 %v1679, %v1677
        %v2042 = vpack.c.b16 %v1680, %v1678
        %v2043 = vpack.c.b16 %v1683, %v1681
        %v2044 = vpack.c.b16 %v1684, %v1682
        %v2045 = vpack.c.b16 %v1687, %v1685
        %v2046 = vpack.c.b16 %v1688, %v1686
        %v2047 = vpack.c.b16 %v1691, %v1689
        %v2048 = vpack.c.b16 %v1692, %v1690
        %v2049 = vpack.c.b16 %v1695, %v1693
        %v2050 = vpack.c.b16 %v1696, %v1694
        %v2051 = vpack.c.b16 %v1699, %v1697
        %v2052 = vpack.c.b16 %v1700, %v1698
        %v2053 = vpack.c.b16 %v1703, %v1701
        %v2054 = vpack.c.b16 %v1704, %v1702
        %v2055 = vpack.c.b16 %v1707, %v1705
        %v2056 = vpack.c.b16 %v1708, %v1706
        %v2057 = vpack.c.b16 %v1711, %v1709
        %v2058 = vpack.c.b16 %v1712, %v1710
        %v2059 = vpack.c.b16 %v1715, %v1713
        %v2060 = vpack.c.b16 %v1716, %v1714
        %v2061 = vpack.c.b16 %v1719, %v1717
        %v2062 = vpack.c.b16 %v1720, %v1718
        %v2063 = vpack.c.b16 %v1723, %v1721
        %v2064 = vpack.c.b16 %v1724, %v1722
        %v2065 = vpack.c.b16 %v1727, %v1725
        %v2066 = vpack.c.b16 %v1728, %v1726
        %v2067 = vpack.c.b16 %v1731, %v1729
        %v2068 = vpack.c.b16 %v1732, %v1730
        %v2069 = vpack.c.b16 %v1735, %v1733
        %v2070 = vpack.c.b16 %v1736, %v1734
        %v2071 = vpack.c.b16 %v1739, %v1737
        %v2072 = vpack.c.b16 %v1740, %v1738
        %v2073 = vpack.c.b16 %v1743, %v1741
        %v2074 = vpack.c.b16 %v1744, %v1742
        %v2075 = vpack.c.b16 %v1747, %v1745
        %v2076 = vpack.c.b16 %v1748, %v1746
        %v2077 = vpack.c.b16 %v1751, %v1749
        %v2078 = vpack.c.b16 %v1752, %v1750
        %v2079 = vpack.c.b16 %v1755, %v1753
        %v2080 = vpack.c.b16 %v1756, %v1754
        %v2081 = vpack.c.b16 %v1759, %v1757
        %v2082 = vpack.c.b16 %v1760, %v1758
        %v2083 = vpack.c.b16 %v1763, %v1761
        %v2084 = vpack.c.b16 %v1764, %v1762
        %v2085 = vpack.c.b16 %v1767, %v1765
        %v2086 = vpack.c.b16 %v1768, %v1766
        %v2087 = vpack.c.b16 %v1771, %v1769
        %v2088 = vpack.c.b16 %v1772, %v1770
        %v2089 = vpack.c.b16 %v1775, %v1773
        %v2090 = vpack.c.b16 %v1776, %v1774
        %v2091 = vpack.c.b16 %v1779, %v1777
        %v2092 = vpack.c.b16 %v1780, %v1778
        %v2093 = vpack.c.b16 %v1783, %v1781
        %v2094 = vpack.c.b16 %v1784, %v1782
        %v2095 = vpack.c.b16 %v1787, %v1785
        %v2096 = vpack.c.b16 %v1788, %v1786
        %v2097 = vpack.c.b16 %v1791, %v1789
        %v2098 = vpack.c.b16 %v1792, %v1790
        %v2099 = vpack.c.b16 %v1795, %v1793
        %v2100 = vpack.c.b16 %v1796, %v1794
        %v2101 = vpack.c.b16 %v1799, %v1797
        %v2102 = vpack.c.b16 %v1800, %v1798
        %v2103 = vpack.c.b16 %v1803, %v1801
        %v2104 = vpack.c.b16 %v1804, %v1802
        %v2105 = vpack.c.b16 %v1807, %v1805
        %v2106 = vpack.c.b16 %v1808, %v1806
        %v2107 = vpack.c.b16 %v1811, %v1809
        %v2108 = vpack.c.b16 %v1812, %v1810
        %v2109 = vpack.c.b16 %v1815, %v1813
        %v2110 = vpack.c.b16 %v1816, %v1814
        %v2111 = vpack.c.b16 %v1819, %v1817
        %v2112 = vpack.c.b16 %v1820, %v1818
        %v2113 = vpack.c.b16 %v1823, %v1821
        %v2114 = vpack.c.b16 %v1824, %v1822
        %v2115 = vpack.c.b16 %v1827, %v1825
        %v2116 = vpack.c.b16 %v1828, %v1826
        %v2117 = vpack.c.b16 %v1831, %v1829
        %v2118 = vpack.c.b16 %v1832, %v1830
        %v2119 = vpack.c.b16 %v1835, %v1833
        %v2120 = vpack.c.b16 %v1836, %v1834
        %v2121 = vpack.c.b16 %v1839, %v1837
        %v2122 = vpack.c.b16 %v1840, %v1838
        %v2123 = vpack.c.b16 %v1843, %v1841
        %v2124 = vpack.c.b16 %v1844, %v1842
        %v2125 = vpack.c.b16 %v1847, %v1845
        %v2126 = vpack.c.b16 %v1848, %v1846
        %v2127 = vpack.c.b16 %v1851, %v1849
        %v2128 = vpack.c.b16 %v1852, %v1850
        %v2129 = vpack.c.b16 %v1855, %v1853
        %v2130 = vpack.c.b16 %v1856, %v1854
        %v2131 = vpack.c.b16 %v1859, %v1857
        %v2132 = vpack.c.b16 %v1860, %v1858
        %v2133 = vpack.c.b16 %v1863, %v1861
        %v2134 = vpack.c.b16 %v1864, %v1862
        %v2135 = vpack.c.b16 %v1867, %v1865
        %v2136 = vpack.c.b16 %v1868, %v1866
        %v2137 = vpack.c.b16 %v1871, %v1869
        %v2138 = vpack.c.b16 %v1872, %v1870
        %v2139 = vpack.c.b16 %v1875, %v1873
        %v2140 = vpack.c.b16 %v1876, %v1874
        %v2141 = vpack.c.b16 %v1879, %v1877
        %v2142 = vpack.c.b16 %v1880, %v1878
        %v2143 = vpack.c.b16 %v1883, %v1881
        %v2144 = vpack.c.b16 %v1884, %v1882
        %v2145 = vpack.c.b16 %v1887, %v1885
        %v2146 = vpack.c.b16 %v1888, %v1886
        %v2147 = vpack.c.b16 %v1891, %v1889
        %v2148 = vpack.c.b16 %v1892, %v1890
        %v2149 = vpack.c.b16 %v1895, %v1893
        %v2150 = vpack.c.b16 %v1896, %v1894
        %v2151 = vpack.c.b16 %v1899, %v1897
        %v2152 = vpack.c.b16 %v1900, %v1898
        %v2153 = vpack.c.b16 %v1903, %v1901
        %v2154 = vpack.c.b16 %v1904, %v1902
        %v2155 = vpack.c.b16 %v1907, %v1905
        %v2156 = vpack.c.b16 %v1908, %v1906
        %v2157 = vpack.c.b16 %v1911, %v1909
        %v2158 = vpack.c.b16 %v1912, %v1910
        %v2159 = vpack.c.b16 %v1915, %v1913
        %v2160 = vpack.c.b16 %v1916, %v1914
        %v2161 = vpack.c.b16 %v1919, %v1917
        %v2162 = vpack.c.b16 %v1920, %v1918
        %v2163 = vpack.c.b16 %v1923, %v1921
        %v2164 = vpack.c.b16 %v1924, %v1922
        %v2165 = vpack.c.b16 %v1927, %v1925
        %v2166 = vpack.c.b16 %v1928, %v1926
        %v2167 = vpack.c.b16 %v1931, %v1929
        %v2168 = vpack.c.b16 %v1932, %v1930
        %v2169 = vpack.c.b16 %v1935, %v1933
        %v2170 = vpack.c.b16 %v1936, %v1934
        %v2171 = vpack.c.b16 %v1939, %v1937
        %v2172 = vpack.c.b16 %v1940, %v1938
        %v2173 = vpack.c.b16 %v1943, %v1941
        %v2174 = vpack.c.b16 %v1944, %v1942
        %v2175 = vpack.c.b16 %v1947, %v1945
        %v2176 = vpack.c.b16 %v1948, %v1946
        %v2177 = vpack.c.b16 %v1951, %v1949
        %v2178 = vpack.c.b16 %v1952, %v1950
        %v2179 = vpack.c.b16 %v1955, %v1953
        %v2180 = vpack.c.b16 %v1956, %v1954
        %v2181 = vpack.c.b16 %v1959, %v1957
        %v2182 = vpack.c.b16 %v1960, %v1958
        %v2183 = vpack.c.b16 %v1963, %v1961
        %v2184 = vpack.c.b16 %v1964, %v1962
        %v2185 = vpack.c.b16 %v1967, %v1965
        %v2186 = vpack.c.b16 %v1968, %v1966
        %v2187 = vpack.c.b16 %v1971, %v1969
        %v2188 = vpack.c.b16 %v1972, %v1970
        %v2189 = vpack.c.b16 %v1975, %v1973
        %v2190 = vpack.c.b16 %v1976, %v1974
        %v2191 = vpack.c.b16 %v1979, %v1977
        %v2192 = vpack.c.b16 %v1980, %v1978
        %v2193 = vpack.c.b16 %v1983, %v1981
        %v2194 = vpack.c.b16 %v1984, %v1982
        %v2195 = vpack.c.b16 %v1987, %v1985
        %v2196 = vpack.c.b16 %v1988, %v1986
        %v2197 = vpack.c.b16 %v1991, %v1989
        %v2198 = vpack.c.b16 %v1992, %v1990
        %v2199 = vpack.c.b16 %v1995, %v1993
        %v2200 = vpack.c.b16 %v1996, %v1994
        %v2201 = vpack.c.b16 %v1999, %v1997
        %v2202 = vpack.c.b16 %v2000, %v1998
        %v2203 = vpack.c.b16 %v2003, %v2001
        %v2204 = vpack.c.b16 %v2004, %v2002
        %v2205 = vpack.c.b16 %v2007, %v2005
        %v2206 = vpack.c.b16 %v2008, %v2006
        %v2207 = vpack.c.b16 %v2011, %v2009
        %v2208 = vpack.c.b16 %v2012, %v2010
        %v2209 = vpack.c.b16 %v2015, %v2013
        %v2210 = vpack.c.b16 %v2016, %v2014
        %v2211 = vpack.c.b16 %v2019, %v2017
        %v2212 = vpack.c.b16 %v2020, %v2018
        %2405 = vmatprep.subr.bf16.mxu0 %v2022
        %2406 = vmatpush1.bf16.msra.mxu0 %v2021
        %2407 = vmatprep.subr.bf16.mxu0 %v2024
        %2408 = vmatpush1.bf16.msra.mxu0 %v2023
        %2409 = vmatprep.subr.bf16.mxu0 %v2026
        %2410 = vmatpush1.bf16.msra.mxu0 %v2025
        %2411 = vmatprep.subr.bf16.mxu0 %v2028
        %2412 = vmatpush1.bf16.msra.mxu0 %v2027
        %2413 = vmatprep.subr.bf16.mxu0 %v2030
        %2414 = vmatpush1.bf16.msra.mxu0 %v2029
        %2415 = vmatprep.subr.bf16.mxu0 %v2032
        %2416 = vmatpush1.bf16.msra.mxu0 %v2031
        %2417 = vmatprep.subr.bf16.mxu0 %v2034
        %2418 = vmatpush1.bf16.msra.mxu0 %v2033
        %2419 = vmatprep.subr.bf16.mxu0 %v2036
        %2420 = vmatpush1.bf16.msra.mxu0 %v2035
        %2421 = vmatprep.subr.bf16.mxu0 %v2038
        %2422 = vmatpush1.bf16.msra.mxu0 %v2037
        %2423 = vmatprep.subr.bf16.mxu0 %v2040
        %2424 = vmatpush1.bf16.msra.mxu0 %v2039
        %2425 = vmatprep.subr.bf16.mxu0 %v2042
        %2426 = vmatpush1.bf16.msra.mxu0 %v2041
        %2427 = vmatprep.subr.bf16.mxu0 %v2044
        %2428 = vmatpush1.bf16.msra.mxu0 %v2043
        %2429 = vmatprep.subr.bf16.mxu0 %v2046
        %2430 = vmatpush1.bf16.msra.mxu0 %v2045
        %2431 = vmatprep.subr.bf16.mxu0 %v2048
        %2432 = vmatpush1.bf16.msra.mxu0 %v2047
        %2433 = vmatprep.subr.bf16.mxu0 %v2050
        %2434 = vmatpush1.bf16.msra.mxu0 %v2049
        %2435 = vmatprep.subr.bf16.mxu0 %v2052
        %2436 = vmatpush1.bf16.msra.mxu0 %v2051
        %2437 = vmatprep.mubr.bf16.mxu0 %v1374
        %2438 = vmatmul.mubr.bf16.gmra.mrb[0].mxu0 %v1373
        %v2439 = vpop.f32.mrb[0].mxu0
        %v2440 = vadd.f32 %v1258, %v2439
        %v2441 = vpop.f32.mrb[0].mxu0
        %v2442 = vadd.f32 %v1262, %v2441
        %v2443 = vpop.f32.mrb[0].mxu0
        %v2444 = vadd.f32 %v1258, %v2443
        %v2445 = vpop.f32.mrb[0].mxu0
        %v2446 = vadd.f32 %v1262, %v2445
        %2447 = vmatprep.mubr.bf16.mxu0 %v1386
        %2448 = vmatmul.mubr.bf16.gmra.mrb[0].mxu0 %v1385
        %v2449 = vpop.f32.mrb[0].mxu0
        %v2450 = vadd.f32 %v1258, %v2449
        %v2451 = vpop.f32.mrb[0].mxu0
        %v2452 = vadd.f32 %v1262, %v2451
        %v2453 = vpop.f32.mrb[0].mxu0
        %v2454 = vadd.f32 %v1258, %v2453
        %v2455 = vpop.f32.mrb[0].mxu0
        %v2456 = vadd.f32 %v1262, %v2455
        %2457 = vmatprep.mubr.bf16.mxu0 %v1398
        %2458 = vmatmul.mubr.bf16.gmra.mrb[0].mxu0 %v1397
        %v2459 = vpop.f32.mrb[0].mxu0
        %v2460 = vadd.f32 %v1258, %v2459
        %v2461 = vpop.f32.mrb[0].mxu0
        %v2462 = vadd.f32 %v1262, %v2461
        %v2463 = vpop.f32.mrb[0].mxu0
        %v2464 = vadd.f32 %v1258, %v2463
        %v2465 = vpop.f32.mrb[0].mxu0
        %v2466 = vadd.f32 %v1262, %v2465
        %2467 = vdwg.mxu0
        %2468 = vmatprep.subr.bf16.mxu0 %v2054
        %2469 = vmatpush1.bf16.msra.mxu0 %v2053
        %2470 = vmatprep.subr.bf16.mxu0 %v2056
        %2471 = vmatpush1.bf16.msra.mxu0 %v2055
        %2472 = vmatprep.subr.bf16.mxu0 %v2058
        %2473 = vmatpush1.bf16.msra.mxu0 %v2057
        %2474 = vmatprep.subr.bf16.mxu0 %v2060
        %2475 = vmatpush1.bf16.msra.mxu0 %v2059
        %2476 = vmatprep.subr.bf16.mxu0 %v2062
        %2477 = vmatpush1.bf16.msra.mxu0 %v2061
        %2478 = vmatprep.subr.bf16.mxu0 %v2064
        %2479 = vmatpush1.bf16.msra.mxu0 %v2063
        %2480 = vmatprep.subr.bf16.mxu0 %v2066
        %2481 = vmatpush1.bf16.msra.mxu0 %v2065
        %2482 = vmatprep.subr.bf16.mxu0 %v2068
        %2483 = vmatpush1.bf16.msra.mxu0 %v2067
        %2484 = vmatprep.subr.bf16.mxu0 %v2070
        %2485 = vmatpush1.bf16.msra.mxu0 %v2069
        %2486 = vmatprep.subr.bf16.mxu0 %v2072
        %2487 = vmatpush1.bf16.msra.mxu0 %v2071
        %2488 = vmatprep.subr.bf16.mxu0 %v2074
        %2489 = vmatpush1.bf16.msra.mxu0 %v2073
        %2490 = vmatprep.subr.bf16.mxu0 %v2076
        %2491 = vmatpush1.bf16.msra.mxu0 %v2075
        %2492 = vmatprep.subr.bf16.mxu0 %v2078
        %2493 = vmatpush1.bf16.msra.mxu0 %v2077
        %2494 = vmatprep.subr.bf16.mxu0 %v2080
        %2495 = vmatpush1.bf16.msra.mxu0 %v2079
        %2496 = vmatprep.subr.bf16.mxu0 %v2082
        %2497 = vmatpush1.bf16.msra.mxu0 %v2081
        %2498 = vmatprep.subr.bf16.mxu0 %v2084
        %2499 = vmatpush1.bf16.msra.mxu0 %v2083
        %2500 = vmatprep.mubr.bf16.mxu0 %v1376
        %2501 = vmatmul.mubr.bf16.gmra.mrb[0].mxu0 %v1375
        %v2502 = vpop.f32.mrb[0].mxu0
        %v2503 = vadd.f32 %v2440, %v2502
        %v2504 = vpop.f32.mrb[0].mxu0
        %v2505 = vadd.f32 %v2442, %v2504
        %v2506 = vpop.f32.mrb[0].mxu0
        %v2507 = vadd.f32 %v2444, %v2506
        %v2508 = vpop.f32.mrb[0].mxu0
        %v2509 = vadd.f32 %v2446, %v2508
        %2510 = vmatprep.mubr.bf16.mxu0 %v1388
        %2511 = vmatmul.mubr.bf16.gmra.mrb[0].mxu0 %v1387
        %v2512 = vpop.f32.mrb[0].mxu0
        %v2513 = vadd.f32 %v2450, %v2512
        %v2514 = vpop.f32.mrb[0].mxu0
        %v2515 = vadd.f32 %v2452, %v2514
        %v2516 = vpop.f32.mrb[0].mxu0
        %v2517 = vadd.f32 %v2454, %v2516
        %v2518 = vpop.f32.mrb[0].mxu0
        %v2519 = vadd.f32 %v2456, %v2518
        %2520 = vmatprep.mubr.bf16.mxu0 %v1400
        %2521 = vmatmul.mubr.bf16.gmra.mrb[0].mxu0 %v1399
        %v2522 = vpop.f32.mrb[0].mxu0
        %v2523 = vadd.f32 %v2460, %v2522
        %v2524 = vpop.f32.mrb[0].mxu0
        %v2525 = vadd.f32 %v2462, %v2524
        %v2526 = vpop.f32.mrb[0].mxu0
        %v2527 = vadd.f32 %v2464, %v2526
        %v2528 = vpop.f32.mrb[0].mxu0
        %v2529 = vadd.f32 %v2466, %v2528
        %2530 = vdwg.mxu0
        %2531 = vmatprep.subr.bf16.mxu0 %v2086
        %2532 = vmatpush1.bf16.msra.mxu0 %v2085
        %2533 = vmatprep.subr.bf16.mxu0 %v2088
        %2534 = vmatpush1.bf16.msra.mxu0 %v2087
        %2535 = vmatprep.subr.bf16.mxu0 %v2090
        %2536 = vmatpush1.bf16.msra.mxu0 %v2089
        %2537 = vmatprep.subr.bf16.mxu0 %v2092
        %2538 = vmatpush1.bf16.msra.mxu0 %v2091
        %2539 = vmatprep.subr.bf16.mxu0 %v2094
        %2540 = vmatpush1.bf16.msra.mxu0 %v2093
        %2541 = vmatprep.subr.bf16.mxu0 %v2096
        %2542 = vmatpush1.bf16.msra.mxu0 %v2095
        %2543 = vmatprep.subr.bf16.mxu0 %v2098
        %2544 = vmatpush1.bf16.msra.mxu0 %v2097
        %2545 = vmatprep.subr.bf16.mxu0 %v2100
        %2546 = vmatpush1.bf16.msra.mxu0 %v2099
        %2547 = vmatprep.subr.bf16.mxu0 %v2102
        %2548 = vmatpush1.bf16.msra.mxu0 %v2101
        %2549 = vmatprep.subr.bf16.mxu0 %v2104
        %2550 = vmatpush1.bf16.msra.mxu0 %v2103
        %2551 = vmatprep.subr.bf16.mxu0 %v2106
        %2552 = vmatpush1.bf16.msra.mxu0 %v2105
        %2553 = vmatprep.subr.bf16.mxu0 %v2108
        %2554 = vmatpush1.bf16.msra.mxu0 %v2107
        %2555 = vmatprep.subr.bf16.mxu0 %v2110
        %2556 = vmatpush1.bf16.msra.mxu0 %v2109
        %2557 = vmatprep.subr.bf16.mxu0 %v2112
        %2558 = vmatpush1.bf16.msra.mxu0 %v2111
        %2559 = vmatprep.subr.bf16.mxu0 %v2114
        %2560 = vmatpush1.bf16.msra.mxu0 %v2113
        %2561 = vmatprep.subr.bf16.mxu0 %v2116
        %2562 = vmatpush1.bf16.msra.mxu0 %v2115
        %2563 = vmatprep.mubr.bf16.mxu0 %v1378
        %2564 = vmatmul.mubr.bf16.gmra.mrb[0].mxu0 %v1377
        %v2565 = vpop.f32.mrb[0].mxu0
        %v2566 = vadd.f32 %v2503, %v2565
        %v2567 = vpop.f32.mrb[0].mxu0
        %v2568 = vadd.f32 %v2505, %v2567
        %v2569 = vpop.f32.mrb[0].mxu0
        %v2570 = vadd.f32 %v2507, %v2569
        %v2571 = vpop.f32.mrb[0].mxu0
        %v2572 = vadd.f32 %v2509, %v2571
        %2573 = vmatprep.mubr.bf16.mxu0 %v1390
        %2574 = vmatmul.mubr.bf16.gmra.mrb[0].mxu0 %v1389
        %v2575 = vpop.f32.mrb[0].mxu0
        %v2576 = vadd.f32 %v2513, %v2575
        %v2577 = vpop.f32.mrb[0].mxu0
        %v2578 = vadd.f32 %v2515, %v2577
        %v2579 = vpop.f32.mrb[0].mxu0
        %v2580 = vadd.f32 %v2517, %v2579
        %v2581 = vpop.f32.mrb[0].mxu0
        %v2582 = vadd.f32 %v2519, %v2581
        %2583 = vmatprep.mubr.bf16.mxu0 %v1402
        %2584 = vmatmul.mubr.bf16.gmra.mrb[0].mxu0 %v1401
        %v2585 = vpop.f32.mrb[0].mxu0
        %v2586 = vadd.f32 %v2523, %v2585
        %v2587 = vpop.f32.mrb[0].mxu0
        %v2588 = vadd.f32 %v2525, %v2587
        %v2589 = vpop.f32.mrb[0].mxu0
        %v2590 = vadd.f32 %v2527, %v2589
        %v2591 = vpop.f32.mrb[0].mxu0
        %v2592 = vadd.f32 %v2529, %v2591
        %2593 = vdwg.mxu0
        %2594 = vmatprep.subr.bf16.mxu0 %v2118
        %2595 = vmatpush1.bf16.msra.mxu0 %v2117
        %2596 = vmatprep.subr.bf16.mxu0 %v2120
        %2597 = vmatpush1.bf16.msra.mxu0 %v2119
        %2598 = vmatprep.subr.bf16.mxu0 %v2122
        %2599 = vmatpush1.bf16.msra.mxu0 %v2121
        %2600 = vmatprep.subr.bf16.mxu0 %v2124
        %2601 = vmatpush1.bf16.msra.mxu0 %v2123
        %2602 = vmatprep.subr.bf16.mxu0 %v2126
        %2603 = vmatpush1.bf16.msra.mxu0 %v2125
        %2604 = vmatprep.subr.bf16.mxu0 %v2128
        %2605 = vmatpush1.bf16.msra.mxu0 %v2127
        %2606 = vmatprep.subr.bf16.mxu0 %v2130
        %2607 = vmatpush1.bf16.msra.mxu0 %v2129
        %2608 = vmatprep.subr.bf16.mxu0 %v2132
        %2609 = vmatpush1.bf16.msra.mxu0 %v2131
        %2610 = vmatprep.subr.bf16.mxu0 %v2134
        %2611 = vmatpush1.bf16.msra.mxu0 %v2133
        %2612 = vmatprep.subr.bf16.mxu0 %v2136
        %2613 = vmatpush1.bf16.msra.mxu0 %v2135
        %2614 = vmatprep.subr.bf16.mxu0 %v2138
        %2615 = vmatpush1.bf16.msra.mxu0 %v2137
        %2616 = vmatprep.subr.bf16.mxu0 %v2140
        %2617 = vmatpush1.bf16.msra.mxu0 %v2139
        %2618 = vmatprep.subr.bf16.mxu0 %v2142
        %2619 = vmatpush1.bf16.msra.mxu0 %v2141
        %2620 = vmatprep.subr.bf16.mxu0 %v2144
        %2621 = vmatpush1.bf16.msra.mxu0 %v2143
        %2622 = vmatprep.subr.bf16.mxu0 %v2146
        %2623 = vmatpush1.bf16.msra.mxu0 %v2145
        %2624 = vmatprep.subr.bf16.mxu0 %v2148
        %2625 = vmatpush1.bf16.msra.mxu0 %v2147
        %2626 = vmatprep.mubr.bf16.mxu0 %v1380
        %2627 = vmatmul.mubr.bf16.gmra.mrb[0].mxu0 %v1379
        %v2628 = vpop.f32.mrb[0].mxu0
        %v2629 = vadd.f32 %v2566, %v2628
        %v2630 = vpop.f32.mrb[0].mxu0
        %v2631 = vadd.f32 %v2568, %v2630
        %v2632 = vpop.f32.mrb[0].mxu0
        %v2633 = vadd.f32 %v2570, %v2632
        %v2634 = vpop.f32.mrb[0].mxu0
        %v2635 = vadd.f32 %v2572, %v2634
        %2636 = vmatprep.mubr.bf16.mxu0 %v1392
        %2637 = vmatmul.mubr.bf16.gmra.mrb[0].mxu0 %v1391
        %v2638 = vpop.f32.mrb[0].mxu0
        %v2639 = vadd.f32 %v2576, %v2638
        %v2640 = vpop.f32.mrb[0].mxu0
        %v2641 = vadd.f32 %v2578, %v2640
        %v2642 = vpop.f32.mrb[0].mxu0
        %v2643 = vadd.f32 %v2580, %v2642
        %v2644 = vpop.f32.mrb[0].mxu0
        %v2645 = vadd.f32 %v2582, %v2644
        %2646 = vmatprep.mubr.bf16.mxu0 %v1404
        %2647 = vmatmul.mubr.bf16.gmra.mrb[0].mxu0 %v1403
        %v2648 = vpop.f32.mrb[0].mxu0
        %v2649 = vadd.f32 %v2586, %v2648
        %v2650 = vpop.f32.mrb[0].mxu0
        %v2651 = vadd.f32 %v2588, %v2650
        %v2652 = vpop.f32.mrb[0].mxu0
        %v2653 = vadd.f32 %v2590, %v2652
        %v2654 = vpop.f32.mrb[0].mxu0
        %v2655 = vadd.f32 %v2592, %v2654
        %2656 = vdwg.mxu0
        %2657 = vmatprep.subr.bf16.mxu0 %v2150
        %2658 = vmatpush1.bf16.msra.mxu0 %v2149
        %2659 = vmatprep.subr.bf16.mxu0 %v2152
        %2660 = vmatpush1.bf16.msra.mxu0 %v2151
        %2661 = vmatprep.subr.bf16.mxu0 %v2154
        %2662 = vmatpush1.bf16.msra.mxu0 %v2153
        %2663 = vmatprep.subr.bf16.mxu0 %v2156
        %2664 = vmatpush1.bf16.msra.mxu0 %v2155
        %2665 = vmatprep.subr.bf16.mxu0 %v2158
        %2666 = vmatpush1.bf16.msra.mxu0 %v2157
        %2667 = vmatprep.subr.bf16.mxu0 %v2160
        %2668 = vmatpush1.bf16.msra.mxu0 %v2159
        %2669 = vmatprep.subr.bf16.mxu0 %v2162
        %2670 = vmatpush1.bf16.msra.mxu0 %v2161
        %2671 = vmatprep.subr.bf16.mxu0 %v2164
        %2672 = vmatpush1.bf16.msra.mxu0 %v2163
        %2673 = vmatprep.subr.bf16.mxu0 %v2166
        %2674 = vmatpush1.bf16.msra.mxu0 %v2165
        %2675 = vmatprep.subr.bf16.mxu0 %v2168
        %2676 = vmatpush1.bf16.msra.mxu0 %v2167
        %2677 = vmatprep.subr.bf16.mxu0 %v2170
        %2678 = vmatpush1.bf16.msra.mxu0 %v2169
        %2679 = vmatprep.subr.bf16.mxu0 %v2172
        %2680 = vmatpush1.bf16.msra.mxu0 %v2171
        %2681 = vmatprep.subr.bf16.mxu0 %v2174
        %2682 = vmatpush1.bf16.msra.mxu0 %v2173
        %2683 = vmatprep.subr.bf16.mxu0 %v2176
        %2684 = vmatpush1.bf16.msra.mxu0 %v2175
        %2685 = vmatprep.subr.bf16.mxu0 %v2178
        %2686 = vmatpush1.bf16.msra.mxu0 %v2177
        %2687 = vmatprep.subr.bf16.mxu0 %v2180
        %2688 = vmatpush1.bf16.msra.mxu0 %v2179
        %2689 = vmatprep.mubr.bf16.mxu0 %v1382
        %2690 = vmatmul.mubr.bf16.gmra.mrb[0].mxu0 %v1381
        %v2691 = vpop.f32.mrb[0].mxu0
        %v2692 = vadd.f32 %v2629, %v2691
        %v2693 = vpop.f32.mrb[0].mxu0
        %v2694 = vadd.f32 %v2631, %v2693
        %v2695 = vpop.f32.mrb[0].mxu0
        %v2696 = vadd.f32 %v2633, %v2695
        %v2697 = vpop.f32.mrb[0].mxu0
        %v2698 = vadd.f32 %v2635, %v2697
        %2699 = vmatprep.mubr.bf16.mxu0 %v1394
        %2700 = vmatmul.mubr.bf16.gmra.mrb[0].mxu0 %v1393
        %v2701 = vpop.f32.mrb[0].mxu0
        %v2702 = vadd.f32 %v2639, %v2701
        %v2703 = vpop.f32.mrb[0].mxu0
        %v2704 = vadd.f32 %v2641, %v2703
        %v2705 = vpop.f32.mrb[0].mxu0
        %v2706 = vadd.f32 %v2643, %v2705
        %v2707 = vpop.f32.mrb[0].mxu0
        %v2708 = vadd.f32 %v2645, %v2707
        %2709 = vmatprep.mubr.bf16.mxu0 %v1406
        %2710 = vmatmul.mubr.bf16.gmra.mrb[0].mxu0 %v1405
        %v2711 = vpop.f32.mrb[0].mxu0
        %v2712 = vadd.f32 %v2649, %v2711
        %v2713 = vpop.f32.mrb[0].mxu0
        %v2714 = vadd.f32 %v2651, %v2713
        %v2715 = vpop.f32.mrb[0].mxu0
        %v2716 = vadd.f32 %v2653, %v2715
        %v2717 = vpop.f32.mrb[0].mxu0
        %v2718 = vadd.f32 %v2655, %v2717
        %2719 = vdwg.mxu0
        %2720 = vmatprep.subr.bf16.mxu0 %v2182
        %2721 = vmatpush1.bf16.msra.mxu0 %v2181
        %2722 = vmatprep.subr.bf16.mxu0 %v2184
        %2723 = vmatpush1.bf16.msra.mxu0 %v2183
        %2724 = vmatprep.subr.bf16.mxu0 %v2186
        %2725 = vmatpush1.bf16.msra.mxu0 %v2185
        %2726 = vmatprep.subr.bf16.mxu0 %v2188
        %2727 = vmatpush1.bf16.msra.mxu0 %v2187
        %2728 = vmatprep.subr.bf16.mxu0 %v2190
        %2729 = vmatpush1.bf16.msra.mxu0 %v2189
        %2730 = vmatprep.subr.bf16.mxu0 %v2192
        %2731 = vmatpush1.bf16.msra.mxu0 %v2191
        %2732 = vmatprep.subr.bf16.mxu0 %v2194
        %2733 = vmatpush1.bf16.msra.mxu0 %v2193
        %2734 = vmatprep.subr.bf16.mxu0 %v2196
        %2735 = vmatpush1.bf16.msra.mxu0 %v2195
        %2736 = vmatprep.subr.bf16.mxu0 %v2198
        %2737 = vmatpush1.bf16.msra.mxu0 %v2197
        %2738 = vmatprep.subr.bf16.mxu0 %v2200
        %2739 = vmatpush1.bf16.msra.mxu0 %v2199
        %2740 = vmatprep.subr.bf16.mxu0 %v2202
        %2741 = vmatpush1.bf16.msra.mxu0 %v2201
        %2742 = vmatprep.subr.bf16.mxu0 %v2204
        %2743 = vmatpush1.bf16.msra.mxu0 %v2203
        %2744 = vmatprep.subr.bf16.mxu0 %v2206
        %2745 = vmatpush1.bf16.msra.mxu0 %v2205
        %2746 = vmatprep.subr.bf16.mxu0 %v2208
        %2747 = vmatpush1.bf16.msra.mxu0 %v2207
        %2748 = vmatprep.subr.bf16.mxu0 %v2210
        %2749 = vmatpush1.bf16.msra.mxu0 %v2209
        %2750 = vmatprep.subr.bf16.mxu0 %v2212
        %2751 = vmatpush1.bf16.msra.mxu0 %v2211
        %2752 = vmatprep.mubr.bf16.mxu0 %v1384
        %2753 = vmatmul.mubr.bf16.gmra.mrb[0].mxu0 %v1383
        %v2754 = vpop.f32.mrb[0].mxu0
        %v2755 = vadd.f32 %v2692, %v2754
        %v2756 = vpop.f32.mrb[0].mxu0
        %v2757 = vadd.f32 %v2694, %v2756
        %v2758 = vpop.f32.mrb[0].mxu0
        %v2759 = vadd.f32 %v2696, %v2758
        %v2760 = vpop.f32.mrb[0].mxu0
        %v2761 = vadd.f32 %v2698, %v2760
        %2762 = vmatprep.mubr.bf16.mxu0 %v1396
        %2763 = vmatmul.mubr.bf16.gmra.mrb[0].mxu0 %v1395
        %v2764 = vpop.f32.mrb[0].mxu0
        %v2765 = vadd.f32 %v2702, %v2764
        %v2766 = vpop.f32.mrb[0].mxu0
        %v2767 = vadd.f32 %v2704, %v2766
        %v2768 = vpop.f32.mrb[0].mxu0
        %v2769 = vadd.f32 %v2706, %v2768
        %v2770 = vpop.f32.mrb[0].mxu0
        %v2771 = vadd.f32 %v2708, %v2770
        %2772 = vmatprep.mubr.bf16.mxu0 %v1408
        %2773 = vmatmul.mubr.bf16.gmra.mrb[0].mxu0 %v1407
        %v2774 = vpop.f32.mrb[0].mxu0
        %v2775 = vadd.f32 %v2712, %v2774
        %v2776 = vpop.f32.mrb[0].mxu0
        %v2777 = vadd.f32 %v2714, %v2776
        %v2778 = vpop.f32.mrb[0].mxu0
        %v2779 = vadd.f32 %v2716, %v2778
        %v2780 = vpop.f32.mrb[0].mxu0
        %v2781 = vadd.f32 %v2718, %v2780
        %2782 = vdwg.mxu0
        %vm2783 = vcmp.ge.f32.partialorder %v2755, 0.0
        %vm2784 = vcmp.ge.f32.partialorder %v2757, 0.0
        %vm2785 = vcmp.ge.f32.partialorder %v2759, 0.0
        %vm2786 = vcmp.ge.f32.partialorder %v2761, 0.0
        %vm2787 = vcmp.ge.f32.partialorder %v2765, 0.0
        %vm2788 = vcmp.ge.f32.partialorder %v2767, 0.0
        %vm2789 = vcmp.ge.f32.partialorder %v2769, 0.0
        %vm2790 = vcmp.ge.f32.partialorder %v2771, 0.0
        %vm2791 = vcmp.ge.f32.partialorder %v2775, 0.0
        %vm2792 = vcmp.ge.f32.partialorder %v2777, 0.0
        %vm2793 = vcmp.ge.f32.partialorder %v2779, 0.0
        %vm2794 = vcmp.ge.f32.partialorder %v2781, 0.0
        %v2795 = vmul.f32 %v2755, 0.01
        %v2796 = vmul.f32 %v2757, 0.01
        %v2797 = vmul.f32 %v2759, 0.01
        %v2798 = vmul.f32 %v2761, 0.01
        %v2799 = vmul.f32 %v2765, 0.01
        %v2800 = vmul.f32 %v2767, 0.01
        %v2801 = vmul.f32 %v2769, 0.01
        %v2802 = vmul.f32 %v2771, 0.01
        %v2803 = vmul.f32 %v2775, 0.01
        %v2804 = vmul.f32 %v2777, 0.01
        %v2805 = vmul.f32 %v2779, 0.01
        %v2806 = vmul.f32 %v2781, 0.01
        %v2807 = vsel %vm2783, %v2755, %v2795
        %v2808 = vsel %vm2784, %v2757, %v2796
        %v2809 = vsel %vm2785, %v2759, %v2797
        %v2810 = vsel %vm2786, %v2761, %v2798
        %v2811 = vsel %vm2787, %v2765, %v2799
        %v2812 = vsel %vm2788, %v2767, %v2800
        %v2813 = vsel %vm2789, %v2769, %v2801
        %v2814 = vsel %vm2790, %v2771, %v2802
        %v2815 = vsel %vm2791, %v2775, %v2803
        %v2816 = vsel %vm2792, %v2777, %v2804
        %v2817 = vsel %vm2793, %v2779, %v2805
        %v2818 = vsel %vm2794, %v2781, %v2806
        %2819 = vst [vmem:[%s1009] sm:$0xff] %v2807
        %2820 = vst [vmem:[%s1009 + $0x8] sm:$0xff] %v2808
        %2821 = vst [vmem:[%s1009 + $0x10] sm:$0xff] %v2809
        %2822 = vst [vmem:[%s1009 + $0x18] sm:$0xff] %v2810
        %2823 = vst [vmem:[%s1009 + $0x20] sm:$0xff] %v2811
        %2824 = vst [vmem:[%s1009 + $0x28] sm:$0xff] %v2812
        %2825 = vst [vmem:[%s1009 + $0x30] sm:$0xff] %v2813
        %2826 = vst [vmem:[%s1009 + $0x38] sm:$0xff] %v2814
        %2827 = vst [vmem:[%s1009 + $0x40] sm:$0xff] %v2815
        %2828 = vst [vmem:[%s1009 + $0x48] sm:$0xff] %v2816
        %2829 = vst [vmem:[%s1009 + $0x50] sm:$0xff] %v2817
        %2830 = vst [vmem:[%s1009 + $0x58] sm:$0xff] %v2818
        %s2831 = sand.u32 %s114, 1
        %s2832 = sand.u32 %s114, 1
        %s2833 = smul.addr %s2832, 96
        %s2834 = scalar_lea.vmem [#allocation3], %s2833
        // Predicated region
        $region71: #{_lambda_.10} parent=65 // pred_check
          %p2835 = pneg %p124
        $region72: #{_lambda_.10} parent=65 // pred_check_branch
          %2837 = sbr.rel (%p2835) target = $region74
        $region73: #{_lambda_.10} parent=65 // pred_region
          %s2838 = smul.u32 6, %s18
          %s2839 = smul.u32 2, %s19
          %s2840 = smul.addr %s2838, 4
          %s2841 = sadd.s32 %s2839, %s2840
          %s2842 = smul.addr %s2841, 8
          %s2843 = scalar_lea.vmem %s3, %s2842
          // Predicated region
          $region75: #{_lambda_.10} parent=73 // pred_check
            _
          $region76: #{_lambda_.10} parent=73 // pred_check_branch
            %2845 = sbr.rel (0) target = $region78
          $region77: #{_lambda_.10} parent=73 // pred_region
            // Predicated region
            $region79: #{_lambda_.10} parent=77 // pred_check
              _
            $region80: #{_lambda_.10} parent=77 // pred_check_branch
              %2847 = sbr.rel (0) target = $region82
            $region81: #{_lambda_.10} parent=77 // pred_region
              loop: start=0, step=1, limit=1
              $region83: #{_lambda_.10} parent=81 // loop_pre_header
                _
              $region84: #{_lambda_.10} parent=81 // loop_header
                %s2849 = sphi 0, %s2853
                %p2850 = scmp.ge.s32.totalorder %s2849, 1
                %s2854 = sphi %s2834, %s2834
                %s2855 = sphi %s2843, %s2843
              $region85: #{_lambda_.10} parent=81 // loop_header_branch
                %2852 = sbr.rel (%p2850) target = $region89
              $region86: #{_lambda_.10} parent=81 // loop_body
                %v2856 = vld [vmem:[%s2854] sm:$0xff]
                %2857 = vst [vmem:[%s2855] sm:$0xff] %v2856
                %v2858 = vld [vmem:[%s2854 + $0x8] sm:$0xff]
                %2859 = vst [vmem:[%s2855 + $0x8] sm:$0xff] %v2858
                %v2860 = vld [vmem:[%s2854 + $0x10] sm:$0xff]
                %2861 = vst [vmem:[%s2855 + $0x20] sm:$0xff] %v2860
                %v2862 = vld [vmem:[%s2854 + $0x18] sm:$0xff]
                %2863 = vst [vmem:[%s2855 + $0x28] sm:$0xff] %v2862
                %v2864 = vld [vmem:[%s2854 + $0x20] sm:$0xff]
                %2865 = vst [vmem:[%s2855 + $0x40] sm:$0xff] %v2864
                %v2866 = vld [vmem:[%s2854 + $0x28] sm:$0xff]
                %2867 = vst [vmem:[%s2855 + $0x48] sm:$0xff] %v2866
                %v2868 = vld [vmem:[%s2854 + $0x30] sm:$0xff]
                %2869 = vst [vmem:[%s2855 + $0x60] sm:$0xff] %v2868
                %v2870 = vld [vmem:[%s2854 + $0x38] sm:$0xff]
                %2871 = vst [vmem:[%s2855 + $0x68] sm:$0xff] %v2870
                %v2872 = vld [vmem:[%s2854 + $0x40] sm:$0xff]
                %2873 = vst [vmem:[%s2855 + $0x80] sm:$0xff] %v2872
                %v2874 = vld [vmem:[%s2854 + $0x48] sm:$0xff]
                %2875 = vst [vmem:[%s2855 + $0x88] sm:$0xff] %v2874
                %v2876 = vld [vmem:[%s2854 + $0x50] sm:$0xff]
                %2877 = vst [vmem:[%s2855 + $0xa0] sm:$0xff] %v2876
                %v2878 = vld [vmem:[%s2854 + $0x58] sm:$0xff]
                %2879 = vst [vmem:[%s2855 + $0xa8] sm:$0xff] %v2878
              $region87: #{_lambda_.10} parent=81 // loop_footer
                %s2853 = sadd.s32 1, %s2849
              $region88: #{_lambda_.10} parent=81 // loop_footer_branch
                %2848 = sbr.rel target = $region84
              $region89: #{_lambda_.10} parent=81 // loop_exit
                _
            $region82: #{_lambda_.10} parent=77 // pred_fallthru
              _
            // Predicated region
            $region90: #{_lambda_.10} parent=77 // pred_check
              _
            $region91: #{_lambda_.10} parent=77 // pred_check_branch
              %2881 = sbr.rel target = $region93
            $region92: #{_lambda_.10} parent=77 // pred_region
              _
            $region93: #{_lambda_.10} parent=77 // pred_fallthru
              _
          $region78: #{_lambda_.10} parent=73 // pred_fallthru
            _
          %2882 = vnop
        $region74: #{_lambda_.10} parent=65 // pred_fallthru
          _
      $region66: #{_lambda_.10} parent=5 // pred_fallthru
        _
      %p2883 = scmp.le.s32.totalorder 2, %s9
      // Predicated region
      $region94: #{_lambda_.10} parent=5 // pred_check
        %p2884 = pneg %p2883
      $region95: #{_lambda_.10} parent=5 // pred_check_branch
        %2886 = sbr.rel (%p2884) target = $region97
      $region96: #{_lambda_.10} parent=5 // pred_region
        %s2887 = ssub.s32 %s9, 2
        // Predicated region
        $region98: #{_lambda_.10} parent=96 // pred_check
          %p2888 = pneg %p130
        $region99: #{_lambda_.10} parent=96 // pred_check_branch
          %2890 = sbr.rel (%p2888) target = $region101
        $region100: #{_lambda_.10} parent=96 // pred_region
          %s2891 = sand.u32 %s115, 1
          %s2892 = sand.u32 %s115, 1
          %s2893 = smul.addr %s2892, 96
          %s2894 = scalar_lea.vmem [#allocation3], %s2893
        $region101: #{_lambda_.10} parent=96 // pred_fallthru
          _
      $region97: #{_lambda_.10} parent=5 // pred_fallthru
        _
    $region6: #{_lambda_.10} parent=1 // loop_footer
      %s13 = sadd.s32 1, %s9
    $region7: #{_lambda_.10} parent=1 // loop_footer_branch
      %8 = sbr.rel target = $region3
    $region8: #{_lambda_.10} parent=1 // loop_exit
      _

// kernel: _lambda_.11
$region0: #{_lambda_.11}
  #allocation0 [shape = 'u32[]', space=smem, size = 0x4, offset = 0x4, fixed_abs, tag = 'smem constant byte address 0x4 - core index']
  #allocation1 [shape = 'u32[144,128]{1,0:T(1,128)}', space=vmem, size = 0x12000, scoped, tag = 'internal scratch']
  %s0 = inlined_call_operand.vmem [shape: bf16[16,1536], index: 0, kind: input, shape index: {}]
  %s1 = inlined_call_operand.vmem [shape: bf16[1536,512], index: 1, kind: input, shape index: {}]
  %s2 = inlined_call_operand.vmem [shape: f32[1,512], index: 2, kind: input, shape index: {}]
  %s3 = inlined_call_operand.vmem [shape: f32[16,512], index: 3, kind: output, shape index: {}]
  %s4 = sld [smem:[#allocation0]]
  $region102: #{_lambda_.11} parent=0
    _
  %s6 = ssub.s32 1, %s4
  %s7 = scalar_select 0, %s6, %s4
  $region1: #{_lambda_.11} parent=0
    #allocation2 [shape = 'u8[1572864]{0}', space=vmem, size = 0x180000, scoped, tag = 'input window, operand 1']
    #allocation3 [shape = 'u8[32768]{0}', space=vmem, size = 0x8000, scoped, tag = 'output window, operand 0']
    loop: start=0, step=1, limit=4
    $region2: #{_lambda_.11} parent=1 // loop_pre_header
      _
    $region3: #{_lambda_.11} parent=1 // loop_header
      %s9 = sphi 0, %s13
      %p10 = scmp.ge.s32.totalorder %s9, 4
      %s16 = sphi 0, %s28
      %s17 = sphi 0, %s24
      %s18 = sphi 0, %s16
      %s19 = sphi 0, %s17
      %s20 = sphi 0, %s18
      %s21 = sphi 0, %s19
      %s31 = sphi 0, %s33
      %s34 = sphi 0, %s31
      %s35 = sphi 0, %s34
      %s51 = sphi 0, %s35
      %s57 = sphi 0, %s59
      %s60 = sphi 0, %s57
      %s61 = sphi 0, %s60
      %s77 = sphi 0, %s61
      %s83 = sphi 0, %s85
      %s86 = sphi 0, %s83
      %s87 = sphi 0, %s86
      %s103 = sphi 0, %s87
      %s111 = sphi 0, %s113
      %s114 = sphi 0, %s111
      %s115 = sphi 0, %s114
      %s131 = sphi 0, %s115
    $region4: #{_lambda_.11} parent=1 // loop_header_branch
      %12 = sbr.rel (%p10) target = $region8
    $region5: #{_lambda_.11} parent=1 // loop_body
      %s14 = ssub.s32 %s9, 1
      %s15 = ssub.s32 %s9, 2
      %s22 = sadd.s32 1, %s17
      %p23 = scmp.ge.s32.totalorder %s22, 2
      %s24 = scalar_select %p23, 0, %s22
      %s25 = sadd.s32 1, %s16
      %s26 = scalar_select %p23, %s25, %s16
      %p27 = scmp.ge.s32.totalorder %s26, 1
      %s28 = scalar_select %p27, 0, %s26
      %s29 = ssub.s32 %s16, %s28
      %p30 = scmp.eq.s32.totalorder %s29, 0
      %s32 = sadd.s32 %s31, 1
      %s33 = scalar_select %p30, %s31, %s32
      %p36 = pneg %p30
      %p37 = scmp.eq.s32.totalorder %s9, 1
      %p38 = por %p36, %p37
      %p39 = scmp.ne.s32.totalorder %s31, %s34
      %p40 = scmp.eq.s32.totalorder %s9, 0
      %p41 = por %p39, %p40
      %p42 = scmp.ne.s32.totalorder %s31, %s34
      %p43 = scmp.eq.s32.totalorder %s14, 1
      %p44 = por %p42, %p43
      %p45 = scmp.ne.s32.totalorder %s34, %s35
      %p46 = scmp.eq.s32.totalorder %s14, 0
      %p47 = por %p45, %p46
      %p48 = scmp.ne.s32.totalorder %s34, %s35
      %p49 = scmp.eq.s32.totalorder %s15, 1
      %p50 = por %p48, %p49
      %p52 = scmp.ne.s32.totalorder %s35, %s51
      %p53 = scmp.eq.s32.totalorder %s15, 0
      %p54 = por %p52, %p53
      %s55 = ssub.s32 %s17, %s24
      %p56 = scmp.eq.s32.totalorder %s55, 0
      %s58 = sadd.s32 %s57, 1
      %s59 = scalar_select %p56, %s57, %s58
      %p62 = pneg %p56
      %p63 = scmp.eq.s32.totalorder %s9, 1
      %p64 = por %p62, %p63
      %p65 = scmp.ne.s32.totalorder %s57, %s60
      %p66 = scmp.eq.s32.totalorder %s9, 0
      %p67 = por %p65, %p66
      %p68 = scmp.ne.s32.totalorder %s57, %s60
      %p69 = scmp.eq.s32.totalorder %s14, 1
      %p70 = por %p68, %p69
      %p71 = scmp.ne.s32.totalorder %s60, %s61
      %p72 = scmp.eq.s32.totalorder %s14, 0
      %p73 = por %p71, %p72
      %p74 = scmp.ne.s32.totalorder %s60, %s61
      %p75 = scmp.eq.s32.totalorder %s15, 1
      %p76 = por %p74, %p75
      %p78 = scmp.ne.s32.totalorder %s61, %s77
      %p79 = scmp.eq.s32.totalorder %s15, 0
      %p80 = por %p78, %p79
      %s81 = ssub.s32 %s17, %s24
      %p82 = scmp.eq.s32.totalorder %s81, 0
      %s84 = sadd.s32 %s83, 1
      %s85 = scalar_select %p82, %s83, %s84
      %p88 = pneg %p82
      %p89 = scmp.eq.s32.totalorder %s9, 1
      %p90 = por %p88, %p89
      %p91 = scmp.ne.s32.totalorder %s83, %s86
      %p92 = scmp.eq.s32.totalorder %s9, 0
      %p93 = por %p91, %p92
      %p94 = scmp.ne.s32.totalorder %s83, %s86
      %p95 = scmp.eq.s32.totalorder %s14, 1
      %p96 = por %p94, %p95
      %p97 = scmp.ne.s32.totalorder %s86, %s87
      %p98 = scmp.eq.s32.totalorder %s14, 0
      %p99 = por %p97, %p98
      %p100 = scmp.ne.s32.totalorder %s86, %s87
      %p101 = scmp.eq.s32.totalorder %s15, 1
      %p102 = por %p100, %p101
      %p104 = scmp.ne.s32.totalorder %s87, %s103
      %p105 = scmp.eq.s32.totalorder %s15, 0
      %p106 = por %p104, %p105
      %s107 = ssub.s32 %s16, %s28
      %s108 = ssub.s32 %s17, %s24
      %s109 = sor.u32 %s107, %s108
      %p110 = scmp.eq.s32.totalorder %s109, 0
      %s112 = sadd.s32 %s111, 1
      %s113 = scalar_select %p110, %s111, %s112
      %p116 = pneg %p110
      %p117 = scmp.eq.s32.totalorder %s9, 1
      %p118 = por %p116, %p117
      %p119 = scmp.ne.s32.totalorder %s111, %s114
      %p120 = scmp.eq.s32.totalorder %s9, 0
      %p121 = por %p119, %p120
      %p122 = scmp.ne.s32.totalorder %s111, %s114
      %p123 = scmp.eq.s32.totalorder %s14, 1
      %p124 = por %p122, %p123
      %p125 = scmp.ne.s32.totalorder %s114, %s115
      %p126 = scmp.eq.s32.totalorder %s14, 0
      %p127 = por %p125, %p126
      %p128 = scmp.ne.s32.totalorder %s114, %s115
      %p129 = scmp.eq.s32.totalorder %s15, 1
      %p130 = por %p128, %p129
      %p132 = scmp.ne.s32.totalorder %s115, %s131
      %p133 = scmp.eq.s32.totalorder %s15, 0
      %p134 = por %p132, %p133
      %p135 = scmp.le.s32.totalorder 1, %s9
      %p136 = scmp.lt.s32.totalorder %s9, 3
      %p137 = pnand %p135, %p136
      %p138 = pneg %p137
      // Predicated region
      $region9: #{_lambda_.11} parent=5 // pred_check
        _
      $region10: #{_lambda_.11} parent=5 // pred_check_branch
        %140 = sbr.rel (%p137) target = $region12
      $region11: #{_lambda_.11} parent=5 // pred_region
        %s141 = ssub.s32 %s9, 1
        // Predicated region
        $region13: #{_lambda_.11} parent=11 // pred_check
          %p142 = pneg %p47
        $region14: #{_lambda_.11} parent=11 // pred_check_branch
          %144 = sbr.rel (%p142) target = $region16
        $region15: #{_lambda_.11} parent=11 // pred_region
          %s145 = smul.u32 2, %s18
          %p146 = scmp.lt.s32.totalorder %s145, 1
          %s147 = scalar_select %p146, %s145, 1
          %s148 = smul.addr %s147, 12
          %s149 = smul.addr %s148, 4
          %s150 = scalar_lea.vmem %s0, %s149
          %s151 = smul.u32 2, %s18
        $region16: #{_lambda_.11} parent=11 // pred_fallthru
          _
      $region12: #{_lambda_.11} parent=5 // pred_fallthru
        _
      %p152 = scmp.lt.s32.totalorder %s9, 2
      // Predicated region
      $region17: #{_lambda_.11} parent=5 // pred_check
        %p153 = pneg %p152
      $region18: #{_lambda_.11} parent=5 // pred_check_branch
        %155 = sbr.rel (%p153) target = $region20
      $region19: #{_lambda_.11} parent=5 // pred_region
        // Predicated region
        $region21: #{_lambda_.11} parent=19 // pred_check
          %p156 = pneg %p67
        $region22: #{_lambda_.11} parent=19 // pred_check_branch
          %158 = sbr.rel (%p156) target = $region24
        $region23: #{_lambda_.11} parent=19 // pred_region
          %s159 = sand.u32 %s57, 1
          %s160 = sand.u32 %s57, 1
          %s161 = smul.addr %s160, 1536
          %s162 = scalar_lea.vmem [#allocation2], %s161
          %s163 = smul.u32 2, %s17
          %s164 = smul.addr %s163, 4
          %s165 = scalar_lea.vmem %s1, %s164
          // Predicated region
          $region25: #{_lambda_.11} parent=23 // pred_check
            _
          $region26: #{_lambda_.11} parent=23 // pred_check_branch
            %167 = sbr.rel (0) target = $region28
          $region27: #{_lambda_.11} parent=23 // pred_region
            // Predicated region
            $region29: #{_lambda_.11} parent=27 // pred_check
              _
            $region30: #{_lambda_.11} parent=27 // pred_check_branch
              %169 = sbr.rel (0) target = $region32
            $region31: #{_lambda_.11} parent=27 // pred_region
              // Predicated region
              $region44: #{_lambda_.11} parent=31 // pred_check
                _
              $region45: #{_lambda_.11} parent=31 // pred_check_branch
                %566 = sbr.rel (0) target = $region47
              $region46: #{_lambda_.11} parent=31 // pred_region
                loop: start=0, step=1, limit=1
                $region48: #{_lambda_.11} parent=46 // loop_pre_header
                  _
                $region49: #{_lambda_.11} parent=46 // loop_header
                  %s568 = sphi 0, %s572
                  %p569 = scmp.ge.s32.totalorder %s568, 1
                  %s573 = sphi %s165, %s165
                  %s574 = sphi %s162, %s162
                $region50: #{_lambda_.11} parent=46 // loop_header_branch
                  %571 = sbr.rel (%p569) target = $region54
                $region51: #{_lambda_.11} parent=46 // loop_body
                  %v575 = vld [vmem:[%s573] sm:$0xff]
                  %576 = vst [vmem:[%s574] sm:$0xff] %v575
                  %v577 = vld [vmem:[%s573 + $0x10] sm:$0xff]
                  %578 = vst [vmem:[%s574 + $0x8] sm:$0xff] %v577
                  %v579 = vld [vmem:[%s573 + $0x20] sm:$0xff]
                  %580 = vst [vmem:[%s574 + $0x10] sm:$0xff] %v579
                  %v581 = vld [vmem:[%s573 + $0x30] sm:$0xff]
                  %582 = vst [vmem:[%s574 + $0x18] sm:$0xff] %v581
                  %v583 = vld [vmem:[%s573 + $0x40] sm:$0xff]
                  %584 = vst [vmem:[%s574 + $0x20] sm:$0xff] %v583
                  %v585 = vld [vmem:[%s573 + $0x50] sm:$0xff]
                  %586 = vst [vmem:[%s574 + $0x28] sm:$0xff] %v585
                  %v587 = vld [vmem:[%s573 + $0x60] sm:$0xff]
                  %588 = vst [vmem:[%s574 + $0x30] sm:$0xff] %v587
                  %v589 = vld [vmem:[%s573 + $0x70] sm:$0xff]
                  %590 = vst [vmem:[%s574 + $0x38] sm:$0xff] %v589
                  %v591 = vld [vmem:[%s573 + $0x80] sm:$0xff]
                  %592 = vst [vmem:[%s574 + $0x40] sm:$0xff] %v591
                  %v593 = vld [vmem:[%s573 + $0x90] sm:$0xff]
                  %594 = vst [vmem:[%s574 + $0x48] sm:$0xff] %v593
                  %v595 = vld [vmem:[%s573 + $0xa0] sm:$0xff]
                  %596 = vst [vmem:[%s574 + $0x50] sm:$0xff] %v595
                  %v597 = vld [vmem:[%s573 + $0xb0] sm:$0xff]
                  %598 = vst [vmem:[%s574 + $0x58] sm:$0xff] %v597
                  %v599 = vld [vmem:[%s573 + $0xc0] sm:$0xff]
                  %600 = vst [vmem:[%s574 + $0x60] sm:$0xff] %v599
                  %v601 = vld [vmem:[%s573 + $0xd0] sm:$0xff]
                  %602 = vst [vmem:[%s574 + $0x68] sm:$0xff] %v601
                  %v603 = vld [vmem:[%s573 + $0xe0] sm:$0xff]
                  %604 = vst [vmem:[%s574 + $0x70] sm:$0xff] %v603
                  %v605 = vld [vmem:[%s573 + $0xf0] sm:$0xff]
                  %606 = vst [vmem:[%s574 + $0x78] sm:$0xff] %v605
                  %v607 = vld [vmem:[%s573 + $0x100] sm:$0xff]
                  %608 = vst [vmem:[%s574 + $0x80] sm:$0xff] %v607
                  %v609 = vld [vmem:[%s573 + $0x110] sm:$0xff]
                  %610 = vst [vmem:[%s574 + $0x88] sm:$0xff] %v609
                  %v611 = vld [vmem:[%s573 + $0x120] sm:$0xff]
                  %612 = vst [vmem:[%s574 + $0x90] sm:$0xff] %v611
                  %v613 = vld [vmem:[%s573 + $0x130] sm:$0xff]
                  %614 = vst [vmem:[%s574 + $0x98] sm:$0xff] %v613
                  %v615 = vld [vmem:[%s573 + $0x140] sm:$0xff]
                  %616 = vst [vmem:[%s574 + $0xa0] sm:$0xff] %v615
                  %v617 = vld [vmem:[%s573 + $0x150] sm:$0xff]
                  %618 = vst [vmem:[%s574 + $0xa8] sm:$0xff] %v617
                  %v619 = vld [vmem:[%s573 + $0x160] sm:$0xff]
                  %620 = vst [vmem:[%s574 + $0xb0] sm:$0xff] %v619
                  %v621 = vld [vmem:[%s573 + $0x170] sm:$0xff]
                  %622 = vst [vmem:[%s574 + $0xb8] sm:$0xff] %v621
                  %v623 = vld [vmem:[%s573 + $0x180] sm:$0xff]
                  %624 = vst [vmem:[%s574 + $0xc0] sm:$0xff] %v623
                  %v625 = vld [vmem:[%s573 + $0x190] sm:$0xff]
                  %626 = vst [vmem:[%s574 + $0xc8] sm:$0xff] %v625
                  %v627 = vld [vmem:[%s573 + $0x1a0] sm:$0xff]
                  %628 = vst [vmem:[%s574 + $0xd0] sm:$0xff] %v627
                  %v629 = vld [vmem:[%s573 + $0x1b0] sm:$0xff]
                  %630 = vst [vmem:[%s574 + $0xd8] sm:$0xff] %v629
                  %v631 = vld [vmem:[%s573 + $0x1c0] sm:$0xff]
                  %632 = vst [vmem:[%s574 + $0xe0] sm:$0xff] %v631
                  %v633 = vld [vmem:[%s573 + $0x1d0] sm:$0xff]
                  %634 = vst [vmem:[%s574 + $0xe8] sm:$0xff] %v633
                  %v635 = vld [vmem:[%s573 + $0x1e0] sm:$0xff]
                  %636 = vst [vmem:[%s574 + $0xf0] sm:$0xff] %v635
                  %v637 = vld [vmem:[%s573 + $0x1f0] sm:$0xff]
                  %638 = vst [vmem:[%s574 + $0xf8] sm:$0xff] %v637
                  %v639 = vld [vmem:[%s573 + $0x200] sm:$0xff]
                  %640 = vst [vmem:[%s574 + $0x100] sm:$0xff] %v639
                  %v641 = vld [vmem:[%s573 + $0x210] sm:$0xff]
                  %642 = vst [vmem:[%s574 + $0x108] sm:$0xff] %v641
                  %v643 = vld [vmem:[%s573 + $0x220] sm:$0xff]
                  %644 = vst [vmem:[%s574 + $0x110] sm:$0xff] %v643
                  %v645 = vld [vmem:[%s573 + $0x230] sm:$0xff]
                  %646 = vst [vmem:[%s574 + $0x118] sm:$0xff] %v645
                  %v647 = vld [vmem:[%s573 + $0x240] sm:$0xff]
                  %648 = vst [vmem:[%s574 + $0x120] sm:$0xff] %v647
                  %v649 = vld [vmem:[%s573 + $0x250] sm:$0xff]
                  %650 = vst [vmem:[%s574 + $0x128] sm:$0xff] %v649
                  %v651 = vld [vmem:[%s573 + $0x260] sm:$0xff]
                  %652 = vst [vmem:[%s574 + $0x130] sm:$0xff] %v651
                  %v653 = vld [vmem:[%s573 + $0x270] sm:$0xff]
                  %654 = vst [vmem:[%s574 + $0x138] sm:$0xff] %v653
                  %v655 = vld [vmem:[%s573 + $0x280] sm:$0xff]
                  %656 = vst [vmem:[%s574 + $0x140] sm:$0xff] %v655
                  %v657 = vld [vmem:[%s573 + $0x290] sm:$0xff]
                  %658 = vst [vmem:[%s574 + $0x148] sm:$0xff] %v657
                  %v659 = vld [vmem:[%s573 + $0x2a0] sm:$0xff]
                  %660 = vst [vmem:[%s574 + $0x150] sm:$0xff] %v659
                  %v661 = vld [vmem:[%s573 + $0x2b0] sm:$0xff]
                  %662 = vst [vmem:[%s574 + $0x158] sm:$0xff] %v661
                  %v663 = vld [vmem:[%s573 + $0x2c0] sm:$0xff]
                  %664 = vst [vmem:[%s574 + $0x160] sm:$0xff] %v663
                  %v665 = vld [vmem:[%s573 + $0x2d0] sm:$0xff]
                  %666 = vst [vmem:[%s574 + $0x168] sm:$0xff] %v665
                  %v667 = vld [vmem:[%s573 + $0x2e0] sm:$0xff]
                  %668 = vst [vmem:[%s574 + $0x170] sm:$0xff] %v667
                  %v669 = vld [vmem:[%s573 + $0x2f0] sm:$0xff]
                  %670 = vst [vmem:[%s574 + $0x178] sm:$0xff] %v669
                  %v671 = vld [vmem:[%s573 + $0x300] sm:$0xff]
                  %672 = vst [vmem:[%s574 + $0x180] sm:$0xff] %v671
                  %v673 = vld [vmem:[%s573 + $0x310] sm:$0xff]
                  %674 = vst [vmem:[%s574 + $0x188] sm:$0xff] %v673
                  %v675 = vld [vmem:[%s573 + $0x320] sm:$0xff]
                  %676 = vst [vmem:[%s574 + $0x190] sm:$0xff] %v675
                  %v677 = vld [vmem:[%s573 + $0x330] sm:$0xff]
                  %678 = vst [vmem:[%s574 + $0x198] sm:$0xff] %v677
                  %v679 = vld [vmem:[%s573 + $0x340] sm:$0xff]
                  %680 = vst [vmem:[%s574 + $0x1a0] sm:$0xff] %v679
                  %v681 = vld [vmem:[%s573 + $0x350] sm:$0xff]
                  %682 = vst [vmem:[%s574 + $0x1a8] sm:$0xff] %v681
                  %v683 = vld [vmem:[%s573 + $0x360] sm:$0xff]
                  %684 = vst [vmem:[%s574 + $0x1b0] sm:$0xff] %v683
                  %v685 = vld [vmem:[%s573 + $0x370] sm:$0xff]
                  %686 = vst [vmem:[%s574 + $0x1b8] sm:$0xff] %v685
                  %v687 = vld [vmem:[%s573 + $0x380] sm:$0xff]
                  %688 = vst [vmem:[%s574 + $0x1c0] sm:$0xff] %v687
                  %v689 = vld [vmem:[%s573 + $0x390] sm:$0xff]
                  %690 = vst [vmem:[%s574 + $0x1c8] sm:$0xff] %v689
                  %v691 = vld [vmem:[%s573 + $0x3a0] sm:$0xff]
                  %692 = vst [vmem:[%s574 + $0x1d0] sm:$0xff] %v691
                  %v693 = vld [vmem:[%s573 + $0x3b0] sm:$0xff]
                  %694 = vst [vmem:[%s574 + $0x1d8] sm:$0xff] %v693
                  %v695 = vld [vmem:[%s573 + $0x3c0] sm:$0xff]
                  %696 = vst [vmem:[%s574 + $0x1e0] sm:$0xff] %v695
                  %v697 = vld [vmem:[%s573 + $0x3d0] sm:$0xff]
                  %698 = vst [vmem:[%s574 + $0x1e8] sm:$0xff] %v697
                  %v699 = vld [vmem:[%s573 + $0x3e0] sm:$0xff]
                  %700 = vst [vmem:[%s574 + $0x1f0] sm:$0xff] %v699
                  %v701 = vld [vmem:[%s573 + $0x3f0] sm:$0xff]
                  %702 = vst [vmem:[%s574 + $0x1f8] sm:$0xff] %v701
                  %v703 = vld [vmem:[%s573 + $0x400] sm:$0xff]
                  %704 = vst [vmem:[%s574 + $0x200] sm:$0xff] %v703
                  %v705 = vld [vmem:[%s573 + $0x410] sm:$0xff]
                  %706 = vst [vmem:[%s574 + $0x208] sm:$0xff] %v705
                  %v707 = vld [vmem:[%s573 + $0x420] sm:$0xff]
                  %708 = vst [vmem:[%s574 + $0x210] sm:$0xff] %v707
                  %v709 = vld [vmem:[%s573 + $0x430] sm:$0xff]
                  %710 = vst [vmem:[%s574 + $0x218] sm:$0xff] %v709
                  %v711 = vld [vmem:[%s573 + $0x440] sm:$0xff]
                  %712 = vst [vmem:[%s574 + $0x220] sm:$0xff] %v711
                  %v713 = vld [vmem:[%s573 + $0x450] sm:$0xff]
                  %714 = vst [vmem:[%s574 + $0x228] sm:$0xff] %v713
                  %v715 = vld [vmem:[%s573 + $0x460] sm:$0xff]
                  %716 = vst [vmem:[%s574 + $0x230] sm:$0xff] %v715
                  %v717 = vld [vmem:[%s573 + $0x470] sm:$0xff]
                  %718 = vst [vmem:[%s574 + $0x238] sm:$0xff] %v717
                  %v719 = vld [vmem:[%s573 + $0x480] sm:$0xff]
                  %720 = vst [vmem:[%s574 + $0x240] sm:$0xff] %v719
                  %v721 = vld [vmem:[%s573 + $0x490] sm:$0xff]
                  %722 = vst [vmem:[%s574 + $0x248] sm:$0xff] %v721
                  %v723 = vld [vmem:[%s573 + $0x4a0] sm:$0xff]
                  %724 = vst [vmem:[%s574 + $0x250] sm:$0xff] %v723
                  %v725 = vld [vmem:[%s573 + $0x4b0] sm:$0xff]
                  %726 = vst [vmem:[%s574 + $0x258] sm:$0xff] %v725
                  %v727 = vld [vmem:[%s573 + $0x4c0] sm:$0xff]
                  %728 = vst [vmem:[%s574 + $0x260] sm:$0xff] %v727
                  %v729 = vld [vmem:[%s573 + $0x4d0] sm:$0xff]
                  %730 = vst [vmem:[%s574 + $0x268] sm:$0xff] %v729
                  %v731 = vld [vmem:[%s573 + $0x4e0] sm:$0xff]
                  %732 = vst [vmem:[%s574 + $0x270] sm:$0xff] %v731
                  %v733 = vld [vmem:[%s573 + $0x4f0] sm:$0xff]
                  %734 = vst [vmem:[%s574 + $0x278] sm:$0xff] %v733
                  %v735 = vld [vmem:[%s573 + $0x500] sm:$0xff]
                  %736 = vst [vmem:[%s574 + $0x280] sm:$0xff] %v735
                  %v737 = vld [vmem:[%s573 + $0x510] sm:$0xff]
                  %738 = vst [vmem:[%s574 + $0x288] sm:$0xff] %v737
                  %v739 = vld [vmem:[%s573 + $0x520] sm:$0xff]
                  %740 = vst [vmem:[%s574 + $0x290] sm:$0xff] %v739
                  %v741 = vld [vmem:[%s573 + $0x530] sm:$0xff]
                  %742 = vst [vmem:[%s574 + $0x298] sm:$0xff] %v741
                  %v743 = vld [vmem:[%s573 + $0x540] sm:$0xff]
                  %744 = vst [vmem:[%s574 + $0x2a0] sm:$0xff] %v743
                  %v745 = vld [vmem:[%s573 + $0x550] sm:$0xff]
                  %746 = vst [vmem:[%s574 + $0x2a8] sm:$0xff] %v745
                  %v747 = vld [vmem:[%s573 + $0x560] sm:$0xff]
                  %748 = vst [vmem:[%s574 + $0x2b0] sm:$0xff] %v747
                  %v749 = vld [vmem:[%s573 + $0x570] sm:$0xff]
                  %750 = vst [vmem:[%s574 + $0x2b8] sm:$0xff] %v749
                  %v751 = vld [vmem:[%s573 + $0x580] sm:$0xff]
                  %752 = vst [vmem:[%s574 + $0x2c0] sm:$0xff] %v751
                  %v753 = vld [vmem:[%s573 + $0x590] sm:$0xff]
                  %754 = vst [vmem:[%s574 + $0x2c8] sm:$0xff] %v753
                  %v755 = vld [vmem:[%s573 + $0x5a0] sm:$0xff]
                  %756 = vst [vmem:[%s574 + $0x2d0] sm:$0xff] %v755
                  %v757 = vld [vmem:[%s573 + $0x5b0] sm:$0xff]
                  %758 = vst [vmem:[%s574 + $0x2d8] sm:$0xff] %v757
                  %v759 = vld [vmem:[%s573 + $0x5c0] sm:$0xff]
                  %760 = vst [vmem:[%s574 + $0x2e0] sm:$0xff] %v759
                  %v761 = vld [vmem:[%s573 + $0x5d0] sm:$0xff]
                  %762 = vst [vmem:[%s574 + $0x2e8] sm:$0xff] %v761
                  %v763 = vld [vmem:[%s573 + $0x5e0] sm:$0xff]
                  %764 = vst [vmem:[%s574 + $0x2f0] sm:$0xff] %v763
                  %v765 = vld [vmem:[%s573 + $0x5f0] sm:$0xff]
                  %766 = vst [vmem:[%s574 + $0x2f8] sm:$0xff] %v765
                  %v767 = vld [vmem:[%s573 + $0x600] sm:$0xff]
                  %768 = vst [vmem:[%s574 + $0x300] sm:$0xff] %v767
                  %v769 = vld [vmem:[%s573 + $0x610] sm:$0xff]
                  %770 = vst [vmem:[%s574 + $0x308] sm:$0xff] %v769
                  %v771 = vld [vmem:[%s573 + $0x620] sm:$0xff]
                  %772 = vst [vmem:[%s574 + $0x310] sm:$0xff] %v771
                  %v773 = vld [vmem:[%s573 + $0x630] sm:$0xff]
                  %774 = vst [vmem:[%s574 + $0x318] sm:$0xff] %v773
                  %v775 = vld [vmem:[%s573 + $0x640] sm:$0xff]
                  %776 = vst [vmem:[%s574 + $0x320] sm:$0xff] %v775
                  %v777 = vld [vmem:[%s573 + $0x650] sm:$0xff]
                  %778 = vst [vmem:[%s574 + $0x328] sm:$0xff] %v777
                  %v779 = vld [vmem:[%s573 + $0x660] sm:$0xff]
                  %780 = vst [vmem:[%s574 + $0x330] sm:$0xff] %v779
                  %v781 = vld [vmem:[%s573 + $0x670] sm:$0xff]
                  %782 = vst [vmem:[%s574 + $0x338] sm:$0xff] %v781
                  %v783 = vld [vmem:[%s573 + $0x680] sm:$0xff]
                  %784 = vst [vmem:[%s574 + $0x340] sm:$0xff] %v783
                  %v785 = vld [vmem:[%s573 + $0x690] sm:$0xff]
                  %786 = vst [vmem:[%s574 + $0x348] sm:$0xff] %v785
                  %v787 = vld [vmem:[%s573 + $0x6a0] sm:$0xff]
                  %788 = vst [vmem:[%s574 + $0x350] sm:$0xff] %v787
                  %v789 = vld [vmem:[%s573 + $0x6b0] sm:$0xff]
                  %790 = vst [vmem:[%s574 + $0x358] sm:$0xff] %v789
                  %v791 = vld [vmem:[%s573 + $0x6c0] sm:$0xff]
                  %792 = vst [vmem:[%s574 + $0x360] sm:$0xff] %v791
                  %v793 = vld [vmem:[%s573 + $0x6d0] sm:$0xff]
                  %794 = vst [vmem:[%s574 + $0x368] sm:$0xff] %v793
                  %v795 = vld [vmem:[%s573 + $0x6e0] sm:$0xff]
                  %796 = vst [vmem:[%s574 + $0x370] sm:$0xff] %v795
                  %v797 = vld [vmem:[%s573 + $0x6f0] sm:$0xff]
                  %798 = vst [vmem:[%s574 + $0x378] sm:$0xff] %v797
                  %v799 = vld [vmem:[%s573 + $0x700] sm:$0xff]
                  %800 = vst [vmem:[%s574 + $0x380] sm:$0xff] %v799
                  %v801 = vld [vmem:[%s573 + $0x710] sm:$0xff]
                  %802 = vst [vmem:[%s574 + $0x388] sm:$0xff] %v801
                  %v803 = vld [vmem:[%s573 + $0x720] sm:$0xff]
                  %804 = vst [vmem:[%s574 + $0x390] sm:$0xff] %v803
                  %v805 = vld [vmem:[%s573 + $0x730] sm:$0xff]
                  %806 = vst [vmem:[%s574 + $0x398] sm:$0xff] %v805
                  %v807 = vld [vmem:[%s573 + $0x740] sm:$0xff]
                  %808 = vst [vmem:[%s574 + $0x3a0] sm:$0xff] %v807
                  %v809 = vld [vmem:[%s573 + $0x750] sm:$0xff]
                  %810 = vst [vmem:[%s574 + $0x3a8] sm:$0xff] %v809
                  %v811 = vld [vmem:[%s573 + $0x760] sm:$0xff]
                  %812 = vst [vmem:[%s574 + $0x3b0] sm:$0xff] %v811
                  %v813 = vld [vmem:[%s573 + $0x770] sm:$0xff]
                  %814 = vst [vmem:[%s574 + $0x3b8] sm:$0xff] %v813
                  %v815 = vld [vmem:[%s573 + $0x780] sm:$0xff]
                  %816 = vst [vmem:[%s574 + $0x3c0] sm:$0xff] %v815
                  %v817 = vld [vmem:[%s573 + $0x790] sm:$0xff]
                  %818 = vst [vmem:[%s574 + $0x3c8] sm:$0xff] %v817
                  %v819 = vld [vmem:[%s573 + $0x7a0] sm:$0xff]
                  %820 = vst [vmem:[%s574 + $0x3d0] sm:$0xff] %v819
                  %v821 = vld [vmem:[%s573 + $0x7b0] sm:$0xff]
                  %822 = vst [vmem:[%s574 + $0x3d8] sm:$0xff] %v821
                  %v823 = vld [vmem:[%s573 + $0x7c0] sm:$0xff]
                  %824 = vst [vmem:[%s574 + $0x3e0] sm:$0xff] %v823
                  %v825 = vld [vmem:[%s573 + $0x7d0] sm:$0xff]
                  %826 = vst [vmem:[%s574 + $0x3e8] sm:$0xff] %v825
                  %v827 = vld [vmem:[%s573 + $0x7e0] sm:$0xff]
                  %828 = vst [vmem:[%s574 + $0x3f0] sm:$0xff] %v827
                  %v829 = vld [vmem:[%s573 + $0x7f0] sm:$0xff]
                  %830 = vst [vmem:[%s574 + $0x3f8] sm:$0xff] %v829
                  %v831 = vld [vmem:[%s573 + $0x800] sm:$0xff]
                  %832 = vst [vmem:[%s574 + $0x400] sm:$0xff] %v831
                  %v833 = vld [vmem:[%s573 + $0x810] sm:$0xff]
                  %834 = vst [vmem:[%s574 + $0x408] sm:$0xff] %v833
                  %v835 = vld [vmem:[%s573 + $0x820] sm:$0xff]
                  %836 = vst [vmem:[%s574 + $0x410] sm:$0xff] %v835
                  %v837 = vld [vmem:[%s573 + $0x830] sm:$0xff]
                  %838 = vst [vmem:[%s574 + $0x418] sm:$0xff] %v837
                  %v839 = vld [vmem:[%s573 + $0x840] sm:$0xff]
                  %840 = vst [vmem:[%s574 + $0x420] sm:$0xff] %v839
                  %v841 = vld [vmem:[%s573 + $0x850] sm:$0xff]
                  %842 = vst [vmem:[%s574 + $0x428] sm:$0xff] %v841
                  %v843 = vld [vmem:[%s573 + $0x860] sm:$0xff]
                  %844 = vst [vmem:[%s574 + $0x430] sm:$0xff] %v843
                  %v845 = vld [vmem:[%s573 + $0x870] sm:$0xff]
                  %846 = vst [vmem:[%s574 + $0x438] sm:$0xff] %v845
                  %v847 = vld [vmem:[%s573 + $0x880] sm:$0xff]
                  %848 = vst [vmem:[%s574 + $0x440] sm:$0xff] %v847
                  %v849 = vld [vmem:[%s573 + $0x890] sm:$0xff]
                  %850 = vst [vmem:[%s574 + $0x448] sm:$0xff] %v849
                  %v851 = vld [vmem:[%s573 + $0x8a0] sm:$0xff]
                  %852 = vst [vmem:[%s574 + $0x450] sm:$0xff] %v851
                  %v853 = vld [vmem:[%s573 + $0x8b0] sm:$0xff]
                  %854 = vst [vmem:[%s574 + $0x458] sm:$0xff] %v853
                  %v855 = vld [vmem:[%s573 + $0x8c0] sm:$0xff]
                  %856 = vst [vmem:[%s574 + $0x460] sm:$0xff] %v855
                  %v857 = vld [vmem:[%s573 + $0x8d0] sm:$0xff]
                  %858 = vst [vmem:[%s574 + $0x468] sm:$0xff] %v857
                  %v859 = vld [vmem:[%s573 + $0x8e0] sm:$0xff]
                  %860 = vst [vmem:[%s574 + $0x470] sm:$0xff] %v859
                  %v861 = vld [vmem:[%s573 + $0x8f0] sm:$0xff]
                  %862 = vst [vmem:[%s574 + $0x478] sm:$0xff] %v861
                  %v863 = vld [vmem:[%s573 + $0x900] sm:$0xff]
                  %864 = vst [vmem:[%s574 + $0x480] sm:$0xff] %v863
                  %v865 = vld [vmem:[%s573 + $0x910] sm:$0xff]
                  %866 = vst [vmem:[%s574 + $0x488] sm:$0xff] %v865
                  %v867 = vld [vmem:[%s573 + $0x920] sm:$0xff]
                  %868 = vst [vmem:[%s574 + $0x490] sm:$0xff] %v867
                  %v869 = vld [vmem:[%s573 + $0x930] sm:$0xff]
                  %870 = vst [vmem:[%s574 + $0x498] sm:$0xff] %v869
                  %v871 = vld [vmem:[%s573 + $0x940] sm:$0xff]
                  %872 = vst [vmem:[%s574 + $0x4a0] sm:$0xff] %v871
                  %v873 = vld [vmem:[%s573 + $0x950] sm:$0xff]
                  %874 = vst [vmem:[%s574 + $0x4a8] sm:$0xff] %v873
                  %v875 = vld [vmem:[%s573 + $0x960] sm:$0xff]
                  %876 = vst [vmem:[%s574 + $0x4b0] sm:$0xff] %v875
                  %v877 = vld [vmem:[%s573 + $0x970] sm:$0xff]
                  %878 = vst [vmem:[%s574 + $0x4b8] sm:$0xff] %v877
                  %v879 = vld [vmem:[%s573 + $0x980] sm:$0xff]
                  %880 = vst [vmem:[%s574 + $0x4c0] sm:$0xff] %v879
                  %v881 = vld [vmem:[%s573 + $0x990] sm:$0xff]
                  %882 = vst [vmem:[%s574 + $0x4c8] sm:$0xff] %v881
                  %v883 = vld [vmem:[%s573 + $0x9a0] sm:$0xff]
                  %884 = vst [vmem:[%s574 + $0x4d0] sm:$0xff] %v883
                  %v885 = vld [vmem:[%s573 + $0x9b0] sm:$0xff]
                  %886 = vst [vmem:[%s574 + $0x4d8] sm:$0xff] %v885
                  %v887 = vld [vmem:[%s573 + $0x9c0] sm:$0xff]
                  %888 = vst [vmem:[%s574 + $0x4e0] sm:$0xff] %v887
                  %v889 = vld [vmem:[%s573 + $0x9d0] sm:$0xff]
                  %890 = vst [vmem:[%s574 + $0x4e8] sm:$0xff] %v889
                  %v891 = vld [vmem:[%s573 + $0x9e0] sm:$0xff]
                  %892 = vst [vmem:[%s574 + $0x4f0] sm:$0xff] %v891
                  %v893 = vld [vmem:[%s573 + $0x9f0] sm:$0xff]
                  %894 = vst [vmem:[%s574 + $0x4f8] sm:$0xff] %v893
                  %v895 = vld [vmem:[%s573 + $0xa00] sm:$0xff]
                  %896 = vst [vmem:[%s574 + $0x500] sm:$0xff] %v895
                  %v897 = vld [vmem:[%s573 + $0xa10] sm:$0xff]
                  %898 = vst [vmem:[%s574 + $0x508] sm:$0xff] %v897
                  %v899 = vld [vmem:[%s573 + $0xa20] sm:$0xff]
                  %900 = vst [vmem:[%s574 + $0x510] sm:$0xff] %v899
                  %v901 = vld [vmem:[%s573 + $0xa30] sm:$0xff]
                  %902 = vst [vmem:[%s574 + $0x518] sm:$0xff] %v901
                  %v903 = vld [vmem:[%s573 + $0xa40] sm:$0xff]
                  %904 = vst [vmem:[%s574 + $0x520] sm:$0xff] %v903
                  %v905 = vld [vmem:[%s573 + $0xa50] sm:$0xff]
                  %906 = vst [vmem:[%s574 + $0x528] sm:$0xff] %v905
                  %v907 = vld [vmem:[%s573 + $0xa60] sm:$0xff]
                  %908 = vst [vmem:[%s574 + $0x530] sm:$0xff] %v907
                  %v909 = vld [vmem:[%s573 + $0xa70] sm:$0xff]
                  %910 = vst [vmem:[%s574 + $0x538] sm:$0xff] %v909
                  %v911 = vld [vmem:[%s573 + $0xa80] sm:$0xff]
                  %912 = vst [vmem:[%s574 + $0x540] sm:$0xff] %v911
                  %v913 = vld [vmem:[%s573 + $0xa90] sm:$0xff]
                  %914 = vst [vmem:[%s574 + $0x548] sm:$0xff] %v913
                  %v915 = vld [vmem:[%s573 + $0xaa0] sm:$0xff]
                  %916 = vst [vmem:[%s574 + $0x550] sm:$0xff] %v915
                  %v917 = vld [vmem:[%s573 + $0xab0] sm:$0xff]
                  %918 = vst [vmem:[%s574 + $0x558] sm:$0xff] %v917
                  %v919 = vld [vmem:[%s573 + $0xac0] sm:$0xff]
                  %920 = vst [vmem:[%s574 + $0x560] sm:$0xff] %v919
                  %v921 = vld [vmem:[%s573 + $0xad0] sm:$0xff]
                  %922 = vst [vmem:[%s574 + $0x568] sm:$0xff] %v921
                  %v923 = vld [vmem:[%s573 + $0xae0] sm:$0xff]
                  %924 = vst [vmem:[%s574 + $0x570] sm:$0xff] %v923
                  %v925 = vld [vmem:[%s573 + $0xaf0] sm:$0xff]
                  %926 = vst [vmem:[%s574 + $0x578] sm:$0xff] %v925
                  %v927 = vld [vmem:[%s573 + $0xb00] sm:$0xff]
                  %928 = vst [vmem:[%s574 + $0x580] sm:$0xff] %v927
                  %v929 = vld [vmem:[%s573 + $0xb10] sm:$0xff]
                  %930 = vst [vmem:[%s574 + $0x588] sm:$0xff] %v929
                  %v931 = vld [vmem:[%s573 + $0xb20] sm:$0xff]
                  %932 = vst [vmem:[%s574 + $0x590] sm:$0xff] %v931
                  %v933 = vld [vmem:[%s573 + $0xb30] sm:$0xff]
                  %934 = vst [vmem:[%s574 + $0x598] sm:$0xff] %v933
                  %v935 = vld [vmem:[%s573 + $0xb40] sm:$0xff]
                  %936 = vst [vmem:[%s574 + $0x5a0] sm:$0xff] %v935
                  %v937 = vld [vmem:[%s573 + $0xb50] sm:$0xff]
                  %938 = vst [vmem:[%s574 + $0x5a8] sm:$0xff] %v937
                  %v939 = vld [vmem:[%s573 + $0xb60] sm:$0xff]
                  %940 = vst [vmem:[%s574 + $0x5b0] sm:$0xff] %v939
                  %v941 = vld [vmem:[%s573 + $0xb70] sm:$0xff]
                  %942 = vst [vmem:[%s574 + $0x5b8] sm:$0xff] %v941
                  %v943 = vld [vmem:[%s573 + $0xb80] sm:$0xff]
                  %944 = vst [vmem:[%s574 + $0x5c0] sm:$0xff] %v943
                  %v945 = vld [vmem:[%s573 + $0xb90] sm:$0xff]
                  %946 = vst [vmem:[%s574 + $0x5c8] sm:$0xff] %v945
                  %v947 = vld [vmem:[%s573 + $0xba0] sm:$0xff]
                  %948 = vst [vmem:[%s574 + $0x5d0] sm:$0xff] %v947
                  %v949 = vld [vmem:[%s573 + $0xbb0] sm:$0xff]
                  %950 = vst [vmem:[%s574 + $0x5d8] sm:$0xff] %v949
                  %v951 = vld [vmem:[%s573 + $0xbc0] sm:$0xff]
                  %952 = vst [vmem:[%s574 + $0x5e0] sm:$0xff] %v951
                  %v953 = vld [vmem:[%s573 + $0xbd0] sm:$0xff]
                  %954 = vst [vmem:[%s574 + $0x5e8] sm:$0xff] %v953
                  %v955 = vld [vmem:[%s573 + $0xbe0] sm:$0xff]
                  %956 = vst [vmem:[%s574 + $0x5f0] sm:$0xff] %v955
                  %v957 = vld [vmem:[%s573 + $0xbf0] sm:$0xff]
                  %958 = vst [vmem:[%s574 + $0x5f8] sm:$0xff] %v957
                $region52: #{_lambda_.11} parent=46 // loop_footer
                  %s572 = sadd.s32 1, %s568
                $region53: #{_lambda_.11} parent=46 // loop_footer_branch
                  %567 = sbr.rel target = $region49
                $region54: #{_lambda_.11} parent=46 // loop_exit
                  _
              $region47: #{_lambda_.11} parent=31 // pred_fallthru
                _
              // Predicated region
              $region55: #{_lambda_.11} parent=31 // pred_check
                _
              $region56: #{_lambda_.11} parent=31 // pred_check_branch
                %960 = sbr.rel target = $region58
              $region57: #{_lambda_.11} parent=31 // pred_region
                _
              $region58: #{_lambda_.11} parent=31 // pred_fallthru
                _
            $region32: #{_lambda_.11} parent=27 // pred_fallthru
              _
            // Predicated region
            $region33: #{_lambda_.11} parent=27 // pred_check
              _
            $region34: #{_lambda_.11} parent=27 // pred_check_branch
              %171 = sbr.rel target = $region36
            $region35: #{_lambda_.11} parent=27 // pred_region
              loop: start=0, step=1, limit=1
              $region37: #{_lambda_.11} parent=35 // loop_pre_header
                _
              $region38: #{_lambda_.11} parent=35 // loop_header
                %s174 = sphi 0, %s178
                %p175 = scmp.ge.s32.totalorder %s174, 1
                %s179 = sphi %s165, %s165
                %s180 = sphi %s162, %s162
              $region39: #{_lambda_.11} parent=35 // loop_header_branch
                %177 = sbr.rel (%p175) target = $region43
              $region40: #{_lambda_.11} parent=35 // loop_body
                %v181 = vld [vmem:[%s179] sm:$0xff]
                %182 = vst [vmem:[%s180] sm:$0xff] %v181
                %v183 = vld [vmem:[%s179 + $0x10] sm:$0xff]
                %184 = vst [vmem:[%s180 + $0x8] sm:$0xff] %v183
                %v185 = vld [vmem:[%s179 + $0x20] sm:$0xff]
                %186 = vst [vmem:[%s180 + $0x10] sm:$0xff] %v185
                %v187 = vld [vmem:[%s179 + $0x30] sm:$0xff]
                %188 = vst [vmem:[%s180 + $0x18] sm:$0xff] %v187
                %v189 = vld [vmem:[%s179 + $0x40] sm:$0xff]
                %190 = vst [vmem:[%s180 + $0x20] sm:$0xff] %v189
                %v191 = vld [vmem:[%s179 + $0x50] sm:$0xff]
                %192 = vst [vmem:[%s180 + $0x28] sm:$0xff] %v191
                %v193 = vld [vmem:[%s179 + $0x60] sm:$0xff]
                %194 = vst [vmem:[%s180 + $0x30] sm:$0xff] %v193
                %v195 = vld [vmem:[%s179 + $0x70] sm:$0xff]
                %196 = vst [vmem:[%s180 + $0x38] sm:$0xff] %v195
                %v197 = vld [vmem:[%s179 + $0x80] sm:$0xff]
                %198 = vst [vmem:[%s180 + $0x40] sm:$0xff] %v197
                %v199 = vld [vmem:[%s179 + $0x90] sm:$0xff]
                %200 = vst [vmem:[%s180 + $0x48] sm:$0xff] %v199
                %v201 = vld [vmem:[%s179 + $0xa0] sm:$0xff]
                %202 = vst [vmem:[%s180 + $0x50] sm:$0xff] %v201
                %v203 = vld [vmem:[%s179 + $0xb0] sm:$0xff]
                %204 = vst [vmem:[%s180 + $0x58] sm:$0xff] %v203
                %v205 = vld [vmem:[%s179 + $0xc0] sm:$0xff]
                %206 = vst [vmem:[%s180 + $0x60] sm:$0xff] %v205
                %v207 = vld [vmem:[%s179 + $0xd0] sm:$0xff]
                %208 = vst [vmem:[%s180 + $0x68] sm:$0xff] %v207
                %v209 = vld [vmem:[%s179 + $0xe0] sm:$0xff]
                %210 = vst [vmem:[%s180 + $0x70] sm:$0xff] %v209
                %v211 = vld [vmem:[%s179 + $0xf0] sm:$0xff]
                %212 = vst [vmem:[%s180 + $0x78] sm:$0xff] %v211
                %v213 = vld [vmem:[%s179 + $0x100] sm:$0xff]
                %214 = vst [vmem:[%s180 + $0x80] sm:$0xff] %v213
                %v215 = vld [vmem:[%s179 + $0x110] sm:$0xff]
                %216 = vst [vmem:[%s180 + $0x88] sm:$0xff] %v215
                %v217 = vld [vmem:[%s179 + $0x120] sm:$0xff]
                %218 = vst [vmem:[%s180 + $0x90] sm:$0xff] %v217
                %v219 = vld [vmem:[%s179 + $0x130] sm:$0xff]
                %220 = vst [vmem:[%s180 + $0x98] sm:$0xff] %v219
                %v221 = vld [vmem:[%s179 + $0x140] sm:$0xff]
                %222 = vst [vmem:[%s180 + $0xa0] sm:$0xff] %v221
                %v223 = vld [vmem:[%s179 + $0x150] sm:$0xff]
                %224 = vst [vmem:[%s180 + $0xa8] sm:$0xff] %v223
                %v225 = vld [vmem:[%s179 + $0x160] sm:$0xff]
                %226 = vst [vmem:[%s180 + $0xb0] sm:$0xff] %v225
                %v227 = vld [vmem:[%s179 + $0x170] sm:$0xff]
                %228 = vst [vmem:[%s180 + $0xb8] sm:$0xff] %v227
                %v229 = vld [vmem:[%s179 + $0x180] sm:$0xff]
                %230 = vst [vmem:[%s180 + $0xc0] sm:$0xff] %v229
                %v231 = vld [vmem:[%s179 + $0x190] sm:$0xff]
                %232 = vst [vmem:[%s180 + $0xc8] sm:$0xff] %v231
                %v233 = vld [vmem:[%s179 + $0x1a0] sm:$0xff]
                %234 = vst [vmem:[%s180 + $0xd0] sm:$0xff] %v233
                %v235 = vld [vmem:[%s179 + $0x1b0] sm:$0xff]
                %236 = vst [vmem:[%s180 + $0xd8] sm:$0xff] %v235
                %v237 = vld [vmem:[%s179 + $0x1c0] sm:$0xff]
                %238 = vst [vmem:[%s180 + $0xe0] sm:$0xff] %v237
                %v239 = vld [vmem:[%s179 + $0x1d0] sm:$0xff]
                %240 = vst [vmem:[%s180 + $0xe8] sm:$0xff] %v239
                %v241 = vld [vmem:[%s179 + $0x1e0] sm:$0xff]
                %242 = vst [vmem:[%s180 + $0xf0] sm:$0xff] %v241
                %v243 = vld [vmem:[%s179 + $0x1f0] sm:$0xff]
                %244 = vst [vmem:[%s180 + $0xf8] sm:$0xff] %v243
                %v245 = vld [vmem:[%s179 + $0x200] sm:$0xff]
                %246 = vst [vmem:[%s180 + $0x100] sm:$0xff] %v245
                %v247 = vld [vmem:[%s179 + $0x210] sm:$0xff]
                %248 = vst [vmem:[%s180 + $0x108] sm:$0xff] %v247
                %v249 = vld [vmem:[%s179 + $0x220] sm:$0xff]
                %250 = vst [vmem:[%s180 + $0x110] sm:$0xff] %v249
                %v251 = vld [vmem:[%s179 + $0x230] sm:$0xff]
                %252 = vst [vmem:[%s180 + $0x118] sm:$0xff] %v251
                %v253 = vld [vmem:[%s179 + $0x240] sm:$0xff]
                %254 = vst [vmem:[%s180 + $0x120] sm:$0xff] %v253
                %v255 = vld [vmem:[%s179 + $0x250] sm:$0xff]
                %256 = vst [vmem:[%s180 + $0x128] sm:$0xff] %v255
                %v257 = vld [vmem:[%s179 + $0x260] sm:$0xff]
                %258 = vst [vmem:[%s180 + $0x130] sm:$0xff] %v257
                %v259 = vld [vmem:[%s179 + $0x270] sm:$0xff]
                %260 = vst [vmem:[%s180 + $0x138] sm:$0xff] %v259
                %v261 = vld [vmem:[%s179 + $0x280] sm:$0xff]
                %262 = vst [vmem:[%s180 + $0x140] sm:$0xff] %v261
                %v263 = vld [vmem:[%s179 + $0x290] sm:$0xff]
                %264 = vst [vmem:[%s180 + $0x148] sm:$0xff] %v263
                %v265 = vld [vmem:[%s179 + $0x2a0] sm:$0xff]
                %266 = vst [vmem:[%s180 + $0x150] sm:$0xff] %v265
                %v267 = vld [vmem:[%s179 + $0x2b0] sm:$0xff]
                %268 = vst [vmem:[%s180 + $0x158] sm:$0xff] %v267
                %v269 = vld [vmem:[%s179 + $0x2c0] sm:$0xff]
                %270 = vst [vmem:[%s180 + $0x160] sm:$0xff] %v269
                %v271 = vld [vmem:[%s179 + $0x2d0] sm:$0xff]
                %272 = vst [vmem:[%s180 + $0x168] sm:$0xff] %v271
                %v273 = vld [vmem:[%s179 + $0x2e0] sm:$0xff]
                %274 = vst [vmem:[%s180 + $0x170] sm:$0xff] %v273
                %v275 = vld [vmem:[%s179 + $0x2f0] sm:$0xff]
                %276 = vst [vmem:[%s180 + $0x178] sm:$0xff] %v275
                %v277 = vld [vmem:[%s179 + $0x300] sm:$0xff]
                %278 = vst [vmem:[%s180 + $0x180] sm:$0xff] %v277
                %v279 = vld [vmem:[%s179 + $0x310] sm:$0xff]
                %280 = vst [vmem:[%s180 + $0x188] sm:$0xff] %v279
                %v281 = vld [vmem:[%s179 + $0x320] sm:$0xff]
                %282 = vst [vmem:[%s180 + $0x190] sm:$0xff] %v281
                %v283 = vld [vmem:[%s179 + $0x330] sm:$0xff]
                %284 = vst [vmem:[%s180 + $0x198] sm:$0xff] %v283
                %v285 = vld [vmem:[%s179 + $0x340] sm:$0xff]
                %286 = vst [vmem:[%s180 + $0x1a0] sm:$0xff] %v285
                %v287 = vld [vmem:[%s179 + $0x350] sm:$0xff]
                %288 = vst [vmem:[%s180 + $0x1a8] sm:$0xff] %v287
                %v289 = vld [vmem:[%s179 + $0x360] sm:$0xff]
                %290 = vst [vmem:[%s180 + $0x1b0] sm:$0xff] %v289
                %v291 = vld [vmem:[%s179 + $0x370] sm:$0xff]
                %292 = vst [vmem:[%s180 + $0x1b8] sm:$0xff] %v291
                %v293 = vld [vmem:[%s179 + $0x380] sm:$0xff]
                %294 = vst [vmem:[%s180 + $0x1c0] sm:$0xff] %v293
                %v295 = vld [vmem:[%s179 + $0x390] sm:$0xff]
                %296 = vst [vmem:[%s180 + $0x1c8] sm:$0xff] %v295
                %v297 = vld [vmem:[%s179 + $0x3a0] sm:$0xff]
                %298 = vst [vmem:[%s180 + $0x1d0] sm:$0xff] %v297
                %v299 = vld [vmem:[%s179 + $0x3b0] sm:$0xff]
                %300 = vst [vmem:[%s180 + $0x1d8] sm:$0xff] %v299
                %v301 = vld [vmem:[%s179 + $0x3c0] sm:$0xff]
                %302 = vst [vmem:[%s180 + $0x1e0] sm:$0xff] %v301
                %v303 = vld [vmem:[%s179 + $0x3d0] sm:$0xff]
                %304 = vst [vmem:[%s180 + $0x1e8] sm:$0xff] %v303
                %v305 = vld [vmem:[%s179 + $0x3e0] sm:$0xff]
                %306 = vst [vmem:[%s180 + $0x1f0] sm:$0xff] %v305
                %v307 = vld [vmem:[%s179 + $0x3f0] sm:$0xff]
                %308 = vst [vmem:[%s180 + $0x1f8] sm:$0xff] %v307
                %v309 = vld [vmem:[%s179 + $0x400] sm:$0xff]
                %310 = vst [vmem:[%s180 + $0x200] sm:$0xff] %v309
                %v311 = vld [vmem:[%s179 + $0x410] sm:$0xff]
                %312 = vst [vmem:[%s180 + $0x208] sm:$0xff] %v311
                %v313 = vld [vmem:[%s179 + $0x420] sm:$0xff]
                %314 = vst [vmem:[%s180 + $0x210] sm:$0xff] %v313
                %v315 = vld [vmem:[%s179 + $0x430] sm:$0xff]
                %316 = vst [vmem:[%s180 + $0x218] sm:$0xff] %v315
                %v317 = vld [vmem:[%s179 + $0x440] sm:$0xff]
                %318 = vst [vmem:[%s180 + $0x220] sm:$0xff] %v317
                %v319 = vld [vmem:[%s179 + $0x450] sm:$0xff]
                %320 = vst [vmem:[%s180 + $0x228] sm:$0xff] %v319
                %v321 = vld [vmem:[%s179 + $0x460] sm:$0xff]
                %322 = vst [vmem:[%s180 + $0x230] sm:$0xff] %v321
                %v323 = vld [vmem:[%s179 + $0x470] sm:$0xff]
                %324 = vst [vmem:[%s180 + $0x238] sm:$0xff] %v323
                %v325 = vld [vmem:[%s179 + $0x480] sm:$0xff]
                %326 = vst [vmem:[%s180 + $0x240] sm:$0xff] %v325
                %v327 = vld [vmem:[%s179 + $0x490] sm:$0xff]
                %328 = vst [vmem:[%s180 + $0x248] sm:$0xff] %v327
                %v329 = vld [vmem:[%s179 + $0x4a0] sm:$0xff]
                %330 = vst [vmem:[%s180 + $0x250] sm:$0xff] %v329
                %v331 = vld [vmem:[%s179 + $0x4b0] sm:$0xff]
                %332 = vst [vmem:[%s180 + $0x258] sm:$0xff] %v331
                %v333 = vld [vmem:[%s179 + $0x4c0] sm:$0xff]
                %334 = vst [vmem:[%s180 + $0x260] sm:$0xff] %v333
                %v335 = vld [vmem:[%s179 + $0x4d0] sm:$0xff]
                %336 = vst [vmem:[%s180 + $0x268] sm:$0xff] %v335
                %v337 = vld [vmem:[%s179 + $0x4e0] sm:$0xff]
                %338 = vst [vmem:[%s180 + $0x270] sm:$0xff] %v337
                %v339 = vld [vmem:[%s179 + $0x4f0] sm:$0xff]
                %340 = vst [vmem:[%s180 + $0x278] sm:$0xff] %v339
                %v341 = vld [vmem:[%s179 + $0x500] sm:$0xff]
                %342 = vst [vmem:[%s180 + $0x280] sm:$0xff] %v341
                %v343 = vld [vmem:[%s179 + $0x510] sm:$0xff]
                %344 = vst [vmem:[%s180 + $0x288] sm:$0xff] %v343
                %v345 = vld [vmem:[%s179 + $0x520] sm:$0xff]
                %346 = vst [vmem:[%s180 + $0x290] sm:$0xff] %v345
                %v347 = vld [vmem:[%s179 + $0x530] sm:$0xff]
                %348 = vst [vmem:[%s180 + $0x298] sm:$0xff] %v347
                %v349 = vld [vmem:[%s179 + $0x540] sm:$0xff]
                %350 = vst [vmem:[%s180 + $0x2a0] sm:$0xff] %v349
                %v351 = vld [vmem:[%s179 + $0x550] sm:$0xff]
                %352 = vst [vmem:[%s180 + $0x2a8] sm:$0xff] %v351
                %v353 = vld [vmem:[%s179 + $0x560] sm:$0xff]
                %354 = vst [vmem:[%s180 + $0x2b0] sm:$0xff] %v353
                %v355 = vld [vmem:[%s179 + $0x570] sm:$0xff]
                %356 = vst [vmem:[%s180 + $0x2b8] sm:$0xff] %v355
                %v357 = vld [vmem:[%s179 + $0x580] sm:$0xff]
                %358 = vst [vmem:[%s180 + $0x2c0] sm:$0xff] %v357
                %v359 = vld [vmem:[%s179 + $0x590] sm:$0xff]
                %360 = vst [vmem:[%s180 + $0x2c8] sm:$0xff] %v359
                %v361 = vld [vmem:[%s179 + $0x5a0] sm:$0xff]
                %362 = vst [vmem:[%s180 + $0x2d0] sm:$0xff] %v361
                %v363 = vld [vmem:[%s179 + $0x5b0] sm:$0xff]
                %364 = vst [vmem:[%s180 + $0x2d8] sm:$0xff] %v363
                %v365 = vld [vmem:[%s179 + $0x5c0] sm:$0xff]
                %366 = vst [vmem:[%s180 + $0x2e0] sm:$0xff] %v365
                %v367 = vld [vmem:[%s179 + $0x5d0] sm:$0xff]
                %368 = vst [vmem:[%s180 + $0x2e8] sm:$0xff] %v367
                %v369 = vld [vmem:[%s179 + $0x5e0] sm:$0xff]
                %370 = vst [vmem:[%s180 + $0x2f0] sm:$0xff] %v369
                %v371 = vld [vmem:[%s179 + $0x5f0] sm:$0xff]
                %372 = vst [vmem:[%s180 + $0x2f8] sm:$0xff] %v371
                %v373 = vld [vmem:[%s179 + $0x600] sm:$0xff]
                %374 = vst [vmem:[%s180 + $0x300] sm:$0xff] %v373
                %v375 = vld [vmem:[%s179 + $0x610] sm:$0xff]
                %376 = vst [vmem:[%s180 + $0x308] sm:$0xff] %v375
                %v377 = vld [vmem:[%s179 + $0x620] sm:$0xff]
                %378 = vst [vmem:[%s180 + $0x310] sm:$0xff] %v377
                %v379 = vld [vmem:[%s179 + $0x630] sm:$0xff]
                %380 = vst [vmem:[%s180 + $0x318] sm:$0xff] %v379
                %v381 = vld [vmem:[%s179 + $0x640] sm:$0xff]
                %382 = vst [vmem:[%s180 + $0x320] sm:$0xff] %v381
                %v383 = vld [vmem:[%s179 + $0x650] sm:$0xff]
                %384 = vst [vmem:[%s180 + $0x328] sm:$0xff] %v383
                %v385 = vld [vmem:[%s179 + $0x660] sm:$0xff]
                %386 = vst [vmem:[%s180 + $0x330] sm:$0xff] %v385
                %v387 = vld [vmem:[%s179 + $0x670] sm:$0xff]
                %388 = vst [vmem:[%s180 + $0x338] sm:$0xff] %v387
                %v389 = vld [vmem:[%s179 + $0x680] sm:$0xff]
                %390 = vst [vmem:[%s180 + $0x340] sm:$0xff] %v389
                %v391 = vld [vmem:[%s179 + $0x690] sm:$0xff]
                %392 = vst [vmem:[%s180 + $0x348] sm:$0xff] %v391
                %v393 = vld [vmem:[%s179 + $0x6a0] sm:$0xff]
                %394 = vst [vmem:[%s180 + $0x350] sm:$0xff] %v393
                %v395 = vld [vmem:[%s179 + $0x6b0] sm:$0xff]
                %396 = vst [vmem:[%s180 + $0x358] sm:$0xff] %v395
                %v397 = vld [vmem:[%s179 + $0x6c0] sm:$0xff]
                %398 = vst [vmem:[%s180 + $0x360] sm:$0xff] %v397
                %v399 = vld [vmem:[%s179 + $0x6d0] sm:$0xff]
                %400 = vst [vmem:[%s180 + $0x368] sm:$0xff] %v399
                %v401 = vld [vmem:[%s179 + $0x6e0] sm:$0xff]
                %402 = vst [vmem:[%s180 + $0x370] sm:$0xff] %v401
                %v403 = vld [vmem:[%s179 + $0x6f0] sm:$0xff]
                %404 = vst [vmem:[%s180 + $0x378] sm:$0xff] %v403
                %v405 = vld [vmem:[%s179 + $0x700] sm:$0xff]
                %406 = vst [vmem:[%s180 + $0x380] sm:$0xff] %v405
                %v407 = vld [vmem:[%s179 + $0x710] sm:$0xff]
                %408 = vst [vmem:[%s180 + $0x388] sm:$0xff] %v407
                %v409 = vld [vmem:[%s179 + $0x720] sm:$0xff]
                %410 = vst [vmem:[%s180 + $0x390] sm:$0xff] %v409
                %v411 = vld [vmem:[%s179 + $0x730] sm:$0xff]
                %412 = vst [vmem:[%s180 + $0x398] sm:$0xff] %v411
                %v413 = vld [vmem:[%s179 + $0x740] sm:$0xff]
                %414 = vst [vmem:[%s180 + $0x3a0] sm:$0xff] %v413
                %v415 = vld [vmem:[%s179 + $0x750] sm:$0xff]
                %416 = vst [vmem:[%s180 + $0x3a8] sm:$0xff] %v415
                %v417 = vld [vmem:[%s179 + $0x760] sm:$0xff]
                %418 = vst [vmem:[%s180 + $0x3b0] sm:$0xff] %v417
                %v419 = vld [vmem:[%s179 + $0x770] sm:$0xff]
                %420 = vst [vmem:[%s180 + $0x3b8] sm:$0xff] %v419
                %v421 = vld [vmem:[%s179 + $0x780] sm:$0xff]
                %422 = vst [vmem:[%s180 + $0x3c0] sm:$0xff] %v421
                %v423 = vld [vmem:[%s179 + $0x790] sm:$0xff]
                %424 = vst [vmem:[%s180 + $0x3c8] sm:$0xff] %v423
                %v425 = vld [vmem:[%s179 + $0x7a0] sm:$0xff]
                %426 = vst [vmem:[%s180 + $0x3d0] sm:$0xff] %v425
                %v427 = vld [vmem:[%s179 + $0x7b0] sm:$0xff]
                %428 = vst [vmem:[%s180 + $0x3d8] sm:$0xff] %v427
                %v429 = vld [vmem:[%s179 + $0x7c0] sm:$0xff]
                %430 = vst [vmem:[%s180 + $0x3e0] sm:$0xff] %v429
                %v431 = vld [vmem:[%s179 + $0x7d0] sm:$0xff]
                %432 = vst [vmem:[%s180 + $0x3e8] sm:$0xff] %v431
                %v433 = vld [vmem:[%s179 + $0x7e0] sm:$0xff]
                %434 = vst [vmem:[%s180 + $0x3f0] sm:$0xff] %v433
                %v435 = vld [vmem:[%s179 + $0x7f0] sm:$0xff]
                %436 = vst [vmem:[%s180 + $0x3f8] sm:$0xff] %v435
                %v437 = vld [vmem:[%s179 + $0x800] sm:$0xff]
                %438 = vst [vmem:[%s180 + $0x400] sm:$0xff] %v437
                %v439 = vld [vmem:[%s179 + $0x810] sm:$0xff]
                %440 = vst [vmem:[%s180 + $0x408] sm:$0xff] %v439
                %v441 = vld [vmem:[%s179 + $0x820] sm:$0xff]
                %442 = vst [vmem:[%s180 + $0x410] sm:$0xff] %v441
                %v443 = vld [vmem:[%s179 + $0x830] sm:$0xff]
                %444 = vst [vmem:[%s180 + $0x418] sm:$0xff] %v443
                %v445 = vld [vmem:[%s179 + $0x840] sm:$0xff]
                %446 = vst [vmem:[%s180 + $0x420] sm:$0xff] %v445
                %v447 = vld [vmem:[%s179 + $0x850] sm:$0xff]
                %448 = vst [vmem:[%s180 + $0x428] sm:$0xff] %v447
                %v449 = vld [vmem:[%s179 + $0x860] sm:$0xff]
                %450 = vst [vmem:[%s180 + $0x430] sm:$0xff] %v449
                %v451 = vld [vmem:[%s179 + $0x870] sm:$0xff]
                %452 = vst [vmem:[%s180 + $0x438] sm:$0xff] %v451
                %v453 = vld [vmem:[%s179 + $0x880] sm:$0xff]
                %454 = vst [vmem:[%s180 + $0x440] sm:$0xff] %v453
                %v455 = vld [vmem:[%s179 + $0x890] sm:$0xff]
                %456 = vst [vmem:[%s180 + $0x448] sm:$0xff] %v455
                %v457 = vld [vmem:[%s179 + $0x8a0] sm:$0xff]
                %458 = vst [vmem:[%s180 + $0x450] sm:$0xff] %v457
                %v459 = vld [vmem:[%s179 + $0x8b0] sm:$0xff]
                %460 = vst [vmem:[%s180 + $0x458] sm:$0xff] %v459
                %v461 = vld [vmem:[%s179 + $0x8c0] sm:$0xff]
                %462 = vst [vmem:[%s180 + $0x460] sm:$0xff] %v461
                %v463 = vld [vmem:[%s179 + $0x8d0] sm:$0xff]
                %464 = vst [vmem:[%s180 + $0x468] sm:$0xff] %v463
                %v465 = vld [vmem:[%s179 + $0x8e0] sm:$0xff]
                %466 = vst [vmem:[%s180 + $0x470] sm:$0xff] %v465
                %v467 = vld [vmem:[%s179 + $0x8f0] sm:$0xff]
                %468 = vst [vmem:[%s180 + $0x478] sm:$0xff] %v467
                %v469 = vld [vmem:[%s179 + $0x900] sm:$0xff]
                %470 = vst [vmem:[%s180 + $0x480] sm:$0xff] %v469
                %v471 = vld [vmem:[%s179 + $0x910] sm:$0xff]
                %472 = vst [vmem:[%s180 + $0x488] sm:$0xff] %v471
                %v473 = vld [vmem:[%s179 + $0x920] sm:$0xff]
                %474 = vst [vmem:[%s180 + $0x490] sm:$0xff] %v473
                %v475 = vld [vmem:[%s179 + $0x930] sm:$0xff]
                %476 = vst [vmem:[%s180 + $0x498] sm:$0xff] %v475
                %v477 = vld [vmem:[%s179 + $0x940] sm:$0xff]
                %478 = vst [vmem:[%s180 + $0x4a0] sm:$0xff] %v477
                %v479 = vld [vmem:[%s179 + $0x950] sm:$0xff]
                %480 = vst [vmem:[%s180 + $0x4a8] sm:$0xff] %v479
                %v481 = vld [vmem:[%s179 + $0x960] sm:$0xff]
                %482 = vst [vmem:[%s180 + $0x4b0] sm:$0xff] %v481
                %v483 = vld [vmem:[%s179 + $0x970] sm:$0xff]
                %484 = vst [vmem:[%s180 + $0x4b8] sm:$0xff] %v483
                %v485 = vld [vmem:[%s179 + $0x980] sm:$0xff]
                %486 = vst [vmem:[%s180 + $0x4c0] sm:$0xff] %v485
                %v487 = vld [vmem:[%s179 + $0x990] sm:$0xff]
                %488 = vst [vmem:[%s180 + $0x4c8] sm:$0xff] %v487
                %v489 = vld [vmem:[%s179 + $0x9a0] sm:$0xff]
                %490 = vst [vmem:[%s180 + $0x4d0] sm:$0xff] %v489
                %v491 = vld [vmem:[%s179 + $0x9b0] sm:$0xff]
                %492 = vst [vmem:[%s180 + $0x4d8] sm:$0xff] %v491
                %v493 = vld [vmem:[%s179 + $0x9c0] sm:$0xff]
                %494 = vst [vmem:[%s180 + $0x4e0] sm:$0xff] %v493
                %v495 = vld [vmem:[%s179 + $0x9d0] sm:$0xff]
                %496 = vst [vmem:[%s180 + $0x4e8] sm:$0xff] %v495
                %v497 = vld [vmem:[%s179 + $0x9e0] sm:$0xff]
                %498 = vst [vmem:[%s180 + $0x4f0] sm:$0xff] %v497
                %v499 = vld [vmem:[%s179 + $0x9f0] sm:$0xff]
                %500 = vst [vmem:[%s180 + $0x4f8] sm:$0xff] %v499
                %v501 = vld [vmem:[%s179 + $0xa00] sm:$0xff]
                %502 = vst [vmem:[%s180 + $0x500] sm:$0xff] %v501
                %v503 = vld [vmem:[%s179 + $0xa10] sm:$0xff]
                %504 = vst [vmem:[%s180 + $0x508] sm:$0xff] %v503
                %v505 = vld [vmem:[%s179 + $0xa20] sm:$0xff]
                %506 = vst [vmem:[%s180 + $0x510] sm:$0xff] %v505
                %v507 = vld [vmem:[%s179 + $0xa30] sm:$0xff]
                %508 = vst [vmem:[%s180 + $0x518] sm:$0xff] %v507
                %v509 = vld [vmem:[%s179 + $0xa40] sm:$0xff]
                %510 = vst [vmem:[%s180 + $0x520] sm:$0xff] %v509
                %v511 = vld [vmem:[%s179 + $0xa50] sm:$0xff]
                %512 = vst [vmem:[%s180 + $0x528] sm:$0xff] %v511
                %v513 = vld [vmem:[%s179 + $0xa60] sm:$0xff]
                %514 = vst [vmem:[%s180 + $0x530] sm:$0xff] %v513
                %v515 = vld [vmem:[%s179 + $0xa70] sm:$0xff]
                %516 = vst [vmem:[%s180 + $0x538] sm:$0xff] %v515
                %v517 = vld [vmem:[%s179 + $0xa80] sm:$0xff]
                %518 = vst [vmem:[%s180 + $0x540] sm:$0xff] %v517
                %v519 = vld [vmem:[%s179 + $0xa90] sm:$0xff]
                %520 = vst [vmem:[%s180 + $0x548] sm:$0xff] %v519
                %v521 = vld [vmem:[%s179 + $0xaa0] sm:$0xff]
                %522 = vst [vmem:[%s180 + $0x550] sm:$0xff] %v521
                %v523 = vld [vmem:[%s179 + $0xab0] sm:$0xff]
                %524 = vst [vmem:[%s180 + $0x558] sm:$0xff] %v523
                %v525 = vld [vmem:[%s179 + $0xac0] sm:$0xff]
                %526 = vst [vmem:[%s180 + $0x560] sm:$0xff] %v525
                %v527 = vld [vmem:[%s179 + $0xad0] sm:$0xff]
                %528 = vst [vmem:[%s180 + $0x568] sm:$0xff] %v527
                %v529 = vld [vmem:[%s179 + $0xae0] sm:$0xff]
                %530 = vst [vmem:[%s180 + $0x570] sm:$0xff] %v529
                %v531 = vld [vmem:[%s179 + $0xaf0] sm:$0xff]
                %532 = vst [vmem:[%s180 + $0x578] sm:$0xff] %v531
                %v533 = vld [vmem:[%s179 + $0xb00] sm:$0xff]
                %534 = vst [vmem:[%s180 + $0x580] sm:$0xff] %v533
                %v535 = vld [vmem:[%s179 + $0xb10] sm:$0xff]
                %536 = vst [vmem:[%s180 + $0x588] sm:$0xff] %v535
                %v537 = vld [vmem:[%s179 + $0xb20] sm:$0xff]
                %538 = vst [vmem:[%s180 + $0x590] sm:$0xff] %v537
                %v539 = vld [vmem:[%s179 + $0xb30] sm:$0xff]
                %540 = vst [vmem:[%s180 + $0x598] sm:$0xff] %v539
                %v541 = vld [vmem:[%s179 + $0xb40] sm:$0xff]
                %542 = vst [vmem:[%s180 + $0x5a0] sm:$0xff] %v541
                %v543 = vld [vmem:[%s179 + $0xb50] sm:$0xff]
                %544 = vst [vmem:[%s180 + $0x5a8] sm:$0xff] %v543
                %v545 = vld [vmem:[%s179 + $0xb60] sm:$0xff]
                %546 = vst [vmem:[%s180 + $0x5b0] sm:$0xff] %v545
                %v547 = vld [vmem:[%s179 + $0xb70] sm:$0xff]
                %548 = vst [vmem:[%s180 + $0x5b8] sm:$0xff] %v547
                %v549 = vld [vmem:[%s179 + $0xb80] sm:$0xff]
                %550 = vst [vmem:[%s180 + $0x5c0] sm:$0xff] %v549
                %v551 = vld [vmem:[%s179 + $0xb90] sm:$0xff]
                %552 = vst [vmem:[%s180 + $0x5c8] sm:$0xff] %v551
                %v553 = vld [vmem:[%s179 + $0xba0] sm:$0xff]
                %554 = vst [vmem:[%s180 + $0x5d0] sm:$0xff] %v553
                %v555 = vld [vmem:[%s179 + $0xbb0] sm:$0xff]
                %556 = vst [vmem:[%s180 + $0x5d8] sm:$0xff] %v555
                %v557 = vld [vmem:[%s179 + $0xbc0] sm:$0xff]
                %558 = vst [vmem:[%s180 + $0x5e0] sm:$0xff] %v557
                %v559 = vld [vmem:[%s179 + $0xbd0] sm:$0xff]
                %560 = vst [vmem:[%s180 + $0x5e8] sm:$0xff] %v559
                %v561 = vld [vmem:[%s179 + $0xbe0] sm:$0xff]
                %562 = vst [vmem:[%s180 + $0x5f0] sm:$0xff] %v561
                %v563 = vld [vmem:[%s179 + $0xbf0] sm:$0xff]
                %564 = vst [vmem:[%s180 + $0x5f8] sm:$0xff] %v563
              $region41: #{_lambda_.11} parent=35 // loop_footer
                %s178 = sadd.s32 1, %s174
              $region42: #{_lambda_.11} parent=35 // loop_footer_branch
                %173 = sbr.rel target = $region38
              $region43: #{_lambda_.11} parent=35 // loop_exit
                _
            $region36: #{_lambda_.11} parent=27 // pred_fallthru
              _
          $region28: #{_lambda_.11} parent=23 // pred_fallthru
            _
          %961 = vnop
        $region24: #{_lambda_.11} parent=19 // pred_fallthru
          _
        // Predicated region
        $region59: #{_lambda_.11} parent=19 // pred_check
          %p962 = pneg %p93
        $region60: #{_lambda_.11} parent=19 // pred_check_branch
          %964 = sbr.rel (%p962) target = $region62
        $region61: #{_lambda_.11} parent=19 // pred_region
          %s965 = smul.u32 2, %s17
          %p966 = scmp.lt.s32.totalorder %s965, 3
          %s967 = scalar_select %p966, %s965, 3
          %s968 = scalar_lea.vmem %s2, %s967
          %s969 = smul.u32 2, %s17
        $region62: #{_lambda_.11} parent=19 // pred_fallthru
          _
      $region20: #{_lambda_.11} parent=5 // pred_fallthru
        _
      %p970 = scmp.le.s32.totalorder 1, %s9
      %p971 = scmp.lt.s32.totalorder %s9, 3
      %p972 = pnand %p970, %p971
      %p973 = pneg %p972
      // Predicated region
      $region63: #{_lambda_.11} parent=5 // pred_check
        _
      $region64: #{_lambda_.11} parent=5 // pred_check_branch
        %975 = sbr.rel (%p972) target = $region66
      $region65: #{_lambda_.11} parent=5 // pred_region
        %s976 = ssub.s32 %s9, 1
        %s977 = sand.u32 %s60, 1
        %s978 = sand.u32 %s60, 1
        %s979 = smul.addr %s978, 1536
        %s980 = scalar_lea.vmem [#allocation2], %s979
        // Predicated region
        $region67: #{_lambda_.11} parent=65 // pred_check
          %p981 = pneg %p73
        $region68: #{_lambda_.11} parent=65 // pred_check_branch
          %983 = sbr.rel (%p981) target = $region70
        $region69: #{_lambda_.11} parent=65 // pred_region
          _
        $region70: #{_lambda_.11} parent=65 // pred_fallthru
          _
        %s984 = smul.u32 2, %s18
        %p985 = scmp.lt.s32.totalorder %s984, 1
        %s986 = scalar_select %p985, %s984, 1
        %s987 = smul.addr %s986, 12
        %s988 = smul.addr %s987, 4
        %s989 = scalar_lea.vmem %s0, %s988
        %p990 = pneg %p47
        %p991 = pneg %p44
        %s992 = sand.u32 %s60, 1
        %s993 = sand.u32 %s60, 1
        %s994 = smul.addr %s993, 1536
        %s995 = scalar_lea.vmem [#allocation2], %s994
        %p996 = pneg %p73
        %p997 = pneg %p70
        %s998 = smul.u32 2, %s19
        %p999 = scmp.lt.s32.totalorder %s998, 3
        %s1000 = scalar_select %p999, %s998, 3
        %s1001 = scalar_lea.vmem %s2, %s1000
        %p1002 = pneg %p99
        %p1003 = pneg %p96
        %p1004 = pneg %p127
        %p1005 = pneg %p124
        %s1006 = sand.u32 %s114, 1
        %s1007 = sand.u32 %s114, 1
        %s1008 = smul.addr %s1007, 32
        %s1009 = scalar_lea.vmem [#allocation3], %s1008
        %s1010 = smul.u32 2, %s18
        %p1011 = scmp.lt.s32.totalorder %s1010, 1
        %s1012 = scalar_select %p1011, %s1010, 1
        %s1013 = smul.addr %s1012, 12
        %s1014 = smul.addr %s1013, 4
        %s1015 = scalar_lea.vmem %s0, %s1014
        %s1016 = smul.u32 2, %s18
        %s1017 = smul.u32 2, %s19
        %s1018 = smul.u32 2, %s19
        %p1019 = scmp.lt.s32.totalorder %s1018, 3
        %s1020 = scalar_select %p1019, %s1018, 3
        %s1021 = scalar_lea.vmem %s2, %s1020
        %s1022 = smul.u32 2, %s19
        %s1023 = smul.u32 2, %s18
        %s1024 = smul.u32 2, %s19
        %v1025 = vld [vmem:[%s1015] sm:$0xff]
        %v1026 = vld [vmem:[%s1015 + $0x8] sm:$0xff]
        %v1027 = vld [vmem:[%s1015 + $0x10] sm:$0xff]
        %v1028 = vld [vmem:[%s1015 + $0x18] sm:$0xff]
        %v1029 = vld [vmem:[%s1015 + $0x20] sm:$0xff]
        %v1030 = vld [vmem:[%s1015 + $0x28] sm:$0xff]
        %v1031 = vld [vmem:[%s1015 + $0x30] sm:$0xff]
        %v1032 = vld [vmem:[%s1015 + $0x38] sm:$0xff]
        %v1033 = vld [vmem:[%s1015 + $0x40] sm:$0xff]
        %v1034 = vld [vmem:[%s1015 + $0x48] sm:$0xff]
        %v1035 = vld [vmem:[%s1015 + $0x50] sm:$0xff]
        %v1036 = vld [vmem:[%s1015 + $0x58] sm:$0xff]
        %v1037 = vld [vmem:[%s980] sm:$0xff]
        %v1038 = vld [vmem:[%s980 + $0x8] sm:$0xff]
        %v1039 = vld [vmem:[%s980 + $0x10] sm:$0xff]
        %v1040 = vld [vmem:[%s980 + $0x18] sm:$0xff]
        %v1041 = vld [vmem:[%s980 + $0x20] sm:$0xff]
        %v1042 = vld [vmem:[%s980 + $0x28] sm:$0xff]
        %v1043 = vld [vmem:[%s980 + $0x30] sm:$0xff]
        %v1044 = vld [vmem:[%s980 + $0x38] sm:$0xff]
        %v1045 = vld [vmem:[%s980 + $0x40] sm:$0xff]
        %v1046 = vld [vmem:[%s980 + $0x48] sm:$0xff]
        %v1047 = vld [vmem:[%s980 + $0x50] sm:$0xff]
        %v1048 = vld [vmem:[%s980 + $0x58] sm:$0xff]
        %v1049 = vld [vmem:[%s980 + $0x60] sm:$0xff]
        %v1050 = vld [vmem:[%s980 + $0x68] sm:$0xff]
        %v1051 = vld [vmem:[%s980 + $0x70] sm:$0xff]
        %v1052 = vld [vmem:[%s980 + $0x78] sm:$0xff]
        %v1053 = vld [vmem:[%s980 + $0x80] sm:$0xff]
        %v1054 = vld [vmem:[%s980 + $0x88] sm:$0xff]
        %v1055 = vld [vmem:[%s980 + $0x90] sm:$0xff]
        %v1056 = vld [vmem:[%s980 + $0x98] sm:$0xff]
        %v1057 = vld [vmem:[%s980 + $0xa0] sm:$0xff]
        %v1058 = vld [vmem:[%s980 + $0xa8] sm:$0xff]
        %v1059 = vld [vmem:[%s980 + $0xb0] sm:$0xff]
        %v1060 = vld [vmem:[%s980 + $0xb8] sm:$0xff]
        %v1061 = vld [vmem:[%s980 + $0xc0] sm:$0xff]
        %v1062 = vld [vmem:[%s980 + $0xc8] sm:$0xff]
        %v1063 = vld [vmem:[%s980 + $0xd0] sm:$0xff]
        %v1064 = vld [vmem:[%s980 + $0xd8] sm:$0xff]
        %v1065 = vld [vmem:[%s980 + $0xe0] sm:$0xff]
        %v1066 = vld [vmem:[%s980 + $0xe8] sm:$0xff]
        %v1067 = vld [vmem:[%s980 + $0xf0] sm:$0xff]
        %v1068 = vld [vmem:[%s980 + $0xf8] sm:$0xff]
        %v1069 = vld [vmem:[%s980 + $0x100] sm:$0xff]
        %v1070 = vld [vmem:[%s980 + $0x108] sm:$0xff]
        %v1071 = vld [vmem:[%s980 + $0x110] sm:$0xff]
        %v1072 = vld [vmem:[%s980 + $0x118] sm:$0xff]
        %v1073 = vld [vmem:[%s980 + $0x120] sm:$0xff]
        %v1074 = vld [vmem:[%s980 + $0x128] sm:$0xff]
        %v1075 = vld [vmem:[%s980 + $0x130] sm:$0xff]
        %v1076 = vld [vmem:[%s980 + $0x138] sm:$0xff]
        %v1077 = vld [vmem:[%s980 + $0x140] sm:$0xff]
        %v1078 = vld [vmem:[%s980 + $0x148] sm:$0xff]
        %v1079 = vld [vmem:[%s980 + $0x150] sm:$0xff]
        %v1080 = vld [vmem:[%s980 + $0x158] sm:$0xff]
        %v1081 = vld [vmem:[%s980 + $0x160] sm:$0xff]
        %v1082 = vld [vmem:[%s980 + $0x168] sm:$0xff]
        %v1083 = vld [vmem:[%s980 + $0x170] sm:$0xff]
        %v1084 = vld [vmem:[%s980 + $0x178] sm:$0xff]
        %v1085 = vld [vmem:[%s980 + $0x180] sm:$0xff]
        %v1086 = vld [vmem:[%s980 + $0x188] sm:$0xff]
        %v1087 = vld [vmem:[%s980 + $0x190] sm:$0xff]
        %v1088 = vld [vmem:[%s980 + $0x198] sm:$0xff]
        %v1089 = vld [vmem:[%s980 + $0x1a0] sm:$0xff]
        %v1090 = vld [vmem:[%s980 + $0x1a8] sm:$0xff]
        %v1091 = vld [vmem:[%s980 + $0x1b0] sm:$0xff]
        %v1092 = vld [vmem:[%s980 + $0x1b8] sm:$0xff]
        %v1093 = vld [vmem:[%s980 + $0x1c0] sm:$0xff]
        %v1094 = vld [vmem:[%s980 + $0x1c8] sm:$0xff]
        %v1095 = vld [vmem:[%s980 + $0x1d0] sm:$0xff]
        %v1096 = vld [vmem:[%s980 + $0x1d8] sm:$0xff]
        %v1097 = vld [vmem:[%s980 + $0x1e0] sm:$0xff]
        %v1098 = vld [vmem:[%s980 + $0x1e8] sm:$0xff]
        %v1099 = vld [vmem:[%s980 + $0x1f0] sm:$0xff]
        %v1100 = vld [vmem:[%s980 + $0x1f8] sm:$0xff]
        %v1101 = vld [vmem:[%s980 + $0x200] sm:$0xff]
        %v1102 = vld [vmem:[%s980 + $0x208] sm:$0xff]
        %v1103 = vld [vmem:[%s980 + $0x210] sm:$0xff]
        %v1104 = vld [vmem:[%s980 + $0x218] sm:$0xff]
        %v1105 = vld [vmem:[%s980 + $0x220] sm:$0xff]
        %v1106 = vld [vmem:[%s980 + $0x228] sm:$0xff]
        %v1107 = vld [vmem:[%s980 + $0x230] sm:$0xff]
        %v1108 = vld [vmem:[%s980 + $0x238] sm:$0xff]
        %v1109 = vld [vmem:[%s980 + $0x240] sm:$0xff]
        %v1110 = vld [vmem:[%s980 + $0x248] sm:$0xff]
        %v1111 = vld [vmem:[%s980 + $0x250] sm:$0xff]
        %v1112 = vld [vmem:[%s980 + $0x258] sm:$0xff]
        %v1113 = vld [vmem:[%s980 + $0x260] sm:$0xff]
        %v1114 = vld [vmem:[%s980 + $0x268] sm:$0xff]
        %v1115 = vld [vmem:[%s980 + $0x270] sm:$0xff]
        %v1116 = vld [vmem:[%s980 + $0x278] sm:$0xff]
        %v1117 = vld [vmem:[%s980 + $0x280] sm:$0xff]
        %v1118 = vld [vmem:[%s980 + $0x288] sm:$0xff]
        %v1119 = vld [vmem:[%s980 + $0x290] sm:$0xff]
        %v1120 = vld [vmem:[%s980 + $0x298] sm:$0xff]
        %v1121 = vld [vmem:[%s980 + $0x2a0] sm:$0xff]
        %v1122 = vld [vmem:[%s980 + $0x2a8] sm:$0xff]
        %v1123 = vld [vmem:[%s980 + $0x2b0] sm:$0xff]
        %v1124 = vld [vmem:[%s980 + $0x2b8] sm:$0xff]
        %v1125 = vld [vmem:[%s980 + $0x2c0] sm:$0xff]
        %v1126 = vld [vmem:[%s980 + $0x2c8] sm:$0xff]
        %v1127 = vld [vmem:[%s980 + $0x2d0] sm:$0xff]
        %v1128 = vld [vmem:[%s980 + $0x2d8] sm:$0xff]
        %v1129 = vld [vmem:[%s980 + $0x2e0] sm:$0xff]
        %v1130 = vld [vmem:[%s980 + $0x2e8] sm:$0xff]
        %v1131 = vld [vmem:[%s980 + $0x2f0] sm:$0xff]
        %v1132 = vld [vmem:[%s980 + $0x2f8] sm:$0xff]
        %v1133 = vld [vmem:[%s980 + $0x300] sm:$0xff]
        %v1134 = vld [vmem:[%s980 + $0x308] sm:$0xff]
        %v1135 = vld [vmem:[%s980 + $0x310] sm:$0xff]
        %v1136 = vld [vmem:[%s980 + $0x318] sm:$0xff]
        %v1137 = vld [vmem:[%s980 + $0x320] sm:$0xff]
        %v1138 = vld [vmem:[%s980 + $0x328] sm:$0xff]
        %v1139 = vld [vmem:[%s980 + $0x330] sm:$0xff]
        %v1140 = vld [vmem:[%s980 + $0x338] sm:$0xff]
        %v1141 = vld [vmem:[%s980 + $0x340] sm:$0xff]
        %v1142 = vld [vmem:[%s980 + $0x348] sm:$0xff]
        %v1143 = vld [vmem:[%s980 + $0x350] sm:$0xff]
        %v1144 = vld [vmem:[%s980 + $0x358] sm:$0xff]
        %v1145 = vld [vmem:[%s980 + $0x360] sm:$0xff]
        %v1146 = vld [vmem:[%s980 + $0x368] sm:$0xff]
        %v1147 = vld [vmem:[%s980 + $0x370] sm:$0xff]
        %v1148 = vld [vmem:[%s980 + $0x378] sm:$0xff]
        %v1149 = vld [vmem:[%s980 + $0x380] sm:$0xff]
        %v1150 = vld [vmem:[%s980 + $0x388] sm:$0xff]
        %v1151 = vld [vmem:[%s980 + $0x390] sm:$0xff]
        %v1152 = vld [vmem:[%s980 + $0x398] sm:$0xff]
        %v1153 = vld [vmem:[%s980 + $0x3a0] sm:$0xff]
        %v1154 = vld [vmem:[%s980 + $0x3a8] sm:$0xff]
        %v1155 = vld [vmem:[%s980 + $0x3b0] sm:$0xff]
        %v1156 = vld [vmem:[%s980 + $0x3b8] sm:$0xff]
        %v1157 = vld [vmem:[%s980 + $0x3c0] sm:$0xff]
        %v1158 = vld [vmem:[%s980 + $0x3c8] sm:$0xff]
        %v1159 = vld [vmem:[%s980 + $0x3d0] sm:$0xff]
        %v1160 = vld [vmem:[%s980 + $0x3d8] sm:$0xff]
        %v1161 = vld [vmem:[%s980 + $0x3e0] sm:$0xff]
        %v1162 = vld [vmem:[%s980 + $0x3e8] sm:$0xff]
        %v1163 = vld [vmem:[%s980 + $0x3f0] sm:$0xff]
        %v1164 = vld [vmem:[%s980 + $0x3f8] sm:$0xff]
        %v1165 = vld [vmem:[%s980 + $0x400] sm:$0xff]
        %v1166 = vld [vmem:[%s980 + $0x408] sm:$0xff]
        %v1167 = vld [vmem:[%s980 + $0x410] sm:$0xff]
        %v1168 = vld [vmem:[%s980 + $0x418] sm:$0xff]
        %v1169 = vld [vmem:[%s980 + $0x420] sm:$0xff]
        %v1170 = vld [vmem:[%s980 + $0x428] sm:$0xff]
        %v1171 = vld [vmem:[%s980 + $0x430] sm:$0xff]
        %v1172 = vld [vmem:[%s980 + $0x438] sm:$0xff]
        %v1173 = vld [vmem:[%s980 + $0x440] sm:$0xff]
        %v1174 = vld [vmem:[%s980 + $0x448] sm:$0xff]
        %v1175 = vld [vmem:[%s980 + $0x450] sm:$0xff]
        %v1176 = vld [vmem:[%s980 + $0x458] sm:$0xff]
        %v1177 = vld [vmem:[%s980 + $0x460] sm:$0xff]
        %v1178 = vld [vmem:[%s980 + $0x468] sm:$0xff]
        %v1179 = vld [vmem:[%s980 + $0x470] sm:$0xff]
        %v1180 = vld [vmem:[%s980 + $0x478] sm:$0xff]
        %v1181 = vld [vmem:[%s980 + $0x480] sm:$0xff]
        %v1182 = vld [vmem:[%s980 + $0x488] sm:$0xff]
        %v1183 = vld [vmem:[%s980 + $0x490] sm:$0xff]
        %v1184 = vld [vmem:[%s980 + $0x498] sm:$0xff]
        %v1185 = vld [vmem:[%s980 + $0x4a0] sm:$0xff]
        %v1186 = vld [vmem:[%s980 + $0x4a8] sm:$0xff]
        %v1187 = vld [vmem:[%s980 + $0x4b0] sm:$0xff]
        %v1188 = vld [vmem:[%s980 + $0x4b8] sm:$0xff]
        %v1189 = vld [vmem:[%s980 + $0x4c0] sm:$0xff]
        %v1190 = vld [vmem:[%s980 + $0x4c8] sm:$0xff]
        %v1191 = vld [vmem:[%s980 + $0x4d0] sm:$0xff]
        %v1192 = vld [vmem:[%s980 + $0x4d8] sm:$0xff]
        %v1193 = vld [vmem:[%s980 + $0x4e0] sm:$0xff]
        %v1194 = vld [vmem:[%s980 + $0x4e8] sm:$0xff]
        %v1195 = vld [vmem:[%s980 + $0x4f0] sm:$0xff]
        %v1196 = vld [vmem:[%s980 + $0x4f8] sm:$0xff]
        %v1197 = vld [vmem:[%s980 + $0x500] sm:$0xff]
        %v1198 = vld [vmem:[%s980 + $0x508] sm:$0xff]
        %v1199 = vld [vmem:[%s980 + $0x510] sm:$0xff]
        %v1200 = vld [vmem:[%s980 + $0x518] sm:$0xff]
        %v1201 = vld [vmem:[%s980 + $0x520] sm:$0xff]
        %v1202 = vld [vmem:[%s980 + $0x528] sm:$0xff]
        %v1203 = vld [vmem:[%s980 + $0x530] sm:$0xff]
        %v1204 = vld [vmem:[%s980 + $0x538] sm:$0xff]
        %v1205 = vld [vmem:[%s980 + $0x540] sm:$0xff]
        %v1206 = vld [vmem:[%s980 + $0x548] sm:$0xff]
        %v1207 = vld [vmem:[%s980 + $0x550] sm:$0xff]
        %v1208 = vld [vmem:[%s980 + $0x558] sm:$0xff]
        %v1209 = vld [vmem:[%s980 + $0x560] sm:$0xff]
        %v1210 = vld [vmem:[%s980 + $0x568] sm:$0xff]
        %v1211 = vld [vmem:[%s980 + $0x570] sm:$0xff]
        %v1212 = vld [vmem:[%s980 + $0x578] sm:$0xff]
        %v1213 = vld [vmem:[%s980 + $0x580] sm:$0xff]
        %v1214 = vld [vmem:[%s980 + $0x588] sm:$0xff]
        %v1215 = vld [vmem:[%s980 + $0x590] sm:$0xff]
        %v1216 = vld [vmem:[%s980 + $0x598] sm:$0xff]
        %v1217 = vld [vmem:[%s980 + $0x5a0] sm:$0xff]
        %v1218 = vld [vmem:[%s980 + $0x5a8] sm:$0xff]
        %v1219 = vld [vmem:[%s980 + $0x5b0] sm:$0xff]
        %v1220 = vld [vmem:[%s980 + $0x5b8] sm:$0xff]
        %v1221 = vld [vmem:[%s980 + $0x5c0] sm:$0xff]
        %v1222 = vld [vmem:[%s980 + $0x5c8] sm:$0xff]
        %v1223 = vld [vmem:[%s980 + $0x5d0] sm:$0xff]
        %v1224 = vld [vmem:[%s980 + $0x5d8] sm:$0xff]
        %v1225 = vld [vmem:[%s980 + $0x5e0] sm:$0xff]
        %v1226 = vld [vmem:[%s980 + $0x5e8] sm:$0xff]
        %v1227 = vld [vmem:[%s980 + $0x5f0] sm:$0xff]
        %v1228 = vld [vmem:[%s980 + $0x5f8] sm:$0xff]
        %v1229 = vld [vmem:[%s1021] sm:$0x3]
        %v1231 = vlaneseq
        %v1232 = vshrl.u32 %v1231, 7
        %v1233 = vsub.s32 0, %v1232
        %v1234 = vrot.slane %v1229, %v1233
        %v1235 = vlaneseq
        %v1236 = vshrl.u32 %v1235, 7
        %v1237 = vsub.s32 1, %v1236
        %v1238 = vrot.slane %v1229, %v1237
        %v1253 = vunpack.c.l.b16 %v1025
        %v1254 = vunpack.c.h.b16 %v1025
        %v1255 = vunpack.c.l.b16 %v1026
        %v1256 = vunpack.c.h.b16 %v1026
        %v1257 = vunpack.c.l.b16 %v1027
        %v1258 = vunpack.c.h.b16 %v1027
        %v1259 = vunpack.c.l.b16 %v1028
        %v1260 = vunpack.c.h.b16 %v1028
        %v1261 = vunpack.c.l.b16 %v1029
        %v1262 = vunpack.c.h.b16 %v1029
        %v1263 = vunpack.c.l.b16 %v1030
        %v1264 = vunpack.c.h.b16 %v1030
        %v1265 = vunpack.c.l.b16 %v1031
        %v1266 = vunpack.c.h.b16 %v1031
        %v1267 = vunpack.c.l.b16 %v1032
        %v1268 = vunpack.c.h.b16 %v1032
        %v1269 = vunpack.c.l.b16 %v1033
        %v1270 = vunpack.c.h.b16 %v1033
        %v1271 = vunpack.c.l.b16 %v1034
        %v1272 = vunpack.c.h.b16 %v1034
        %v1273 = vunpack.c.l.b16 %v1035
        %v1274 = vunpack.c.h.b16 %v1035
        %v1275 = vunpack.c.l.b16 %v1036
        %v1276 = vunpack.c.h.b16 %v1036
        %v1277 = vpack.c.b16 %v1265, %v1253
        %v1278 = vpack.c.b16 %v1266, %v1254
        %v1279 = vpack.c.b16 %v1267, %v1255
        %v1280 = vpack.c.b16 %v1268, %v1256
        %v1281 = vpack.c.b16 %v1269, %v1257
        %v1282 = vpack.c.b16 %v1270, %v1258
        %v1283 = vpack.c.b16 %v1271, %v1259
        %v1284 = vpack.c.b16 %v1272, %v1260
        %v1285 = vpack.c.b16 %v1273, %v1261
        %v1286 = vpack.c.b16 %v1274, %v1262
        %v1287 = vpack.c.b16 %v1275, %v1263
        %v1288 = vpack.c.b16 %v1276, %v1264
        %v1493 = vunpack.c.l.b16 %v1037
        %v1494 = vunpack.c.h.b16 %v1037
        %v1495 = vunpack.c.l.b16 %v1038
        %v1496 = vunpack.c.h.b16 %v1038
        %v1497 = vunpack.c.l.b16 %v1039
        %v1498 = vunpack.c.h.b16 %v1039
        %v1499 = vunpack.c.l.b16 %v1040
        %v1500 = vunpack.c.h.b16 %v1040
        %v1501 = vunpack.c.l.b16 %v1041
        %v1502 = vunpack.c.h.b16 %v1041
        %v1503 = vunpack.c.l.b16 %v1042
        %v1504 = vunpack.c.h.b16 %v1042
        %v1505 = vunpack.c.l.b16 %v1043
        %v1506 = vunpack.c.h.b16 %v1043
        %v1507 = vunpack.c.l.b16 %v1044
        %v1508 = vunpack.c.h.b16 %v1044
        %v1509 = vunpack.c.l.b16 %v1045
        %v1510 = vunpack.c.h.b16 %v1045
        %v1511 = vunpack.c.l.b16 %v1046
        %v1512 = vunpack.c.h.b16 %v1046
        %v1513 = vunpack.c.l.b16 %v1047
        %v1514 = vunpack.c.h.b16 %v1047
        %v1515 = vunpack.c.l.b16 %v1048
        %v1516 = vunpack.c.h.b16 %v1048
        %v1517 = vunpack.c.l.b16 %v1049
        %v1518 = vunpack.c.h.b16 %v1049
        %v1519 = vunpack.c.l.b16 %v1050
        %v1520 = vunpack.c.h.b16 %v1050
        %v1521 = vunpack.c.l.b16 %v1051
        %v1522 = vunpack.c.h.b16 %v1051
        %v1523 = vunpack.c.l.b16 %v1052
        %v1524 = vunpack.c.h.b16 %v1052
        %v1525 = vunpack.c.l.b16 %v1053
        %v1526 = vunpack.c.h.b16 %v1053
        %v1527 = vunpack.c.l.b16 %v1054
        %v1528 = vunpack.c.h.b16 %v1054
        %v1529 = vunpack.c.l.b16 %v1055
        %v1530 = vunpack.c.h.b16 %v1055
        %v1531 = vunpack.c.l.b16 %v1056
        %v1532 = vunpack.c.h.b16 %v1056
        %v1533 = vunpack.c.l.b16 %v1057
        %v1534 = vunpack.c.h.b16 %v1057
        %v1535 = vunpack.c.l.b16 %v1058
        %v1536 = vunpack.c.h.b16 %v1058
        %v1537 = vunpack.c.l.b16 %v1059
        %v1538 = vunpack.c.h.b16 %v1059
        %v1539 = vunpack.c.l.b16 %v1060
        %v1540 = vunpack.c.h.b16 %v1060
        %v1541 = vunpack.c.l.b16 %v1061
        %v1542 = vunpack.c.h.b16 %v1061
        %v1543 = vunpack.c.l.b16 %v1062
        %v1544 = vunpack.c.h.b16 %v1062
        %v1545 = vunpack.c.l.b16 %v1063
        %v1546 = vunpack.c.h.b16 %v1063
        %v1547 = vunpack.c.l.b16 %v1064
        %v1548 = vunpack.c.h.b16 %v1064
        %v1549 = vunpack.c.l.b16 %v1065
        %v1550 = vunpack.c.h.b16 %v1065
        %v1551 = vunpack.c.l.b16 %v1066
        %v1552 = vunpack.c.h.b16 %v1066
        %v1553 = vunpack.c.l.b16 %v1067
        %v1554 = vunpack.c.h.b16 %v1067
        %v1555 = vunpack.c.l.b16 %v1068
        %v1556 = vunpack.c.h.b16 %v1068
        %v1557 = vunpack.c.l.b16 %v1069
        %v1558 = vunpack.c.h.b16 %v1069
        %v1559 = vunpack.c.l.b16 %v1070
        %v1560 = vunpack.c.h.b16 %v1070
        %v1561 = vunpack.c.l.b16 %v1071
        %v1562 = vunpack.c.h.b16 %v1071
        %v1563 = vunpack.c.l.b16 %v1072
        %v1564 = vunpack.c.h.b16 %v1072
        %v1565 = vunpack.c.l.b16 %v1073
        %v1566 = vunpack.c.h.b16 %v1073
        %v1567 = vunpack.c.l.b16 %v1074
        %v1568 = vunpack.c.h.b16 %v1074
        %v1569 = vunpack.c.l.b16 %v1075
        %v1570 = vunpack.c.h.b16 %v1075
        %v1571 = vunpack.c.l.b16 %v1076
        %v1572 = vunpack.c.h.b16 %v1076
        %v1573 = vunpack.c.l.b16 %v1077
        %v1574 = vunpack.c.h.b16 %v1077
        %v1575 = vunpack.c.l.b16 %v1078
        %v1576 = vunpack.c.h.b16 %v1078
        %v1577 = vunpack.c.l.b16 %v1079
        %v1578 = vunpack.c.h.b16 %v1079
        %v1579 = vunpack.c.l.b16 %v1080
        %v1580 = vunpack.c.h.b16 %v1080
        %v1581 = vunpack.c.l.b16 %v1081
        %v1582 = vunpack.c.h.b16 %v1081
        %v1583 = vunpack.c.l.b16 %v1082
        %v1584 = vunpack.c.h.b16 %v1082
        %v1585 = vunpack.c.l.b16 %v1083
        %v1586 = vunpack.c.h.b16 %v1083
        %v1587 = vunpack.c.l.b16 %v1084
        %v1588 = vunpack.c.h.b16 %v1084
        %v1589 = vunpack.c.l.b16 %v1085
        %v1590 = vunpack.c.h.b16 %v1085
        %v1591 = vunpack.c.l.b16 %v1086
        %v1592 = vunpack.c.h.b16 %v1086
        %v1593 = vunpack.c.l.b16 %v1087
        %v1594 = vunpack.c.h.b16 %v1087
        %v1595 = vunpack.c.l.b16 %v1088
        %v1596 = vunpack.c.h.b16 %v1088
        %v1597 = vunpack.c.l.b16 %v1089
        %v1598 = vunpack.c.h.b16 %v1089
        %v1599 = vunpack.c.l.b16 %v1090
        %v1600 = vunpack.c.h.b16 %v1090
        %v1601 = vunpack.c.l.b16 %v1091
        %v1602 = vunpack.c.h.b16 %v1091
        %v1603 = vunpack.c.l.b16 %v1092
        %v1604 = vunpack.c.h.b16 %v1092
        %v1605 = vunpack.c.l.b16 %v1093
        %v1606 = vunpack.c.h.b16 %v1093
        %v1607 = vunpack.c.l.b16 %v1094
        %v1608 = vunpack.c.h.b16 %v1094
        %v1609 = vunpack.c.l.b16 %v1095
        %v1610 = vunpack.c.h.b16 %v1095
        %v1611 = vunpack.c.l.b16 %v1096
        %v1612 = vunpack.c.h.b16 %v1096
        %v1613 = vunpack.c.l.b16 %v1097
        %v1614 = vunpack.c.h.b16 %v1097
        %v1615 = vunpack.c.l.b16 %v1098
        %v1616 = vunpack.c.h.b16 %v1098
        %v1617 = vunpack.c.l.b16 %v1099
        %v1618 = vunpack.c.h.b16 %v1099
        %v1619 = vunpack.c.l.b16 %v1100
        %v1620 = vunpack.c.h.b16 %v1100
        %v1621 = vunpack.c.l.b16 %v1101
        %v1622 = vunpack.c.h.b16 %v1101
        %v1623 = vunpack.c.l.b16 %v1102
        %v1624 = vunpack.c.h.b16 %v1102
        %v1625 = vunpack.c.l.b16 %v1103
        %v1626 = vunpack.c.h.b16 %v1103
        %v1627 = vunpack.c.l.b16 %v1104
        %v1628 = vunpack.c.h.b16 %v1104
        %v1629 = vunpack.c.l.b16 %v1105
        %v1630 = vunpack.c.h.b16 %v1105
        %v1631 = vunpack.c.l.b16 %v1106
        %v1632 = vunpack.c.h.b16 %v1106
        %v1633 = vunpack.c.l.b16 %v1107
        %v1634 = vunpack.c.h.b16 %v1107
        %v1635 = vunpack.c.l.b16 %v1108
        %v1636 = vunpack.c.h.b16 %v1108
        %v1637 = vunpack.c.l.b16 %v1109
        %v1638 = vunpack.c.h.b16 %v1109
        %v1639 = vunpack.c.l.b16 %v1110
        %v1640 = vunpack.c.h.b16 %v1110
        %v1641 = vunpack.c.l.b16 %v1111
        %v1642 = vunpack.c.h.b16 %v1111
        %v1643 = vunpack.c.l.b16 %v1112
        %v1644 = vunpack.c.h.b16 %v1112
        %v1645 = vunpack.c.l.b16 %v1113
        %v1646 = vunpack.c.h.b16 %v1113
        %v1647 = vunpack.c.l.b16 %v1114
        %v1648 = vunpack.c.h.b16 %v1114
        %v1649 = vunpack.c.l.b16 %v1115
        %v1650 = vunpack.c.h.b16 %v1115
        %v1651 = vunpack.c.l.b16 %v1116
        %v1652 = vunpack.c.h.b16 %v1116
        %v1653 = vunpack.c.l.b16 %v1117
        %v1654 = vunpack.c.h.b16 %v1117
        %v1655 = vunpack.c.l.b16 %v1118
        %v1656 = vunpack.c.h.b16 %v1118
        %v1657 = vunpack.c.l.b16 %v1119
        %v1658 = vunpack.c.h.b16 %v1119
        %v1659 = vunpack.c.l.b16 %v1120
        %v1660 = vunpack.c.h.b16 %v1120
        %v1661 = vunpack.c.l.b16 %v1121
        %v1662 = vunpack.c.h.b16 %v1121
        %v1663 = vunpack.c.l.b16 %v1122
        %v1664 = vunpack.c.h.b16 %v1122
        %v1665 = vunpack.c.l.b16 %v1123
        %v1666 = vunpack.c.h.b16 %v1123
        %v1667 = vunpack.c.l.b16 %v1124
        %v1668 = vunpack.c.h.b16 %v1124
        %v1669 = vunpack.c.l.b16 %v1125
        %v1670 = vunpack.c.h.b16 %v1125
        %v1671 = vunpack.c.l.b16 %v1126
        %v1672 = vunpack.c.h.b16 %v1126
        %v1673 = vunpack.c.l.b16 %v1127
        %v1674 = vunpack.c.h.b16 %v1127
        %v1675 = vunpack.c.l.b16 %v1128
        %v1676 = vunpack.c.h.b16 %v1128
        %v1677 = vunpack.c.l.b16 %v1129
        %v1678 = vunpack.c.h.b16 %v1129
        %v1679 = vunpack.c.l.b16 %v1130
        %v1680 = vunpack.c.h.b16 %v1130
        %v1681 = vunpack.c.l.b16 %v1131
        %v1682 = vunpack.c.h.b16 %v1131
        %v1683 = vunpack.c.l.b16 %v1132
        %v1684 = vunpack.c.h.b16 %v1132
        %v1685 = vunpack.c.l.b16 %v1133
        %v1686 = vunpack.c.h.b16 %v1133
        %v1687 = vunpack.c.l.b16 %v1134
        %v1688 = vunpack.c.h.b16 %v1134
        %v1689 = vunpack.c.l.b16 %v1135
        %v1690 = vunpack.c.h.b16 %v1135
        %v1691 = vunpack.c.l.b16 %v1136
        %v1692 = vunpack.c.h.b16 %v1136
        %v1693 = vunpack.c.l.b16 %v1137
        %v1694 = vunpack.c.h.b16 %v1137
        %v1695 = vunpack.c.l.b16 %v1138
        %v1696 = vunpack.c.h.b16 %v1138
        %v1697 = vunpack.c.l.b16 %v1139
        %v1698 = vunpack.c.h.b16 %v1139
        %v1699 = vunpack.c.l.b16 %v1140
        %v1700 = vunpack.c.h.b16 %v1140
        %v1701 = vunpack.c.l.b16 %v1141
        %v1702 = vunpack.c.h.b16 %v1141
        %v1703 = vunpack.c.l.b16 %v1142
        %v1704 = vunpack.c.h.b16 %v1142
        %v1705 = vunpack.c.l.b16 %v1143
        %v1706 = vunpack.c.h.b16 %v1143
        %v1707 = vunpack.c.l.b16 %v1144
        %v1708 = vunpack.c.h.b16 %v1144
        %v1709 = vunpack.c.l.b16 %v1145
        %v1710 = vunpack.c.h.b16 %v1145
        %v1711 = vunpack.c.l.b16 %v1146
        %v1712 = vunpack.c.h.b16 %v1146
        %v1713 = vunpack.c.l.b16 %v1147
        %v1714 = vunpack.c.h.b16 %v1147
        %v1715 = vunpack.c.l.b16 %v1148
        %v1716 = vunpack.c.h.b16 %v1148
        %v1717 = vunpack.c.l.b16 %v1149
        %v1718 = vunpack.c.h.b16 %v1149
        %v1719 = vunpack.c.l.b16 %v1150
        %v1720 = vunpack.c.h.b16 %v1150
        %v1721 = vunpack.c.l.b16 %v1151
        %v1722 = vunpack.c.h.b16 %v1151
        %v1723 = vunpack.c.l.b16 %v1152
        %v1724 = vunpack.c.h.b16 %v1152
        %v1725 = vunpack.c.l.b16 %v1153
        %v1726 = vunpack.c.h.b16 %v1153
        %v1727 = vunpack.c.l.b16 %v1154
        %v1728 = vunpack.c.h.b16 %v1154
        %v1729 = vunpack.c.l.b16 %v1155
        %v1730 = vunpack.c.h.b16 %v1155
        %v1731 = vunpack.c.l.b16 %v1156
        %v1732 = vunpack.c.h.b16 %v1156
        %v1733 = vunpack.c.l.b16 %v1157
        %v1734 = vunpack.c.h.b16 %v1157
        %v1735 = vunpack.c.l.b16 %v1158
        %v1736 = vunpack.c.h.b16 %v1158
        %v1737 = vunpack.c.l.b16 %v1159
        %v1738 = vunpack.c.h.b16 %v1159
        %v1739 = vunpack.c.l.b16 %v1160
        %v1740 = vunpack.c.h.b16 %v1160
        %v1741 = vunpack.c.l.b16 %v1161
        %v1742 = vunpack.c.h.b16 %v1161
        %v1743 = vunpack.c.l.b16 %v1162
        %v1744 = vunpack.c.h.b16 %v1162
        %v1745 = vunpack.c.l.b16 %v1163
        %v1746 = vunpack.c.h.b16 %v1163
        %v1747 = vunpack.c.l.b16 %v1164
        %v1748 = vunpack.c.h.b16 %v1164
        %v1749 = vunpack.c.l.b16 %v1165
        %v1750 = vunpack.c.h.b16 %v1165
        %v1751 = vunpack.c.l.b16 %v1166
        %v1752 = vunpack.c.h.b16 %v1166
        %v1753 = vunpack.c.l.b16 %v1167
        %v1754 = vunpack.c.h.b16 %v1167
        %v1755 = vunpack.c.l.b16 %v1168
        %v1756 = vunpack.c.h.b16 %v1168
        %v1757 = vunpack.c.l.b16 %v1169
        %v1758 = vunpack.c.h.b16 %v1169
        %v1759 = vunpack.c.l.b16 %v1170
        %v1760 = vunpack.c.h.b16 %v1170
        %v1761 = vunpack.c.l.b16 %v1171
        %v1762 = vunpack.c.h.b16 %v1171
        %v1763 = vunpack.c.l.b16 %v1172
        %v1764 = vunpack.c.h.b16 %v1172
        %v1765 = vunpack.c.l.b16 %v1173
        %v1766 = vunpack.c.h.b16 %v1173
        %v1767 = vunpack.c.l.b16 %v1174
        %v1768 = vunpack.c.h.b16 %v1174
        %v1769 = vunpack.c.l.b16 %v1175
        %v1770 = vunpack.c.h.b16 %v1175
        %v1771 = vunpack.c.l.b16 %v1176
        %v1772 = vunpack.c.h.b16 %v1176
        %v1773 = vunpack.c.l.b16 %v1177
        %v1774 = vunpack.c.h.b16 %v1177
        %v1775 = vunpack.c.l.b16 %v1178
        %v1776 = vunpack.c.h.b16 %v1178
        %v1777 = vunpack.c.l.b16 %v1179
        %v1778 = vunpack.c.h.b16 %v1179
        %v1779 = vunpack.c.l.b16 %v1180
        %v1780 = vunpack.c.h.b16 %v1180
        %v1781 = vunpack.c.l.b16 %v1181
        %v1782 = vunpack.c.h.b16 %v1181
        %v1783 = vunpack.c.l.b16 %v1182
        %v1784 = vunpack.c.h.b16 %v1182
        %v1785 = vunpack.c.l.b16 %v1183
        %v1786 = vunpack.c.h.b16 %v1183
        %v1787 = vunpack.c.l.b16 %v1184
        %v1788 = vunpack.c.h.b16 %v1184
        %v1789 = vunpack.c.l.b16 %v1185
        %v1790 = vunpack.c.h.b16 %v1185
        %v1791 = vunpack.c.l.b16 %v1186
        %v1792 = vunpack.c.h.b16 %v1186
        %v1793 = vunpack.c.l.b16 %v1187
        %v1794 = vunpack.c.h.b16 %v1187
        %v1795 = vunpack.c.l.b16 %v1188
        %v1796 = vunpack.c.h.b16 %v1188
        %v1797 = vunpack.c.l.b16 %v1189
        %v1798 = vunpack.c.h.b16 %v1189
        %v1799 = vunpack.c.l.b16 %v1190
        %v1800 = vunpack.c.h.b16 %v1190
        %v1801 = vunpack.c.l.b16 %v1191
        %v1802 = vunpack.c.h.b16 %v1191
        %v1803 = vunpack.c.l.b16 %v1192
        %v1804 = vunpack.c.h.b16 %v1192
        %v1805 = vunpack.c.l.b16 %v1193
        %v1806 = vunpack.c.h.b16 %v1193
        %v1807 = vunpack.c.l.b16 %v1194
        %v1808 = vunpack.c.h.b16 %v1194
        %v1809 = vunpack.c.l.b16 %v1195
        %v1810 = vunpack.c.h.b16 %v1195
        %v1811 = vunpack.c.l.b16 %v1196
        %v1812 = vunpack.c.h.b16 %v1196
        %v1813 = vunpack.c.l.b16 %v1197
        %v1814 = vunpack.c.h.b16 %v1197
        %v1815 = vunpack.c.l.b16 %v1198
        %v1816 = vunpack.c.h.b16 %v1198
        %v1817 = vunpack.c.l.b16 %v1199
        %v1818 = vunpack.c.h.b16 %v1199
        %v1819 = vunpack.c.l.b16 %v1200
        %v1820 = vunpack.c.h.b16 %v1200
        %v1821 = vunpack.c.l.b16 %v1201
        %v1822 = vunpack.c.h.b16 %v1201
        %v1823 = vunpack.c.l.b16 %v1202
        %v1824 = vunpack.c.h.b16 %v1202
        %v1825 = vunpack.c.l.b16 %v1203
        %v1826 = vunpack.c.h.b16 %v1203
        %v1827 = vunpack.c.l.b16 %v1204
        %v1828 = vunpack.c.h.b16 %v1204
        %v1829 = vunpack.c.l.b16 %v1205
        %v1830 = vunpack.c.h.b16 %v1205
        %v1831 = vunpack.c.l.b16 %v1206
        %v1832 = vunpack.c.h.b16 %v1206
        %v1833 = vunpack.c.l.b16 %v1207
        %v1834 = vunpack.c.h.b16 %v1207
        %v1835 = vunpack.c.l.b16 %v1208
        %v1836 = vunpack.c.h.b16 %v1208
        %v1837 = vunpack.c.l.b16 %v1209
        %v1838 = vunpack.c.h.b16 %v1209
        %v1839 = vunpack.c.l.b16 %v1210
        %v1840 = vunpack.c.h.b16 %v1210
        %v1841 = vunpack.c.l.b16 %v1211
        %v1842 = vunpack.c.h.b16 %v1211
        %v1843 = vunpack.c.l.b16 %v1212
        %v1844 = vunpack.c.h.b16 %v1212
        %v1845 = vunpack.c.l.b16 %v1213
        %v1846 = vunpack.c.h.b16 %v1213
        %v1847 = vunpack.c.l.b16 %v1214
        %v1848 = vunpack.c.h.b16 %v1214
        %v1849 = vunpack.c.l.b16 %v1215
        %v1850 = vunpack.c.h.b16 %v1215
        %v1851 = vunpack.c.l.b16 %v1216
        %v1852 = vunpack.c.h.b16 %v1216
        %v1853 = vunpack.c.l.b16 %v1217
        %v1854 = vunpack.c.h.b16 %v1217
        %v1855 = vunpack.c.l.b16 %v1218
        %v1856 = vunpack.c.h.b16 %v1218
        %v1857 = vunpack.c.l.b16 %v1219
        %v1858 = vunpack.c.h.b16 %v1219
        %v1859 = vunpack.c.l.b16 %v1220
        %v1860 = vunpack.c.h.b16 %v1220
        %v1861 = vunpack.c.l.b16 %v1221
        %v1862 = vunpack.c.h.b16 %v1221
        %v1863 = vunpack.c.l.b16 %v1222
        %v1864 = vunpack.c.h.b16 %v1222
        %v1865 = vunpack.c.l.b16 %v1223
        %v1866 = vunpack.c.h.b16 %v1223
        %v1867 = vunpack.c.l.b16 %v1224
        %v1868 = vunpack.c.h.b16 %v1224
        %v1869 = vunpack.c.l.b16 %v1225
        %v1870 = vunpack.c.h.b16 %v1225
        %v1871 = vunpack.c.l.b16 %v1226
        %v1872 = vunpack.c.h.b16 %v1226
        %v1873 = vunpack.c.l.b16 %v1227
        %v1874 = vunpack.c.h.b16 %v1227
        %v1875 = vunpack.c.l.b16 %v1228
        %v1876 = vunpack.c.h.b16 %v1228
        %v1877 = vpack.c.b16 %v1495, %v1493
        %v1878 = vpack.c.b16 %v1496, %v1494
        %v1879 = vpack.c.b16 %v1499, %v1497
        %v1880 = vpack.c.b16 %v1500, %v1498
        %v1881 = vpack.c.b16 %v1503, %v1501
        %v1882 = vpack.c.b16 %v1504, %v1502
        %v1883 = vpack.c.b16 %v1507, %v1505
        %v1884 = vpack.c.b16 %v1508, %v1506
        %v1885 = vpack.c.b16 %v1511, %v1509
        %v1886 = vpack.c.b16 %v1512, %v1510
        %v1887 = vpack.c.b16 %v1515, %v1513
        %v1888 = vpack.c.b16 %v1516, %v1514
        %v1889 = vpack.c.b16 %v1519, %v1517
        %v1890 = vpack.c.b16 %v1520, %v1518
        %v1891 = vpack.c.b16 %v1523, %v1521
        %v1892 = vpack.c.b16 %v1524, %v1522
        %v1893 = vpack.c.b16 %v1527, %v1525
        %v1894 = vpack.c.b16 %v1528, %v1526
        %v1895 = vpack.c.b16 %v1531, %v1529
        %v1896 = vpack.c.b16 %v1532, %v1530
        %v1897 = vpack.c.b16 %v1535, %v1533
        %v1898 = vpack.c.b16 %v1536, %v1534
        %v1899 = vpack.c.b16 %v1539, %v1537
        %v1900 = vpack.c.b16 %v1540, %v1538
        %v1901 = vpack.c.b16 %v1543, %v1541
        %v1902 = vpack.c.b16 %v1544, %v1542
        %v1903 = vpack.c.b16 %v1547, %v1545
        %v1904 = vpack.c.b16 %v1548, %v1546
        %v1905 = vpack.c.b16 %v1551, %v1549
        %v1906 = vpack.c.b16 %v1552, %v1550
        %v1907 = vpack.c.b16 %v1555, %v1553
        %v1908 = vpack.c.b16 %v1556, %v1554
        %v1909 = vpack.c.b16 %v1559, %v1557
        %v1910 = vpack.c.b16 %v1560, %v1558
        %v1911 = vpack.c.b16 %v1563, %v1561
        %v1912 = vpack.c.b16 %v1564, %v1562
        %v1913 = vpack.c.b16 %v1567, %v1565
        %v1914 = vpack.c.b16 %v1568, %v1566
        %v1915 = vpack.c.b16 %v1571, %v1569
        %v1916 = vpack.c.b16 %v1572, %v1570
        %v1917 = vpack.c.b16 %v1575, %v1573
        %v1918 = vpack.c.b16 %v1576, %v1574
        %v1919 = vpack.c.b16 %v1579, %v1577
        %v1920 = vpack.c.b16 %v1580, %v1578
        %v1921 = vpack.c.b16 %v1583, %v1581
        %v1922 = vpack.c.b16 %v1584, %v1582
        %v1923 = vpack.c.b16 %v1587, %v1585
        %v1924 = vpack.c.b16 %v1588, %v1586
        %v1925 = vpack.c.b16 %v1591, %v1589
        %v1926 = vpack.c.b16 %v1592, %v1590
        %v1927 = vpack.c.b16 %v1595, %v1593
        %v1928 = vpack.c.b16 %v1596, %v1594
        %v1929 = vpack.c.b16 %v1599, %v1597
        %v1930 = vpack.c.b16 %v1600, %v1598
        %v1931 = vpack.c.b16 %v1603, %v1601
        %v1932 = vpack.c.b16 %v1604, %v1602
        %v1933 = vpack.c.b16 %v1607, %v1605
        %v1934 = vpack.c.b16 %v1608, %v1606
        %v1935 = vpack.c.b16 %v1611, %v1609
        %v1936 = vpack.c.b16 %v1612, %v1610
        %v1937 = vpack.c.b16 %v1615, %v1613
        %v1938 = vpack.c.b16 %v1616, %v1614
        %v1939 = vpack.c.b16 %v1619, %v1617
        %v1940 = vpack.c.b16 %v1620, %v1618
        %v1941 = vpack.c.b16 %v1623, %v1621
        %v1942 = vpack.c.b16 %v1624, %v1622
        %v1943 = vpack.c.b16 %v1627, %v1625
        %v1944 = vpack.c.b16 %v1628, %v1626
        %v1945 = vpack.c.b16 %v1631, %v1629
        %v1946 = vpack.c.b16 %v1632, %v1630
        %v1947 = vpack.c.b16 %v1635, %v1633
        %v1948 = vpack.c.b16 %v1636, %v1634
        %v1949 = vpack.c.b16 %v1639, %v1637
        %v1950 = vpack.c.b16 %v1640, %v1638
        %v1951 = vpack.c.b16 %v1643, %v1641
        %v1952 = vpack.c.b16 %v1644, %v1642
        %v1953 = vpack.c.b16 %v1647, %v1645
        %v1954 = vpack.c.b16 %v1648, %v1646
        %v1955 = vpack.c.b16 %v1651, %v1649
        %v1956 = vpack.c.b16 %v1652, %v1650
        %v1957 = vpack.c.b16 %v1655, %v1653
        %v1958 = vpack.c.b16 %v1656, %v1654
        %v1959 = vpack.c.b16 %v1659, %v1657
        %v1960 = vpack.c.b16 %v1660, %v1658
        %v1961 = vpack.c.b16 %v1663, %v1661
        %v1962 = vpack.c.b16 %v1664, %v1662
        %v1963 = vpack.c.b16 %v1667, %v1665
        %v1964 = vpack.c.b16 %v1668, %v1666
        %v1965 = vpack.c.b16 %v1671, %v1669
        %v1966 = vpack.c.b16 %v1672, %v1670
        %v1967 = vpack.c.b16 %v1675, %v1673
        %v1968 = vpack.c.b16 %v1676, %v1674
        %v1969 = vpack.c.b16 %v1679, %v1677
        %v1970 = vpack.c.b16 %v1680, %v1678
        %v1971 = vpack.c.b16 %v1683, %v1681
        %v1972 = vpack.c.b16 %v1684, %v1682
        %v1973 = vpack.c.b16 %v1687, %v1685
        %v1974 = vpack.c.b16 %v1688, %v1686
        %v1975 = vpack.c.b16 %v1691, %v1689
        %v1976 = vpack.c.b16 %v1692, %v1690
        %v1977 = vpack.c.b16 %v1695, %v1693
        %v1978 = vpack.c.b16 %v1696, %v1694
        %v1979 = vpack.c.b16 %v1699, %v1697
        %v1980 = vpack.c.b16 %v1700, %v1698
        %v1981 = vpack.c.b16 %v1703, %v1701
        %v1982 = vpack.c.b16 %v1704, %v1702
        %v1983 = vpack.c.b16 %v1707, %v1705
        %v1984 = vpack.c.b16 %v1708, %v1706
        %v1985 = vpack.c.b16 %v1711, %v1709
        %v1986 = vpack.c.b16 %v1712, %v1710
        %v1987 = vpack.c.b16 %v1715, %v1713
        %v1988 = vpack.c.b16 %v1716, %v1714
        %v1989 = vpack.c.b16 %v1719, %v1717
        %v1990 = vpack.c.b16 %v1720, %v1718
        %v1991 = vpack.c.b16 %v1723, %v1721
        %v1992 = vpack.c.b16 %v1724, %v1722
        %v1993 = vpack.c.b16 %v1727, %v1725
        %v1994 = vpack.c.b16 %v1728, %v1726
        %v1995 = vpack.c.b16 %v1731, %v1729
        %v1996 = vpack.c.b16 %v1732, %v1730
        %v1997 = vpack.c.b16 %v1735, %v1733
        %v1998 = vpack.c.b16 %v1736, %v1734
        %v1999 = vpack.c.b16 %v1739, %v1737
        %v2000 = vpack.c.b16 %v1740, %v1738
        %v2001 = vpack.c.b16 %v1743, %v1741
        %v2002 = vpack.c.b16 %v1744, %v1742
        %v2003 = vpack.c.b16 %v1747, %v1745
        %v2004 = vpack.c.b16 %v1748, %v1746
        %v2005 = vpack.c.b16 %v1751, %v1749
        %v2006 = vpack.c.b16 %v1752, %v1750
        %v2007 = vpack.c.b16 %v1755, %v1753
        %v2008 = vpack.c.b16 %v1756, %v1754
        %v2009 = vpack.c.b16 %v1759, %v1757
        %v2010 = vpack.c.b16 %v1760, %v1758
        %v2011 = vpack.c.b16 %v1763, %v1761
        %v2012 = vpack.c.b16 %v1764, %v1762
        %v2013 = vpack.c.b16 %v1767, %v1765
        %v2014 = vpack.c.b16 %v1768, %v1766
        %v2015 = vpack.c.b16 %v1771, %v1769
        %v2016 = vpack.c.b16 %v1772, %v1770
        %v2017 = vpack.c.b16 %v1775, %v1773
        %v2018 = vpack.c.b16 %v1776, %v1774
        %v2019 = vpack.c.b16 %v1779, %v1777
        %v2020 = vpack.c.b16 %v1780, %v1778
        %v2021 = vpack.c.b16 %v1783, %v1781
        %v2022 = vpack.c.b16 %v1784, %v1782
        %v2023 = vpack.c.b16 %v1787, %v1785
        %v2024 = vpack.c.b16 %v1788, %v1786
        %v2025 = vpack.c.b16 %v1791, %v1789
        %v2026 = vpack.c.b16 %v1792, %v1790
        %v2027 = vpack.c.b16 %v1795, %v1793
        %v2028 = vpack.c.b16 %v1796, %v1794
        %v2029 = vpack.c.b16 %v1799, %v1797
        %v2030 = vpack.c.b16 %v1800, %v1798
        %v2031 = vpack.c.b16 %v1803, %v1801
        %v2032 = vpack.c.b16 %v1804, %v1802
        %v2033 = vpack.c.b16 %v1807, %v1805
        %v2034 = vpack.c.b16 %v1808, %v1806
        %v2035 = vpack.c.b16 %v1811, %v1809
        %v2036 = vpack.c.b16 %v1812, %v1810
        %v2037 = vpack.c.b16 %v1815, %v1813
        %v2038 = vpack.c.b16 %v1816, %v1814
        %v2039 = vpack.c.b16 %v1819, %v1817
        %v2040 = vpack.c.b16 %v1820, %v1818
        %v2041 = vpack.c.b16 %v1823, %v1821
        %v2042 = vpack.c.b16 %v1824, %v1822
        %v2043 = vpack.c.b16 %v1827, %v1825
        %v2044 = vpack.c.b16 %v1828, %v1826
        %v2045 = vpack.c.b16 %v1831, %v1829
        %v2046 = vpack.c.b16 %v1832, %v1830
        %v2047 = vpack.c.b16 %v1835, %v1833
        %v2048 = vpack.c.b16 %v1836, %v1834
        %v2049 = vpack.c.b16 %v1839, %v1837
        %v2050 = vpack.c.b16 %v1840, %v1838
        %v2051 = vpack.c.b16 %v1843, %v1841
        %v2052 = vpack.c.b16 %v1844, %v1842
        %v2053 = vpack.c.b16 %v1847, %v1845
        %v2054 = vpack.c.b16 %v1848, %v1846
        %v2055 = vpack.c.b16 %v1851, %v1849
        %v2056 = vpack.c.b16 %v1852, %v1850
        %v2057 = vpack.c.b16 %v1855, %v1853
        %v2058 = vpack.c.b16 %v1856, %v1854
        %v2059 = vpack.c.b16 %v1859, %v1857
        %v2060 = vpack.c.b16 %v1860, %v1858
        %v2061 = vpack.c.b16 %v1863, %v1861
        %v2062 = vpack.c.b16 %v1864, %v1862
        %v2063 = vpack.c.b16 %v1867, %v1865
        %v2064 = vpack.c.b16 %v1868, %v1866
        %v2065 = vpack.c.b16 %v1871, %v1869
        %v2066 = vpack.c.b16 %v1872, %v1870
        %v2067 = vpack.c.b16 %v1875, %v1873
        %v2068 = vpack.c.b16 %v1876, %v1874
        %2261 = vmatprep.subr.bf16.mxu0 %v1878
        %2262 = vmatpush1.bf16.msra.mxu0 %v1877
        %2263 = vmatprep.subr.bf16.mxu0 %v1880
        %2264 = vmatpush1.bf16.msra.mxu0 %v1879
        %2265 = vmatprep.subr.bf16.mxu0 %v1882
        %2266 = vmatpush1.bf16.msra.mxu0 %v1881
        %2267 = vmatprep.subr.bf16.mxu0 %v1884
        %2268 = vmatpush1.bf16.msra.mxu0 %v1883
        %2269 = vmatprep.subr.bf16.mxu0 %v1886
        %2270 = vmatpush1.bf16.msra.mxu0 %v1885
        %2271 = vmatprep.subr.bf16.mxu0 %v1888
        %2272 = vmatpush1.bf16.msra.mxu0 %v1887
        %2273 = vmatprep.subr.bf16.mxu0 %v1890
        %2274 = vmatpush1.bf16.msra.mxu0 %v1889
        %2275 = vmatprep.subr.bf16.mxu0 %v1892
        %2276 = vmatpush1.bf16.msra.mxu0 %v1891
        %2277 = vmatprep.subr.bf16.mxu0 %v1894
        %2278 = vmatpush1.bf16.msra.mxu0 %v1893
        %2279 = vmatprep.subr.bf16.mxu0 %v1896
        %2280 = vmatpush1.bf16.msra.mxu0 %v1895
        %2281 = vmatprep.subr.bf16.mxu0 %v1898
        %2282 = vmatpush1.bf16.msra.mxu0 %v1897
        %2283 = vmatprep.subr.bf16.mxu0 %v1900
        %2284 = vmatpush1.bf16.msra.mxu0 %v1899
        %2285 = vmatprep.subr.bf16.mxu0 %v1902
        %2286 = vmatpush1.bf16.msra.mxu0 %v1901
        %2287 = vmatprep.subr.bf16.mxu0 %v1904
        %2288 = vmatpush1.bf16.msra.mxu0 %v1903
        %2289 = vmatprep.subr.bf16.mxu0 %v1906
        %2290 = vmatpush1.bf16.msra.mxu0 %v1905
        %2291 = vmatprep.subr.bf16.mxu0 %v1908
        %2292 = vmatpush1.bf16.msra.mxu0 %v1907
        %2293 = vmatprep.mubr.bf16.mxu0 %v1278
        %2294 = vmatmul.mubr.bf16.gmra.mrb[0].mxu0 %v1277
        %v2295 = vpop.f32.mrb[0].mxu0
        %v2296 = vadd.f32 %v1234, %v2295
        %v2297 = vpop.f32.mrb[0].mxu0
        %v2298 = vadd.f32 %v1238, %v2297
        %v2299 = vpop.f32.mrb[0].mxu0
        %v2300 = vadd.f32 %v1234, %v2299
        %v2301 = vpop.f32.mrb[0].mxu0
        %v2302 = vadd.f32 %v1238, %v2301
        %2303 = vdwg.mxu0
        %2304 = vmatprep.subr.bf16.mxu0 %v1910
        %2305 = vmatpush1.bf16.msra.mxu0 %v1909
        %2306 = vmatprep.subr.bf16.mxu0 %v1912
        %2307 = vmatpush1.bf16.msra.mxu0 %v1911
        %2308 = vmatprep.subr.bf16.mxu0 %v1914
        %2309 = vmatpush1.bf16.msra.mxu0 %v1913
        %2310 = vmatprep.subr.bf16.mxu0 %v1916
        %2311 = vmatpush1.bf16.msra.mxu0 %v1915
        %2312 = vmatprep.subr.bf16.mxu0 %v1918
        %2313 = vmatpush1.bf16.msra.mxu0 %v1917
        %2314 = vmatprep.subr.bf16.mxu0 %v1920
        %2315 = vmatpush1.bf16.msra.mxu0 %v1919
        %2316 = vmatprep.subr.bf16.mxu0 %v1922
        %2317 = vmatpush1.bf16.msra.mxu0 %v1921
        %2318 = vmatprep.subr.bf16.mxu0 %v1924
        %2319 = vmatpush1.bf16.msra.mxu0 %v1923
        %2320 = vmatprep.subr.bf16.mxu0 %v1926
        %2321 = vmatpush1.bf16.msra.mxu0 %v1925
        %2322 = vmatprep.subr.bf16.mxu0 %v1928
        %2323 = vmatpush1.bf16.msra.mxu0 %v1927
        %2324 = vmatprep.subr.bf16.mxu0 %v1930
        %2325 = vmatpush1.bf16.msra.mxu0 %v1929
        %2326 = vmatprep.subr.bf16.mxu0 %v1932
        %2327 = vmatpush1.bf16.msra.mxu0 %v1931
        %2328 = vmatprep.subr.bf16.mxu0 %v1934
        %2329 = vmatpush1.bf16.msra.mxu0 %v1933
        %2330 = vmatprep.subr.bf16.mxu0 %v1936
        %2331 = vmatpush1.bf16.msra.mxu0 %v1935
        %2332 = vmatprep.subr.bf16.mxu0 %v1938
        %2333 = vmatpush1.bf16.msra.mxu0 %v1937
        %2334 = vmatprep.subr.bf16.mxu0 %v1940
        %2335 = vmatpush1.bf16.msra.mxu0 %v1939
        %2336 = vmatprep.mubr.bf16.mxu0 %v1280
        %2337 = vmatmul.mubr.bf16.gmra.mrb[0].mxu0 %v1279
        %v2338 = vpop.f32.mrb[0].mxu0
        %v2339 = vadd.f32 %v2296, %v2338
        %v2340 = vpop.f32.mrb[0].mxu0
        %v2341 = vadd.f32 %v2298, %v2340
        %v2342 = vpop.f32.mrb[0].mxu0
        %v2343 = vadd.f32 %v2300, %v2342
        %v2344 = vpop.f32.mrb[0].mxu0
        %v2345 = vadd.f32 %v2302, %v2344
        %2346 = vdwg.mxu0
        %2347 = vmatprep.subr.bf16.mxu0 %v1942
        %2348 = vmatpush1.bf16.msra.mxu0 %v1941
        %2349 = vmatprep.subr.bf16.mxu0 %v1944
        %2350 = vmatpush1.bf16.msra.mxu0 %v1943
        %2351 = vmatprep.subr.bf16.mxu0 %v1946
        %2352 = vmatpush1.bf16.msra.mxu0 %v1945
        %2353 = vmatprep.subr.bf16.mxu0 %v1948
        %2354 = vmatpush1.bf16.msra.mxu0 %v1947
        %2355 = vmatprep.subr.bf16.mxu0 %v1950
        %2356 = vmatpush1.bf16.msra.mxu0 %v1949
        %2357 = vmatprep.subr.bf16.mxu0 %v1952
        %2358 = vmatpush1.bf16.msra.mxu0 %v1951
        %2359 = vmatprep.subr.bf16.mxu0 %v1954
        %2360 = vmatpush1.bf16.msra.mxu0 %v1953
        %2361 = vmatprep.subr.bf16.mxu0 %v1956
        %2362 = vmatpush1.bf16.msra.mxu0 %v1955
        %2363 = vmatprep.subr.bf16.mxu0 %v1958
        %2364 = vmatpush1.bf16.msra.mxu0 %v1957
        %2365 = vmatprep.subr.bf16.mxu0 %v1960
        %2366 = vmatpush1.bf16.msra.mxu0 %v1959
        %2367 = vmatprep.subr.bf16.mxu0 %v1962
        %2368 = vmatpush1.bf16.msra.mxu0 %v1961
        %2369 = vmatprep.subr.bf16.mxu0 %v1964
        %2370 = vmatpush1.bf16.msra.mxu0 %v1963
        %2371 = vmatprep.subr.bf16.mxu0 %v1966
        %2372 = vmatpush1.bf16.msra.mxu0 %v1965
        %2373 = vmatprep.subr.bf16.mxu0 %v1968
        %2374 = vmatpush1.bf16.msra.mxu0 %v1967
        %2375 = vmatprep.subr.bf16.mxu0 %v1970
        %2376 = vmatpush1.bf16.msra.mxu0 %v1969
        %2377 = vmatprep.subr.bf16.mxu0 %v1972
        %2378 = vmatpush1.bf16.msra.mxu0 %v1971
        %2379 = vmatprep.mubr.bf16.mxu0 %v1282
        %2380 = vmatmul.mubr.bf16.gmra.mrb[0].mxu0 %v1281
        %v2381 = vpop.f32.mrb[0].mxu0
        %v2382 = vadd.f32 %v2339, %v2381
        %v2383 = vpop.f32.mrb[0].mxu0
        %v2384 = vadd.f32 %v2341, %v2383
        %v2385 = vpop.f32.mrb[0].mxu0
        %v2386 = vadd.f32 %v2343, %v2385
        %v2387 = vpop.f32.mrb[0].mxu0
        %v2388 = vadd.f32 %v2345, %v2387
        %2389 = vdwg.mxu0
        %2390 = vmatprep.subr.bf16.mxu0 %v1974
        %2391 = vmatpush1.bf16.msra.mxu0 %v1973
        %2392 = vmatprep.subr.bf16.mxu0 %v1976
        %2393 = vmatpush1.bf16.msra.mxu0 %v1975
        %2394 = vmatprep.subr.bf16.mxu0 %v1978
        %2395 = vmatpush1.bf16.msra.mxu0 %v1977
        %2396 = vmatprep.subr.bf16.mxu0 %v1980
        %2397 = vmatpush1.bf16.msra.mxu0 %v1979
        %2398 = vmatprep.subr.bf16.mxu0 %v1982
        %2399 = vmatpush1.bf16.msra.mxu0 %v1981
        %2400 = vmatprep.subr.bf16.mxu0 %v1984
        %2401 = vmatpush1.bf16.msra.mxu0 %v1983
        %2402 = vmatprep.subr.bf16.mxu0 %v1986
        %2403 = vmatpush1.bf16.msra.mxu0 %v1985
        %2404 = vmatprep.subr.bf16.mxu0 %v1988
        %2405 = vmatpush1.bf16.msra.mxu0 %v1987
        %2406 = vmatprep.subr.bf16.mxu0 %v1990
        %2407 = vmatpush1.bf16.msra.mxu0 %v1989
        %2408 = vmatprep.subr.bf16.mxu0 %v1992
        %2409 = vmatpush1.bf16.msra.mxu0 %v1991
        %2410 = vmatprep.subr.bf16.mxu0 %v1994
        %2411 = vmatpush1.bf16.msra.mxu0 %v1993
        %2412 = vmatprep.subr.bf16.mxu0 %v1996
        %2413 = vmatpush1.bf16.msra.mxu0 %v1995
        %2414 = vmatprep.subr.bf16.mxu0 %v1998
        %2415 = vmatpush1.bf16.msra.mxu0 %v1997
        %2416 = vmatprep.subr.bf16.mxu0 %v2000
        %2417 = vmatpush1.bf16.msra.mxu0 %v1999
        %2418 = vmatprep.subr.bf16.mxu0 %v2002
        %2419 = vmatpush1.bf16.msra.mxu0 %v2001
        %2420 = vmatprep.subr.bf16.mxu0 %v2004
        %2421 = vmatpush1.bf16.msra.mxu0 %v2003
        %2422 = vmatprep.mubr.bf16.mxu0 %v1284
        %2423 = vmatmul.mubr.bf16.gmra.mrb[0].mxu0 %v1283
        %v2424 = vpop.f32.mrb[0].mxu0
        %v2425 = vadd.f32 %v2382, %v2424
        %v2426 = vpop.f32.mrb[0].mxu0
        %v2427 = vadd.f32 %v2384, %v2426
        %v2428 = vpop.f32.mrb[0].mxu0
        %v2429 = vadd.f32 %v2386, %v2428
        %v2430 = vpop.f32.mrb[0].mxu0
        %v2431 = vadd.f32 %v2388, %v2430
        %2432 = vdwg.mxu0
        %2433 = vmatprep.subr.bf16.mxu0 %v2006
        %2434 = vmatpush1.bf16.msra.mxu0 %v2005
        %2435 = vmatprep.subr.bf16.mxu0 %v2008
        %2436 = vmatpush1.bf16.msra.mxu0 %v2007
        %2437 = vmatprep.subr.bf16.mxu0 %v2010
        %2438 = vmatpush1.bf16.msra.mxu0 %v2009
        %2439 = vmatprep.subr.bf16.mxu0 %v2012
        %2440 = vmatpush1.bf16.msra.mxu0 %v2011
        %2441 = vmatprep.subr.bf16.mxu0 %v2014
        %2442 = vmatpush1.bf16.msra.mxu0 %v2013
        %2443 = vmatprep.subr.bf16.mxu0 %v2016
        %2444 = vmatpush1.bf16.msra.mxu0 %v2015
        %2445 = vmatprep.subr.bf16.mxu0 %v2018
        %2446 = vmatpush1.bf16.msra.mxu0 %v2017
        %2447 = vmatprep.subr.bf16.mxu0 %v2020
        %2448 = vmatpush1.bf16.msra.mxu0 %v2019
        %2449 = vmatprep.subr.bf16.mxu0 %v2022
        %2450 = vmatpush1.bf16.msra.mxu0 %v2021
        %2451 = vmatprep.subr.bf16.mxu0 %v2024
        %2452 = vmatpush1.bf16.msra.mxu0 %v2023
        %2453 = vmatprep.subr.bf16.mxu0 %v2026
        %2454 = vmatpush1.bf16.msra.mxu0 %v2025
        %2455 = vmatprep.subr.bf16.mxu0 %v2028
        %2456 = vmatpush1.bf16.msra.mxu0 %v2027
        %2457 = vmatprep.subr.bf16.mxu0 %v2030
        %2458 = vmatpush1.bf16.msra.mxu0 %v2029
        %2459 = vmatprep.subr.bf16.mxu0 %v2032
        %2460 = vmatpush1.bf16.msra.mxu0 %v2031
        %2461 = vmatprep.subr.bf16.mxu0 %v2034
        %2462 = vmatpush1.bf16.msra.mxu0 %v2033
        %2463 = vmatprep.subr.bf16.mxu0 %v2036
        %2464 = vmatpush1.bf16.msra.mxu0 %v2035
        %2465 = vmatprep.mubr.bf16.mxu0 %v1286
        %2466 = vmatmul.mubr.bf16.gmra.mrb[0].mxu0 %v1285
        %v2467 = vpop.f32.mrb[0].mxu0
        %v2468 = vadd.f32 %v2425, %v2467
        %v2469 = vpop.f32.mrb[0].mxu0
        %v2470 = vadd.f32 %v2427, %v2469
        %v2471 = vpop.f32.mrb[0].mxu0
        %v2472 = vadd.f32 %v2429, %v2471
        %v2473 = vpop.f32.mrb[0].mxu0
        %v2474 = vadd.f32 %v2431, %v2473
        %2475 = vdwg.mxu0
        %2476 = vmatprep.subr.bf16.mxu0 %v2038
        %2477 = vmatpush1.bf16.msra.mxu0 %v2037
        %2478 = vmatprep.subr.bf16.mxu0 %v2040
        %2479 = vmatpush1.bf16.msra.mxu0 %v2039
        %2480 = vmatprep.subr.bf16.mxu0 %v2042
        %2481 = vmatpush1.bf16.msra.mxu0 %v2041
        %2482 = vmatprep.subr.bf16.mxu0 %v2044
        %2483 = vmatpush1.bf16.msra.mxu0 %v2043
        %2484 = vmatprep.subr.bf16.mxu0 %v2046
        %2485 = vmatpush1.bf16.msra.mxu0 %v2045
        %2486 = vmatprep.subr.bf16.mxu0 %v2048
        %2487 = vmatpush1.bf16.msra.mxu0 %v2047
        %2488 = vmatprep.subr.bf16.mxu0 %v2050
        %2489 = vmatpush1.bf16.msra.mxu0 %v2049
        %2490 = vmatprep.subr.bf16.mxu0 %v2052
        %2491 = vmatpush1.bf16.msra.mxu0 %v2051
        %2492 = vmatprep.subr.bf16.mxu0 %v2054
        %2493 = vmatpush1.bf16.msra.mxu0 %v2053
        %2494 = vmatprep.subr.bf16.mxu0 %v2056
        %2495 = vmatpush1.bf16.msra.mxu0 %v2055
        %2496 = vmatprep.subr.bf16.mxu0 %v2058
        %2497 = vmatpush1.bf16.msra.mxu0 %v2057
        %2498 = vmatprep.subr.bf16.mxu0 %v2060
        %2499 = vmatpush1.bf16.msra.mxu0 %v2059
        %2500 = vmatprep.subr.bf16.mxu0 %v2062
        %2501 = vmatpush1.bf16.msra.mxu0 %v2061
        %2502 = vmatprep.subr.bf16.mxu0 %v2064
        %2503 = vmatpush1.bf16.msra.mxu0 %v2063
        %2504 = vmatprep.subr.bf16.mxu0 %v2066
        %2505 = vmatpush1.bf16.msra.mxu0 %v2065
        %2506 = vmatprep.subr.bf16.mxu0 %v2068
        %2507 = vmatpush1.bf16.msra.mxu0 %v2067
        %2508 = vmatprep.mubr.bf16.mxu0 %v1288
        %2509 = vmatmul.mubr.bf16.gmra.mrb[0].mxu0 %v1287
        %v2510 = vpop.f32.mrb[0].mxu0
        %v2511 = vadd.f32 %v2468, %v2510
        %v2512 = vpop.f32.mrb[0].mxu0
        %v2513 = vadd.f32 %v2470, %v2512
        %v2514 = vpop.f32.mrb[0].mxu0
        %v2515 = vadd.f32 %v2472, %v2514
        %v2516 = vpop.f32.mrb[0].mxu0
        %v2517 = vadd.f32 %v2474, %v2516
        %2518 = vdwg.mxu0
        %vm2519 = vcmp.ge.f32.partialorder %v2511, 0.0
        %vm2520 = vcmp.ge.f32.partialorder %v2513, 0.0
        %vm2521 = vcmp.ge.f32.partialorder %v2515, 0.0
        %vm2522 = vcmp.ge.f32.partialorder %v2517, 0.0
        %v2523 = vmul.f32 %v2511, 0.01
        %v2524 = vmul.f32 %v2513, 0.01
        %v2525 = vmul.f32 %v2515, 0.01
        %v2526 = vmul.f32 %v2517, 0.01
        %v2527 = vsel %vm2519, %v2511, %v2523
        %v2528 = vsel %vm2520, %v2513, %v2524
        %v2529 = vsel %vm2521, %v2515, %v2525
        %v2530 = vsel %vm2522, %v2517, %v2526
        %2531 = vst [vmem:[%s1009] sm:$0xff] %v2527
        %2532 = vst [vmem:[%s1009 + $0x8] sm:$0xff] %v2528
        %2533 = vst [vmem:[%s1009 + $0x10] sm:$0xff] %v2529
        %2534 = vst [vmem:[%s1009 + $0x18] sm:$0xff] %v2530
        %s2535 = sand.u32 %s114, 1
        %s2536 = sand.u32 %s114, 1
        %s2537 = smul.addr %s2536, 32
        %s2538 = scalar_lea.vmem [#allocation3], %s2537
        // Predicated region
        $region71: #{_lambda_.11} parent=65 // pred_check
          %p2539 = pneg %p124
        $region72: #{_lambda_.11} parent=65 // pred_check_branch
          %2541 = sbr.rel (%p2539) target = $region74
        $region73: #{_lambda_.11} parent=65 // pred_region
          %s2542 = smul.u32 2, %s18
          %s2543 = smul.u32 2, %s19
          %s2544 = smul.addr %s2542, 4
          %s2545 = sadd.s32 %s2543, %s2544
          %s2546 = smul.addr %s2545, 8
          %s2547 = scalar_lea.vmem %s3, %s2546
          // Predicated region
          $region75: #{_lambda_.11} parent=73 // pred_check
            _
          $region76: #{_lambda_.11} parent=73 // pred_check_branch
            %2549 = sbr.rel (0) target = $region78
          $region77: #{_lambda_.11} parent=73 // pred_region
            // Predicated region
            $region79: #{_lambda_.11} parent=77 // pred_check
              _
            $region80: #{_lambda_.11} parent=77 // pred_check_branch
              %2551 = sbr.rel (0) target = $region82
            $region81: #{_lambda_.11} parent=77 // pred_region
              loop: start=0, step=1, limit=1
              $region83: #{_lambda_.11} parent=81 // loop_pre_header
                _
              $region84: #{_lambda_.11} parent=81 // loop_header
                %s2553 = sphi 0, %s2557
                %p2554 = scmp.ge.s32.totalorder %s2553, 1
                %s2558 = sphi %s2538, %s2538
                %s2559 = sphi %s2547, %s2547
              $region85: #{_lambda_.11} parent=81 // loop_header_branch
                %2556 = sbr.rel (%p2554) target = $region89
              $region86: #{_lambda_.11} parent=81 // loop_body
                %v2560 = vld [vmem:[%s2558] sm:$0xff]
                %2561 = vst [vmem:[%s2559] sm:$0xff] %v2560
                %v2562 = vld [vmem:[%s2558 + $0x8] sm:$0xff]
                %2563 = vst [vmem:[%s2559 + $0x8] sm:$0xff] %v2562
                %v2564 = vld [vmem:[%s2558 + $0x10] sm:$0xff]
                %2565 = vst [vmem:[%s2559 + $0x20] sm:$0xff] %v2564
                %v2566 = vld [vmem:[%s2558 + $0x18] sm:$0xff]
                %2567 = vst [vmem:[%s2559 + $0x28] sm:$0xff] %v2566
              $region87: #{_lambda_.11} parent=81 // loop_footer
                %s2557 = sadd.s32 1, %s2553
              $region88: #{_lambda_.11} parent=81 // loop_footer_branch
                %2552 = sbr.rel target = $region84
              $region89: #{_lambda_.11} parent=81 // loop_exit
                _
            $region82: #{_lambda_.11} parent=77 // pred_fallthru
              _
            // Predicated region
            $region90: #{_lambda_.11} parent=77 // pred_check
              _
            $region91: #{_lambda_.11} parent=77 // pred_check_branch
              %2569 = sbr.rel target = $region93
            $region92: #{_lambda_.11} parent=77 // pred_region
              _
            $region93: #{_lambda_.11} parent=77 // pred_fallthru
              _
          $region78: #{_lambda_.11} parent=73 // pred_fallthru
            _
          %2570 = vnop
        $region74: #{_lambda_.11} parent=65 // pred_fallthru
          _
      $region66: #{_lambda_.11} parent=5 // pred_fallthru
        _
      %p2571 = scmp.le.s32.totalorder 2, %s9
      // Predicated region
      $region94: #{_lambda_.11} parent=5 // pred_check
        %p2572 = pneg %p2571
      $region95: #{_lambda_.11} parent=5 // pred_check_branch
        %2574 = sbr.rel (%p2572) target = $region97
      $region96: #{_lambda_.11} parent=5 // pred_region
        %s2575 = ssub.s32 %s9, 2
        // Predicated region
        $region98: #{_lambda_.11} parent=96 // pred_check
          %p2576 = pneg %p130
        $region99: #{_lambda_.11} parent=96 // pred_check_branch
          %2578 = sbr.rel (%p2576) target = $region101
        $region100: #{_lambda_.11} parent=96 // pred_region
          %s2579 = sand.u32 %s115, 1
          %s2580 = sand.u32 %s115, 1
          %s2581 = smul.addr %s2580, 32
          %s2582 = scalar_lea.vmem [#allocation3], %s2581
        $region101: #{_lambda_.11} parent=96 // pred_fallthru
          _
      $region97: #{_lambda_.11} parent=5 // pred_fallthru
        _
    $region6: #{_lambda_.11} parent=1 // loop_footer
      %s13 = sadd.s32 1, %s9
    $region7: #{_lambda_.11} parent=1 // loop_footer_branch
      %8 = sbr.rel target = $region3
    $region8: #{_lambda_.11} parent=1 // loop_exit
      _

// kernel: _lambda_.13
$region0: #{_lambda_.13}
  #allocation0 [shape = 'u32[]', space=smem, size = 0x4, offset = 0x4, fixed_abs, tag = 'smem constant byte address 0x4 - core index']
  #allocation1 [shape = 'u32[144,128]{1,0:T(1,128)}', space=vmem, size = 0x12000, scoped, tag = 'internal scratch']
  %s0 = inlined_call_operand.vmem [shape: bf16[16,512], index: 0, kind: input, shape index: {}]
  %s1 = inlined_call_operand.vmem [shape: bf16[512,128], index: 1, kind: input, shape index: {}]
  %s2 = inlined_call_operand.vmem [shape: f32[1,128], index: 2, kind: input, shape index: {}]
  %s3 = inlined_call_operand.vmem [shape: f32[1,128], index: 3, kind: input, shape index: {}]
  %s4 = inlined_call_operand.vmem [shape: f32[1,128], index: 4, kind: input, shape index: {}]
  %s5 = inlined_call_operand.vmem [shape: bf16[128,128], index: 5, kind: input, shape index: {}]
  %s6 = inlined_call_operand.vmem [shape: f32[1,128], index: 6, kind: input, shape index: {}]
  %s7 = inlined_call_operand.vmem [shape: f32[16,128], index: 7, kind: output, shape index: {}]
  %s8 = sld [smem:[#allocation0]]
  $region38: #{_lambda_.13} parent=0
    _
  %s10 = ssub.s32 1, %s8
  %s11 = scalar_select 0, %s10, %s8
  // Predicated region
  $region2: #{_lambda_.13} parent=0 // pred_check
    _
  $region3: #{_lambda_.13} parent=0 // pred_check_branch
    %13 = sbr.rel (0) target = $region5
  $region4: #{_lambda_.13} parent=0 // pred_region
    _
  $region5: #{_lambda_.13} parent=0 // pred_fallthru
    _
  // Predicated region
  $region6: #{_lambda_.13} parent=0 // pred_check
    _
  $region7: #{_lambda_.13} parent=0 // pred_check_branch
    %15 = sbr.rel (0) target = $region9
  $region8: #{_lambda_.13} parent=0 // pred_region
    _
  $region9: #{_lambda_.13} parent=0 // pred_fallthru
    _
  // Predicated region
  $region10: #{_lambda_.13} parent=0 // pred_check
    _
  $region11: #{_lambda_.13} parent=0 // pred_check_branch
    %17 = sbr.rel (0) target = $region13
  $region12: #{_lambda_.13} parent=0 // pred_region
    _
  $region13: #{_lambda_.13} parent=0 // pred_fallthru
    _
  // Predicated region
  $region14: #{_lambda_.13} parent=0 // pred_check
    _
  $region15: #{_lambda_.13} parent=0 // pred_check_branch
    %19 = sbr.rel (0) target = $region17
  $region16: #{_lambda_.13} parent=0 // pred_region
    _
  $region17: #{_lambda_.13} parent=0 // pred_fallthru
    _
  // Predicated region
  $region18: #{_lambda_.13} parent=0 // pred_check
    _
  $region19: #{_lambda_.13} parent=0 // pred_check_branch
    %21 = sbr.rel (0) target = $region21
  $region20: #{_lambda_.13} parent=0 // pred_region
    _
  $region21: #{_lambda_.13} parent=0 // pred_fallthru
    _
  // Predicated region
  $region22: #{_lambda_.13} parent=0 // pred_check
    _
  $region23: #{_lambda_.13} parent=0 // pred_check_branch
    %23 = sbr.rel (0) target = $region25
  $region24: #{_lambda_.13} parent=0 // pred_region
    _
  $region25: #{_lambda_.13} parent=0 // pred_fallthru
    _
  // Predicated region
  $region26: #{_lambda_.13} parent=0 // pred_check
    _
  $region27: #{_lambda_.13} parent=0 // pred_check_branch
    %25 = sbr.rel (0) target = $region29
  $region28: #{_lambda_.13} parent=0 // pred_region
    _
  $region29: #{_lambda_.13} parent=0 // pred_fallthru
    _
  %v27 = vld [vmem:[%s0] sm:$0xff]
  %v28 = vld [vmem:[%s0 + $0x8] sm:$0xff]
  %v29 = vld [vmem:[%s0 + $0x10] sm:$0xff]
  %v30 = vld [vmem:[%s0 + $0x18] sm:$0xff]
  %v31 = vld [vmem:[%s1] sm:$0xf]
  %v32 = vld [vmem:[%s1 + $0x4] sm:$0xf]
  %v33 = vld [vmem:[%s1 + $0x8] sm:$0xf]
  %v34 = vld [vmem:[%s1 + $0xc] sm:$0xf]
  %v35 = vld [vmem:[%s1 + $0x10] sm:$0xf]
  %v36 = vld [vmem:[%s1 + $0x14] sm:$0xf]
  %v37 = vld [vmem:[%s1 + $0x18] sm:$0xf]
  %v38 = vld [vmem:[%s1 + $0x1c] sm:$0xf]
  %v39 = vld [vmem:[%s1 + $0x20] sm:$0xf]
  %v40 = vld [vmem:[%s1 + $0x24] sm:$0xf]
  %v41 = vld [vmem:[%s1 + $0x28] sm:$0xf]
  %v42 = vld [vmem:[%s1 + $0x2c] sm:$0xf]
  %v43 = vld [vmem:[%s1 + $0x30] sm:$0xf]
  %v44 = vld [vmem:[%s1 + $0x34] sm:$0xf]
  %v45 = vld [vmem:[%s1 + $0x38] sm:$0xf]
  %v46 = vld [vmem:[%s1 + $0x3c] sm:$0xf]
  %v47 = vld [vmem:[%s1 + $0x40] sm:$0xf]
  %v48 = vld [vmem:[%s1 + $0x44] sm:$0xf]
  %v49 = vld [vmem:[%s1 + $0x48] sm:$0xf]
  %v50 = vld [vmem:[%s1 + $0x4c] sm:$0xf]
  %v51 = vld [vmem:[%s1 + $0x50] sm:$0xf]
  %v52 = vld [vmem:[%s1 + $0x54] sm:$0xf]
  %v53 = vld [vmem:[%s1 + $0x58] sm:$0xf]
  %v54 = vld [vmem:[%s1 + $0x5c] sm:$0xf]
  %v55 = vld [vmem:[%s1 + $0x60] sm:$0xf]
  %v56 = vld [vmem:[%s1 + $0x64] sm:$0xf]
  %v57 = vld [vmem:[%s1 + $0x68] sm:$0xf]
  %v58 = vld [vmem:[%s1 + $0x6c] sm:$0xf]
  %v59 = vld [vmem:[%s1 + $0x70] sm:$0xf]
  %v60 = vld [vmem:[%s1 + $0x74] sm:$0xf]
  %v61 = vld [vmem:[%s1 + $0x78] sm:$0xf]
  %v62 = vld [vmem:[%s1 + $0x7c] sm:$0xf]
  %v63 = vld [vmem:[%s1 + $0x80] sm:$0xf]
  %v64 = vld [vmem:[%s1 + $0x84] sm:$0xf]
  %v65 = vld [vmem:[%s1 + $0x88] sm:$0xf]
  %v66 = vld [vmem:[%s1 + $0x8c] sm:$0xf]
  %v67 = vld [vmem:[%s1 + $0x90] sm:$0xf]
  %v68 = vld [vmem:[%s1 + $0x94] sm:$0xf]
  %v69 = vld [vmem:[%s1 + $0x98] sm:$0xf]
  %v70 = vld [vmem:[%s1 + $0x9c] sm:$0xf]
  %v71 = vld [vmem:[%s1 + $0xa0] sm:$0xf]
  %v72 = vld [vmem:[%s1 + $0xa4] sm:$0xf]
  %v73 = vld [vmem:[%s1 + $0xa8] sm:$0xf]
  %v74 = vld [vmem:[%s1 + $0xac] sm:$0xf]
  %v75 = vld [vmem:[%s1 + $0xb0] sm:$0xf]
  %v76 = vld [vmem:[%s1 + $0xb4] sm:$0xf]
  %v77 = vld [vmem:[%s1 + $0xb8] sm:$0xf]
  %v78 = vld [vmem:[%s1 + $0xbc] sm:$0xf]
  %v79 = vld [vmem:[%s1 + $0xc0] sm:$0xf]
  %v80 = vld [vmem:[%s1 + $0xc4] sm:$0xf]
  %v81 = vld [vmem:[%s1 + $0xc8] sm:$0xf]
  %v82 = vld [vmem:[%s1 + $0xcc] sm:$0xf]
  %v83 = vld [vmem:[%s1 + $0xd0] sm:$0xf]
  %v84 = vld [vmem:[%s1 + $0xd4] sm:$0xf]
  %v85 = vld [vmem:[%s1 + $0xd8] sm:$0xf]
  %v86 = vld [vmem:[%s1 + $0xdc] sm:$0xf]
  %v87 = vld [vmem:[%s1 + $0xe0] sm:$0xf]
  %v88 = vld [vmem:[%s1 + $0xe4] sm:$0xf]
  %v89 = vld [vmem:[%s1 + $0xe8] sm:$0xf]
  %v90 = vld [vmem:[%s1 + $0xec] sm:$0xf]
  %v91 = vld [vmem:[%s1 + $0xf0] sm:$0xf]
  %v92 = vld [vmem:[%s1 + $0xf4] sm:$0xf]
  %v93 = vld [vmem:[%s1 + $0xf8] sm:$0xf]
  %v94 = vld [vmem:[%s1 + $0xfc] sm:$0xf]
  %v95 = vld [vmem:[%s2] sm:$0x1]
  %v97 = vlaneseq
  %v98 = vshrl.u32 %v97, 7
  %v99 = vsub.s32 0, %v98
  %v100 = vrot.slane %v95, %v99
  %v106 = vunpack.c.l.b16 %v27
  %v107 = vunpack.c.h.b16 %v27
  %v108 = vunpack.c.l.b16 %v28
  %v109 = vunpack.c.h.b16 %v28
  %v110 = vunpack.c.l.b16 %v29
  %v111 = vunpack.c.h.b16 %v29
  %v112 = vunpack.c.l.b16 %v30
  %v113 = vunpack.c.h.b16 %v30
  %v114 = vpack.c.b16 %v110, %v106
  %v115 = vpack.c.b16 %v111, %v107
  %v116 = vpack.c.b16 %v112, %v108
  %v117 = vpack.c.b16 %v113, %v109
  %v186 = vunpack.c.l.b16 %v31
  %v187 = vunpack.c.l.b16 %v32
  %v188 = vunpack.c.l.b16 %v33
  %v189 = vunpack.c.l.b16 %v34
  %v190 = vunpack.c.l.b16 %v35
  %v191 = vunpack.c.l.b16 %v36
  %v192 = vunpack.c.l.b16 %v37
  %v193 = vunpack.c.l.b16 %v38
  %v194 = vunpack.c.l.b16 %v39
  %v195 = vunpack.c.l.b16 %v40
  %v196 = vunpack.c.l.b16 %v41
  %v197 = vunpack.c.l.b16 %v42
  %v198 = vunpack.c.l.b16 %v43
  %v199 = vunpack.c.l.b16 %v44
  %v200 = vunpack.c.l.b16 %v45
  %v201 = vunpack.c.l.b16 %v46
  %v202 = vunpack.c.l.b16 %v47
  %v203 = vunpack.c.l.b16 %v48
  %v204 = vunpack.c.l.b16 %v49
  %v205 = vunpack.c.l.b16 %v50
  %v206 = vunpack.c.l.b16 %v51
  %v207 = vunpack.c.l.b16 %v52
  %v208 = vunpack.c.l.b16 %v53
  %v209 = vunpack.c.l.b16 %v54
  %v210 = vunpack.c.l.b16 %v55
  %v211 = vunpack.c.l.b16 %v56
  %v212 = vunpack.c.l.b16 %v57
  %v213 = vunpack.c.l.b16 %v58
  %v214 = vunpack.c.l.b16 %v59
  %v215 = vunpack.c.l.b16 %v60
  %v216 = vunpack.c.l.b16 %v61
  %v217 = vunpack.c.l.b16 %v62
  %v218 = vunpack.c.l.b16 %v63
  %v219 = vunpack.c.l.b16 %v64
  %v220 = vunpack.c.l.b16 %v65
  %v221 = vunpack.c.l.b16 %v66
  %v222 = vunpack.c.l.b16 %v67
  %v223 = vunpack.c.l.b16 %v68
  %v224 = vunpack.c.l.b16 %v69
  %v225 = vunpack.c.l.b16 %v70
  %v226 = vunpack.c.l.b16 %v71
  %v227 = vunpack.c.l.b16 %v72
  %v228 = vunpack.c.l.b16 %v73
  %v229 = vunpack.c.l.b16 %v74
  %v230 = vunpack.c.l.b16 %v75
  %v231 = vunpack.c.l.b16 %v76
  %v232 = vunpack.c.l.b16 %v77
  %v233 = vunpack.c.l.b16 %v78
  %v234 = vunpack.c.l.b16 %v79
  %v235 = vunpack.c.l.b16 %v80
  %v236 = vunpack.c.l.b16 %v81
  %v237 = vunpack.c.l.b16 %v82
  %v238 = vunpack.c.l.b16 %v83
  %v239 = vunpack.c.l.b16 %v84
  %v240 = vunpack.c.l.b16 %v85
  %v241 = vunpack.c.l.b16 %v86
  %v242 = vunpack.c.l.b16 %v87
  %v243 = vunpack.c.l.b16 %v88
  %v244 = vunpack.c.l.b16 %v89
  %v245 = vunpack.c.l.b16 %v90
  %v246 = vunpack.c.l.b16 %v91
  %v247 = vunpack.c.l.b16 %v92
  %v248 = vunpack.c.l.b16 %v93
  %v249 = vunpack.c.l.b16 %v94
  %v250 = vpack.c.b16 %v187, %v186
  %v251 = vpack.c.b16 %v189, %v188
  %v252 = vpack.c.b16 %v191, %v190
  %v253 = vpack.c.b16 %v193, %v192
  %v254 = vpack.c.b16 %v195, %v194
  %v255 = vpack.c.b16 %v197, %v196
  %v256 = vpack.c.b16 %v199, %v198
  %v257 = vpack.c.b16 %v201, %v200
  %v258 = vpack.c.b16 %v203, %v202
  %v259 = vpack.c.b16 %v205, %v204
  %v260 = vpack.c.b16 %v207, %v206
  %v261 = vpack.c.b16 %v209, %v208
  %v262 = vpack.c.b16 %v211, %v210
  %v263 = vpack.c.b16 %v213, %v212
  %v264 = vpack.c.b16 %v215, %v214
  %v265 = vpack.c.b16 %v217, %v216
  %v266 = vpack.c.b16 %v219, %v218
  %v267 = vpack.c.b16 %v221, %v220
  %v268 = vpack.c.b16 %v223, %v222
  %v269 = vpack.c.b16 %v225, %v224
  %v270 = vpack.c.b16 %v227, %v226
  %v271 = vpack.c.b16 %v229, %v228
  %v272 = vpack.c.b16 %v231, %v230
  %v273 = vpack.c.b16 %v233, %v232
  %v274 = vpack.c.b16 %v235, %v234
  %v275 = vpack.c.b16 %v237, %v236
  %v276 = vpack.c.b16 %v239, %v238
  %v277 = vpack.c.b16 %v241, %v240
  %v278 = vpack.c.b16 %v243, %v242
  %v279 = vpack.c.b16 %v245, %v244
  %v280 = vpack.c.b16 %v247, %v246
  %v281 = vpack.c.b16 %v249, %v248
  %314 = vmatprep.subr.bf16.mxu0 0
  %315 = vmatpush1.bf16.msra.mxu0 %v250
  %316 = vmatprep.subr.bf16.mxu0 0
  %317 = vmatpush1.bf16.msra.mxu0 %v251
  %318 = vmatprep.subr.bf16.mxu0 0
  %319 = vmatpush1.bf16.msra.mxu0 %v252
  %320 = vmatprep.subr.bf16.mxu0 0
  %321 = vmatpush1.bf16.msra.mxu0 %v253
  %322 = vmatprep.subr.bf16.mxu0 0
  %323 = vmatpush1.bf16.msra.mxu0 %v254
  %324 = vmatprep.subr.bf16.mxu0 0
  %325 = vmatpush1.bf16.msra.mxu0 %v255
  %326 = vmatprep.subr.bf16.mxu0 0
  %327 = vmatpush1.bf16.msra.mxu0 %v256
  %328 = vmatprep.subr.bf16.mxu0 0
  %329 = vmatpush1.bf16.msra.mxu0 %v257
  %330 = vmatprep.subr.bf16.mxu0 0
  %331 = vmatpush1.bf16.msra.mxu0 %v258
  %332 = vmatprep.subr.bf16.mxu0 0
  %333 = vmatpush1.bf16.msra.mxu0 %v259
  %334 = vmatprep.subr.bf16.mxu0 0
  %335 = vmatpush1.bf16.msra.mxu0 %v260
  %336 = vmatprep.subr.bf16.mxu0 0
  %337 = vmatpush1.bf16.msra.mxu0 %v261
  %338 = vmatprep.subr.bf16.mxu0 0
  %339 = vmatpush1.bf16.msra.mxu0 %v262
  %340 = vmatprep.subr.bf16.mxu0 0
  %341 = vmatpush1.bf16.msra.mxu0 %v263
  %342 = vmatprep.subr.bf16.mxu0 0
  %343 = vmatpush1.bf16.msra.mxu0 %v264
  %344 = vmatprep.subr.bf16.mxu0 0
  %345 = vmatpush1.bf16.msra.mxu0 %v265
  %346 = vmatprep.mubr.bf16.mxu0 %v115
  %347 = vmatmul.mubr.bf16.gmra.mrb[0].mxu0 %v114
  %v348 = vpop.f32.mrb[0].mxu0
  %v349 = vadd.f32 %v100, %v348
  %v350 = vpop.f32.mrb[0].mxu0
  %v351 = vpop.f32.mrb[0].mxu0
  %v352 = vadd.f32 %v100, %v351
  %v353 = vpop.f32.mrb[0].mxu0
  %354 = vdwg.mxu0
  %355 = vmatprep.subr.bf16.mxu0 0
  %356 = vmatpush1.bf16.msra.mxu0 %v266
  %357 = vmatprep.subr.bf16.mxu0 0
  %358 = vmatpush1.bf16.msra.mxu0 %v267
  %359 = vmatprep.subr.bf16.mxu0 0
  %360 = vmatpush1.bf16.msra.mxu0 %v268
  %361 = vmatprep.subr.bf16.mxu0 0
  %362 = vmatpush1.bf16.msra.mxu0 %v269
  %363 = vmatprep.subr.bf16.mxu0 0
  %364 = vmatpush1.bf16.msra.mxu0 %v270
  %365 = vmatprep.subr.bf16.mxu0 0
  %366 = vmatpush1.bf16.msra.mxu0 %v271
  %367 = vmatprep.subr.bf16.mxu0 0
  %368 = vmatpush1.bf16.msra.mxu0 %v272
  %369 = vmatprep.subr.bf16.mxu0 0
  %370 = vmatpush1.bf16.msra.mxu0 %v273
  %371 = vmatprep.subr.bf16.mxu0 0
  %372 = vmatpush1.bf16.msra.mxu0 %v274
  %373 = vmatprep.subr.bf16.mxu0 0
  %374 = vmatpush1.bf16.msra.mxu0 %v275
  %375 = vmatprep.subr.bf16.mxu0 0
  %376 = vmatpush1.bf16.msra.mxu0 %v276
  %377 = vmatprep.subr.bf16.mxu0 0
  %378 = vmatpush1.bf16.msra.mxu0 %v277
  %379 = vmatprep.subr.bf16.mxu0 0
  %380 = vmatpush1.bf16.msra.mxu0 %v278
  %381 = vmatprep.subr.bf16.mxu0 0
  %382 = vmatpush1.bf16.msra.mxu0 %v279
  %383 = vmatprep.subr.bf16.mxu0 0
  %384 = vmatpush1.bf16.msra.mxu0 %v280
  %385 = vmatprep.subr.bf16.mxu0 0
  %386 = vmatpush1.bf16.msra.mxu0 %v281
  %387 = vmatprep.mubr.bf16.mxu0 %v117
  %388 = vmatmul.mubr.bf16.gmra.mrb[0].mxu0 %v116
  %v389 = vpop.f32.mrb[0].mxu0
  %v390 = vadd.f32 %v349, %v389
  %v391 = vpop.f32.mrb[0].mxu0
  %v392 = vpop.f32.mrb[0].mxu0
  %v393 = vadd.f32 %v352, %v392
  %v394 = vpop.f32.mrb[0].mxu0
  %395 = vdwg.mxu0
  %vm396 = vcmp.ge.f32.partialorder %v390, 0.0
  %vm397 = vcmp.ge.f32.partialorder %v393, 0.0
  %v398 = vmul.f32 %v390, 0.01
  %v399 = vmul.f32 %v393, 0.01
  %v400 = vsel %vm396, %v390, %v398
  %v401 = vsel %vm397, %v393, %v399
  %v402 = vlaneseq
  %v403 = vshrl.u32 %v402, 7
  %v404 = vadd.s32 %v403, 8
  %vm405 = vcmp.lt.s32.totalorder %v403, 2
  %vm406 = vcmp.lt.s32.totalorder %v404, 2
  %v407 = vsel %vm405, 1, 0
  %v408 = vsel %vm406, 1, 0
  %v409 = vcvt.s32.f32 %v407
  %v410 = vcvt.s32.f32 %v408
  %v411 = vmul.f32 %v400, %v409
  %v412 = vmul.f32 %v401, %v410
  %v413 = vadd.f32 %v411, %v412
  %v414 = vrot.slane %v413, 4
  %v415 = vadd.f32 %v413, %v414
  %v416 = vrot.slane %v415, 2
  %v417 = vadd.f32 %v415, %v416
  %v418 = vrot.slane %v417, 1
  %v419 = vadd.f32 %v417, %v418
  %v420 = vmul.f32 %v419, 0.5
  %v421 = vsub.f32 %v400, %v420
  %v422 = vsub.f32 %v401, %v420
  %v423 = vmul.f32 %v421, %v409
  %v424 = vmul.f32 %v422, %v410
  %v425 = vmul.f32 %v423, %v423
  %v426 = vmul.f32 %v424, %v424
  %v427 = vadd.f32 %v425, %v426
  %v428 = vrot.slane %v427, 4
  %v429 = vadd.f32 %v427, %v428
  %v430 = vrot.slane %v429, 2
  %v431 = vadd.f32 %v429, %v430
  %v432 = vrot.slane %v431, 1
  %v433 = vadd.f32 %v431, %v432
  %v434 = vmul.f32 %v433, 0.5
  %v435 = vadd.f32 %v434, 1e-05
  %v436 = vrsqrt.pop %v435
  %v437 = vmul.f32 %v421, %v436
  %v438 = vmul.f32 %v422, %v436
  %v439 = vld [vmem:[%s3] sm:$0x1]
  %v441 = vlaneseq
  %v442 = vshrl.u32 %v441, 7
  %v443 = vsub.s32 0, %v442
  %v444 = vrot.slane %v439, %v443
  %v446 = vmul.f32 %v437, %v444
  %v447 = vmul.f32 %v438, %v444
  %v448 = vld [vmem:[%s4] sm:$0x1]
  %v450 = vlaneseq
  %v451 = vshrl.u32 %v450, 7
  %v452 = vsub.s32 0, %v451
  %v453 = vrot.slane %v448, %v452
  %v455 = vadd.f32 %v446, %v453
  %v456 = vadd.f32 %v447, %v453
  %v457 = vpack.c.bf16 %v456, %v455
  %v458 = vld [vmem:[%s5] sm:$0xf]
  %v459 = vld [vmem:[%s5 + $0x4] sm:$0xf]
  %v460 = vld [vmem:[%s5 + $0x8] sm:$0xf]
  %v461 = vld [vmem:[%s5 + $0xc] sm:$0xf]
  %v462 = vld [vmem:[%s5 + $0x10] sm:$0xf]
  %v463 = vld [vmem:[%s5 + $0x14] sm:$0xf]
  %v464 = vld [vmem:[%s5 + $0x18] sm:$0xf]
  %v465 = vld [vmem:[%s5 + $0x1c] sm:$0xf]
  %v466 = vld [vmem:[%s5 + $0x20] sm:$0xf]
  %v467 = vld [vmem:[%s5 + $0x24] sm:$0xf]
  %v468 = vld [vmem:[%s5 + $0x28] sm:$0xf]
  %v469 = vld [vmem:[%s5 + $0x2c] sm:$0xf]
  %v470 = vld [vmem:[%s5 + $0x30] sm:$0xf]
  %v471 = vld [vmem:[%s5 + $0x34] sm:$0xf]
  %v472 = vld [vmem:[%s5 + $0x38] sm:$0xf]
  %v473 = vld [vmem:[%s5 + $0x3c] sm:$0xf]
  %v474 = vld [vmem:[%s6] sm:$0x1]
  %v476 = vlaneseq
  %v477 = vshrl.u32 %v476, 7
  %v478 = vsub.s32 0, %v477
  %v479 = vrot.slane %v474, %v478
  %v497 = vunpack.c.l.b16 %v458
  %v498 = vunpack.c.l.b16 %v459
  %v499 = vunpack.c.l.b16 %v460
  %v500 = vunpack.c.l.b16 %v461
  %v501 = vunpack.c.l.b16 %v462
  %v502 = vunpack.c.l.b16 %v463
  %v503 = vunpack.c.l.b16 %v464
  %v504 = vunpack.c.l.b16 %v465
  %v505 = vunpack.c.l.b16 %v466
  %v506 = vunpack.c.l.b16 %v467
  %v507 = vunpack.c.l.b16 %v468
  %v508 = vunpack.c.l.b16 %v469
  %v509 = vunpack.c.l.b16 %v470
  %v510 = vunpack.c.l.b16 %v471
  %v511 = vunpack.c.l.b16 %v472
  %v512 = vunpack.c.l.b16 %v473
  %v513 = vpack.c.b16 %v498, %v497
  %v514 = vpack.c.b16 %v500, %v499
  %v515 = vpack.c.b16 %v502, %v501
  %v516 = vpack.c.b16 %v504, %v503
  %v517 = vpack.c.b16 %v506, %v505
  %v518 = vpack.c.b16 %v508, %v507
  %v519 = vpack.c.b16 %v510, %v509
  %v520 = vpack.c.b16 %v512, %v511
  %529 = vmatprep.subr.bf16.mxu0 0
  %530 = vmatpush1.bf16.msra.mxu0 %v513
  %531 = vmatprep.subr.bf16.mxu0 0
  %532 = vmatpush1.bf16.msra.mxu0 %v514
  %533 = vmatprep.subr.bf16.mxu0 0
  %534 = vmatpush1.bf16.msra.mxu0 %v515
  %535 = vmatprep.subr.bf16.mxu0 0
  %536 = vmatpush1.bf16.msra.mxu0 %v516
  %537 = vmatprep.subr.bf16.mxu0 0
  %538 = vmatpush1.bf16.msra.mxu0 %v517
  %539 = vmatprep.subr.bf16.mxu0 0
  %540 = vmatpush1.bf16.msra.mxu0 %v518
  %541 = vmatprep.subr.bf16.mxu0 0
  %542 = vmatpush1.bf16.msra.mxu0 %v519
  %543 = vmatprep.subr.bf16.mxu0 0
  %544 = vmatpush1.bf16.msra.mxu0 %v520
  %545 = vmatprep.subr.bf16.mxu0 0
  %546 = vmatpush1.bf16.msra.mxu0 0
  %547 = vmatprep.subr.bf16.mxu0 0
  %548 = vmatpush1.bf16.msra.mxu0 0
  %549 = vmatprep.subr.bf16.mxu0 0
  %550 = vmatpush1.bf16.msra.mxu0 0
  %551 = vmatprep.subr.bf16.mxu0 0
  %552 = vmatpush1.bf16.msra.mxu0 0
  %553 = vmatprep.subr.bf16.mxu0 0
  %554 = vmatpush1.bf16.msra.mxu0 0
  %555 = vmatprep.subr.bf16.mxu0 0
  %556 = vmatpush1.bf16.msra.mxu0 0
  %557 = vmatprep.subr.bf16.mxu0 0
  %558 = vmatpush1.bf16.msra.mxu0 0
  %559 = vmatprep.subr.bf16.mxu0 0
  %560 = vmatpush1.bf16.msra.mxu0 0
  %561 = vmatprep.mubr.bf16.mxu0 0
  %562 = vmatmul.mubr.bf16.gmra.mrb[0].mxu0 %v457
  %v563 = vpop.f32.mrb[0].mxu0
  %v564 = vadd.f32 %v479, %v563
  %v565 = vpop.f32.mrb[0].mxu0
  %v566 = vpop.f32.mrb[0].mxu0
  %v567 = vadd.f32 %v479, %v566
  %v568 = vpop.f32.mrb[0].mxu0
  %569 = vdwg.mxu0
  %570 = vst [vmem:[%s7] sm:$0xff] %v564
  %571 = vst [vmem:[%s7 + $0x8] sm:$0xff] %v567
  // Predicated region
  $region30: #{_lambda_.13} parent=0 // pred_check
    _
  $region31: #{_lambda_.13} parent=0 // pred_check_branch
    %573 = sbr.rel (0) target = $region33
  $region32: #{_lambda_.13} parent=0 // pred_region
    _
  $region33: #{_lambda_.13} parent=0 // pred_fallthru
    _
  // Predicated region
  $region34: #{_lambda_.13} parent=0 // pred_check
    _
  $region35: #{_lambda_.13} parent=0 // pred_check_branch
    %575 = sbr.rel (0) target = $region37
  $region36: #{_lambda_.13} parent=0 // pred_region
    _
  $region37: #{_lambda_.13} parent=0 // pred_fallthru
    _

</llo_original>
